<compile_context>
chip_gen: v7x
topology: tpu7x:2x2x1
jax: 0.10.0
libtpu: 0.0.40
codegen_flags: <defaults>
</compile_context>

<pallas_src>
import functools

import jax
import jax.numpy as jnp
from jax.experimental import pallas as pl
from jax.experimental.pallas import tpu as pltpu


def _activate(x, activation):
    if activation == "relu":
        return jnp.maximum(x, 0.0)
    if activation == "tanh":
        return jnp.tanh(x)
    if activation == "sigmoid":
        return jax.nn.sigmoid(x)
    return x


def _full_spec(a):
    # Whole-array block; every operand here is tiny and fits VMEM easily.
    return pl.BlockSpec(a.shape, lambda i: (0,) * a.ndim)


# ---------------------------------------------------------------------------
# Pallas kernel 1: bidirectional LSTM, full recurrence in-kernel
# ---------------------------------------------------------------------------
def _bilstm_kernel(x_ref, wih_ref, whh_ref, b_ref, hs_ref, h_sc, c_sc, *, hidden):
    """One time step of one LSTM direction (PyTorch gate order i, f, g, o)."""
    t = pl.program_id(1)

    @pl.when(t == 0)
    def _init():
        h_sc[...] = jnp.zeros_like(h_sc)
        c_sc[...] = jnp.zeros_like(c_sc)

    x_t = x_ref[0]                                   # (B, In)
    h_prev = h_sc[...]
    c_prev = c_sc[...]
    gates = (jnp.dot(x_t, wih_ref[0], preferred_element_type=jnp.float32)
             + jnp.dot(h_prev, whh_ref[0], preferred_element_type=jnp.float32)
             + b_ref[0])                             # (B, 4H)
    H = hidden
    i_g = jax.nn.sigmoid(gates[:, 0 * H:1 * H])
    f_g = jax.nn.sigmoid(gates[:, 1 * H:2 * H])
    g_g = jnp.tanh(gates[:, 2 * H:3 * H])
    o_g = jax.nn.sigmoid(gates[:, 3 * H:4 * H])
    c_new = f_g * c_prev + i_g * g_g
    h_new = o_g * jnp.tanh(c_new)
    h_sc[...] = h_new
    c_sc[...] = c_new
    hs_ref[...] = h_new[None, None, :, :]


def lstm_bi(x, p):
    """Bidirectional single-layer LSTM.  x: (B, T, In) -> (B, T, 2H)."""
    B, T, In = x.shape
    H4 = p["w_ih"].shape[2]
    H = H4 // 4
    xt = jnp.transpose(x, (1, 0, 2))                 # (T, B, In)

    def pos(d, t):
        # forward (d=0) walks t, backward (d=1) walks T-1-t; the backward
        # output is written back to its original time position, which matches
        # reverse-run-then-reverse (PyTorch bidirectional semantics).
        return (1 - d) * t + d * (T - 1 - t)

    hs = pl.pallas_call(
        functools.partial(_bilstm_kernel, hidden=H),
        out_shape=jax.ShapeDtypeStruct((2, T, B, H), jnp.float32),
        grid=(2, T),
        in_specs=[
            pl.BlockSpec((1, B, In), lambda d, t: (pos(d, t), 0, 0)),
            pl.BlockSpec((1, In, H4), lambda d, t: (d, 0, 0)),
            pl.BlockSpec((1, H, H4), lambda d, t: (d, 0, 0)),
            pl.BlockSpec((1, 1, H4), lambda d, t: (d, 0, 0)),
        ],
        out_specs=pl.BlockSpec((1, 1, B, H), lambda d, t: (d, pos(d, t), 0, 0)),
        scratch_shapes=[pltpu.VMEM((B, H), jnp.float32),
                        pltpu.VMEM((B, H), jnp.float32)],
        compiler_params=pltpu.CompilerParams(
            dimension_semantics=("parallel", "arbitrary")),
    )(xt, p["w_ih"], p["w_hh"], p["b"])
    out = jnp.concatenate([hs[0], hs[1]], axis=-1)   # (T, B, 2H)
    return jnp.transpose(out, (1, 0, 2))             # (B, T, 2H)


# ---------------------------------------------------------------------------
# Pallas kernel 2: masked additive self attention over all scenes, one launch
# ---------------------------------------------------------------------------
def _scene_attention_kernel(h_ref, m_ref, w_ref, b_ref, v_ref, pooled_ref):
    w = w_ref[...]
    b = b_ref[...]
    v = v_ref[...]
    n_scenes = h_ref.shape[0]
    for s in range(n_scenes):                        # static unroll, 1 launch
        h = h_ref[s]                                 # (L, D)
        m = m_ref[s]                                 # (L, 1); 1.0 = valid
        act = jnp.tanh(jnp.dot(h, w, preferred_element_type=jnp.float32) + b)
        sc = jnp.dot(act, v, preferred_element_type=jnp.float32)     # (L, 1)
        sc = jnp.where(m > 0.0, sc, -1e30)
        mx = jnp.max(sc, axis=0, keepdims=True)
        e = jnp.exp(sc - mx) * m
        denom = jnp.maximum(jnp.sum(e, axis=0, keepdims=True), 1e-9)  # len==0 guard
        alpha = e / denom
        pooled_ref[pl.ds(s, 1), :] = jnp.sum(alpha * h, axis=0, keepdims=True)


def scene_attention(scene_outs, scene_lens, w, b, v):
    """scene_outs: (S, L, D), scene_lens: (S,) -> pooled (S, D)."""
    S, L, D = scene_outs.shape
    mask = (jnp.arange(L)[None, :] < scene_lens[:, None]).astype(jnp.float32)
    mask = mask[:, :, None]                          # (S, L, 1)
    return pl.pallas_call(
        _scene_attention_kernel,
        out_shape=jax.ShapeDtypeStruct((S, D), jnp.float32),
        grid=(1,),
        in_specs=[
            pl.BlockSpec((S, L, D), lambda i: (0, 0, 0)),
            pl.BlockSpec((S, L, 1), lambda i: (0, 0, 0)),
            pl.BlockSpec((D, D), lambda i: (0, 0)),
            pl.BlockSpec((1, D), lambda i: (0, 0)),
            pl.BlockSpec((D, 1), lambda i: (0, 0)),
        ],
        out_specs=pl.BlockSpec((S, D), lambda i: (0, 0)),
    )(scene_outs, mask, w, b.reshape(1, D), v)


# ---------------------------------------------------------------------------
# Pallas kernel 3: projection + plot/script interaction + prediction MLP
# ---------------------------------------------------------------------------
def _interaction_mlp_kernel(*refs, n_extra, activation):
    (tp_ref, u_ref, wp_ref, bp_ref,
     w1u_ref, w1t_ref, w1p_ref, w1d_ref, w1c_ref, b1_ref) = refs[:10]
    extra = refs[10:10 + 2 * n_extra]
    wo_ref, bo_ref, y_ref = refs[10 + 2 * n_extra:]

    u = u_ref[...]                                   # (N, D)
    tp = (jnp.dot(tp_ref[...], wp_ref[...], preferred_element_type=jnp.float32)
          + bp_ref[...])                             # projected TP emb, (N, D)
    prod = tp * u
    diff = tp - u
    dot = jnp.sum(prod, axis=-1, keepdims=True)      # (N, 1)
    tp_n = jnp.sqrt(jnp.sum(tp * tp, axis=-1, keepdims=True))
    u_n = jnp.sqrt(jnp.sum(u * u, axis=-1, keepdims=True))
    cos = dot / jnp.maximum(tp_n * u_n, 1e-8)        # (N, 1)

    # first MLP layer on concat([u, tp, prod, diff, cos]) without the concat
    h = (jnp.dot(u, w1u_ref[...], preferred_element_type=jnp.float32)
         + jnp.dot(tp, w1t_ref[...], preferred_element_type=jnp.float32)
         + jnp.dot(prod, w1p_ref[...], preferred_element_type=jnp.float32)
         + jnp.dot(diff, w1d_ref[...], preferred_element_type=jnp.float32)
         + cos * w1c_ref[...]
         + b1_ref[...])
    h = _activate(h, activation)
    for layer in range(n_extra):
        h = _activate(
            jnp.dot(h, extra[2 * layer][...], preferred_element_type=jnp.float32)
            + extra[2 * layer + 1][...], activation)
    y_ref[...] = (jnp.dot(h, wo_ref[...], preferred_element_type=jnp.float32)
                  + bo_ref[...])


def interaction_mlp(tp_emb, u, w_proj, b_proj, pred, activation):
    """tp_emb: (T, plot_size), u: (S, D) -> scene logits (T, S)."""
    T = tp_emb.shape[0]
    S, D = u.shape
    assert w_proj.shape[1] == D, "projected TP dim must match script feature dim"
    N = T * S
    # Broadcast to all (TP, scene) pairs in the wrapper (only N x D, tiny) so
    # the kernel stays purely 2-D; the (T, S, 4D+1) tensor is never built.
    tp_rep = jnp.repeat(tp_emb, S, axis=0)           # (N, plot_size)
    u_rep = jnp.tile(u, (T, 1))                      # (N, D)

    hidden = pred["hidden"]
    assert len(hidden) >= 1
    w1, b1 = hidden[0]
    F = w1.shape[1]
    Fp = ((F + 127) // 128) * 128                    # lane-dense hidden width
    padc = Fp - F

    def pad_cols(w):
        return jnp.pad(w, ((0, 0), (0, padc)))

    # split W1 by interaction feature block order [u, tp, prod, diff, cos]
    w1u = pad_cols(w1[0:D])
    w1t = pad_cols(w1[D:2 * D])
    w1p = pad_cols(w1[2 * D:3 * D])
    w1d = pad_cols(w1[3 * D:4 * D])
    w1c = pad_cols(w1[4 * D:4 * D + 1])
    b1p = jnp.pad(b1, (0, padc)).reshape(1, Fp)

    extra = []
    for (w, b) in hidden[1:]:
        extra.append(jnp.pad(w, ((0, padc), (0, padc))))
        extra.append(jnp.pad(b, (0, padc)).reshape(1, Fp))
    wo, bo = pred["out"]
    wop = jnp.pad(wo, ((0, padc), (0, 0)))
    bop = bo.reshape(1, 1)

    inputs = [tp_rep, u_rep, w_proj, b_proj.reshape(1, D),
              w1u, w1t, w1p, w1d, w1c, b1p, *extra, wop, bop]
    y = pl.pallas_call(
        functools.partial(_interaction_mlp_kernel,
                          n_extra=len(hidden) - 1, activation=activation),
        out_shape=jax.ShapeDtypeStruct((N, 1), jnp.float32),
        grid=(1,),
        in_specs=[_full_spec(a) for a in inputs],
        out_specs=pl.BlockSpec((N, 1), lambda i: (0, 0)),
    )(*inputs)
    return y.reshape(T, S)


# ---------------------------------------------------------------------------
# Parameter initialisation (deterministic, synthetic)
# ---------------------------------------------------------------------------
def _mk(key, shape, scale=0.1):
    return scale * jax.random.normal(key, shape, jnp.float32)


def init_lstm(key, in_size, hidden):
    ks = jax.random.split(key, 3)
    # stacked [forward, backward] weights, already transposed for x @ W
    return dict(
        w_ih=_mk(ks[0], (2, in_size, 4 * hidden)),
        w_hh=_mk(ks[1], (2, hidden, 4 * hidden)),
        b=_mk(ks[2], (2, 1, 4 * hidden)),            # b_ih + b_hh folded
    )


def init_params(key, config):
    plot_size = config["plot_encoder_size"] * (2 if config["plot_encoder_bidirectional"] else 1)
    scene_size = config["scene_encoder_size"] * (2 if config["scene_encoder_bidirectional"] else 1)
    script_size = config["script_encoder_size"] * (2 if config["script_encoder_bidirectional"] else 1)
    interaction_size = plot_size * 3 + script_size * 3 * 3 + 1

    ks = jax.random.split(key, 10 + 2 * config["interaction_layers"])
    hidden = []
    kidx = 8
    for _ in range(config["interaction_layers"]):
        hidden.append((_mk(ks[kidx], (interaction_size, interaction_size)),
                       _mk(ks[kidx + 1], (interaction_size,))))
        kidx += 2
    out = (_mk(ks[kidx], (interaction_size, 1)), _mk(ks[kidx + 1], (1,)))

    return dict(
        plot_encoder=init_lstm(ks[0], config["input_size"], config["plot_encoder_size"]),
        scene_encoder=init_lstm(ks[1], config["input_size"], config["scene_encoder_size"]),
        script_encoder=init_lstm(ks[2], scene_size, config["script_encoder_size"]),
        scene_attention=(_mk(ks[3], (scene_size, scene_size)),
                         _mk(ks[4], (scene_size,)),
                         _mk(ks[5], (scene_size, 1))),
        projection=(_mk(ks[6], (plot_size, plot_size * 3)),
                    _mk(ks[7], (plot_size * 3,))),
        prediction=dict(hidden=hidden, out=out),
    )


# ---------------------------------------------------------------------------
# TAM forward
# ---------------------------------------------------------------------------
def tam_forward(params, plot, script, tp_ids, scene_lens, window_length, config):
    # plot encoder: sentence-level plot encodings
    plot_outs = lstm_bi(plot[None], params["plot_encoder"])     # (1, P, plot_size)
    plot_embeddings = plot_outs[0]                              # (P, plot_size)
    tp_embeddings = plot_embeddings[tp_ids]                     # (T, plot_size)

    # scene encoder + self attention: one vector per scene
    scene_outs = lstm_bi(script, params["scene_encoder"])       # (S, L, scene_size)
    w_a, b_a, v_a = params["scene_attention"]
    scene_embeddings = scene_attention(scene_outs, scene_lens, w_a, b_a, v_a)

    # script encoder: scene-level contextualised encodings
    script_outs = lstm_bi(scene_embeddings[None], params["script_encoder"])
    script_embeddings = script_outs[0]                          # (S, script_size)

    # windowed left/right context: vectorized cumsum + gathers (O(1) XLA ops)
    S, D = script_embeddings.shape
    w = int(window_length * S)
    csum = jnp.concatenate([jnp.zeros((1, D), jnp.float32),
                            jnp.cumsum(script_embeddings, axis=0)], axis=0)
    idx = jnp.arange(S)
    start = jnp.maximum(idx - w, 0)
    lcnt = idx - start                                           # = min(i, w)
    left = (csum[idx] - csum[start]) / jnp.maximum(lcnt, 1).astype(jnp.float32)[:, None]
    left = jnp.where(((idx > 0) & (lcnt > 0))[:, None], left, 0.0)
    end = jnp.minimum(idx + w, S)
    rcnt = end - idx
    right = (csum[end] - csum[idx]) / jnp.maximum(rcnt, 1).astype(jnp.float32)[:, None]
    right = jnp.where(((idx < S - 1) & (rcnt > 0))[:, None], right, 0.0)
    u = jnp.concatenate([script_embeddings, left, right], axis=-1)   # (S, 3*script_size)

    # fused projection + plot/script interaction + prediction MLP
    y = interaction_mlp(tp_embeddings, u,
                        params["projection"][0], params["projection"][1],
                        params["prediction"],
                        config["interaction_activation"])
    return y                                                     # (T, num_scenes)


# ---------------------------------------------------------------------------
if __name__ == "__main__":
    config = dict(
        input_size=16,
        plot_encoder_size=16, plot_encoder_bidirectional=True, plot_encoder_layers=1,
        scene_encoder_size=8, scene_encoder_bidirectional=True, scene_encoder_layers=1,
        script_encoder_size=16, script_encoder_bidirectional=True, script_encoder_layers=1,
        interaction_layers=2, interaction_dropout=0.0, interaction_activation="relu",
    )
    window_length = 0.25

    key = jax.random.PRNGKey(0)
    kp, ks, kparams = jax.random.split(key, 3)

    P, S, L = 12, 8, 6
    plot = jax.random.normal(kp, (P, config["input_size"]), jnp.float32)
    script = jax.random.normal(ks, (S, L, config["input_size"]), jnp.float32)
    tp_ids = jnp.array([1, 3, 5, 8, 10], jnp.int32)          # 5 turning points
    scene_lens = jnp.array([6, 4, 5, 6, 3, 2, 6, 5], jnp.int32)

    params = init_params(kparams, config)

    fwd = jax.jit(functools.partial(tam_forward,
                                    window_length=window_length, config=config))
    y = jax.block_until_ready(fwd(params, plot, script, tp_ids, scene_lens))
    assert y.shape == (5, S)
    assert bool(jnp.all(jnp.isfinite(y)))
    print("KERNEL_OK")
</pallas_src>

<mosaic_0001>
module attributes {stable_mosaic.version = 11 : i64} {
  func.func @_bilstm_kernel(%arg0: i32, %arg1: i32, %arg2: memref<1x1x16xf32, #tpu.memory_space<vmem>>, %arg3: memref<1x16x64xf32, #tpu.memory_space<vmem>>, %arg4: memref<1x16x64xf32, #tpu.memory_space<vmem>>, %arg5: memref<1x1x64xf32, #tpu.memory_space<vmem>>, %arg6: memref<1x1x1x16xf32, #tpu.memory_space<vmem>>, %arg7: memref<1x16xf32, #tpu.memory_space<vmem>>, %arg8: memref<1x16xf32, #tpu.memory_space<vmem>>) attributes {dimension_semantics = [#tpu.dimension_semantics<parallel>, #tpu.dimension_semantics<arbitrary>], iteration_bounds = array<i64: 2, 12>, scalar_prefetch = 0 : i64, scratch_operands = 2 : i64, tpu.core_type = #tpu.core_type<tc>, window_params = [{transform_indices = @transform_0, window_bounds = array<i64: 1, 1, 16>}, {transform_indices = @transform_1, window_bounds = array<i64: 1, 16, 64>}, {transform_indices = @transform_2, window_bounds = array<i64: 1, 16, 64>}, {transform_indices = @transform_3, window_bounds = array<i64: 1, 1, 64>}, {transform_indices = @transform_4, window_bounds = array<i64: 1, 1, 1, 16>}]} {
    %c0_i32 = arith.constant 0 : i32
    %0 = arith.cmpi eq, %arg1, %c0_i32 : i32
    %1 = arith.extui %0 : i1 to i32
    %c0_i32_0 = arith.constant 0 : i32
    %2 = arith.cmpi ne, %1, %c0_i32_0 : i32
    scf.if %2 {
      %cst_28 = arith.constant 0.000000e+00 : f32
      %46 = vector.broadcast %cst_28 : f32 to vector<1x16xf32>
      %c0_29 = arith.constant 0 : index
      %c0_30 = arith.constant 0 : index
      %47 = vector.load %arg7[%c0_29, %c0_30] : memref<1x16xf32, #tpu.memory_space<vmem>>, vector<1x16xf32>
      tpu.vector_store %arg7[%c0_29, %c0_30], %46 {strides = array<i32>} : memref<1x16xf32, #tpu.memory_space<vmem>>, vector<1x16xf32>,
      %cst_31 = arith.constant 0.000000e+00 : f32
      %48 = vector.broadcast %cst_31 : f32 to vector<1x16xf32>
      %c0_32 = arith.constant 0 : index
      %c0_33 = arith.constant 0 : index
      %49 = vector.load %arg8[%c0_32, %c0_33] : memref<1x16xf32, #tpu.memory_space<vmem>>, vector<1x16xf32>
      tpu.vector_store %arg8[%c0_32, %c0_33], %48 {strides = array<i32>} : memref<1x16xf32, #tpu.memory_space<vmem>>, vector<1x16xf32>,
    } else {
    }
    %c0 = arith.constant 0 : index
    %c0_1 = arith.constant 0 : index
    %c0_2 = arith.constant 0 : index
    %3 = vector.load %arg2[%c0, %c0_1, %c0_2] : memref<1x1x16xf32, #tpu.memory_space<vmem>>, vector<1x1x16xf32>
    %4 = vector.shape_cast %3 : vector<1x1x16xf32> to vector<1x16xf32>
    %c0_3 = arith.constant 0 : index
    %c0_4 = arith.constant 0 : index
    %5 = vector.load %arg7[%c0_3, %c0_4] : memref<1x16xf32, #tpu.memory_space<vmem>>, vector<1x16xf32>
    %c0_5 = arith.constant 0 : index
    %c0_6 = arith.constant 0 : index
    %6 = vector.load %arg8[%c0_5, %c0_6] : memref<1x16xf32, #tpu.memory_space<vmem>>, vector<1x16xf32>
    %c0_7 = arith.constant 0 : index
    %c0_8 = arith.constant 0 : index
    %c0_9 = arith.constant 0 : index
    %7 = vector.load %arg3[%c0_7, %c0_8, %c0_9] : memref<1x16x64xf32, #tpu.memory_space<vmem>>, vector<1x16x64xf32>
    %8 = vector.shape_cast %7 : vector<1x16x64xf32> to vector<16x64xf32>
    %cst = arith.constant dense<0.000000e+00> : vector<1x64xf32>
    %9 = tpu.matmul %4, %8, %cst {dimension_numbers = #tpu.dot_dimension_numbers<[1], [0], [0], [1], [0, 0, 1, 1], [], []>} : vector<1x16xf32>, vector<16x64xf32>, vector<1x64xf32> -> vector<1x64xf32>
    %c0_10 = arith.constant 0 : index
    %c0_11 = arith.constant 0 : index
    %c0_12 = arith.constant 0 : index
    %10 = vector.load %arg4[%c0_10, %c0_11, %c0_12] : memref<1x16x64xf32, #tpu.memory_space<vmem>>, vector<1x16x64xf32>
    %11 = vector.shape_cast %10 : vector<1x16x64xf32> to vector<16x64xf32>
    %cst_13 = arith.constant dense<0.000000e+00> : vector<1x64xf32>
    %12 = tpu.matmul %5, %11, %cst_13 {dimension_numbers = #tpu.dot_dimension_numbers<[1], [0], [0], [1], [0, 0, 1, 1], [], []>} : vector<1x16xf32>, vector<16x64xf32>, vector<1x64xf32> -> vector<1x64xf32>
    %13 = arith.addf %9, %12 : vector<1x64xf32>
    %c0_14 = arith.constant 0 : index
    %c0_15 = arith.constant 0 : index
    %c0_16 = arith.constant 0 : index
    %14 = vector.load %arg5[%c0_14, %c0_15, %c0_16] : memref<1x1x64xf32, #tpu.memory_space<vmem>>, vector<1x1x64xf32>
    %15 = vector.shape_cast %14 : vector<1x1x64xf32> to vector<1x64xf32>
    %16 = arith.addf %13, %15 : vector<1x64xf32>
    %17 = vector.extract_strided_slice %16 {offsets = [0, 0], sizes = [1, 16], strides = [1, 1]} : vector<1x64xf32> to vector<1x16xf32>
    %18 = arith.negf %17 : vector<1x16xf32>
    %19 = math.exp %18 : vector<1x16xf32>
    %cst_17 = arith.constant 1.000000e+00 : f32
    %20 = vector.broadcast %cst_17 : f32 to vector<1x16xf32>
    %21 = arith.addf %20, %19 : vector<1x16xf32>
    %22 = arith.divf %20, %21 : vector<1x16xf32>
    %23 = vector.extract_strided_slice %16 {offsets = [0, 16], sizes = [1, 16], strides = [1, 1]} : vector<1x64xf32> to vector<1x16xf32>
    %24 = arith.negf %23 : vector<1x16xf32>
    %25 = math.exp %24 : vector<1x16xf32>
    %cst_18 = arith.constant 1.000000e+00 : f32
    %26 = vector.broadcast %cst_18 : f32 to vector<1x16xf32>
    %27 = arith.addf %26, %25 : vector<1x16xf32>
    %28 = arith.divf %26, %27 : vector<1x16xf32>
    %29 = vector.extract_strided_slice %16 {offsets = [0, 32], sizes = [1, 16], strides = [1, 1]} : vector<1x64xf32> to vector<1x16xf32>
    %30 = math.tanh %29 : vector<1x16xf32>
    %31 = vector.extract_strided_slice %16 {offsets = [0, 48], sizes = [1, 16], strides = [1, 1]} : vector<1x64xf32> to vector<1x16xf32>
    %32 = arith.negf %31 : vector<1x16xf32>
    %33 = math.exp %32 : vector<1x16xf32>
    %cst_19 = arith.constant 1.000000e+00 : f32
    %34 = vector.broadcast %cst_19 : f32 to vector<1x16xf32>
    %35 = arith.addf %34, %33 : vector<1x16xf32>
    %36 = arith.divf %34, %35 : vector<1x16xf32>
    %37 = arith.mulf %28, %6 : vector<1x16xf32>
    %38 = arith.mulf %22, %30 : vector<1x16xf32>
    %39 = arith.addf %37, %38 : vector<1x16xf32>
    %40 = math.tanh %39 : vector<1x16xf32>
    %41 = arith.mulf %36, %40 : vector<1x16xf32>
    %c0_20 = arith.constant 0 : index
    %c0_21 = arith.constant 0 : index
    %42 = vector.load %arg7[%c0_20, %c0_21] : memref<1x16xf32, #tpu.memory_space<vmem>>, vector<1x16xf32>
    tpu.vector_store %arg7[%c0_20, %c0_21], %41 {strides = array<i32>} : memref<1x16xf32, #tpu.memory_space<vmem>>, vector<1x16xf32>,
    %c0_22 = arith.constant 0 : index
    %c0_23 = arith.constant 0 : index
    %43 = vector.load %arg8[%c0_22, %c0_23] : memref<1x16xf32, #tpu.memory_space<vmem>>, vector<1x16xf32>
    tpu.vector_store %arg8[%c0_22, %c0_23], %39 {strides = array<i32>} : memref<1x16xf32, #tpu.memory_space<vmem>>, vector<1x16xf32>,
    %44 = vector.shape_cast %41 : vector<1x16xf32> to vector<1x1x1x16xf32>
    %c0_24 = arith.constant 0 : index
    %c0_25 = arith.constant 0 : index
    %c0_26 = arith.constant 0 : index
    %c0_27 = arith.constant 0 : index
    %45 = vector.load %arg6[%c0_24, %c0_25, %c0_26, %c0_27] : memref<1x1x1x16xf32, #tpu.memory_space<vmem>>, vector<1x1x1x16xf32>
    tpu.vector_store %arg6[%c0_24, %c0_25, %c0_26, %c0_27], %44 {strides = array<i32>} : memref<1x1x1x16xf32, #tpu.memory_space<vmem>>, vector<1x1x1x16xf32>,
    return
  }
  func.func @transform_0(%arg0: i32, %arg1: i32) -> (i32, i32, i32) {
    %c1_i32 = arith.constant 1 : i32
    %0 = arith.subi %c1_i32, %arg0 : i32
    %1 = arith.muli %0, %arg1 : i32
    %c11_i32 = arith.constant 11 : i32
    %2 = arith.subi %c11_i32, %arg1 : i32
    %3 = arith.muli %arg0, %2 : i32
    %4 = arith.addi %1, %3 : i32
    %c0_i32 = arith.constant 0 : i32
    %c0_i32_0 = arith.constant 0 : i32
    %c0_i32_1 = arith.constant 0 : i32
    return %4, %c0_i32, %c0_i32_0 : i32, i32, i32
  }
  func.func @transform_1(%arg0: i32, %arg1: i32) -> (i32, i32, i32) {
    %c0_i32 = arith.constant 0 : i32
    %c0_i32_0 = arith.constant 0 : i32
    %c0_i32_1 = arith.constant 0 : i32
    return %arg0, %c0_i32, %c0_i32_0 : i32, i32, i32
  }
  func.func @transform_2(%arg0: i32, %arg1: i32) -> (i32, i32, i32) {
    %c0_i32 = arith.constant 0 : i32
    %c0_i32_0 = arith.constant 0 : i32
    %c0_i32_1 = arith.constant 0 : i32
    return %arg0, %c0_i32, %c0_i32_0 : i32, i32, i32
  }
  func.func @transform_3(%arg0: i32, %arg1: i32) -> (i32, i32, i32) {
    %c0_i32 = arith.constant 0 : i32
    %c0_i32_0 = arith.constant 0 : i32
    %c0_i32_1 = arith.constant 0 : i32
    return %arg0, %c0_i32, %c0_i32_0 : i32, i32, i32
  }
  func.func @transform_4(%arg0: i32, %arg1: i32) -> (i32, i32, i32, i32) {
    %c1_i32 = arith.constant 1 : i32
    %0 = arith.subi %c1_i32, %arg0 : i32
    %1 = arith.muli %0, %arg1 : i32
    %c11_i32 = arith.constant 11 : i32
    %2 = arith.subi %c11_i32, %arg1 : i32
    %3 = arith.muli %arg0, %2 : i32
    %4 = arith.addi %1, %3 : i32
    %c0_i32 = arith.constant 0 : i32
    %c0_i32_0 = arith.constant 0 : i32
    %c0_i32_1 = arith.constant 0 : i32
    return %arg0, %4, %c0_i32, %c0_i32_0 : i32, i32, i32, i32
  }
}

module attributes {stable_mosaic.version = 11 : i64} {
  func.func @_bilstm_kernel(%arg0: i32, %arg1: i32, %arg2: memref<1x8x16xf32, #tpu.memory_space<vmem>>, %arg3: memref<1x16x32xf32, #tpu.memory_space<vmem>>, %arg4: memref<1x8x32xf32, #tpu.memory_space<vmem>>, %arg5: memref<1x1x32xf32, #tpu.memory_space<vmem>>, %arg6: memref<1x1x8x8xf32, #tpu.memory_space<vmem>>, %arg7: memref<8x8xf32, #tpu.memory_space<vmem>>, %arg8: memref<8x8xf32, #tpu.memory_space<vmem>>) attributes {dimension_semantics = [#tpu.dimension_semantics<parallel>, #tpu.dimension_semantics<arbitrary>], iteration_bounds = array<i64: 2, 6>, scalar_prefetch = 0 : i64, scratch_operands = 2 : i64, tpu.core_type = #tpu.core_type<tc>, window_params = [{transform_indices = @transform_0, window_bounds = array<i64: 1, 8, 16>}, {transform_indices = @transform_1, window_bounds = array<i64: 1, 16, 32>}, {transform_indices = @transform_2, window_bounds = array<i64: 1, 8, 32>}, {transform_indices = @transform_3, window_bounds = array<i64: 1, 1, 32>}, {transform_indices = @transform_4, window_bounds = array<i64: 1, 1, 8, 8>}]} {
    %c0_i32 = arith.constant 0 : i32
    %0 = arith.cmpi eq, %arg1, %c0_i32 : i32
    %1 = arith.extui %0 : i1 to i32
    %c0_i32_0 = arith.constant 0 : i32
    %2 = arith.cmpi ne, %1, %c0_i32_0 : i32
    scf.if %2 {
      %cst_28 = arith.constant 0.000000e+00 : f32
      %47 = vector.broadcast %cst_28 : f32 to vector<8x8xf32>
      %c0_29 = arith.constant 0 : index
      %c0_30 = arith.constant 0 : index
      %48 = vector.load %arg7[%c0_29, %c0_30] : memref<8x8xf32, #tpu.memory_space<vmem>>, vector<8x8xf32>
      tpu.vector_store %arg7[%c0_29, %c0_30], %47 {strides = array<i32>} : memref<8x8xf32, #tpu.memory_space<vmem>>, vector<8x8xf32>,
      %cst_31 = arith.constant 0.000000e+00 : f32
      %49 = vector.broadcast %cst_31 : f32 to vector<8x8xf32>
      %c0_32 = arith.constant 0 : index
      %c0_33 = arith.constant 0 : index
      %50 = vector.load %arg8[%c0_32, %c0_33] : memref<8x8xf32, #tpu.memory_space<vmem>>, vector<8x8xf32>
      tpu.vector_store %arg8[%c0_32, %c0_33], %49 {strides = array<i32>} : memref<8x8xf32, #tpu.memory_space<vmem>>, vector<8x8xf32>,
    } else {
    }
    %c0 = arith.constant 0 : index
    %c0_1 = arith.constant 0 : index
    %c0_2 = arith.constant 0 : index
    %3 = vector.load %arg2[%c0, %c0_1, %c0_2] : memref<1x8x16xf32, #tpu.memory_space<vmem>>, vector<1x8x16xf32>
    %4 = vector.shape_cast %3 : vector<1x8x16xf32> to vector<8x16xf32>
    %c0_3 = arith.constant 0 : index
    %c0_4 = arith.constant 0 : index
    %5 = vector.load %arg7[%c0_3, %c0_4] : memref<8x8xf32, #tpu.memory_space<vmem>>, vector<8x8xf32>
    %c0_5 = arith.constant 0 : index
    %c0_6 = arith.constant 0 : index
    %6 = vector.load %arg8[%c0_5, %c0_6] : memref<8x8xf32, #tpu.memory_space<vmem>>, vector<8x8xf32>
    %c0_7 = arith.constant 0 : index
    %c0_8 = arith.constant 0 : index
    %c0_9 = arith.constant 0 : index
    %7 = vector.load %arg3[%c0_7, %c0_8, %c0_9] : memref<1x16x32xf32, #tpu.memory_space<vmem>>, vector<1x16x32xf32>
    %8 = vector.shape_cast %7 : vector<1x16x32xf32> to vector<16x32xf32>
    %cst = arith.constant dense<0.000000e+00> : vector<8x32xf32>
    %9 = tpu.matmul %4, %8, %cst {dimension_numbers = #tpu.dot_dimension_numbers<[1], [0], [0], [1], [0, 0, 1, 1], [], []>} : vector<8x16xf32>, vector<16x32xf32>, vector<8x32xf32> -> vector<8x32xf32>
    %c0_10 = arith.constant 0 : index
    %c0_11 = arith.constant 0 : index
    %c0_12 = arith.constant 0 : index
    %10 = vector.load %arg4[%c0_10, %c0_11, %c0_12] : memref<1x8x32xf32, #tpu.memory_space<vmem>>, vector<1x8x32xf32>
    %11 = vector.shape_cast %10 : vector<1x8x32xf32> to vector<8x32xf32>
    %cst_13 = arith.constant dense<0.000000e+00> : vector<8x32xf32>
    %12 = tpu.matmul %5, %11, %cst_13 {dimension_numbers = #tpu.dot_dimension_numbers<[1], [0], [0], [1], [0, 0, 1, 1], [], []>} : vector<8x8xf32>, vector<8x32xf32>, vector<8x32xf32> -> vector<8x32xf32>
    %13 = arith.addf %9, %12 : vector<8x32xf32>
    %c0_14 = arith.constant 0 : index
    %c0_15 = arith.constant 0 : index
    %c0_16 = arith.constant 0 : index
    %14 = vector.load %arg5[%c0_14, %c0_15, %c0_16] : memref<1x1x32xf32, #tpu.memory_space<vmem>>, vector<1x1x32xf32>
    %15 = vector.shape_cast %14 : vector<1x1x32xf32> to vector<1x32xf32>
    %16 = vector.broadcast %15 : vector<1x32xf32> to vector<8x32xf32>
    %17 = arith.addf %13, %16 : vector<8x32xf32>
    %18 = vector.extract_strided_slice %17 {offsets = [0, 0], sizes = [8, 8], strides = [1, 1]} : vector<8x32xf32> to vector<8x8xf32>
    %19 = arith.negf %18 : vector<8x8xf32>
    %20 = math.exp %19 : vector<8x8xf32>
    %cst_17 = arith.constant 1.000000e+00 : f32
    %21 = vector.broadcast %cst_17 : f32 to vector<8x8xf32>
    %22 = arith.addf %21, %20 : vector<8x8xf32>
    %23 = arith.divf %21, %22 : vector<8x8xf32>
    %24 = vector.extract_strided_slice %17 {offsets = [0, 8], sizes = [8, 8], strides = [1, 1]} : vector<8x32xf32> to vector<8x8xf32>
    %25 = arith.negf %24 : vector<8x8xf32>
    %26 = math.exp %25 : vector<8x8xf32>
    %cst_18 = arith.constant 1.000000e+00 : f32
    %27 = vector.broadcast %cst_18 : f32 to vector<8x8xf32>
    %28 = arith.addf %27, %26 : vector<8x8xf32>
    %29 = arith.divf %27, %28 : vector<8x8xf32>
    %30 = vector.extract_strided_slice %17 {offsets = [0, 16], sizes = [8, 8], strides = [1, 1]} : vector<8x32xf32> to vector<8x8xf32>
    %31 = math.tanh %30 : vector<8x8xf32>
    %32 = vector.extract_strided_slice %17 {offsets = [0, 24], sizes = [8, 8], strides = [1, 1]} : vector<8x32xf32> to vector<8x8xf32>
    %33 = arith.negf %32 : vector<8x8xf32>
    %34 = math.exp %33 : vector<8x8xf32>
    %cst_19 = arith.constant 1.000000e+00 : f32
    %35 = vector.broadcast %cst_19 : f32 to vector<8x8xf32>
    %36 = arith.addf %35, %34 : vector<8x8xf32>
    %37 = arith.divf %35, %36 : vector<8x8xf32>
    %38 = arith.mulf %29, %6 : vector<8x8xf32>
    %39 = arith.mulf %23, %31 : vector<8x8xf32>
    %40 = arith.addf %38, %39 : vector<8x8xf32>
    %41 = math.tanh %40 : vector<8x8xf32>
    %42 = arith.mulf %37, %41 : vector<8x8xf32>
    %c0_20 = arith.constant 0 : index
    %c0_21 = arith.constant 0 : index
    %43 = vector.load %arg7[%c0_20, %c0_21] : memref<8x8xf32, #tpu.memory_space<vmem>>, vector<8x8xf32>
    tpu.vector_store %arg7[%c0_20, %c0_21], %42 {strides = array<i32>} : memref<8x8xf32, #tpu.memory_space<vmem>>, vector<8x8xf32>,
    %c0_22 = arith.constant 0 : index
    %c0_23 = arith.constant 0 : index
    %44 = vector.load %arg8[%c0_22, %c0_23] : memref<8x8xf32, #tpu.memory_space<vmem>>, vector<8x8xf32>
    tpu.vector_store %arg8[%c0_22, %c0_23], %40 {strides = array<i32>} : memref<8x8xf32, #tpu.memory_space<vmem>>, vector<8x8xf32>,
    %45 = vector.shape_cast %42 : vector<8x8xf32> to vector<1x1x8x8xf32>
    %c0_24 = arith.constant 0 : index
    %c0_25 = arith.constant 0 : index
    %c0_26 = arith.constant 0 : index
    %c0_27 = arith.constant 0 : index
    %46 = vector.load %arg6[%c0_24, %c0_25, %c0_26, %c0_27] : memref<1x1x8x8xf32, #tpu.memory_space<vmem>>, vector<1x1x8x8xf32>
    tpu.vector_store %arg6[%c0_24, %c0_25, %c0_26, %c0_27], %45 {strides = array<i32>} : memref<1x1x8x8xf32, #tpu.memory_space<vmem>>, vector<1x1x8x8xf32>,
    return
  }
  func.func @transform_0(%arg0: i32, %arg1: i32) -> (i32, i32, i32) {
    %c1_i32 = arith.constant 1 : i32
    %0 = arith.subi %c1_i32, %arg0 : i32
    %1 = arith.muli %0, %arg1 : i32
    %c5_i32 = arith.constant 5 : i32
    %2 = arith.subi %c5_i32, %arg1 : i32
    %3 = arith.muli %arg0, %2 : i32
    %4 = arith.addi %1, %3 : i32
    %c0_i32 = arith.constant 0 : i32
    %c0_i32_0 = arith.constant 0 : i32
    %c0_i32_1 = arith.constant 0 : i32
    return %4, %c0_i32, %c0_i32_0 : i32, i32, i32
  }
  func.func @transform_1(%arg0: i32, %arg1: i32) -> (i32, i32, i32) {
    %c0_i32 = arith.constant 0 : i32
    %c0_i32_0 = arith.constant 0 : i32
    %c0_i32_1 = arith.constant 0 : i32
    return %arg0, %c0_i32, %c0_i32_0 : i32, i32, i32
  }
  func.func @transform_2(%arg0: i32, %arg1: i32) -> (i32, i32, i32) {
    %c0_i32 = arith.constant 0 : i32
    %c0_i32_0 = arith.constant 0 : i32
    %c0_i32_1 = arith.constant 0 : i32
    return %arg0, %c0_i32, %c0_i32_0 : i32, i32, i32
  }
  func.func @transform_3(%arg0: i32, %arg1: i32) -> (i32, i32, i32) {
    %c0_i32 = arith.constant 0 : i32
    %c0_i32_0 = arith.constant 0 : i32
    %c0_i32_1 = arith.constant 0 : i32
    return %arg0, %c0_i32, %c0_i32_0 : i32, i32, i32
  }
  func.func @transform_4(%arg0: i32, %arg1: i32) -> (i32, i32, i32, i32) {
    %c1_i32 = arith.constant 1 : i32
    %0 = arith.subi %c1_i32, %arg0 : i32
    %1 = arith.muli %0, %arg1 : i32
    %c5_i32 = arith.constant 5 : i32
    %2 = arith.subi %c5_i32, %arg1 : i32
    %3 = arith.muli %arg0, %2 : i32
    %4 = arith.addi %1, %3 : i32
    %c0_i32 = arith.constant 0 : i32
    %c0_i32_0 = arith.constant 0 : i32
    %c0_i32_1 = arith.constant 0 : i32
    return %arg0, %4, %c0_i32, %c0_i32_0 : i32, i32, i32, i32
  }
}

module attributes {stable_mosaic.version = 11 : i64} {
  func.func @_scene_attention_kernel(%arg0: i32, %arg1: memref<8x6x16xf32, #tpu.memory_space<vmem>>, %arg2: memref<8x6x1xf32, #tpu.memory_space<vmem>>, %arg3: memref<16x16xf32, #tpu.memory_space<vmem>>, %arg4: memref<1x16xf32, #tpu.memory_space<vmem>>, %arg5: memref<16x1xf32, #tpu.memory_space<vmem>>, %arg6: memref<8x16xf32, #tpu.memory_space<vmem>>) attributes {dimension_semantics = [#tpu.dimension_semantics<arbitrary>], iteration_bounds = array<i64: 1>, scalar_prefetch = 0 : i64, scratch_operands = 0 : i64, tpu.core_type = #tpu.core_type<tc>, window_params = [{pipeline_mode = #tpu.pipeline_mode<synchronous>, transform_indices = @transform_0, window_bounds = array<i64: 8, 6, 16>}, {pipeline_mode = #tpu.pipeline_mode<synchronous>, transform_indices = @transform_1, window_bounds = array<i64: 8, 6, 1>}, {pipeline_mode = #tpu.pipeline_mode<synchronous>, transform_indices = @transform_2, window_bounds = array<i64: 16, 16>}, {pipeline_mode = #tpu.pipeline_mode<synchronous>, transform_indices = @transform_3, window_bounds = array<i64: 1, 16>}, {pipeline_mode = #tpu.pipeline_mode<synchronous>, transform_indices = @transform_4, window_bounds = array<i64: 16, 1>}, {pipeline_mode = #tpu.pipeline_mode<synchronous>, transform_indices = @transform_5, window_bounds = array<i64: 8, 16>}]} {
    %c0 = arith.constant 0 : index
    %c0_0 = arith.constant 0 : index
    %0 = vector.load %arg3[%c0, %c0_0] : memref<16x16xf32, #tpu.memory_space<vmem>>, vector<16x16xf32>
    %c0_1 = arith.constant 0 : index
    %c0_2 = arith.constant 0 : index
    %1 = vector.load %arg4[%c0_1, %c0_2] : memref<1x16xf32, #tpu.memory_space<vmem>>, vector<1x16xf32>
    %c0_3 = arith.constant 0 : index
    %c0_4 = arith.constant 0 : index
    %2 = vector.load %arg5[%c0_3, %c0_4] : memref<16x1xf32, #tpu.memory_space<vmem>>, vector<16x1xf32>
    %c0_5 = arith.constant 0 : index
    %c0_6 = arith.constant 0 : index
    %c0_7 = arith.constant 0 : index
    %3 = vector.load %arg1[%c0_5, %c0_6, %c0_7] : memref<8x6x16xf32, #tpu.memory_space<vmem>>, vector<1x6x16xf32>
    %4 = vector.shape_cast %3 : vector<1x6x16xf32> to vector<6x16xf32>
    %c0_8 = arith.constant 0 : index
    %c0_9 = arith.constant 0 : index
    %c0_10 = arith.constant 0 : index
    %5 = vector.load %arg2[%c0_8, %c0_9, %c0_10] : memref<8x6x1xf32, #tpu.memory_space<vmem>>, vector<1x6x1xf32>
    %6 = vector.shape_cast %5 : vector<1x6x1xf32> to vector<6x1xf32>
    %cst = arith.constant dense<0.000000e+00> : vector<6x16xf32>
    %7 = tpu.matmul %4, %0, %cst {dimension_numbers = #tpu.dot_dimension_numbers<[1], [0], [0], [1], [0, 0, 1, 1], [], []>} : vector<6x16xf32>, vector<16x16xf32>, vector<6x16xf32> -> vector<6x16xf32>
    %8 = vector.broadcast %1 : vector<1x16xf32> to vector<6x16xf32>
    %9 = arith.addf %7, %8 : vector<6x16xf32>
    %10 = math.tanh %9 : vector<6x16xf32>
    %cst_11 = arith.constant dense<0.000000e+00> : vector<6x1xf32>
    %11 = tpu.matmul %10, %2, %cst_11 {dimension_numbers = #tpu.dot_dimension_numbers<[1], [0], [0], [1], [0, 0, 1, 1], [], []>} : vector<6x16xf32>, vector<16x1xf32>, vector<6x1xf32> -> vector<6x1xf32>
    %cst_12 = arith.constant 0.000000e+00 : f32
    %12 = vector.broadcast %cst_12 : f32 to vector<6x1xf32>
    %13 = arith.cmpf ogt, %6, %12 : vector<6x1xf32>
    %cst_13 = arith.constant -1.000000e+30 : f32
    %14 = vector.broadcast %cst_13 : f32 to vector<6x1xf32>
    %15 = arith.select %13, %11, %14 : vector<6x1xi1>, vector<6x1xf32>
    %cst_14 = arith.constant dense<0xFF800000> : vector<1xf32>
    %16 = vector.multi_reduction <maximumf>, %15, %cst_14 [0] : vector<6x1xf32> to vector<1xf32>
    %17 = vector.shape_cast %16 : vector<1xf32> to vector<1x1xf32>
    %18 = vector.broadcast %17 : vector<1x1xf32> to vector<6x1xf32>
    %19 = arith.subf %15, %18 : vector<6x1xf32>
    %20 = math.exp %19 : vector<6x1xf32>
    %21 = arith.mulf %20, %6 : vector<6x1xf32>
    %cst_15 = arith.constant dense<0.000000e+00> : vector<1xf32>
    %22 = vector.multi_reduction <add>, %21, %cst_15 [0] : vector<6x1xf32> to vector<1xf32>
    %23 = vector.shape_cast %22 : vector<1xf32> to vector<1x1xf32>
    %cst_16 = arith.constant 9.99999971E-10 : f32
    %24 = vector.broadcast %cst_16 : f32 to vector<1x1xf32>
    %25 = arith.maximumf %23, %24 : vector<1x1xf32>
    %26 = vector.broadcast %25 : vector<1x1xf32> to vector<6x1xf32>
    %27 = arith.divf %21, %26 : vector<6x1xf32>
    %28 = vector.broadcast %27 : vector<6x1xf32> to vector<6x16xf32>
    %29 = arith.mulf %28, %4 : vector<6x16xf32>
    %cst_17 = arith.constant dense<0.000000e+00> : vector<16xf32>
    %30 = vector.multi_reduction <add>, %29, %cst_17 [0] : vector<6x16xf32> to vector<16xf32>
    %31 = vector.shape_cast %30 : vector<16xf32> to vector<1x16xf32>
    %c0_18 = arith.constant 0 : index
    %c0_19 = arith.constant 0 : index
    %32 = vector.load %arg6[%c0_18, %c0_19] : memref<8x16xf32, #tpu.memory_space<vmem>>, vector<1x16xf32>
    tpu.vector_store %arg6[%c0_18, %c0_19], %31 {strides = array<i32>} : memref<8x16xf32, #tpu.memory_space<vmem>>, vector<1x16xf32>,
    %c1 = arith.constant 1 : index
    %c0_20 = arith.constant 0 : index
    %c0_21 = arith.constant 0 : index
    %33 = vector.load %arg1[%c1, %c0_20, %c0_21] : memref<8x6x16xf32, #tpu.memory_space<vmem>>, vector<1x6x16xf32>
    %34 = vector.shape_cast %33 : vector<1x6x16xf32> to vector<6x16xf32>
    %c1_22 = arith.constant 1 : index
    %c0_23 = arith.constant 0 : index
    %c0_24 = arith.constant 0 : index
    %35 = vector.load %arg2[%c1_22, %c0_23, %c0_24] : memref<8x6x1xf32, #tpu.memory_space<vmem>>, vector<1x6x1xf32>
    %36 = vector.shape_cast %35 : vector<1x6x1xf32> to vector<6x1xf32>
    %cst_25 = arith.constant dense<0.000000e+00> : vector<6x16xf32>
    %37 = tpu.matmul %34, %0, %cst_25 {dimension_numbers = #tpu.dot_dimension_numbers<[1], [0], [0], [1], [0, 0, 1, 1], [], []>} : vector<6x16xf32>, vector<16x16xf32>, vector<6x16xf32> -> vector<6x16xf32>
    %38 = vector.broadcast %1 : vector<1x16xf32> to vector<6x16xf32>
    %39 = arith.addf %37, %38 : vector<6x16xf32>
    %40 = math.tanh %39 : vector<6x16xf32>
    %cst_26 = arith.constant dense<0.000000e+00> : vector<6x1xf32>
    %41 = tpu.matmul %40, %2, %cst_26 {dimension_numbers = #tpu.dot_dimension_numbers<[1], [0], [0], [1], [0, 0, 1, 1], [], []>} : vector<6x16xf32>, vector<16x1xf32>, vector<6x1xf32> -> vector<6x1xf32>
    %cst_27 = arith.constant 0.000000e+00 : f32
    %42 = vector.broadcast %cst_27 : f32 to vector<6x1xf32>
    %43 = arith.cmpf ogt, %36, %42 : vector<6x1xf32>
    %cst_28 = arith.constant -1.000000e+30 : f32
    %44 = vector.broadcast %cst_28 : f32 to vector<6x1xf32>
    %45 = arith.select %43, %41, %44 : vector<6x1xi1>, vector<6x1xf32>
    %cst_29 = arith.constant dense<0xFF800000> : vector<1xf32>
    %46 = vector.multi_reduction <maximumf>, %45, %cst_29 [0] : vector<6x1xf32> to vector<1xf32>
    %47 = vector.shape_cast %46 : vector<1xf32> to vector<1x1xf32>
    %48 = vector.broadcast %47 : vector<1x1xf32> to vector<6x1xf32>
    %49 = arith.subf %45, %48 : vector<6x1xf32>
    %50 = math.exp %49 : vector<6x1xf32>
    %51 = arith.mulf %50, %36 : vector<6x1xf32>
    %cst_30 = arith.constant dense<0.000000e+00> : vector<1xf32>
    %52 = vector.multi_reduction <add>, %51, %cst_30 [0] : vector<6x1xf32> to vector<1xf32>
    %53 = vector.shape_cast %52 : vector<1xf32> to vector<1x1xf32>
    %cst_31 = arith.constant 9.99999971E-10 : f32
    %54 = vector.broadcast %cst_31 : f32 to vector<1x1xf32>
    %55 = arith.maximumf %53, %54 : vector<1x1xf32>
    %56 = vector.broadcast %55 : vector<1x1xf32> to vector<6x1xf32>
    %57 = arith.divf %51, %56 : vector<6x1xf32>
    %58 = vector.broadcast %57 : vector<6x1xf32> to vector<6x16xf32>
    %59 = arith.mulf %58, %34 : vector<6x16xf32>
    %cst_32 = arith.constant dense<0.000000e+00> : vector<16xf32>
    %60 = vector.multi_reduction <add>, %59, %cst_32 [0] : vector<6x16xf32> to vector<16xf32>
    %61 = vector.shape_cast %60 : vector<16xf32> to vector<1x16xf32>
    %c1_33 = arith.constant 1 : index
    %c0_34 = arith.constant 0 : index
    %62 = vector.load %arg6[%c1_33, %c0_34] : memref<8x16xf32, #tpu.memory_space<vmem>>, vector<1x16xf32>
    tpu.vector_store %arg6[%c1_33, %c0_34], %61 {strides = array<i32>} : memref<8x16xf32, #tpu.memory_space<vmem>>, vector<1x16xf32>,
    %c2 = arith.constant 2 : index
    %c0_35 = arith.constant 0 : index
    %c0_36 = arith.constant 0 : index
    %63 = vector.load %arg1[%c2, %c0_35, %c0_36] : memref<8x6x16xf32, #tpu.memory_space<vmem>>, vector<1x6x16xf32>
    %64 = vector.shape_cast %63 : vector<1x6x16xf32> to vector<6x16xf32>
    %c2_37 = arith.constant 2 : index
    %c0_38 = arith.constant 0 : index
    %c0_39 = arith.constant 0 : index
    %65 = vector.load %arg2[%c2_37, %c0_38, %c0_39] : memref<8x6x1xf32, #tpu.memory_space<vmem>>, vector<1x6x1xf32>
    %66 = vector.shape_cast %65 : vector<1x6x1xf32> to vector<6x1xf32>
    %cst_40 = arith.constant dense<0.000000e+00> : vector<6x16xf32>
    %67 = tpu.matmul %64, %0, %cst_40 {dimension_numbers = #tpu.dot_dimension_numbers<[1], [0], [0], [1], [0, 0, 1, 1], [], []>} : vector<6x16xf32>, vector<16x16xf32>, vector<6x16xf32> -> vector<6x16xf32>
    %68 = vector.broadcast %1 : vector<1x16xf32> to vector<6x16xf32>
    %69 = arith.addf %67, %68 : vector<6x16xf32>
    %70 = math.tanh %69 : vector<6x16xf32>
    %cst_41 = arith.constant dense<0.000000e+00> : vector<6x1xf32>
    %71 = tpu.matmul %70, %2, %cst_41 {dimension_numbers = #tpu.dot_dimension_numbers<[1], [0], [0], [1], [0, 0, 1, 1], [], []>} : vector<6x16xf32>, vector<16x1xf32>, vector<6x1xf32> -> vector<6x1xf32>
    %cst_42 = arith.constant 0.000000e+00 : f32
    %72 = vector.broadcast %cst_42 : f32 to vector<6x1xf32>
    %73 = arith.cmpf ogt, %66, %72 : vector<6x1xf32>
    %cst_43 = arith.constant -1.000000e+30 : f32
    %74 = vector.broadcast %cst_43 : f32 to vector<6x1xf32>
    %75 = arith.select %73, %71, %74 : vector<6x1xi1>, vector<6x1xf32>
    %cst_44 = arith.constant dense<0xFF800000> : vector<1xf32>
    %76 = vector.multi_reduction <maximumf>, %75, %cst_44 [0] : vector<6x1xf32> to vector<1xf32>
    %77 = vector.shape_cast %76 : vector<1xf32> to vector<1x1xf32>
    %78 = vector.broadcast %77 : vector<1x1xf32> to vector<6x1xf32>
    %79 = arith.subf %75, %78 : vector<6x1xf32>
    %80 = math.exp %79 : vector<6x1xf32>
    %81 = arith.mulf %80, %66 : vector<6x1xf32>
    %cst_45 = arith.constant dense<0.000000e+00> : vector<1xf32>
    %82 = vector.multi_reduction <add>, %81, %cst_45 [0] : vector<6x1xf32> to vector<1xf32>
    %83 = vector.shape_cast %82 : vector<1xf32> to vector<1x1xf32>
    %cst_46 = arith.constant 9.99999971E-10 : f32
    %84 = vector.broadcast %cst_46 : f32 to vector<1x1xf32>
    %85 = arith.maximumf %83, %84 : vector<1x1xf32>
    %86 = vector.broadcast %85 : vector<1x1xf32> to vector<6x1xf32>
    %87 = arith.divf %81, %86 : vector<6x1xf32>
    %88 = vector.broadcast %87 : vector<6x1xf32> to vector<6x16xf32>
    %89 = arith.mulf %88, %64 : vector<6x16xf32>
    %cst_47 = arith.constant dense<0.000000e+00> : vector<16xf32>
    %90 = vector.multi_reduction <add>, %89, %cst_47 [0] : vector<6x16xf32> to vector<16xf32>
    %91 = vector.shape_cast %90 : vector<16xf32> to vector<1x16xf32>
    %c2_48 = arith.constant 2 : index
    %c0_49 = arith.constant 0 : index
    %92 = vector.load %arg6[%c2_48, %c0_49] : memref<8x16xf32, #tpu.memory_space<vmem>>, vector<1x16xf32>
    tpu.vector_store %arg6[%c2_48, %c0_49], %91 {strides = array<i32>} : memref<8x16xf32, #tpu.memory_space<vmem>>, vector<1x16xf32>,
    %c3 = arith.constant 3 : index
    %c0_50 = arith.constant 0 : index
    %c0_51 = arith.constant 0 : index
    %93 = vector.load %arg1[%c3, %c0_50, %c0_51] : memref<8x6x16xf32, #tpu.memory_space<vmem>>, vector<1x6x16xf32>
    %94 = vector.shape_cast %93 : vector<1x6x16xf32> to vector<6x16xf32>
    %c3_52 = arith.constant 3 : index
    %c0_53 = arith.constant 0 : index
    %c0_54 = arith.constant 0 : index
    %95 = vector.load %arg2[%c3_52, %c0_53, %c0_54] : memref<8x6x1xf32, #tpu.memory_space<vmem>>, vector<1x6x1xf32>
    %96 = vector.shape_cast %95 : vector<1x6x1xf32> to vector<6x1xf32>
    %cst_55 = arith.constant dense<0.000000e+00> : vector<6x16xf32>
    %97 = tpu.matmul %94, %0, %cst_55 {dimension_numbers = #tpu.dot_dimension_numbers<[1], [0], [0], [1], [0, 0, 1, 1], [], []>} : vector<6x16xf32>, vector<16x16xf32>, vector<6x16xf32> -> vector<6x16xf32>
    %98 = vector.broadcast %1 : vector<1x16xf32> to vector<6x16xf32>
    %99 = arith.addf %97, %98 : vector<6x16xf32>
    %100 = math.tanh %99 : vector<6x16xf32>
    %cst_56 = arith.constant dense<0.000000e+00> : vector<6x1xf32>
    %101 = tpu.matmul %100, %2, %cst_56 {dimension_numbers = #tpu.dot_dimension_numbers<[1], [0], [0], [1], [0, 0, 1, 1], [], []>} : vector<6x16xf32>, vector<16x1xf32>, vector<6x1xf32> -> vector<6x1xf32>
    %cst_57 = arith.constant 0.000000e+00 : f32
    %102 = vector.broadcast %cst_57 : f32 to vector<6x1xf32>
    %103 = arith.cmpf ogt, %96, %102 : vector<6x1xf32>
    %cst_58 = arith.constant -1.000000e+30 : f32
    %104 = vector.broadcast %cst_58 : f32 to vector<6x1xf32>
    %105 = arith.select %103, %101, %104 : vector<6x1xi1>, vector<6x1xf32>
    %cst_59 = arith.constant dense<0xFF800000> : vector<1xf32>
    %106 = vector.multi_reduction <maximumf>, %105, %cst_59 [0] : vector<6x1xf32> to vector<1xf32>
    %107 = vector.shape_cast %106 : vector<1xf32> to vector<1x1xf32>
    %108 = vector.broadcast %107 : vector<1x1xf32> to vector<6x1xf32>
    %109 = arith.subf %105, %108 : vector<6x1xf32>
    %110 = math.exp %109 : vector<6x1xf32>
    %111 = arith.mulf %110, %96 : vector<6x1xf32>
    %cst_60 = arith.constant dense<0.000000e+00> : vector<1xf32>
    %112 = vector.multi_reduction <add>, %111, %cst_60 [0] : vector<6x1xf32> to vector<1xf32>
    %113 = vector.shape_cast %112 : vector<1xf32> to vector<1x1xf32>
    %cst_61 = arith.constant 9.99999971E-10 : f32
    %114 = vector.broadcast %cst_61 : f32 to vector<1x1xf32>
    %115 = arith.maximumf %113, %114 : vector<1x1xf32>
    %116 = vector.broadcast %115 : vector<1x1xf32> to vector<6x1xf32>
    %117 = arith.divf %111, %116 : vector<6x1xf32>
    %118 = vector.broadcast %117 : vector<6x1xf32> to vector<6x16xf32>
    %119 = arith.mulf %118, %94 : vector<6x16xf32>
    %cst_62 = arith.constant dense<0.000000e+00> : vector<16xf32>
    %120 = vector.multi_reduction <add>, %119, %cst_62 [0] : vector<6x16xf32> to vector<16xf32>
    %121 = vector.shape_cast %120 : vector<16xf32> to vector<1x16xf32>
    %c3_63 = arith.constant 3 : index
    %c0_64 = arith.constant 0 : index
    %122 = vector.load %arg6[%c3_63, %c0_64] : memref<8x16xf32, #tpu.memory_space<vmem>>, vector<1x16xf32>
    tpu.vector_store %arg6[%c3_63, %c0_64], %121 {strides = array<i32>} : memref<8x16xf32, #tpu.memory_space<vmem>>, vector<1x16xf32>,
    %c4 = arith.constant 4 : index
    %c0_65 = arith.constant 0 : index
    %c0_66 = arith.constant 0 : index
    %123 = vector.load %arg1[%c4, %c0_65, %c0_66] : memref<8x6x16xf32, #tpu.memory_space<vmem>>, vector<1x6x16xf32>
    %124 = vector.shape_cast %123 : vector<1x6x16xf32> to vector<6x16xf32>
    %c4_67 = arith.constant 4 : index
    %c0_68 = arith.constant 0 : index
    %c0_69 = arith.constant 0 : index
    %125 = vector.load %arg2[%c4_67, %c0_68, %c0_69] : memref<8x6x1xf32, #tpu.memory_space<vmem>>, vector<1x6x1xf32>
    %126 = vector.shape_cast %125 : vector<1x6x1xf32> to vector<6x1xf32>
    %cst_70 = arith.constant dense<0.000000e+00> : vector<6x16xf32>
    %127 = tpu.matmul %124, %0, %cst_70 {dimension_numbers = #tpu.dot_dimension_numbers<[1], [0], [0], [1], [0, 0, 1, 1], [], []>} : vector<6x16xf32>, vector<16x16xf32>, vector<6x16xf32> -> vector<6x16xf32>
    %128 = vector.broadcast %1 : vector<1x16xf32> to vector<6x16xf32>
    %129 = arith.addf %127, %128 : vector<6x16xf32>
    %130 = math.tanh %129 : vector<6x16xf32>
    %cst_71 = arith.constant dense<0.000000e+00> : vector<6x1xf32>
    %131 = tpu.matmul %130, %2, %cst_71 {dimension_numbers = #tpu.dot_dimension_numbers<[1], [0], [0], [1], [0, 0, 1, 1], [], []>} : vector<6x16xf32>, vector<16x1xf32>, vector<6x1xf32> -> vector<6x1xf32>
    %cst_72 = arith.constant 0.000000e+00 : f32
    %132 = vector.broadcast %cst_72 : f32 to vector<6x1xf32>
    %133 = arith.cmpf ogt, %126, %132 : vector<6x1xf32>
    %cst_73 = arith.constant -1.000000e+30 : f32
    %134 = vector.broadcast %cst_73 : f32 to vector<6x1xf32>
    %135 = arith.select %133, %131, %134 : vector<6x1xi1>, vector<6x1xf32>
    %cst_74 = arith.constant dense<0xFF800000> : vector<1xf32>
    %136 = vector.multi_reduction <maximumf>, %135, %cst_74 [0] : vector<6x1xf32> to vector<1xf32>
    %137 = vector.shape_cast %136 : vector<1xf32> to vector<1x1xf32>
    %138 = vector.broadcast %137 : vector<1x1xf32> to vector<6x1xf32>
    %139 = arith.subf %135, %138 : vector<6x1xf32>
    %140 = math.exp %139 : vector<6x1xf32>
    %141 = arith.mulf %140, %126 : vector<6x1xf32>
    %cst_75 = arith.constant dense<0.000000e+00> : vector<1xf32>
    %142 = vector.multi_reduction <add>, %141, %cst_75 [0] : vector<6x1xf32> to vector<1xf32>
    %143 = vector.shape_cast %142 : vector<1xf32> to vector<1x1xf32>
    %cst_76 = arith.constant 9.99999971E-10 : f32
    %144 = vector.broadcast %cst_76 : f32 to vector<1x1xf32>
    %145 = arith.maximumf %143, %144 : vector<1x1xf32>
    %146 = vector.broadcast %145 : vector<1x1xf32> to vector<6x1xf32>
    %147 = arith.divf %141, %146 : vector<6x1xf32>
    %148 = vector.broadcast %147 : vector<6x1xf32> to vector<6x16xf32>
    %149 = arith.mulf %148, %124 : vector<6x16xf32>
    %cst_77 = arith.constant dense<0.000000e+00> : vector<16xf32>
    %150 = vector.multi_reduction <add>, %149, %cst_77 [0] : vector<6x16xf32> to vector<16xf32>
    %151 = vector.shape_cast %150 : vector<16xf32> to vector<1x16xf32>
    %c4_78 = arith.constant 4 : index
    %c0_79 = arith.constant 0 : index
    %152 = vector.load %arg6[%c4_78, %c0_79] : memref<8x16xf32, #tpu.memory_space<vmem>>, vector<1x16xf32>
    tpu.vector_store %arg6[%c4_78, %c0_79], %151 {strides = array<i32>} : memref<8x16xf32, #tpu.memory_space<vmem>>, vector<1x16xf32>,
    %c5 = arith.constant 5 : index
    %c0_80 = arith.constant 0 : index
    %c0_81 = arith.constant 0 : index
    %153 = vector.load %arg1[%c5, %c0_80, %c0_81] : memref<8x6x16xf32, #tpu.memory_space<vmem>>, vector<1x6x16xf32>
    %154 = vector.shape_cast %153 : vector<1x6x16xf32> to vector<6x16xf32>
    %c5_82 = arith.constant 5 : index
    %c0_83 = arith.constant 0 : index
    %c0_84 = arith.constant 0 : index
    %155 = vector.load %arg2[%c5_82, %c0_83, %c0_84] : memref<8x6x1xf32, #tpu.memory_space<vmem>>, vector<1x6x1xf32>
    %156 = vector.shape_cast %155 : vector<1x6x1xf32> to vector<6x1xf32>
    %cst_85 = arith.constant dense<0.000000e+00> : vector<6x16xf32>
    %157 = tpu.matmul %154, %0, %cst_85 {dimension_numbers = #tpu.dot_dimension_numbers<[1], [0], [0], [1], [0, 0, 1, 1], [], []>} : vector<6x16xf32>, vector<16x16xf32>, vector<6x16xf32> -> vector<6x16xf32>
    %158 = vector.broadcast %1 : vector<1x16xf32> to vector<6x16xf32>
    %159 = arith.addf %157, %158 : vector<6x16xf32>
    %160 = math.tanh %159 : vector<6x16xf32>
    %cst_86 = arith.constant dense<0.000000e+00> : vector<6x1xf32>
    %161 = tpu.matmul %160, %2, %cst_86 {dimension_numbers = #tpu.dot_dimension_numbers<[1], [0], [0], [1], [0, 0, 1, 1], [], []>} : vector<6x16xf32>, vector<16x1xf32>, vector<6x1xf32> -> vector<6x1xf32>
    %cst_87 = arith.constant 0.000000e+00 : f32
    %162 = vector.broadcast %cst_87 : f32 to vector<6x1xf32>
    %163 = arith.cmpf ogt, %156, %162 : vector<6x1xf32>
    %cst_88 = arith.constant -1.000000e+30 : f32
    %164 = vector.broadcast %cst_88 : f32 to vector<6x1xf32>
    %165 = arith.select %163, %161, %164 : vector<6x1xi1>, vector<6x1xf32>
    %cst_89 = arith.constant dense<0xFF800000> : vector<1xf32>
    %166 = vector.multi_reduction <maximumf>, %165, %cst_89 [0] : vector<6x1xf32> to vector<1xf32>
    %167 = vector.shape_cast %166 : vector<1xf32> to vector<1x1xf32>
    %168 = vector.broadcast %167 : vector<1x1xf32> to vector<6x1xf32>
    %169 = arith.subf %165, %168 : vector<6x1xf32>
    %170 = math.exp %169 : vector<6x1xf32>
    %171 = arith.mulf %170, %156 : vector<6x1xf32>
    %cst_90 = arith.constant dense<0.000000e+00> : vector<1xf32>
    %172 = vector.multi_reduction <add>, %171, %cst_90 [0] : vector<6x1xf32> to vector<1xf32>
    %173 = vector.shape_cast %172 : vector<1xf32> to vector<1x1xf32>
    %cst_91 = arith.constant 9.99999971E-10 : f32
    %174 = vector.broadcast %cst_91 : f32 to vector<1x1xf32>
    %175 = arith.maximumf %173, %174 : vector<1x1xf32>
    %176 = vector.broadcast %175 : vector<1x1xf32> to vector<6x1xf32>
    %177 = arith.divf %171, %176 : vector<6x1xf32>
    %178 = vector.broadcast %177 : vector<6x1xf32> to vector<6x16xf32>
    %179 = arith.mulf %178, %154 : vector<6x16xf32>
    %cst_92 = arith.constant dense<0.000000e+00> : vector<16xf32>
    %180 = vector.multi_reduction <add>, %179, %cst_92 [0] : vector<6x16xf32> to vector<16xf32>
    %181 = vector.shape_cast %180 : vector<16xf32> to vector<1x16xf32>
    %c5_93 = arith.constant 5 : index
    %c0_94 = arith.constant 0 : index
    %182 = vector.load %arg6[%c5_93, %c0_94] : memref<8x16xf32, #tpu.memory_space<vmem>>, vector<1x16xf32>
    tpu.vector_store %arg6[%c5_93, %c0_94], %181 {strides = array<i32>} : memref<8x16xf32, #tpu.memory_space<vmem>>, vector<1x16xf32>,
    %c6 = arith.constant 6 : index
    %c0_95 = arith.constant 0 : index
    %c0_96 = arith.constant 0 : index
    %183 = vector.load %arg1[%c6, %c0_95, %c0_96] : memref<8x6x16xf32, #tpu.memory_space<vmem>>, vector<1x6x16xf32>
    %184 = vector.shape_cast %183 : vector<1x6x16xf32> to vector<6x16xf32>
    %c6_97 = arith.constant 6 : index
    %c0_98 = arith.constant 0 : index
    %c0_99 = arith.constant 0 : index
    %185 = vector.load %arg2[%c6_97, %c0_98, %c0_99] : memref<8x6x1xf32, #tpu.memory_space<vmem>>, vector<1x6x1xf32>
    %186 = vector.shape_cast %185 : vector<1x6x1xf32> to vector<6x1xf32>
    %cst_100 = arith.constant dense<0.000000e+00> : vector<6x16xf32>
    %187 = tpu.matmul %184, %0, %cst_100 {dimension_numbers = #tpu.dot_dimension_numbers<[1], [0], [0], [1], [0, 0, 1, 1], [], []>} : vector<6x16xf32>, vector<16x16xf32>, vector<6x16xf32> -> vector<6x16xf32>
    %188 = vector.broadcast %1 : vector<1x16xf32> to vector<6x16xf32>
    %189 = arith.addf %187, %188 : vector<6x16xf32>
    %190 = math.tanh %189 : vector<6x16xf32>
    %cst_101 = arith.constant dense<0.000000e+00> : vector<6x1xf32>
    %191 = tpu.matmul %190, %2, %cst_101 {dimension_numbers = #tpu.dot_dimension_numbers<[1], [0], [0], [1], [0, 0, 1, 1], [], []>} : vector<6x16xf32>, vector<16x1xf32>, vector<6x1xf32> -> vector<6x1xf32>
    %cst_102 = arith.constant 0.000000e+00 : f32
    %192 = vector.broadcast %cst_102 : f32 to vector<6x1xf32>
    %193 = arith.cmpf ogt, %186, %192 : vector<6x1xf32>
    %cst_103 = arith.constant -1.000000e+30 : f32
    %194 = vector.broadcast %cst_103 : f32 to vector<6x1xf32>
    %195 = arith.select %193, %191, %194 : vector<6x1xi1>, vector<6x1xf32>
    %cst_104 = arith.constant dense<0xFF800000> : vector<1xf32>
    %196 = vector.multi_reduction <maximumf>, %195, %cst_104 [0] : vector<6x1xf32> to vector<1xf32>
    %197 = vector.shape_cast %196 : vector<1xf32> to vector<1x1xf32>
    %198 = vector.broadcast %197 : vector<1x1xf32> to vector<6x1xf32>
    %199 = arith.subf %195, %198 : vector<6x1xf32>
    %200 = math.exp %199 : vector<6x1xf32>
    %201 = arith.mulf %200, %186 : vector<6x1xf32>
    %cst_105 = arith.constant dense<0.000000e+00> : vector<1xf32>
    %202 = vector.multi_reduction <add>, %201, %cst_105 [0] : vector<6x1xf32> to vector<1xf32>
    %203 = vector.shape_cast %202 : vector<1xf32> to vector<1x1xf32>
    %cst_106 = arith.constant 9.99999971E-10 : f32
    %204 = vector.broadcast %cst_106 : f32 to vector<1x1xf32>
    %205 = arith.maximumf %203, %204 : vector<1x1xf32>
    %206 = vector.broadcast %205 : vector<1x1xf32> to vector<6x1xf32>
    %207 = arith.divf %201, %206 : vector<6x1xf32>
    %208 = vector.broadcast %207 : vector<6x1xf32> to vector<6x16xf32>
    %209 = arith.mulf %208, %184 : vector<6x16xf32>
    %cst_107 = arith.constant dense<0.000000e+00> : vector<16xf32>
    %210 = vector.multi_reduction <add>, %209, %cst_107 [0] : vector<6x16xf32> to vector<16xf32>
    %211 = vector.shape_cast %210 : vector<16xf32> to vector<1x16xf32>
    %c6_108 = arith.constant 6 : index
    %c0_109 = arith.constant 0 : index
    %212 = vector.load %arg6[%c6_108, %c0_109] : memref<8x16xf32, #tpu.memory_space<vmem>>, vector<1x16xf32>
    tpu.vector_store %arg6[%c6_108, %c0_109], %211 {strides = array<i32>} : memref<8x16xf32, #tpu.memory_space<vmem>>, vector<1x16xf32>,
    %c7 = arith.constant 7 : index
    %c0_110 = arith.constant 0 : index
    %c0_111 = arith.constant 0 : index
    %213 = vector.load %arg1[%c7, %c0_110, %c0_111] : memref<8x6x16xf32, #tpu.memory_space<vmem>>, vector<1x6x16xf32>
    %214 = vector.shape_cast %213 : vector<1x6x16xf32> to vector<6x16xf32>
    %c7_112 = arith.constant 7 : index
    %c0_113 = arith.constant 0 : index
    %c0_114 = arith.constant 0 : index
    %215 = vector.load %arg2[%c7_112, %c0_113, %c0_114] : memref<8x6x1xf32, #tpu.memory_space<vmem>>, vector<1x6x1xf32>
    %216 = vector.shape_cast %215 : vector<1x6x1xf32> to vector<6x1xf32>
    %cst_115 = arith.constant dense<0.000000e+00> : vector<6x16xf32>
    %217 = tpu.matmul %214, %0, %cst_115 {dimension_numbers = #tpu.dot_dimension_numbers<[1], [0], [0], [1], [0, 0, 1, 1], [], []>} : vector<6x16xf32>, vector<16x16xf32>, vector<6x16xf32> -> vector<6x16xf32>
    %218 = vector.broadcast %1 : vector<1x16xf32> to vector<6x16xf32>
    %219 = arith.addf %217, %218 : vector<6x16xf32>
    %220 = math.tanh %219 : vector<6x16xf32>
    %cst_116 = arith.constant dense<0.000000e+00> : vector<6x1xf32>
    %221 = tpu.matmul %220, %2, %cst_116 {dimension_numbers = #tpu.dot_dimension_numbers<[1], [0], [0], [1], [0, 0, 1, 1], [], []>} : vector<6x16xf32>, vector<16x1xf32>, vector<6x1xf32> -> vector<6x1xf32>
    %cst_117 = arith.constant 0.000000e+00 : f32
    %222 = vector.broadcast %cst_117 : f32 to vector<6x1xf32>
    %223 = arith.cmpf ogt, %216, %222 : vector<6x1xf32>
    %cst_118 = arith.constant -1.000000e+30 : f32
    %224 = vector.broadcast %cst_118 : f32 to vector<6x1xf32>
    %225 = arith.select %223, %221, %224 : vector<6x1xi1>, vector<6x1xf32>
    %cst_119 = arith.constant dense<0xFF800000> : vector<1xf32>
    %226 = vector.multi_reduction <maximumf>, %225, %cst_119 [0] : vector<6x1xf32> to vector<1xf32>
    %227 = vector.shape_cast %226 : vector<1xf32> to vector<1x1xf32>
    %228 = vector.broadcast %227 : vector<1x1xf32> to vector<6x1xf32>
    %229 = arith.subf %225, %228 : vector<6x1xf32>
    %230 = math.exp %229 : vector<6x1xf32>
    %231 = arith.mulf %230, %216 : vector<6x1xf32>
    %cst_120 = arith.constant dense<0.000000e+00> : vector<1xf32>
    %232 = vector.multi_reduction <add>, %231, %cst_120 [0] : vector<6x1xf32> to vector<1xf32>
    %233 = vector.shape_cast %232 : vector<1xf32> to vector<1x1xf32>
    %cst_121 = arith.constant 9.99999971E-10 : f32
    %234 = vector.broadcast %cst_121 : f32 to vector<1x1xf32>
    %235 = arith.maximumf %233, %234 : vector<1x1xf32>
    %236 = vector.broadcast %235 : vector<1x1xf32> to vector<6x1xf32>
    %237 = arith.divf %231, %236 : vector<6x1xf32>
    %238 = vector.broadcast %237 : vector<6x1xf32> to vector<6x16xf32>
    %239 = arith.mulf %238, %214 : vector<6x16xf32>
    %cst_122 = arith.constant dense<0.000000e+00> : vector<16xf32>
    %240 = vector.multi_reduction <add>, %239, %cst_122 [0] : vector<6x16xf32> to vector<16xf32>
    %241 = vector.shape_cast %240 : vector<16xf32> to vector<1x16xf32>
    %c7_123 = arith.constant 7 : index
    %c0_124 = arith.constant 0 : index
    %242 = vector.load %arg6[%c7_123, %c0_124] : memref<8x16xf32, #tpu.memory_space<vmem>>, vector<1x16xf32>
    tpu.vector_store %arg6[%c7_123, %c0_124], %241 {strides = array<i32>} : memref<8x16xf32, #tpu.memory_space<vmem>>, vector<1x16xf32>,
    return
  }
  func.func @transform_0(%arg0: i32) -> (i32, i32, i32) {
    %c0_i32 = arith.constant 0 : i32
    %c0_i32_0 = arith.constant 0 : i32
    %c0_i32_1 = arith.constant 0 : i32
    %c0_i32_2 = arith.constant 0 : i32
    return %c0_i32, %c0_i32_0, %c0_i32_1 : i32, i32, i32
  }
  func.func @transform_1(%arg0: i32) -> (i32, i32, i32) {
    %c0_i32 = arith.constant 0 : i32
    %c0_i32_0 = arith.constant 0 : i32
    %c0_i32_1 = arith.constant 0 : i32
    %c0_i32_2 = arith.constant 0 : i32
    return %c0_i32, %c0_i32_0, %c0_i32_1 : i32, i32, i32
  }
  func.func @transform_2(%arg0: i32) -> (i32, i32) {
    %c0_i32 = arith.constant 0 : i32
    %c0_i32_0 = arith.constant 0 : i32
    %c0_i32_1 = arith.constant 0 : i32
    return %c0_i32, %c0_i32_0 : i32, i32
  }
  func.func @transform_3(%arg0: i32) -> (i32, i32) {
    %c0_i32 = arith.constant 0 : i32
    %c0_i32_0 = arith.constant 0 : i32
    %c0_i32_1 = arith.constant 0 : i32
    return %c0_i32, %c0_i32_0 : i32, i32
  }
  func.func @transform_4(%arg0: i32) -> (i32, i32) {
    %c0_i32 = arith.constant 0 : i32
    %c0_i32_0 = arith.constant 0 : i32
    %c0_i32_1 = arith.constant 0 : i32
    return %c0_i32, %c0_i32_0 : i32, i32
  }
  func.func @transform_5(%arg0: i32) -> (i32, i32) {
    %c0_i32 = arith.constant 0 : i32
    %c0_i32_0 = arith.constant 0 : i32
    %c0_i32_1 = arith.constant 0 : i32
    return %c0_i32, %c0_i32_0 : i32, i32
  }
}

module attributes {stable_mosaic.version = 11 : i64} {
  func.func @_bilstm_kernel(%arg0: i32, %arg1: i32, %arg2: memref<1x1x16xf32, #tpu.memory_space<vmem>>, %arg3: memref<1x16x64xf32, #tpu.memory_space<vmem>>, %arg4: memref<1x16x64xf32, #tpu.memory_space<vmem>>, %arg5: memref<1x1x64xf32, #tpu.memory_space<vmem>>, %arg6: memref<1x1x1x16xf32, #tpu.memory_space<vmem>>, %arg7: memref<1x16xf32, #tpu.memory_space<vmem>>, %arg8: memref<1x16xf32, #tpu.memory_space<vmem>>) attributes {dimension_semantics = [#tpu.dimension_semantics<parallel>, #tpu.dimension_semantics<arbitrary>], iteration_bounds = array<i64: 2, 8>, scalar_prefetch = 0 : i64, scratch_operands = 2 : i64, tpu.core_type = #tpu.core_type<tc>, window_params = [{transform_indices = @transform_0, window_bounds = array<i64: 1, 1, 16>}, {transform_indices = @transform_1, window_bounds = array<i64: 1, 16, 64>}, {transform_indices = @transform_2, window_bounds = array<i64: 1, 16, 64>}, {transform_indices = @transform_3, window_bounds = array<i64: 1, 1, 64>}, {transform_indices = @transform_4, window_bounds = array<i64: 1, 1, 1, 16>}]} {
    %c0_i32 = arith.constant 0 : i32
    %0 = arith.cmpi eq, %arg1, %c0_i32 : i32
    %1 = arith.extui %0 : i1 to i32
    %c0_i32_0 = arith.constant 0 : i32
    %2 = arith.cmpi ne, %1, %c0_i32_0 : i32
    scf.if %2 {
      %cst_28 = arith.constant 0.000000e+00 : f32
      %46 = vector.broadcast %cst_28 : f32 to vector<1x16xf32>
      %c0_29 = arith.constant 0 : index
      %c0_30 = arith.constant 0 : index
      %47 = vector.load %arg7[%c0_29, %c0_30] : memref<1x16xf32, #tpu.memory_space<vmem>>, vector<1x16xf32>
      tpu.vector_store %arg7[%c0_29, %c0_30], %46 {strides = array<i32>} : memref<1x16xf32, #tpu.memory_space<vmem>>, vector<1x16xf32>,
      %cst_31 = arith.constant 0.000000e+00 : f32
      %48 = vector.broadcast %cst_31 : f32 to vector<1x16xf32>
      %c0_32 = arith.constant 0 : index
      %c0_33 = arith.constant 0 : index
      %49 = vector.load %arg8[%c0_32, %c0_33] : memref<1x16xf32, #tpu.memory_space<vmem>>, vector<1x16xf32>
      tpu.vector_store %arg8[%c0_32, %c0_33], %48 {strides = array<i32>} : memref<1x16xf32, #tpu.memory_space<vmem>>, vector<1x16xf32>,
    } else {
    }
    %c0 = arith.constant 0 : index
    %c0_1 = arith.constant 0 : index
    %c0_2 = arith.constant 0 : index
    %3 = vector.load %arg2[%c0, %c0_1, %c0_2] : memref<1x1x16xf32, #tpu.memory_space<vmem>>, vector<1x1x16xf32>
    %4 = vector.shape_cast %3 : vector<1x1x16xf32> to vector<1x16xf32>
    %c0_3 = arith.constant 0 : index
    %c0_4 = arith.constant 0 : index
    %5 = vector.load %arg7[%c0_3, %c0_4] : memref<1x16xf32, #tpu.memory_space<vmem>>, vector<1x16xf32>
    %c0_5 = arith.constant 0 : index
    %c0_6 = arith.constant 0 : index
    %6 = vector.load %arg8[%c0_5, %c0_6] : memref<1x16xf32, #tpu.memory_space<vmem>>, vector<1x16xf32>
    %c0_7 = arith.constant 0 : index
    %c0_8 = arith.constant 0 : index
    %c0_9 = arith.constant 0 : index
    %7 = vector.load %arg3[%c0_7, %c0_8, %c0_9] : memref<1x16x64xf32, #tpu.memory_space<vmem>>, vector<1x16x64xf32>
    %8 = vector.shape_cast %7 : vector<1x16x64xf32> to vector<16x64xf32>
    %cst = arith.constant dense<0.000000e+00> : vector<1x64xf32>
    %9 = tpu.matmul %4, %8, %cst {dimension_numbers = #tpu.dot_dimension_numbers<[1], [0], [0], [1], [0, 0, 1, 1], [], []>} : vector<1x16xf32>, vector<16x64xf32>, vector<1x64xf32> -> vector<1x64xf32>
    %c0_10 = arith.constant 0 : index
    %c0_11 = arith.constant 0 : index
    %c0_12 = arith.constant 0 : index
    %10 = vector.load %arg4[%c0_10, %c0_11, %c0_12] : memref<1x16x64xf32, #tpu.memory_space<vmem>>, vector<1x16x64xf32>
    %11 = vector.shape_cast %10 : vector<1x16x64xf32> to vector<16x64xf32>
    %cst_13 = arith.constant dense<0.000000e+00> : vector<1x64xf32>
    %12 = tpu.matmul %5, %11, %cst_13 {dimension_numbers = #tpu.dot_dimension_numbers<[1], [0], [0], [1], [0, 0, 1, 1], [], []>} : vector<1x16xf32>, vector<16x64xf32>, vector<1x64xf32> -> vector<1x64xf32>
    %13 = arith.addf %9, %12 : vector<1x64xf32>
    %c0_14 = arith.constant 0 : index
    %c0_15 = arith.constant 0 : index
    %c0_16 = arith.constant 0 : index
    %14 = vector.load %arg5[%c0_14, %c0_15, %c0_16] : memref<1x1x64xf32, #tpu.memory_space<vmem>>, vector<1x1x64xf32>
    %15 = vector.shape_cast %14 : vector<1x1x64xf32> to vector<1x64xf32>
    %16 = arith.addf %13, %15 : vector<1x64xf32>
    %17 = vector.extract_strided_slice %16 {offsets = [0, 0], sizes = [1, 16], strides = [1, 1]} : vector<1x64xf32> to vector<1x16xf32>
    %18 = arith.negf %17 : vector<1x16xf32>
    %19 = math.exp %18 : vector<1x16xf32>
    %cst_17 = arith.constant 1.000000e+00 : f32
    %20 = vector.broadcast %cst_17 : f32 to vector<1x16xf32>
    %21 = arith.addf %20, %19 : vector<1x16xf32>
    %22 = arith.divf %20, %21 : vector<1x16xf32>
    %23 = vector.extract_strided_slice %16 {offsets = [0, 16], sizes = [1, 16], strides = [1, 1]} : vector<1x64xf32> to vector<1x16xf32>
    %24 = arith.negf %23 : vector<1x16xf32>
    %25 = math.exp %24 : vector<1x16xf32>
    %cst_18 = arith.constant 1.000000e+00 : f32
    %26 = vector.broadcast %cst_18 : f32 to vector<1x16xf32>
    %27 = arith.addf %26, %25 : vector<1x16xf32>
    %28 = arith.divf %26, %27 : vector<1x16xf32>
    %29 = vector.extract_strided_slice %16 {offsets = [0, 32], sizes = [1, 16], strides = [1, 1]} : vector<1x64xf32> to vector<1x16xf32>
    %30 = math.tanh %29 : vector<1x16xf32>
    %31 = vector.extract_strided_slice %16 {offsets = [0, 48], sizes = [1, 16], strides = [1, 1]} : vector<1x64xf32> to vector<1x16xf32>
    %32 = arith.negf %31 : vector<1x16xf32>
    %33 = math.exp %32 : vector<1x16xf32>
    %cst_19 = arith.constant 1.000000e+00 : f32
    %34 = vector.broadcast %cst_19 : f32 to vector<1x16xf32>
    %35 = arith.addf %34, %33 : vector<1x16xf32>
    %36 = arith.divf %34, %35 : vector<1x16xf32>
    %37 = arith.mulf %28, %6 : vector<1x16xf32>
    %38 = arith.mulf %22, %30 : vector<1x16xf32>
    %39 = arith.addf %37, %38 : vector<1x16xf32>
    %40 = math.tanh %39 : vector<1x16xf32>
    %41 = arith.mulf %36, %40 : vector<1x16xf32>
    %c0_20 = arith.constant 0 : index
    %c0_21 = arith.constant 0 : index
    %42 = vector.load %arg7[%c0_20, %c0_21] : memref<1x16xf32, #tpu.memory_space<vmem>>, vector<1x16xf32>
    tpu.vector_store %arg7[%c0_20, %c0_21], %41 {strides = array<i32>} : memref<1x16xf32, #tpu.memory_space<vmem>>, vector<1x16xf32>,
    %c0_22 = arith.constant 0 : index
    %c0_23 = arith.constant 0 : index
    %43 = vector.load %arg8[%c0_22, %c0_23] : memref<1x16xf32, #tpu.memory_space<vmem>>, vector<1x16xf32>
    tpu.vector_store %arg8[%c0_22, %c0_23], %39 {strides = array<i32>} : memref<1x16xf32, #tpu.memory_space<vmem>>, vector<1x16xf32>,
    %44 = vector.shape_cast %41 : vector<1x16xf32> to vector<1x1x1x16xf32>
    %c0_24 = arith.constant 0 : index
    %c0_25 = arith.constant 0 : index
    %c0_26 = arith.constant 0 : index
    %c0_27 = arith.constant 0 : index
    %45 = vector.load %arg6[%c0_24, %c0_25, %c0_26, %c0_27] : memref<1x1x1x16xf32, #tpu.memory_space<vmem>>, vector<1x1x1x16xf32>
    tpu.vector_store %arg6[%c0_24, %c0_25, %c0_26, %c0_27], %44 {strides = array<i32>} : memref<1x1x1x16xf32, #tpu.memory_space<vmem>>, vector<1x1x1x16xf32>,
    return
  }
  func.func @transform_0(%arg0: i32, %arg1: i32) -> (i32, i32, i32) {
    %c1_i32 = arith.constant 1 : i32
    %0 = arith.subi %c1_i32, %arg0 : i32
    %1 = arith.muli %0, %arg1 : i32
    %c7_i32 = arith.constant 7 : i32
    %2 = arith.subi %c7_i32, %arg1 : i32
    %3 = arith.muli %arg0, %2 : i32
    %4 = arith.addi %1, %3 : i32
    %c0_i32 = arith.constant 0 : i32
    %c0_i32_0 = arith.constant 0 : i32
    %c0_i32_1 = arith.constant 0 : i32
    return %4, %c0_i32, %c0_i32_0 : i32, i32, i32
  }
  func.func @transform_1(%arg0: i32, %arg1: i32) -> (i32, i32, i32) {
    %c0_i32 = arith.constant 0 : i32
    %c0_i32_0 = arith.constant 0 : i32
    %c0_i32_1 = arith.constant 0 : i32
    return %arg0, %c0_i32, %c0_i32_0 : i32, i32, i32
  }
  func.func @transform_2(%arg0: i32, %arg1: i32) -> (i32, i32, i32) {
    %c0_i32 = arith.constant 0 : i32
    %c0_i32_0 = arith.constant 0 : i32
    %c0_i32_1 = arith.constant 0 : i32
    return %arg0, %c0_i32, %c0_i32_0 : i32, i32, i32
  }
  func.func @transform_3(%arg0: i32, %arg1: i32) -> (i32, i32, i32) {
    %c0_i32 = arith.constant 0 : i32
    %c0_i32_0 = arith.constant 0 : i32
    %c0_i32_1 = arith.constant 0 : i32
    return %arg0, %c0_i32, %c0_i32_0 : i32, i32, i32
  }
  func.func @transform_4(%arg0: i32, %arg1: i32) -> (i32, i32, i32, i32) {
    %c1_i32 = arith.constant 1 : i32
    %0 = arith.subi %c1_i32, %arg0 : i32
    %1 = arith.muli %0, %arg1 : i32
    %c7_i32 = arith.constant 7 : i32
    %2 = arith.subi %c7_i32, %arg1 : i32
    %3 = arith.muli %arg0, %2 : i32
    %4 = arith.addi %1, %3 : i32
    %c0_i32 = arith.constant 0 : i32
    %c0_i32_0 = arith.constant 0 : i32
    %c0_i32_1 = arith.constant 0 : i32
    return %arg0, %4, %c0_i32, %c0_i32_0 : i32, i32, i32, i32
  }
}

module attributes {stable_mosaic.version = 11 : i64} {
  func.func @_interaction_mlp_kernel(%arg0: i32, %arg1: memref<40x32xf32, #tpu.memory_space<vmem>>, %arg2: memref<40x96xf32, #tpu.memory_space<vmem>>, %arg3: memref<32x96xf32, #tpu.memory_space<vmem>>, %arg4: memref<1x96xf32, #tpu.memory_space<vmem>>, %arg5: memref<96x512xf32, #tpu.memory_space<vmem>>, %arg6: memref<96x512xf32, #tpu.memory_space<vmem>>, %arg7: memref<96x512xf32, #tpu.memory_space<vmem>>, %arg8: memref<96x512xf32, #tpu.memory_space<vmem>>, %arg9: memref<1x512xf32, #tpu.memory_space<vmem>>, %arg10: memref<1x512xf32, #tpu.memory_space<vmem>>, %arg11: memref<512x512xf32, #tpu.memory_space<vmem>>, %arg12: memref<1x512xf32, #tpu.memory_space<vmem>>, %arg13: memref<512x1xf32, #tpu.memory_space<vmem>>, %arg14: memref<1x1xf32, #tpu.memory_space<vmem>>, %arg15: memref<40x1xf32, #tpu.memory_space<vmem>>) attributes {dimension_semantics = [#tpu.dimension_semantics<arbitrary>], iteration_bounds = array<i64: 1>, scalar_prefetch = 0 : i64, scratch_operands = 0 : i64, tpu.core_type = #tpu.core_type<tc>, window_params = [{pipeline_mode = #tpu.pipeline_mode<synchronous>, transform_indices = @transform_0, window_bounds = array<i64: 40, 32>}, {pipeline_mode = #tpu.pipeline_mode<synchronous>, transform_indices = @transform_1, window_bounds = array<i64: 40, 96>}, {pipeline_mode = #tpu.pipeline_mode<synchronous>, transform_indices = @transform_2, window_bounds = array<i64: 32, 96>}, {pipeline_mode = #tpu.pipeline_mode<synchronous>, transform_indices = @transform_3, window_bounds = array<i64: 1, 96>}, {pipeline_mode = #tpu.pipeline_mode<synchronous>, transform_indices = @transform_4, window_bounds = array<i64: 96, 512>}, {pipeline_mode = #tpu.pipeline_mode<synchronous>, transform_indices = @transform_5, window_bounds = array<i64: 96, 512>}, {pipeline_mode = #tpu.pipeline_mode<synchronous>, transform_indices = @transform_6, window_bounds = array<i64: 96, 512>}, {pipeline_mode = #tpu.pipeline_mode<synchronous>, transform_indices = @transform_7, window_bounds = array<i64: 96, 512>}, {pipeline_mode = #tpu.pipeline_mode<synchronous>, transform_indices = @transform_8, window_bounds = array<i64: 1, 512>}, {pipeline_mode = #tpu.pipeline_mode<synchronous>, transform_indices = @transform_9, window_bounds = array<i64: 1, 512>}, {pipeline_mode = #tpu.pipeline_mode<synchronous>, transform_indices = @transform_10, window_bounds = array<i64: 512, 512>}, {pipeline_mode = #tpu.pipeline_mode<synchronous>, transform_indices = @transform_11, window_bounds = array<i64: 1, 512>}, {pipeline_mode = #tpu.pipeline_mode<synchronous>, transform_indices = @transform_12, window_bounds = array<i64: 512, 1>}, {pipeline_mode = #tpu.pipeline_mode<synchronous>, transform_indices = @transform_13, window_bounds = array<i64: 1, 1>}, {pipeline_mode = #tpu.pipeline_mode<synchronous>, transform_indices = @transform_14, window_bounds = array<i64: 40, 1>}]} {
    %c0 = arith.constant 0 : index
    %c0_0 = arith.constant 0 : index
    %0 = vector.load %arg2[%c0, %c0_0] : memref<40x96xf32, #tpu.memory_space<vmem>>, vector<40x96xf32>
    %c0_1 = arith.constant 0 : index
    %c0_2 = arith.constant 0 : index
    %1 = vector.load %arg1[%c0_1, %c0_2] : memref<40x32xf32, #tpu.memory_space<vmem>>, vector<40x32xf32>
    %c0_3 = arith.constant 0 : index
    %c0_4 = arith.constant 0 : index
    %2 = vector.load %arg3[%c0_3, %c0_4] : memref<32x96xf32, #tpu.memory_space<vmem>>, vector<32x96xf32>
    %cst = arith.constant dense<0.000000e+00> : vector<40x96xf32>
    %3 = tpu.matmul %1, %2, %cst {dimension_numbers = #tpu.dot_dimension_numbers<[1], [0], [0], [1], [0, 0, 1, 1], [], []>} : vector<40x32xf32>, vector<32x96xf32>, vector<40x96xf32> -> vector<40x96xf32>
    %c0_5 = arith.constant 0 : index
    %c0_6 = arith.constant 0 : index
    %4 = vector.load %arg4[%c0_5, %c0_6] : memref<1x96xf32, #tpu.memory_space<vmem>>, vector<1x96xf32>
    %5 = vector.broadcast %4 : vector<1x96xf32> to vector<40x96xf32>
    %6 = arith.addf %3, %5 : vector<40x96xf32>
    %7 = arith.mulf %6, %0 : vector<40x96xf32>
    %8 = arith.subf %6, %0 : vector<40x96xf32>
    %cst_7 = arith.constant dense<0.000000e+00> : vector<40xf32>
    %9 = vector.multi_reduction <add>, %7, %cst_7 [1] : vector<40x96xf32> to vector<40xf32>
    %10 = vector.shape_cast %9 : vector<40xf32> to vector<40x1xf32>
    %11 = arith.mulf %6, %6 : vector<40x96xf32>
    %cst_8 = arith.constant dense<0.000000e+00> : vector<40xf32>
    %12 = vector.multi_reduction <add>, %11, %cst_8 [1] : vector<40x96xf32> to vector<40xf32>
    %13 = vector.shape_cast %12 : vector<40xf32> to vector<40x1xf32>
    %14 = math.sqrt %13 : vector<40x1xf32>
    %15 = arith.mulf %0, %0 : vector<40x96xf32>
    %cst_9 = arith.constant dense<0.000000e+00> : vector<40xf32>
    %16 = vector.multi_reduction <add>, %15, %cst_9 [1] : vector<40x96xf32> to vector<40xf32>
    %17 = vector.shape_cast %16 : vector<40xf32> to vector<40x1xf32>
    %18 = math.sqrt %17 : vector<40x1xf32>
    %19 = arith.mulf %14, %18 : vector<40x1xf32>
    %cst_10 = arith.constant 9.99999993E-9 : f32
    %20 = vector.broadcast %cst_10 : f32 to vector<40x1xf32>
    %21 = arith.maximumf %19, %20 : vector<40x1xf32>
    %22 = arith.divf %10, %21 : vector<40x1xf32>
    %c0_11 = arith.constant 0 : index
    %c0_12 = arith.constant 0 : index
    %23 = vector.load %arg5[%c0_11, %c0_12] : memref<96x512xf32, #tpu.memory_space<vmem>>, vector<96x512xf32>
    %cst_13 = arith.constant dense<0.000000e+00> : vector<40x512xf32>
    %24 = tpu.matmul %0, %23, %cst_13 {dimension_numbers = #tpu.dot_dimension_numbers<[1], [0], [0], [1], [0, 0, 1, 1], [], []>} : vector<40x96xf32>, vector<96x512xf32>, vector<40x512xf32> -> vector<40x512xf32>
    %c0_14 = arith.constant 0 : index
    %c0_15 = arith.constant 0 : index
    %25 = vector.load %arg6[%c0_14, %c0_15] : memref<96x512xf32, #tpu.memory_space<vmem>>, vector<96x512xf32>
    %cst_16 = arith.constant dense<0.000000e+00> : vector<40x512xf32>
    %26 = tpu.matmul %6, %25, %cst_16 {dimension_numbers = #tpu.dot_dimension_numbers<[1], [0], [0], [1], [0, 0, 1, 1], [], []>} : vector<40x96xf32>, vector<96x512xf32>, vector<40x512xf32> -> vector<40x512xf32>
    %27 = arith.addf %24, %26 : vector<40x512xf32>
    %c0_17 = arith.constant 0 : index
    %c0_18 = arith.constant 0 : index
    %28 = vector.load %arg7[%c0_17, %c0_18] : memref<96x512xf32, #tpu.memory_space<vmem>>, vector<96x512xf32>
    %cst_19 = arith.constant dense<0.000000e+00> : vector<40x512xf32>
    %29 = tpu.matmul %7, %28, %cst_19 {dimension_numbers = #tpu.dot_dimension_numbers<[1], [0], [0], [1], [0, 0, 1, 1], [], []>} : vector<40x96xf32>, vector<96x512xf32>, vector<40x512xf32> -> vector<40x512xf32>
    %30 = arith.addf %27, %29 : vector<40x512xf32>
    %c0_20 = arith.constant 0 : index
    %c0_21 = arith.constant 0 : index
    %31 = vector.load %arg8[%c0_20, %c0_21] : memref<96x512xf32, #tpu.memory_space<vmem>>, vector<96x512xf32>
    %cst_22 = arith.constant dense<0.000000e+00> : vector<40x512xf32>
    %32 = tpu.matmul %8, %31, %cst_22 {dimension_numbers = #tpu.dot_dimension_numbers<[1], [0], [0], [1], [0, 0, 1, 1], [], []>} : vector<40x96xf32>, vector<96x512xf32>, vector<40x512xf32> -> vector<40x512xf32>
    %33 = arith.addf %30, %32 : vector<40x512xf32>
    %c0_23 = arith.constant 0 : index
    %c0_24 = arith.constant 0 : index
    %34 = vector.load %arg9[%c0_23, %c0_24] : memref<1x512xf32, #tpu.memory_space<vmem>>, vector<1x512xf32>
    %35 = vector.broadcast %22 : vector<40x1xf32> to vector<40x512xf32>
    %36 = vector.broadcast %34 : vector<1x512xf32> to vector<40x512xf32>
    %37 = arith.mulf %35, %36 : vector<40x512xf32>
    %38 = arith.addf %33, %37 : vector<40x512xf32>
    %c0_25 = arith.constant 0 : index
    %c0_26 = arith.constant 0 : index
    %39 = vector.load %arg10[%c0_25, %c0_26] : memref<1x512xf32, #tpu.memory_space<vmem>>, vector<1x512xf32>
    %40 = vector.broadcast %39 : vector<1x512xf32> to vector<40x512xf32>
    %41 = arith.addf %38, %40 : vector<40x512xf32>
    %cst_27 = arith.constant 0.000000e+00 : f32
    %42 = vector.broadcast %cst_27 : f32 to vector<40x512xf32>
    %43 = arith.maximumf %41, %42 : vector<40x512xf32>
    %c0_28 = arith.constant 0 : index
    %c0_29 = arith.constant 0 : index
    %44 = vector.load %arg11[%c0_28, %c0_29] : memref<512x512xf32, #tpu.memory_space<vmem>>, vector<512x512xf32>
    %cst_30 = arith.constant dense<0.000000e+00> : vector<40x512xf32>
    %45 = tpu.matmul %43, %44, %cst_30 {dimension_numbers = #tpu.dot_dimension_numbers<[1], [0], [0], [1], [0, 0, 1, 1], [], []>} : vector<40x512xf32>, vector<512x512xf32>, vector<40x512xf32> -> vector<40x512xf32>
    %c0_31 = arith.constant 0 : index
    %c0_32 = arith.constant 0 : index
    %46 = vector.load %arg12[%c0_31, %c0_32] : memref<1x512xf32, #tpu.memory_space<vmem>>, vector<1x512xf32>
    %47 = vector.broadcast %46 : vector<1x512xf32> to vector<40x512xf32>
    %48 = arith.addf %45, %47 : vector<40x512xf32>
    %cst_33 = arith.constant 0.000000e+00 : f32
    %49 = vector.broadcast %cst_33 : f32 to vector<40x512xf32>
    %50 = arith.maximumf %48, %49 : vector<40x512xf32>
    %c0_34 = arith.constant 0 : index
    %c0_35 = arith.constant 0 : index
    %51 = vector.load %arg13[%c0_34, %c0_35] : memref<512x1xf32, #tpu.memory_space<vmem>>, vector<512x1xf32>
    %cst_36 = arith.constant dense<0.000000e+00> : vector<40x1xf32>
    %52 = tpu.matmul %50, %51, %cst_36 {dimension_numbers = #tpu.dot_dimension_numbers<[1], [0], [0], [1], [0, 0, 1, 1], [], []>} : vector<40x512xf32>, vector<512x1xf32>, vector<40x1xf32> -> vector<40x1xf32>
    %c0_37 = arith.constant 0 : index
    %c0_38 = arith.constant 0 : index
    %53 = vector.load %arg14[%c0_37, %c0_38] : memref<1x1xf32, #tpu.memory_space<vmem>>, vector<1x1xf32>
    %54 = vector.broadcast %53 : vector<1x1xf32> to vector<40x1xf32>
    %55 = arith.addf %52, %54 : vector<40x1xf32>
    %c0_39 = arith.constant 0 : index
    %c0_40 = arith.constant 0 : index
    %56 = vector.load %arg15[%c0_39, %c0_40] : memref<40x1xf32, #tpu.memory_space<vmem>>, vector<40x1xf32>
    tpu.vector_store %arg15[%c0_39, %c0_40], %55 {strides = array<i32>} : memref<40x1xf32, #tpu.memory_space<vmem>>, vector<40x1xf32>,
    return
  }
  func.func @transform_0(%arg0: i32) -> (i32, i32) {
    %c0_i32 = arith.constant 0 : i32
    %c0_i32_0 = arith.constant 0 : i32
    %c0_i32_1 = arith.constant 0 : i32
    return %c0_i32, %c0_i32_0 : i32, i32
  }
  func.func @transform_1(%arg0: i32) -> (i32, i32) {
    %c0_i32 = arith.constant 0 : i32
    %c0_i32_0 = arith.constant 0 : i32
    %c0_i32_1 = arith.constant 0 : i32
    return %c0_i32, %c0_i32_0 : i32, i32
  }
  func.func @transform_2(%arg0: i32) -> (i32, i32) {
    %c0_i32 = arith.constant 0 : i32
    %c0_i32_0 = arith.constant 0 : i32
    %c0_i32_1 = arith.constant 0 : i32
    return %c0_i32, %c0_i32_0 : i32, i32
  }
  func.func @transform_3(%arg0: i32) -> (i32, i32) {
    %c0_i32 = arith.constant 0 : i32
    %c0_i32_0 = arith.constant 0 : i32
    %c0_i32_1 = arith.constant 0 : i32
    return %c0_i32, %c0_i32_0 : i32, i32
  }
  func.func @transform_4(%arg0: i32) -> (i32, i32) {
    %c0_i32 = arith.constant 0 : i32
    %c0_i32_0 = arith.constant 0 : i32
    %c0_i32_1 = arith.constant 0 : i32
    return %c0_i32, %c0_i32_0 : i32, i32
  }
  func.func @transform_5(%arg0: i32) -> (i32, i32) {
    %c0_i32 = arith.constant 0 : i32
    %c0_i32_0 = arith.constant 0 : i32
    %c0_i32_1 = arith.constant 0 : i32
    return %c0_i32, %c0_i32_0 : i32, i32
  }
  func.func @transform_6(%arg0: i32) -> (i32, i32) {
    %c0_i32 = arith.constant 0 : i32
    %c0_i32_0 = arith.constant 0 : i32
    %c0_i32_1 = arith.constant 0 : i32
    return %c0_i32, %c0_i32_0 : i32, i32
  }
  func.func @transform_7(%arg0: i32) -> (i32, i32) {
    %c0_i32 = arith.constant 0 : i32
    %c0_i32_0 = arith.constant 0 : i32
    %c0_i32_1 = arith.constant 0 : i32
    return %c0_i32, %c0_i32_0 : i32, i32
  }
  func.func @transform_8(%arg0: i32) -> (i32, i32) {
    %c0_i32 = arith.constant 0 : i32
    %c0_i32_0 = arith.constant 0 : i32
    %c0_i32_1 = arith.constant 0 : i32
    return %c0_i32, %c0_i32_0 : i32, i32
  }
  func.func @transform_9(%arg0: i32) -> (i32, i32) {
    %c0_i32 = arith.constant 0 : i32
    %c0_i32_0 = arith.constant 0 : i32
    %c0_i32_1 = arith.constant 0 : i32
    return %c0_i32, %c0_i32_0 : i32, i32
  }
  func.func @transform_10(%arg0: i32) -> (i32, i32) {
    %c0_i32 = arith.constant 0 : i32
    %c0_i32_0 = arith.constant 0 : i32
    %c0_i32_1 = arith.constant 0 : i32
    return %c0_i32, %c0_i32_0 : i32, i32
  }
  func.func @transform_11(%arg0: i32) -> (i32, i32) {
    %c0_i32 = arith.constant 0 : i32
    %c0_i32_0 = arith.constant 0 : i32
    %c0_i32_1 = arith.constant 0 : i32
    return %c0_i32, %c0_i32_0 : i32, i32
  }
  func.func @transform_12(%arg0: i32) -> (i32, i32) {
    %c0_i32 = arith.constant 0 : i32
    %c0_i32_0 = arith.constant 0 : i32
    %c0_i32_1 = arith.constant 0 : i32
    return %c0_i32, %c0_i32_0 : i32, i32
  }
  func.func @transform_13(%arg0: i32) -> (i32, i32) {
    %c0_i32 = arith.constant 0 : i32
    %c0_i32_0 = arith.constant 0 : i32
    %c0_i32_1 = arith.constant 0 : i32
    return %c0_i32, %c0_i32_0 : i32, i32
  }
  func.func @transform_14(%arg0: i32) -> (i32, i32) {
    %c0_i32 = arith.constant 0 : i32
    %c0_i32_0 = arith.constant 0 : i32
    %c0_i32_1 = arith.constant 0 : i32
    return %c0_i32, %c0_i32_0 : i32, i32
  }
}

</mosaic_0001>

<llo_original>
// kernel: tam_forward.5
$region0: #{tam_forward.5}
  #allocation0 [shape = 'u32[]', space=smem, size = 0x4, offset = 0x4, fixed_abs, tag = 'smem constant byte address 0x4 - core index']
  #allocation1 [shape = 'u32[144,128]{1,0:T(1,128)}', space=vmem, size = 0x12000, scoped, tag = 'internal scratch']
  #allocation2 [shape = 'f32[1,16]{1,0:T(1,128)}', space=vmem, size = 0x200, scoped, tag = 'scratch operand']
  #allocation3 [shape = 'f32[1,16]{1,0:T(1,128)}', space=vmem, size = 0x200, scoped, tag = 'scratch operand']
  %s0 = inlined_call_operand.vmem [shape: f32[12,1,16], index: 0, kind: input, shape index: {}]
  %s1 = inlined_call_operand.vmem [shape: f32[2,16,64], index: 1, kind: input, shape index: {}]
  %s2 = inlined_call_operand.vmem [shape: f32[2,16,64], index: 2, kind: input, shape index: {}]
  %s3 = inlined_call_operand.vmem [shape: f32[2,1,64], index: 3, kind: input, shape index: {}]
  %s4 = inlined_call_operand.vmem [shape: f32[2,12,1,16], index: 4, kind: output, shape index: {}]
  %s5 = sld [smem:[#allocation0]]
  $region53: #{tam_forward.5} parent=0
    _
  %s7 = ssub.s32 1, %s5
  %s8 = scalar_select 0, %s7, %s5
  loop: start=0, step=1, limit=26
  $region2: #{tam_forward.5} parent=0 // loop_pre_header
    _
  $region3: #{tam_forward.5} parent=0 // loop_header
    %s10 = sphi 0, %s14
    %p11 = scmp.ge.s32.totalorder %s10, 26
    %s17 = sphi 0, %s29
    %s18 = sphi 0, %s25
    %s19 = sphi 0, %s17
    %s20 = sphi 0, %s18
    %s21 = sphi 0, %s19
    %s22 = sphi 0, %s20
    %s42 = sphi 0, %s44
    %s45 = sphi 0, %s42
    %s46 = sphi 0, %s45
    %s62 = sphi 0, %s46
    %s68 = sphi 0, %s70
    %s71 = sphi 0, %s68
    %s72 = sphi 0, %s71
    %s88 = sphi 0, %s72
    %s94 = sphi 0, %s96
    %s97 = sphi 0, %s94
    %s98 = sphi 0, %s97
    %s114 = sphi 0, %s98
    %s120 = sphi 0, %s122
    %s123 = sphi 0, %s120
    %s124 = sphi 0, %s123
    %s140 = sphi 0, %s124
    %s158 = sphi 0, %s160
    %s161 = sphi 0, %s158
    %s162 = sphi 0, %s161
    %s178 = sphi 0, %s162
  $region4: #{tam_forward.5} parent=0 // loop_header_branch
    %13 = sbr.rel (%p11) target = $region8
  $region5: #{tam_forward.5} parent=0 // loop_body
    %s15 = ssub.s32 %s10, 1
    %s16 = ssub.s32 %s10, 2
    %s23 = sadd.s32 1, %s18
    %p24 = scmp.ge.s32.totalorder %s23, 12
    %s25 = scalar_select %p24, 0, %s23
    %s26 = sadd.s32 1, %s17
    %s27 = scalar_select %p24, %s26, %s17
    %p28 = scmp.ge.s32.totalorder %s27, 2
    %s29 = scalar_select %p28, 0, %s27
    %s30 = ssub.s32 1, %s17
    %s31 = smul.u32 %s30, %s18
    %s32 = ssub.s32 11, %s18
    %s33 = smul.u32 %s17, %s32
    %s34 = sadd.s32 %s31, %s33
    %s35 = ssub.s32 1, %s29
    %s36 = smul.u32 %s35, %s25
    %s37 = ssub.s32 11, %s25
    %s38 = smul.u32 %s29, %s37
    %s39 = sadd.s32 %s36, %s38
    %s40 = ssub.s32 %s34, %s39
    %p41 = scmp.eq.s32.totalorder %s40, 0
    %s43 = sadd.s32 %s42, 1
    %s44 = scalar_select %p41, %s42, %s43
    %p47 = pneg %p41
    %p48 = scmp.eq.s32.totalorder %s10, 23
    %p49 = por %p47, %p48
    %p50 = scmp.ne.s32.totalorder %s42, %s45
    %p51 = scmp.eq.s32.totalorder %s10, 0
    %p52 = por %p50, %p51
    %p53 = scmp.ne.s32.totalorder %s42, %s45
    %p54 = scmp.eq.s32.totalorder %s15, 23
    %p55 = por %p53, %p54
    %p56 = scmp.ne.s32.totalorder %s45, %s46
    %p57 = scmp.eq.s32.totalorder %s15, 0
    %p58 = por %p56, %p57
    %p59 = scmp.ne.s32.totalorder %s45, %s46
    %p60 = scmp.eq.s32.totalorder %s16, 23
    %p61 = por %p59, %p60
    %p63 = scmp.ne.s32.totalorder %s46, %s62
    %p64 = scmp.eq.s32.totalorder %s16, 0
    %p65 = por %p63, %p64
    %s66 = ssub.s32 %s17, %s29
    %p67 = scmp.eq.s32.totalorder %s66, 0
    %s69 = sadd.s32 %s68, 1
    %s70 = scalar_select %p67, %s68, %s69
    %p73 = pneg %p67
    %p74 = scmp.eq.s32.totalorder %s10, 23
    %p75 = por %p73, %p74
    %p76 = scmp.ne.s32.totalorder %s68, %s71
    %p77 = scmp.eq.s32.totalorder %s10, 0
    %p78 = por %p76, %p77
    %p79 = scmp.ne.s32.totalorder %s68, %s71
    %p80 = scmp.eq.s32.totalorder %s15, 23
    %p81 = por %p79, %p80
    %p82 = scmp.ne.s32.totalorder %s71, %s72
    %p83 = scmp.eq.s32.totalorder %s15, 0
    %p84 = por %p82, %p83
    %p85 = scmp.ne.s32.totalorder %s71, %s72
    %p86 = scmp.eq.s32.totalorder %s16, 23
    %p87 = por %p85, %p86
    %p89 = scmp.ne.s32.totalorder %s72, %s88
    %p90 = scmp.eq.s32.totalorder %s16, 0
    %p91 = por %p89, %p90
    %s92 = ssub.s32 %s17, %s29
    %p93 = scmp.eq.s32.totalorder %s92, 0
    %s95 = sadd.s32 %s94, 1
    %s96 = scalar_select %p93, %s94, %s95
    %p99 = pneg %p93
    %p100 = scmp.eq.s32.totalorder %s10, 23
    %p101 = por %p99, %p100
    %p102 = scmp.ne.s32.totalorder %s94, %s97
    %p103 = scmp.eq.s32.totalorder %s10, 0
    %p104 = por %p102, %p103
    %p105 = scmp.ne.s32.totalorder %s94, %s97
    %p106 = scmp.eq.s32.totalorder %s15, 23
    %p107 = por %p105, %p106
    %p108 = scmp.ne.s32.totalorder %s97, %s98
    %p109 = scmp.eq.s32.totalorder %s15, 0
    %p110 = por %p108, %p109
    %p111 = scmp.ne.s32.totalorder %s97, %s98
    %p112 = scmp.eq.s32.totalorder %s16, 23
    %p113 = por %p111, %p112
    %p115 = scmp.ne.s32.totalorder %s98, %s114
    %p116 = scmp.eq.s32.totalorder %s16, 0
    %p117 = por %p115, %p116
    %s118 = ssub.s32 %s17, %s29
    %p119 = scmp.eq.s32.totalorder %s118, 0
    %s121 = sadd.s32 %s120, 1
    %s122 = scalar_select %p119, %s120, %s121
    %p125 = pneg %p119
    %p126 = scmp.eq.s32.totalorder %s10, 23
    %p127 = por %p125, %p126
    %p128 = scmp.ne.s32.totalorder %s120, %s123
    %p129 = scmp.eq.s32.totalorder %s10, 0
    %p130 = por %p128, %p129
    %p131 = scmp.ne.s32.totalorder %s120, %s123
    %p132 = scmp.eq.s32.totalorder %s15, 23
    %p133 = por %p131, %p132
    %p134 = scmp.ne.s32.totalorder %s123, %s124
    %p135 = scmp.eq.s32.totalorder %s15, 0
    %p136 = por %p134, %p135
    %p137 = scmp.ne.s32.totalorder %s123, %s124
    %p138 = scmp.eq.s32.totalorder %s16, 23
    %p139 = por %p137, %p138
    %p141 = scmp.ne.s32.totalorder %s124, %s140
    %p142 = scmp.eq.s32.totalorder %s16, 0
    %p143 = por %p141, %p142
    %s144 = ssub.s32 1, %s17
    %s145 = smul.u32 %s144, %s18
    %s146 = ssub.s32 11, %s18
    %s147 = smul.u32 %s17, %s146
    %s148 = sadd.s32 %s145, %s147
    %s149 = ssub.s32 1, %s29
    %s150 = smul.u32 %s149, %s25
    %s151 = ssub.s32 11, %s25
    %s152 = smul.u32 %s29, %s151
    %s153 = sadd.s32 %s150, %s152
    %s154 = ssub.s32 %s17, %s29
    %s155 = ssub.s32 %s148, %s153
    %s156 = sor.u32 %s154, %s155
    %p157 = scmp.eq.s32.totalorder %s156, 0
    %s159 = sadd.s32 %s158, 1
    %s160 = scalar_select %p157, %s158, %s159
    %p163 = pneg %p157
    %p164 = scmp.eq.s32.totalorder %s10, 23
    %p165 = por %p163, %p164
    %p166 = scmp.ne.s32.totalorder %s158, %s161
    %p167 = scmp.eq.s32.totalorder %s10, 0
    %p168 = por %p166, %p167
    %p169 = scmp.ne.s32.totalorder %s158, %s161
    %p170 = scmp.eq.s32.totalorder %s15, 23
    %p171 = por %p169, %p170
    %p172 = scmp.ne.s32.totalorder %s161, %s162
    %p173 = scmp.eq.s32.totalorder %s15, 0
    %p174 = por %p172, %p173
    %p175 = scmp.ne.s32.totalorder %s161, %s162
    %p176 = scmp.eq.s32.totalorder %s16, 23
    %p177 = por %p175, %p176
    %p179 = scmp.ne.s32.totalorder %s162, %s178
    %p180 = scmp.eq.s32.totalorder %s16, 0
    %p181 = por %p179, %p180
    %p182 = scmp.le.s32.totalorder 1, %s10
    %p183 = scmp.lt.s32.totalorder %s10, 25
    %p184 = pnand %p182, %p183
    %p185 = pneg %p184
    // Predicated region
    $region9: #{tam_forward.5} parent=5 // pred_check
      _
    $region10: #{tam_forward.5} parent=5 // pred_check_branch
      %187 = sbr.rel (%p184) target = $region12
    $region11: #{tam_forward.5} parent=5 // pred_region
      %s188 = ssub.s32 %s10, 1
    $region12: #{tam_forward.5} parent=5 // pred_fallthru
      _
    %p189 = scmp.lt.s32.totalorder %s10, 24
    // Predicated region
    $region13: #{tam_forward.5} parent=5 // pred_check
      %p190 = pneg %p189
    $region14: #{tam_forward.5} parent=5 // pred_check_branch
      %192 = sbr.rel (%p190) target = $region16
    $region15: #{tam_forward.5} parent=5 // pred_region
      // Predicated region
      $region17: #{tam_forward.5} parent=15 // pred_check
        %p193 = pneg %p52
      $region18: #{tam_forward.5} parent=15 // pred_check_branch
        %195 = sbr.rel (%p193) target = $region20
      $region19: #{tam_forward.5} parent=15 // pred_region
        %s196 = ssub.s32 1, %s17
        %s197 = smul.u32 %s196, %s18
        %s198 = ssub.s32 11, %s18
        %s199 = smul.u32 %s17, %s198
        %s200 = sadd.s32 %s197, %s199
        %p201 = scmp.lt.s32.totalorder %s200, 11
        %s202 = scalar_select %p201, %s200, 11
        %s203 = scalar_lea.vmem %s0, %s202
        %s204 = ssub.s32 1, %s17
        %s205 = smul.u32 %s204, %s18
        %s206 = ssub.s32 11, %s18
        %s207 = smul.u32 %s17, %s206
        %s208 = sadd.s32 %s205, %s207
      $region20: #{tam_forward.5} parent=15 // pred_fallthru
        _
      // Predicated region
      $region21: #{tam_forward.5} parent=15 // pred_check
        %p209 = pneg %p78
      $region22: #{tam_forward.5} parent=15 // pred_check_branch
        %211 = sbr.rel (%p209) target = $region24
      $region23: #{tam_forward.5} parent=15 // pred_region
        %p212 = scmp.lt.s32.totalorder %s17, 1
        %s213 = scalar_select %p212, %s17, 1
        %s214 = smul.addr %s213, 2
        %s215 = smul.addr %s214, 8
        %s216 = scalar_lea.vmem %s1, %s215
      $region24: #{tam_forward.5} parent=15 // pred_fallthru
        _
      // Predicated region
      $region25: #{tam_forward.5} parent=15 // pred_check
        %p217 = pneg %p104
      $region26: #{tam_forward.5} parent=15 // pred_check_branch
        %219 = sbr.rel (%p217) target = $region28
      $region27: #{tam_forward.5} parent=15 // pred_region
        %p220 = scmp.lt.s32.totalorder %s17, 1
        %s221 = scalar_select %p220, %s17, 1
        %s222 = smul.addr %s221, 2
        %s223 = smul.addr %s222, 8
        %s224 = scalar_lea.vmem %s2, %s223
      $region28: #{tam_forward.5} parent=15 // pred_fallthru
        _
      // Predicated region
      $region29: #{tam_forward.5} parent=15 // pred_check
        %p225 = pneg %p130
      $region30: #{tam_forward.5} parent=15 // pred_check_branch
        %227 = sbr.rel (%p225) target = $region32
      $region31: #{tam_forward.5} parent=15 // pred_region
        %p228 = scmp.lt.s32.totalorder %s17, 1
        %s229 = scalar_select %p228, %s17, 1
        %s230 = scalar_lea.vmem %s3, %s229
      $region32: #{tam_forward.5} parent=15 // pred_fallthru
        _
    $region16: #{tam_forward.5} parent=5 // pred_fallthru
      _
    %p231 = scmp.le.s32.totalorder 1, %s10
    %p232 = scmp.lt.s32.totalorder %s10, 25
    %p233 = pnand %p231, %p232
    %p234 = pneg %p233
    // Predicated region
    $region33: #{tam_forward.5} parent=5 // pred_check
      _
    $region34: #{tam_forward.5} parent=5 // pred_check_branch
      %236 = sbr.rel (%p233) target = $region36
    $region35: #{tam_forward.5} parent=5 // pred_region
      %s237 = ssub.s32 %s10, 1
      %s238 = ssub.s32 1, %s19
      %s239 = smul.u32 %s238, %s20
      %s240 = ssub.s32 11, %s20
      %s241 = smul.u32 %s19, %s240
      %s242 = sadd.s32 %s239, %s241
      %p243 = scmp.lt.s32.totalorder %s242, 11
      %s244 = scalar_select %p243, %s242, 11
      %s245 = scalar_lea.vmem %s0, %s244
      %p246 = pneg %p58
      %p247 = pneg %p55
      %p248 = scmp.lt.s32.totalorder %s19, 1
      %s249 = scalar_select %p248, %s19, 1
      %s250 = smul.addr %s249, 2
      %s251 = smul.addr %s250, 8
      %s252 = scalar_lea.vmem %s1, %s251
      %p253 = pneg %p84
      %p254 = pneg %p81
      %p255 = scmp.lt.s32.totalorder %s19, 1
      %s256 = scalar_select %p255, %s19, 1
      %s257 = smul.addr %s256, 2
      %s258 = smul.addr %s257, 8
      %s259 = scalar_lea.vmem %s2, %s258
      %p260 = pneg %p110
      %p261 = pneg %p107
      %p262 = scmp.lt.s32.totalorder %s19, 1
      %s263 = scalar_select %p262, %s19, 1
      %s264 = scalar_lea.vmem %s3, %s263
      %p265 = pneg %p136
      %p266 = pneg %p133
      %p267 = pneg %p174
      %p268 = pneg %p171
      %s269 = ssub.s32 1, %s19
      %s270 = smul.u32 %s269, %s20
      %s271 = ssub.s32 11, %s20
      %s272 = smul.u32 %s19, %s271
      %s273 = sadd.s32 %s270, %s272
      %p274 = scmp.lt.s32.totalorder %s19, 1
      %s275 = scalar_select %p274, %s19, 1
      %p276 = scmp.lt.s32.totalorder %s273, 11
      %s277 = scalar_select %p276, %s273, 11
      %s278 = smul.addr %s275, 12
      %s279 = sadd.s32 %s277, %s278
      %s280 = scalar_lea.vmem %s4, %s279
      %s281 = ssub.s32 1, %s19
      %s282 = smul.u32 %s281, %s20
      %s283 = ssub.s32 11, %s20
      %s284 = smul.u32 %s19, %s283
      %s285 = sadd.s32 %s282, %s284
      %p286 = scmp.lt.s32.totalorder %s285, 11
      %s287 = scalar_select %p286, %s285, 11
      %s288 = scalar_lea.vmem %s0, %s287
      %s289 = ssub.s32 1, %s19
      %s290 = smul.u32 %s289, %s20
      %s291 = ssub.s32 11, %s20
      %s292 = smul.u32 %s19, %s291
      %s293 = sadd.s32 %s290, %s292
      %p294 = scmp.lt.s32.totalorder %s19, 1
      %s295 = scalar_select %p294, %s19, 1
      %s296 = smul.addr %s295, 2
      %s297 = smul.addr %s296, 8
      %s298 = scalar_lea.vmem %s1, %s297
      %p299 = scmp.lt.s32.totalorder %s19, 1
      %s300 = scalar_select %p299, %s19, 1
      %s301 = smul.addr %s300, 2
      %s302 = smul.addr %s301, 8
      %s303 = scalar_lea.vmem %s2, %s302
      %p304 = scmp.lt.s32.totalorder %s19, 1
      %s305 = scalar_select %p304, %s19, 1
      %s306 = scalar_lea.vmem %s3, %s305
      %s307 = ssub.s32 1, %s19
      %s308 = smul.u32 %s307, %s20
      %s309 = ssub.s32 11, %s20
      %s310 = smul.u32 %s19, %s309
      %s311 = sadd.s32 %s308, %s310
      %p312 = scmp.lt.s32.totalorder %s19, 1
      %s313 = scalar_select %p312, %s19, 1
      %p314 = scmp.lt.s32.totalorder %s311, 11
      %s315 = scalar_select %p314, %s311, 11
      %s316 = smul.addr %s313, 12
      %s317 = sadd.s32 %s315, %s316
      %s318 = scalar_lea.vmem %s4, %s317
      %s319 = ssub.s32 1, %s19
      %s320 = smul.u32 %s319, %s20
      %s321 = ssub.s32 11, %s20
      %s322 = smul.u32 %s19, %s321
      %s323 = sadd.s32 %s320, %s322
      %p324 = scmp.eq.s32.totalorder %s20, 0
      // Predicated region
      $region37: #{tam_forward.5} parent=35 // pred_check
        %p325 = pneg %p324
      $region38: #{tam_forward.5} parent=35 // pred_check_branch
        %327 = sbr.rel (%p325) target = $region40
      $region39: #{tam_forward.5} parent=35 // pred_region
        %vm328 = vcmask 122880
        %329 = vst.msk [vmem:[#allocation2] sm:$0x1] %vm328, 0.0
        %330 = vst.msk [vmem:[#allocation3] sm:$0x1] %vm328, 0.0
      $region40: #{tam_forward.5} parent=35 // pred_fallthru
        _
      %v331 = vld [vmem:[%s288] sm:$0x1]
      %v332 = vld [vmem:[#allocation2] sm:$0x1]
      %v333 = vld [vmem:[#allocation3] sm:$0x1]
      %v334 = vld [vmem:[%s298] sm:$0xff]
      %v335 = vld [vmem:[%s298 + $0x8] sm:$0xff]
      %v336 = vld [vmem:[%s303] sm:$0xff]
      %v337 = vld [vmem:[%s303 + $0x8] sm:$0xff]
      %vm338 = vcmask 130048
      %v340 = vsel %vm338, %v332, 0
      %342 = vmatprep.subr.mxu0 0.0
      %343 = vmatpush1.msra.mxu0 %v336
      %344 = vmatprep.subr.mxu0 0.0
      %345 = vmatpush1.msra.mxu0 %v337
      %346 = vmatprep.subr.mxu0 0.0
      %347 = vmatpush1.msra.mxu0 0.0
      %348 = vmatprep.subr.mxu0 0.0
      %349 = vmatpush1.msra.mxu0 0.0
      %350 = vmatprep.subr.mxu0 0.0
      %351 = vmatpush1.msra.mxu0 0.0
      %352 = vmatprep.subr.mxu0 0.0
      %353 = vmatpush1.msra.mxu0 0.0
      %354 = vmatprep.subr.mxu0 0.0
      %355 = vmatpush1.msra.mxu0 0.0
      %356 = vmatprep.subr.mxu0 0.0
      %357 = vmatpush1.msra.mxu0 0.0
      %358 = vmatprep.subr.mxu0 0.0
      %359 = vmatpush1.msra.mxu0 0.0
      %360 = vmatprep.subr.mxu0 0.0
      %361 = vmatpush1.msra.mxu0 0.0
      %362 = vmatprep.subr.mxu0 0.0
      %363 = vmatpush1.msra.mxu0 0.0
      %364 = vmatprep.subr.mxu0 0.0
      %365 = vmatpush1.msra.mxu0 0.0
      %366 = vmatprep.subr.mxu0 0.0
      %367 = vmatpush1.msra.mxu0 0.0
      %368 = vmatprep.subr.mxu0 0.0
      %369 = vmatpush1.msra.mxu0 0.0
      %370 = vmatprep.subr.mxu0 0.0
      %371 = vmatpush1.msra.mxu0 0.0
      %372 = vmatprep.subr.mxu0 0.0
      %373 = vmatpush1.msra.mxu0 0.0
      %374 = vmatprep.subr.mxu0 0.0
      %375 = vmatpush1.msra.mxu0 0.0
      %376 = vmatprep.subr.mxu0 0.0
      %377 = vmatpush1.msra.mxu0 0.0
      %378 = vmatprep.subr.mxu0 0.0
      %379 = vmatpush1.msra.mxu0 0.0
      %380 = vmatprep.subr.mxu0 0.0
      %381 = vmatpush1.msra.mxu0 0.0
      %382 = vmatprep.subr.mxu0 0.0
      %383 = vmatpush1.msra.mxu0 0.0
      %384 = vmatprep.subr.mxu0 0.0
      %385 = vmatpush1.msra.mxu0 0.0
      %386 = vmatprep.subr.mxu0 0.0
      %387 = vmatpush1.msra.mxu0 0.0
      %388 = vmatprep.subr.mxu0 0.0
      %389 = vmatpush1.msra.mxu0 0.0
      %390 = vmatprep.subr.mxu0 0.0
      %391 = vmatpush1.msra.mxu0 0.0
      %392 = vmatprep.subr.mxu0 0.0
      %393 = vmatpush1.msra.mxu0 0.0
      %394 = vmatprep.subr.mxu0 0.0
      %395 = vmatpush1.msra.mxu0 0.0
      %396 = vmatprep.subr.mxu0 0.0
      %397 = vmatpush1.msra.mxu0 0.0
      %398 = vmatprep.subr.mxu0 0.0
      %399 = vmatpush1.msra.mxu0 0.0
      %400 = vmatprep.subr.mxu0 0.0
      %401 = vmatpush1.msra.mxu0 0.0
      %402 = vmatprep.subr.mxu0 0.0
      %403 = vmatpush1.msra.mxu0 0.0
      %404 = vmatprep.subr.mxu0 0.0
      %405 = vmatpush1.msra.mxu0 0.0
      %406 = vmatprep.mubr.f32.mxu0 0.0
      %407 = vmatmul.mubr.f32.gmra.mrb[0].mxu0 %v340
      %v408 = vpop.f32.mrb[0].mxu0
      %v409 = vadd.f32 0.0, %v408
      %v410 = vpop.f32.mrb[0].mxu0
      %411 = vdwg.mxu0
      %v413 = vsel %vm338, %v331, 0
      %415 = vmatprep.subr.mxu0 0.0
      %416 = vmatpush1.msra.mxu0 %v334
      %417 = vmatprep.subr.mxu0 0.0
      %418 = vmatpush1.msra.mxu0 %v335
      %419 = vmatprep.subr.mxu0 0.0
      %420 = vmatpush1.msra.mxu0 0.0
      %421 = vmatprep.subr.mxu0 0.0
      %422 = vmatpush1.msra.mxu0 0.0
      %423 = vmatprep.subr.mxu0 0.0
      %424 = vmatpush1.msra.mxu0 0.0
      %425 = vmatprep.subr.mxu0 0.0
      %426 = vmatpush1.msra.mxu0 0.0
      %427 = vmatprep.subr.mxu0 0.0
      %428 = vmatpush1.msra.mxu0 0.0
      %429 = vmatprep.subr.mxu0 0.0
      %430 = vmatpush1.msra.mxu0 0.0
      %431 = vmatprep.subr.mxu0 0.0
      %432 = vmatpush1.msra.mxu0 0.0
      %433 = vmatprep.subr.mxu0 0.0
      %434 = vmatpush1.msra.mxu0 0.0
      %435 = vmatprep.subr.mxu0 0.0
      %436 = vmatpush1.msra.mxu0 0.0
      %437 = vmatprep.subr.mxu0 0.0
      %438 = vmatpush1.msra.mxu0 0.0
      %439 = vmatprep.subr.mxu0 0.0
      %440 = vmatpush1.msra.mxu0 0.0
      %441 = vmatprep.subr.mxu0 0.0
      %442 = vmatpush1.msra.mxu0 0.0
      %443 = vmatprep.subr.mxu0 0.0
      %444 = vmatpush1.msra.mxu0 0.0
      %445 = vmatprep.subr.mxu0 0.0
      %446 = vmatpush1.msra.mxu0 0.0
      %447 = vmatprep.subr.mxu0 0.0
      %448 = vmatpush1.msra.mxu0 0.0
      %449 = vmatprep.subr.mxu0 0.0
      %450 = vmatpush1.msra.mxu0 0.0
      %451 = vmatprep.subr.mxu0 0.0
      %452 = vmatpush1.msra.mxu0 0.0
      %453 = vmatprep.subr.mxu0 0.0
      %454 = vmatpush1.msra.mxu0 0.0
      %455 = vmatprep.subr.mxu0 0.0
      %456 = vmatpush1.msra.mxu0 0.0
      %457 = vmatprep.subr.mxu0 0.0
      %458 = vmatpush1.msra.mxu0 0.0
      %459 = vmatprep.subr.mxu0 0.0
      %460 = vmatpush1.msra.mxu0 0.0
      %461 = vmatprep.subr.mxu0 0.0
      %462 = vmatpush1.msra.mxu0 0.0
      %463 = vmatprep.subr.mxu0 0.0
      %464 = vmatpush1.msra.mxu0 0.0
      %465 = vmatprep.subr.mxu0 0.0
      %466 = vmatpush1.msra.mxu0 0.0
      %467 = vmatprep.subr.mxu0 0.0
      %468 = vmatpush1.msra.mxu0 0.0
      %469 = vmatprep.subr.mxu0 0.0
      %470 = vmatpush1.msra.mxu0 0.0
      %471 = vmatprep.subr.mxu0 0.0
      %472 = vmatpush1.msra.mxu0 0.0
      %473 = vmatprep.subr.mxu0 0.0
      %474 = vmatpush1.msra.mxu0 0.0
      %475 = vmatprep.subr.mxu0 0.0
      %476 = vmatpush1.msra.mxu0 0.0
      %477 = vmatprep.subr.mxu0 0.0
      %478 = vmatpush1.msra.mxu0 0.0
      %479 = vmatprep.mubr.f32.mxu0 0.0
      %480 = vmatmul.mubr.f32.gmra.mrb[0].mxu0 %v413
      %v481 = vpop.f32.mrb[0].mxu0
      %v482 = vadd.f32 %v409, %v481
      %v483 = vpop.f32.mrb[0].mxu0
      %484 = vdwg.mxu0
      %v485 = vld [vmem:[%s306] sm:$0x1]
      %v486 = vadd.f32 %v482, %v485
      %v487 = vxor.u32 %v486, 2147483648
      %v488 = vmul.f32 %v487, 1.442695
      %v489 = vpow.pop %v488
      %v490 = vadd.f32 %v489, 1.0
      %v491 = vrcp.pop %v490
      %v492 = vmul.f32 1.0, %v491
      %v493 = vtanh.pop %v486
      %v495 = vlaneseq
      %v496 = vshrl.u32 %v495, 7
      %v497 = vsub.s32 0, %v496
      %v498 = vrot.slane %v333, %v497
      %499 = vrot.lane.b32.xlu0 %v498, 16
      %v500 = vpop.permute.xlu0 %499
      %v502 = vmul.f32 %v492, %v500
      %504 = vrot.lane.b32.xlu0 %v493, 96
      %v505 = vpop.permute.xlu0 %504
      %v507 = vmul.f32 %v492, %v505
      %509 = vrot.lane.b32.xlu0 %v507, 16
      %v510 = vpop.permute.xlu0 %509
      %v512 = vadd.f32 %v502, %v510
      %v513 = vtanh.pop %v512
      %515 = vrot.lane.b32.xlu0 %v513, 32
      %v516 = vpop.permute.xlu0 %515
      %v518 = vmul.f32 %v492, %v516
      %520 = vrot.lane.b32.xlu0 %v518, 80
      %v521 = vpop.permute.xlu0 %520
      %vm523 = vcmask 122880
      %524 = vst.msk [vmem:[#allocation2] sm:$0x1] %vm523, %v521
      %526 = vrot.lane.b32.xlu0 %v512, 112
      %v527 = vpop.permute.xlu0 %526
      %529 = vst.msk [vmem:[#allocation3] sm:$0x1] %vm523, %v527
      %530 = vst.msk [vmem:[%s318] sm:$0x1] %vm523, %v521
      %s531 = ssub.s32 1, %s19
      %s532 = smul.u32 %s531, %s20
      %s533 = ssub.s32 11, %s20
      %s534 = smul.u32 %s19, %s533
      %s535 = sadd.s32 %s532, %s534
      %p536 = scmp.lt.s32.totalorder %s19, 1
      %s537 = scalar_select %p536, %s19, 1
      %p538 = scmp.lt.s32.totalorder %s535, 11
      %s539 = scalar_select %p538, %s535, 11
      %s540 = smul.addr %s537, 12
      %s541 = sadd.s32 %s539, %s540
      %s542 = scalar_lea.vmem %s4, %s541
      // Predicated region
      $region41: #{tam_forward.5} parent=35 // pred_check
        %p543 = pneg %p171
      $region42: #{tam_forward.5} parent=35 // pred_check_branch
        %545 = sbr.rel (%p543) target = $region44
      $region43: #{tam_forward.5} parent=35 // pred_region
        %s546 = ssub.s32 1, %s19
        %s547 = smul.u32 %s546, %s20
        %s548 = ssub.s32 11, %s20
        %s549 = smul.u32 %s19, %s548
        %s550 = sadd.s32 %s547, %s549
      $region44: #{tam_forward.5} parent=35 // pred_fallthru
        _
    $region36: #{tam_forward.5} parent=5 // pred_fallthru
      _
    %p551 = scmp.le.s32.totalorder 2, %s10
    // Predicated region
    $region45: #{tam_forward.5} parent=5 // pred_check
      %p552 = pneg %p551
    $region46: #{tam_forward.5} parent=5 // pred_check_branch
      %554 = sbr.rel (%p552) target = $region48
    $region47: #{tam_forward.5} parent=5 // pred_region
      %s555 = ssub.s32 %s10, 2
      // Predicated region
      $region49: #{tam_forward.5} parent=47 // pred_check
        %p556 = pneg %p177
      $region50: #{tam_forward.5} parent=47 // pred_check_branch
        %558 = sbr.rel (%p556) target = $region52
      $region51: #{tam_forward.5} parent=47 // pred_region
        %s559 = ssub.s32 1, %s21
        %s560 = smul.u32 %s559, %s22
        %s561 = ssub.s32 11, %s22
        %s562 = smul.u32 %s21, %s561
        %s563 = sadd.s32 %s560, %s562
        %p564 = scmp.lt.s32.totalorder %s21, 1
        %s565 = scalar_select %p564, %s21, 1
        %p566 = scmp.lt.s32.totalorder %s563, 11
        %s567 = scalar_select %p566, %s563, 11
        %s568 = smul.addr %s565, 12
        %s569 = sadd.s32 %s567, %s568
        %s570 = scalar_lea.vmem %s4, %s569
      $region52: #{tam_forward.5} parent=47 // pred_fallthru
        _
    $region48: #{tam_forward.5} parent=5 // pred_fallthru
      _
  $region6: #{tam_forward.5} parent=0 // loop_footer
    %s14 = sadd.s32 1, %s10
  $region7: #{tam_forward.5} parent=0 // loop_footer_branch
    %9 = sbr.rel target = $region3
  $region8: #{tam_forward.5} parent=0 // loop_exit
    _

// kernel: tam_forward.6
$region0: #{tam_forward.6}
  #allocation0 [shape = 'u32[]', space=smem, size = 0x4, offset = 0x4, fixed_abs, tag = 'smem constant byte address 0x4 - core index']
  #allocation1 [shape = 'u32[144,128]{1,0:T(1,128)}', space=vmem, size = 0x12000, scoped, tag = 'internal scratch']
  #allocation2 [shape = 'f32[8,8]{1,0:T(8,128)}', space=vmem, size = 0x1000, scoped, tag = 'scratch operand']
  #allocation3 [shape = 'f32[8,8]{1,0:T(8,128)}', space=vmem, size = 0x1000, scoped, tag = 'scratch operand']
  %s0 = inlined_call_operand.vmem [shape: f32[6,8,16], index: 0, kind: input, shape index: {}]
  %s1 = inlined_call_operand.vmem [shape: f32[2,16,32], index: 1, kind: input, shape index: {}]
  %s2 = inlined_call_operand.vmem [shape: f32[2,8,32], index: 2, kind: input, shape index: {}]
  %s3 = inlined_call_operand.vmem [shape: f32[2,1,32], index: 3, kind: input, shape index: {}]
  %s4 = inlined_call_operand.vmem [shape: f32[2,6,8,8], index: 4, kind: output, shape index: {}]
  %s5 = sld [smem:[#allocation0]]
  $region53: #{tam_forward.6} parent=0
    _
  %s7 = ssub.s32 1, %s5
  %s8 = scalar_select 0, %s7, %s5
  loop: start=0, step=1, limit=14
  $region2: #{tam_forward.6} parent=0 // loop_pre_header
    _
  $region3: #{tam_forward.6} parent=0 // loop_header
    %s10 = sphi 0, %s14
    %p11 = scmp.ge.s32.totalorder %s10, 14
    %s17 = sphi 0, %s29
    %s18 = sphi 0, %s25
    %s19 = sphi 0, %s17
    %s20 = sphi 0, %s18
    %s21 = sphi 0, %s19
    %s22 = sphi 0, %s20
    %s42 = sphi 0, %s44
    %s45 = sphi 0, %s42
    %s46 = sphi 0, %s45
    %s62 = sphi 0, %s46
    %s68 = sphi 0, %s70
    %s71 = sphi 0, %s68
    %s72 = sphi 0, %s71
    %s88 = sphi 0, %s72
    %s94 = sphi 0, %s96
    %s97 = sphi 0, %s94
    %s98 = sphi 0, %s97
    %s114 = sphi 0, %s98
    %s120 = sphi 0, %s122
    %s123 = sphi 0, %s120
    %s124 = sphi 0, %s123
    %s140 = sphi 0, %s124
    %s158 = sphi 0, %s160
    %s161 = sphi 0, %s158
    %s162 = sphi 0, %s161
    %s178 = sphi 0, %s162
  $region4: #{tam_forward.6} parent=0 // loop_header_branch
    %13 = sbr.rel (%p11) target = $region8
  $region5: #{tam_forward.6} parent=0 // loop_body
    %s15 = ssub.s32 %s10, 1
    %s16 = ssub.s32 %s10, 2
    %s23 = sadd.s32 1, %s18
    %p24 = scmp.ge.s32.totalorder %s23, 6
    %s25 = scalar_select %p24, 0, %s23
    %s26 = sadd.s32 1, %s17
    %s27 = scalar_select %p24, %s26, %s17
    %p28 = scmp.ge.s32.totalorder %s27, 2
    %s29 = scalar_select %p28, 0, %s27
    %s30 = ssub.s32 1, %s17
    %s31 = smul.u32 %s30, %s18
    %s32 = ssub.s32 5, %s18
    %s33 = smul.u32 %s17, %s32
    %s34 = sadd.s32 %s31, %s33
    %s35 = ssub.s32 1, %s29
    %s36 = smul.u32 %s35, %s25
    %s37 = ssub.s32 5, %s25
    %s38 = smul.u32 %s29, %s37
    %s39 = sadd.s32 %s36, %s38
    %s40 = ssub.s32 %s34, %s39
    %p41 = scmp.eq.s32.totalorder %s40, 0
    %s43 = sadd.s32 %s42, 1
    %s44 = scalar_select %p41, %s42, %s43
    %p47 = pneg %p41
    %p48 = scmp.eq.s32.totalorder %s10, 11
    %p49 = por %p47, %p48
    %p50 = scmp.ne.s32.totalorder %s42, %s45
    %p51 = scmp.eq.s32.totalorder %s10, 0
    %p52 = por %p50, %p51
    %p53 = scmp.ne.s32.totalorder %s42, %s45
    %p54 = scmp.eq.s32.totalorder %s15, 11
    %p55 = por %p53, %p54
    %p56 = scmp.ne.s32.totalorder %s45, %s46
    %p57 = scmp.eq.s32.totalorder %s15, 0
    %p58 = por %p56, %p57
    %p59 = scmp.ne.s32.totalorder %s45, %s46
    %p60 = scmp.eq.s32.totalorder %s16, 11
    %p61 = por %p59, %p60
    %p63 = scmp.ne.s32.totalorder %s46, %s62
    %p64 = scmp.eq.s32.totalorder %s16, 0
    %p65 = por %p63, %p64
    %s66 = ssub.s32 %s17, %s29
    %p67 = scmp.eq.s32.totalorder %s66, 0
    %s69 = sadd.s32 %s68, 1
    %s70 = scalar_select %p67, %s68, %s69
    %p73 = pneg %p67
    %p74 = scmp.eq.s32.totalorder %s10, 11
    %p75 = por %p73, %p74
    %p76 = scmp.ne.s32.totalorder %s68, %s71
    %p77 = scmp.eq.s32.totalorder %s10, 0
    %p78 = por %p76, %p77
    %p79 = scmp.ne.s32.totalorder %s68, %s71
    %p80 = scmp.eq.s32.totalorder %s15, 11
    %p81 = por %p79, %p80
    %p82 = scmp.ne.s32.totalorder %s71, %s72
    %p83 = scmp.eq.s32.totalorder %s15, 0
    %p84 = por %p82, %p83
    %p85 = scmp.ne.s32.totalorder %s71, %s72
    %p86 = scmp.eq.s32.totalorder %s16, 11
    %p87 = por %p85, %p86
    %p89 = scmp.ne.s32.totalorder %s72, %s88
    %p90 = scmp.eq.s32.totalorder %s16, 0
    %p91 = por %p89, %p90
    %s92 = ssub.s32 %s17, %s29
    %p93 = scmp.eq.s32.totalorder %s92, 0
    %s95 = sadd.s32 %s94, 1
    %s96 = scalar_select %p93, %s94, %s95
    %p99 = pneg %p93
    %p100 = scmp.eq.s32.totalorder %s10, 11
    %p101 = por %p99, %p100
    %p102 = scmp.ne.s32.totalorder %s94, %s97
    %p103 = scmp.eq.s32.totalorder %s10, 0
    %p104 = por %p102, %p103
    %p105 = scmp.ne.s32.totalorder %s94, %s97
    %p106 = scmp.eq.s32.totalorder %s15, 11
    %p107 = por %p105, %p106
    %p108 = scmp.ne.s32.totalorder %s97, %s98
    %p109 = scmp.eq.s32.totalorder %s15, 0
    %p110 = por %p108, %p109
    %p111 = scmp.ne.s32.totalorder %s97, %s98
    %p112 = scmp.eq.s32.totalorder %s16, 11
    %p113 = por %p111, %p112
    %p115 = scmp.ne.s32.totalorder %s98, %s114
    %p116 = scmp.eq.s32.totalorder %s16, 0
    %p117 = por %p115, %p116
    %s118 = ssub.s32 %s17, %s29
    %p119 = scmp.eq.s32.totalorder %s118, 0
    %s121 = sadd.s32 %s120, 1
    %s122 = scalar_select %p119, %s120, %s121
    %p125 = pneg %p119
    %p126 = scmp.eq.s32.totalorder %s10, 11
    %p127 = por %p125, %p126
    %p128 = scmp.ne.s32.totalorder %s120, %s123
    %p129 = scmp.eq.s32.totalorder %s10, 0
    %p130 = por %p128, %p129
    %p131 = scmp.ne.s32.totalorder %s120, %s123
    %p132 = scmp.eq.s32.totalorder %s15, 11
    %p133 = por %p131, %p132
    %p134 = scmp.ne.s32.totalorder %s123, %s124
    %p135 = scmp.eq.s32.totalorder %s15, 0
    %p136 = por %p134, %p135
    %p137 = scmp.ne.s32.totalorder %s123, %s124
    %p138 = scmp.eq.s32.totalorder %s16, 11
    %p139 = por %p137, %p138
    %p141 = scmp.ne.s32.totalorder %s124, %s140
    %p142 = scmp.eq.s32.totalorder %s16, 0
    %p143 = por %p141, %p142
    %s144 = ssub.s32 1, %s17
    %s145 = smul.u32 %s144, %s18
    %s146 = ssub.s32 5, %s18
    %s147 = smul.u32 %s17, %s146
    %s148 = sadd.s32 %s145, %s147
    %s149 = ssub.s32 1, %s29
    %s150 = smul.u32 %s149, %s25
    %s151 = ssub.s32 5, %s25
    %s152 = smul.u32 %s29, %s151
    %s153 = sadd.s32 %s150, %s152
    %s154 = ssub.s32 %s17, %s29
    %s155 = ssub.s32 %s148, %s153
    %s156 = sor.u32 %s154, %s155
    %p157 = scmp.eq.s32.totalorder %s156, 0
    %s159 = sadd.s32 %s158, 1
    %s160 = scalar_select %p157, %s158, %s159
    %p163 = pneg %p157
    %p164 = scmp.eq.s32.totalorder %s10, 11
    %p165 = por %p163, %p164
    %p166 = scmp.ne.s32.totalorder %s158, %s161
    %p167 = scmp.eq.s32.totalorder %s10, 0
    %p168 = por %p166, %p167
    %p169 = scmp.ne.s32.totalorder %s158, %s161
    %p170 = scmp.eq.s32.totalorder %s15, 11
    %p171 = por %p169, %p170
    %p172 = scmp.ne.s32.totalorder %s161, %s162
    %p173 = scmp.eq.s32.totalorder %s15, 0
    %p174 = por %p172, %p173
    %p175 = scmp.ne.s32.totalorder %s161, %s162
    %p176 = scmp.eq.s32.totalorder %s16, 11
    %p177 = por %p175, %p176
    %p179 = scmp.ne.s32.totalorder %s162, %s178
    %p180 = scmp.eq.s32.totalorder %s16, 0
    %p181 = por %p179, %p180
    %p182 = scmp.le.s32.totalorder 1, %s10
    %p183 = scmp.lt.s32.totalorder %s10, 13
    %p184 = pnand %p182, %p183
    %p185 = pneg %p184
    // Predicated region
    $region9: #{tam_forward.6} parent=5 // pred_check
      _
    $region10: #{tam_forward.6} parent=5 // pred_check_branch
      %187 = sbr.rel (%p184) target = $region12
    $region11: #{tam_forward.6} parent=5 // pred_region
      %s188 = ssub.s32 %s10, 1
    $region12: #{tam_forward.6} parent=5 // pred_fallthru
      _
    %p189 = scmp.lt.s32.totalorder %s10, 12
    // Predicated region
    $region13: #{tam_forward.6} parent=5 // pred_check
      %p190 = pneg %p189
    $region14: #{tam_forward.6} parent=5 // pred_check_branch
      %192 = sbr.rel (%p190) target = $region16
    $region15: #{tam_forward.6} parent=5 // pred_region
      // Predicated region
      $region17: #{tam_forward.6} parent=15 // pred_check
        %p193 = pneg %p52
      $region18: #{tam_forward.6} parent=15 // pred_check_branch
        %195 = sbr.rel (%p193) target = $region20
      $region19: #{tam_forward.6} parent=15 // pred_region
        %s196 = ssub.s32 1, %s17
        %s197 = smul.u32 %s196, %s18
        %s198 = ssub.s32 5, %s18
        %s199 = smul.u32 %s17, %s198
        %s200 = sadd.s32 %s197, %s199
        %p201 = scmp.lt.s32.totalorder %s200, 5
        %s202 = scalar_select %p201, %s200, 5
        %s203 = smul.addr %s202, 8
        %s204 = scalar_lea.vmem %s0, %s203
        %s205 = ssub.s32 1, %s17
        %s206 = smul.u32 %s205, %s18
        %s207 = ssub.s32 5, %s18
        %s208 = smul.u32 %s17, %s207
        %s209 = sadd.s32 %s206, %s208
      $region20: #{tam_forward.6} parent=15 // pred_fallthru
        _
      // Predicated region
      $region21: #{tam_forward.6} parent=15 // pred_check
        %p210 = pneg %p78
      $region22: #{tam_forward.6} parent=15 // pred_check_branch
        %212 = sbr.rel (%p210) target = $region24
      $region23: #{tam_forward.6} parent=15 // pred_region
        %p213 = scmp.lt.s32.totalorder %s17, 1
        %s214 = scalar_select %p213, %s17, 1
        %s215 = smul.addr %s214, 2
        %s216 = smul.addr %s215, 8
        %s217 = scalar_lea.vmem %s1, %s216
      $region24: #{tam_forward.6} parent=15 // pred_fallthru
        _
      // Predicated region
      $region25: #{tam_forward.6} parent=15 // pred_check
        %p218 = pneg %p104
      $region26: #{tam_forward.6} parent=15 // pred_check_branch
        %220 = sbr.rel (%p218) target = $region28
      $region27: #{tam_forward.6} parent=15 // pred_region
        %p221 = scmp.lt.s32.totalorder %s17, 1
        %s222 = scalar_select %p221, %s17, 1
        %s223 = smul.addr %s222, 8
        %s224 = scalar_lea.vmem %s2, %s223
      $region28: #{tam_forward.6} parent=15 // pred_fallthru
        _
      // Predicated region
      $region29: #{tam_forward.6} parent=15 // pred_check
        %p225 = pneg %p130
      $region30: #{tam_forward.6} parent=15 // pred_check_branch
        %227 = sbr.rel (%p225) target = $region32
      $region31: #{tam_forward.6} parent=15 // pred_region
        %p228 = scmp.lt.s32.totalorder %s17, 1
        %s229 = scalar_select %p228, %s17, 1
        %s230 = scalar_lea.vmem %s3, %s229
      $region32: #{tam_forward.6} parent=15 // pred_fallthru
        _
    $region16: #{tam_forward.6} parent=5 // pred_fallthru
      _
    %p231 = scmp.le.s32.totalorder 1, %s10
    %p232 = scmp.lt.s32.totalorder %s10, 13
    %p233 = pnand %p231, %p232
    %p234 = pneg %p233
    // Predicated region
    $region33: #{tam_forward.6} parent=5 // pred_check
      _
    $region34: #{tam_forward.6} parent=5 // pred_check_branch
      %236 = sbr.rel (%p233) target = $region36
    $region35: #{tam_forward.6} parent=5 // pred_region
      %s237 = ssub.s32 %s10, 1
      %s238 = ssub.s32 1, %s19
      %s239 = smul.u32 %s238, %s20
      %s240 = ssub.s32 5, %s20
      %s241 = smul.u32 %s19, %s240
      %s242 = sadd.s32 %s239, %s241
      %p243 = scmp.lt.s32.totalorder %s242, 5
      %s244 = scalar_select %p243, %s242, 5
      %s245 = smul.addr %s244, 8
      %s246 = scalar_lea.vmem %s0, %s245
      %p247 = pneg %p58
      %p248 = pneg %p55
      %p249 = scmp.lt.s32.totalorder %s19, 1
      %s250 = scalar_select %p249, %s19, 1
      %s251 = smul.addr %s250, 2
      %s252 = smul.addr %s251, 8
      %s253 = scalar_lea.vmem %s1, %s252
      %p254 = pneg %p84
      %p255 = pneg %p81
      %p256 = scmp.lt.s32.totalorder %s19, 1
      %s257 = scalar_select %p256, %s19, 1
      %s258 = smul.addr %s257, 8
      %s259 = scalar_lea.vmem %s2, %s258
      %p260 = pneg %p110
      %p261 = pneg %p107
      %p262 = scmp.lt.s32.totalorder %s19, 1
      %s263 = scalar_select %p262, %s19, 1
      %s264 = scalar_lea.vmem %s3, %s263
      %p265 = pneg %p136
      %p266 = pneg %p133
      %p267 = pneg %p174
      %p268 = pneg %p171
      %s269 = ssub.s32 1, %s19
      %s270 = smul.u32 %s269, %s20
      %s271 = ssub.s32 5, %s20
      %s272 = smul.u32 %s19, %s271
      %s273 = sadd.s32 %s270, %s272
      %p274 = scmp.lt.s32.totalorder %s19, 1
      %s275 = scalar_select %p274, %s19, 1
      %p276 = scmp.lt.s32.totalorder %s273, 5
      %s277 = scalar_select %p276, %s273, 5
      %s278 = smul.addr %s275, 6
      %s279 = sadd.s32 %s277, %s278
      %s280 = smul.addr %s279, 8
      %s281 = scalar_lea.vmem %s4, %s280
      %s282 = ssub.s32 1, %s19
      %s283 = smul.u32 %s282, %s20
      %s284 = ssub.s32 5, %s20
      %s285 = smul.u32 %s19, %s284
      %s286 = sadd.s32 %s283, %s285
      %p287 = scmp.lt.s32.totalorder %s286, 5
      %s288 = scalar_select %p287, %s286, 5
      %s289 = smul.addr %s288, 8
      %s290 = scalar_lea.vmem %s0, %s289
      %s291 = ssub.s32 1, %s19
      %s292 = smul.u32 %s291, %s20
      %s293 = ssub.s32 5, %s20
      %s294 = smul.u32 %s19, %s293
      %s295 = sadd.s32 %s292, %s294
      %p296 = scmp.lt.s32.totalorder %s19, 1
      %s297 = scalar_select %p296, %s19, 1
      %s298 = smul.addr %s297, 2
      %s299 = smul.addr %s298, 8
      %s300 = scalar_lea.vmem %s1, %s299
      %p301 = scmp.lt.s32.totalorder %s19, 1
      %s302 = scalar_select %p301, %s19, 1
      %s303 = smul.addr %s302, 8
      %s304 = scalar_lea.vmem %s2, %s303
      %p305 = scmp.lt.s32.totalorder %s19, 1
      %s306 = scalar_select %p305, %s19, 1
      %s307 = scalar_lea.vmem %s3, %s306
      %s308 = ssub.s32 1, %s19
      %s309 = smul.u32 %s308, %s20
      %s310 = ssub.s32 5, %s20
      %s311 = smul.u32 %s19, %s310
      %s312 = sadd.s32 %s309, %s311
      %p313 = scmp.lt.s32.totalorder %s19, 1
      %s314 = scalar_select %p313, %s19, 1
      %p315 = scmp.lt.s32.totalorder %s312, 5
      %s316 = scalar_select %p315, %s312, 5
      %s317 = smul.addr %s314, 6
      %s318 = sadd.s32 %s316, %s317
      %s319 = smul.addr %s318, 8
      %s320 = scalar_lea.vmem %s4, %s319
      %s321 = ssub.s32 1, %s19
      %s322 = smul.u32 %s321, %s20
      %s323 = ssub.s32 5, %s20
      %s324 = smul.u32 %s19, %s323
      %s325 = sadd.s32 %s322, %s324
      %p326 = scmp.eq.s32.totalorder %s20, 0
      // Predicated region
      $region37: #{tam_forward.6} parent=35 // pred_check
        %p327 = pneg %p326
      $region38: #{tam_forward.6} parent=35 // pred_check_branch
        %329 = sbr.rel (%p327) target = $region40
      $region39: #{tam_forward.6} parent=35 // pred_region
        %vm330 = vcmask 64512
        %331 = vst.msk [vmem:[#allocation2] sm:$0xff] %vm330, 0.0
        %332 = vst.msk [vmem:[#allocation3] sm:$0xff] %vm330, 0.0
      $region40: #{tam_forward.6} parent=35 // pred_fallthru
        _
      %v333 = vld [vmem:[%s290] sm:$0xff]
      %v334 = vld [vmem:[#allocation2] sm:$0xff]
      %v335 = vld [vmem:[#allocation3] sm:$0xff]
      %v336 = vld [vmem:[%s300] sm:$0xff]
      %v337 = vld [vmem:[%s300 + $0x8] sm:$0xff]
      %v338 = vld [vmem:[%s304] sm:$0xff]
      %vm339 = vcmask 64512
      %v341 = vsel %vm339, %v334, 0
      %343 = vmatprep.subr.mxu0 0.0
      %344 = vmatpush1.msra.mxu0 %v338
      %345 = vmatprep.subr.mxu0 0.0
      %346 = vmatpush1.msra.mxu0 0.0
      %347 = vmatprep.subr.mxu0 0.0
      %348 = vmatpush1.msra.mxu0 0.0
      %349 = vmatprep.subr.mxu0 0.0
      %350 = vmatpush1.msra.mxu0 0.0
      %351 = vmatprep.subr.mxu0 0.0
      %352 = vmatpush1.msra.mxu0 0.0
      %353 = vmatprep.subr.mxu0 0.0
      %354 = vmatpush1.msra.mxu0 0.0
      %355 = vmatprep.subr.mxu0 0.0
      %356 = vmatpush1.msra.mxu0 0.0
      %357 = vmatprep.subr.mxu0 0.0
      %358 = vmatpush1.msra.mxu0 0.0
      %359 = vmatprep.subr.mxu0 0.0
      %360 = vmatpush1.msra.mxu0 0.0
      %361 = vmatprep.subr.mxu0 0.0
      %362 = vmatpush1.msra.mxu0 0.0
      %363 = vmatprep.subr.mxu0 0.0
      %364 = vmatpush1.msra.mxu0 0.0
      %365 = vmatprep.subr.mxu0 0.0
      %366 = vmatpush1.msra.mxu0 0.0
      %367 = vmatprep.subr.mxu0 0.0
      %368 = vmatpush1.msra.mxu0 0.0
      %369 = vmatprep.subr.mxu0 0.0
      %370 = vmatpush1.msra.mxu0 0.0
      %371 = vmatprep.subr.mxu0 0.0
      %372 = vmatpush1.msra.mxu0 0.0
      %373 = vmatprep.subr.mxu0 0.0
      %374 = vmatpush1.msra.mxu0 0.0
      %375 = vmatprep.subr.mxu0 0.0
      %376 = vmatpush1.msra.mxu0 0.0
      %377 = vmatprep.subr.mxu0 0.0
      %378 = vmatpush1.msra.mxu0 0.0
      %379 = vmatprep.subr.mxu0 0.0
      %380 = vmatpush1.msra.mxu0 0.0
      %381 = vmatprep.subr.mxu0 0.0
      %382 = vmatpush1.msra.mxu0 0.0
      %383 = vmatprep.subr.mxu0 0.0
      %384 = vmatpush1.msra.mxu0 0.0
      %385 = vmatprep.subr.mxu0 0.0
      %386 = vmatpush1.msra.mxu0 0.0
      %387 = vmatprep.subr.mxu0 0.0
      %388 = vmatpush1.msra.mxu0 0.0
      %389 = vmatprep.subr.mxu0 0.0
      %390 = vmatpush1.msra.mxu0 0.0
      %391 = vmatprep.subr.mxu0 0.0
      %392 = vmatpush1.msra.mxu0 0.0
      %393 = vmatprep.subr.mxu0 0.0
      %394 = vmatpush1.msra.mxu0 0.0
      %395 = vmatprep.subr.mxu0 0.0
      %396 = vmatpush1.msra.mxu0 0.0
      %397 = vmatprep.subr.mxu0 0.0
      %398 = vmatpush1.msra.mxu0 0.0
      %399 = vmatprep.subr.mxu0 0.0
      %400 = vmatpush1.msra.mxu0 0.0
      %401 = vmatprep.subr.mxu0 0.0
      %402 = vmatpush1.msra.mxu0 0.0
      %403 = vmatprep.subr.mxu0 0.0
      %404 = vmatpush1.msra.mxu0 0.0
      %405 = vmatprep.subr.mxu0 0.0
      %406 = vmatpush1.msra.mxu0 0.0
      %407 = vmatprep.mubr.f32.mxu0 0.0
      %408 = vmatmul.mubr.f32.gmra.mrb[0].mxu0 %v341
      %v409 = vpop.f32.mrb[0].mxu0
      %v410 = vadd.f32 0.0, %v409
      %v411 = vpop.f32.mrb[0].mxu0
      %412 = vdwg.mxu0
      %vm413 = vcmask 130048
      %v415 = vsel %vm413, %v333, 0
      %417 = vmatprep.subr.mxu0 0.0
      %418 = vmatpush1.msra.mxu0 %v336
      %419 = vmatprep.subr.mxu0 0.0
      %420 = vmatpush1.msra.mxu0 %v337
      %421 = vmatprep.subr.mxu0 0.0
      %422 = vmatpush1.msra.mxu0 0.0
      %423 = vmatprep.subr.mxu0 0.0
      %424 = vmatpush1.msra.mxu0 0.0
      %425 = vmatprep.subr.mxu0 0.0
      %426 = vmatpush1.msra.mxu0 0.0
      %427 = vmatprep.subr.mxu0 0.0
      %428 = vmatpush1.msra.mxu0 0.0
      %429 = vmatprep.subr.mxu0 0.0
      %430 = vmatpush1.msra.mxu0 0.0
      %431 = vmatprep.subr.mxu0 0.0
      %432 = vmatpush1.msra.mxu0 0.0
      %433 = vmatprep.subr.mxu0 0.0
      %434 = vmatpush1.msra.mxu0 0.0
      %435 = vmatprep.subr.mxu0 0.0
      %436 = vmatpush1.msra.mxu0 0.0
      %437 = vmatprep.subr.mxu0 0.0
      %438 = vmatpush1.msra.mxu0 0.0
      %439 = vmatprep.subr.mxu0 0.0
      %440 = vmatpush1.msra.mxu0 0.0
      %441 = vmatprep.subr.mxu0 0.0
      %442 = vmatpush1.msra.mxu0 0.0
      %443 = vmatprep.subr.mxu0 0.0
      %444 = vmatpush1.msra.mxu0 0.0
      %445 = vmatprep.subr.mxu0 0.0
      %446 = vmatpush1.msra.mxu0 0.0
      %447 = vmatprep.subr.mxu0 0.0
      %448 = vmatpush1.msra.mxu0 0.0
      %449 = vmatprep.subr.mxu0 0.0
      %450 = vmatpush1.msra.mxu0 0.0
      %451 = vmatprep.subr.mxu0 0.0
      %452 = vmatpush1.msra.mxu0 0.0
      %453 = vmatprep.subr.mxu0 0.0
      %454 = vmatpush1.msra.mxu0 0.0
      %455 = vmatprep.subr.mxu0 0.0
      %456 = vmatpush1.msra.mxu0 0.0
      %457 = vmatprep.subr.mxu0 0.0
      %458 = vmatpush1.msra.mxu0 0.0
      %459 = vmatprep.subr.mxu0 0.0
      %460 = vmatpush1.msra.mxu0 0.0
      %461 = vmatprep.subr.mxu0 0.0
      %462 = vmatpush1.msra.mxu0 0.0
      %463 = vmatprep.subr.mxu0 0.0
      %464 = vmatpush1.msra.mxu0 0.0
      %465 = vmatprep.subr.mxu0 0.0
      %466 = vmatpush1.msra.mxu0 0.0
      %467 = vmatprep.subr.mxu0 0.0
      %468 = vmatpush1.msra.mxu0 0.0
      %469 = vmatprep.subr.mxu0 0.0
      %470 = vmatpush1.msra.mxu0 0.0
      %471 = vmatprep.subr.mxu0 0.0
      %472 = vmatpush1.msra.mxu0 0.0
      %473 = vmatprep.subr.mxu0 0.0
      %474 = vmatpush1.msra.mxu0 0.0
      %475 = vmatprep.subr.mxu0 0.0
      %476 = vmatpush1.msra.mxu0 0.0
      %477 = vmatprep.subr.mxu0 0.0
      %478 = vmatpush1.msra.mxu0 0.0
      %479 = vmatprep.subr.mxu0 0.0
      %480 = vmatpush1.msra.mxu0 0.0
      %481 = vmatprep.mubr.f32.mxu0 0.0
      %482 = vmatmul.mubr.f32.gmra.mrb[0].mxu0 %v415
      %v483 = vpop.f32.mrb[0].mxu0
      %v484 = vadd.f32 %v410, %v483
      %v485 = vpop.f32.mrb[0].mxu0
      %486 = vdwg.mxu0
      %v487 = vld [vmem:[%s307] sm:$0x1]
      %v489 = vlaneseq
      %v490 = vshrl.u32 %v489, 7
      %v491 = vsub.s32 0, %v490
      %v492 = vrot.slane %v487, %v491
      %v494 = vadd.f32 %v484, %v492
      %v495 = vxor.u32 %v494, 2147483648
      %v496 = vmul.f32 %v495, 1.442695
      %v497 = vpow.pop %v496
      %v498 = vadd.f32 %v497, 1.0
      %v499 = vrcp.pop %v498
      %v500 = vmul.f32 1.0, %v499
      %v501 = vtanh.pop %v494
      %503 = vrot.lane.b32.xlu0 %v335, 8
      %v504 = vpop.permute.xlu0 %503
      %v506 = vmul.f32 %v500, %v504
      %508 = vrot.lane.b32.xlu0 %v501, 112
      %v509 = vpop.permute.xlu0 %508
      %v511 = vmul.f32 %v500, %v509
      %513 = vrot.lane.b32.xlu0 %v511, 8
      %v514 = vpop.permute.xlu0 %513
      %v516 = vadd.f32 %v506, %v514
      %v517 = vtanh.pop %v516
      %519 = vrot.lane.b32.xlu0 %v517, 16
      %v520 = vpop.permute.xlu0 %519
      %v522 = vmul.f32 %v500, %v520
      %524 = vrot.lane.b32.xlu0 %v522, 104
      %v525 = vpop.permute.xlu0 %524
      %527 = vst.msk [vmem:[#allocation2] sm:$0xff] %vm339, %v525
      %529 = vrot.lane.b32.xlu0 %v516, 120
      %v530 = vpop.permute.xlu0 %529
      %532 = vst.msk [vmem:[#allocation3] sm:$0xff] %vm339, %v530
      %533 = vst.msk [vmem:[%s320] sm:$0xff] %vm339, %v525
      %s534 = ssub.s32 1, %s19
      %s535 = smul.u32 %s534, %s20
      %s536 = ssub.s32 5, %s20
      %s537 = smul.u32 %s19, %s536
      %s538 = sadd.s32 %s535, %s537
      %p539 = scmp.lt.s32.totalorder %s19, 1
      %s540 = scalar_select %p539, %s19, 1
      %p541 = scmp.lt.s32.totalorder %s538, 5
      %s542 = scalar_select %p541, %s538, 5
      %s543 = smul.addr %s540, 6
      %s544 = sadd.s32 %s542, %s543
      %s545 = smul.addr %s544, 8
      %s546 = scalar_lea.vmem %s4, %s545
      // Predicated region
      $region41: #{tam_forward.6} parent=35 // pred_check
        %p547 = pneg %p171
      $region42: #{tam_forward.6} parent=35 // pred_check_branch
        %549 = sbr.rel (%p547) target = $region44
      $region43: #{tam_forward.6} parent=35 // pred_region
        %s550 = ssub.s32 1, %s19
        %s551 = smul.u32 %s550, %s20
        %s552 = ssub.s32 5, %s20
        %s553 = smul.u32 %s19, %s552
        %s554 = sadd.s32 %s551, %s553
      $region44: #{tam_forward.6} parent=35 // pred_fallthru
        _
    $region36: #{tam_forward.6} parent=5 // pred_fallthru
      _
    %p555 = scmp.le.s32.totalorder 2, %s10
    // Predicated region
    $region45: #{tam_forward.6} parent=5 // pred_check
      %p556 = pneg %p555
    $region46: #{tam_forward.6} parent=5 // pred_check_branch
      %558 = sbr.rel (%p556) target = $region48
    $region47: #{tam_forward.6} parent=5 // pred_region
      %s559 = ssub.s32 %s10, 2
      // Predicated region
      $region49: #{tam_forward.6} parent=47 // pred_check
        %p560 = pneg %p177
      $region50: #{tam_forward.6} parent=47 // pred_check_branch
        %562 = sbr.rel (%p560) target = $region52
      $region51: #{tam_forward.6} parent=47 // pred_region
        %s563 = ssub.s32 1, %s21
        %s564 = smul.u32 %s563, %s22
        %s565 = ssub.s32 5, %s22
        %s566 = smul.u32 %s21, %s565
        %s567 = sadd.s32 %s564, %s566
        %p568 = scmp.lt.s32.totalorder %s21, 1
        %s569 = scalar_select %p568, %s21, 1
        %p570 = scmp.lt.s32.totalorder %s567, 5
        %s571 = scalar_select %p570, %s567, 5
        %s572 = smul.addr %s569, 6
        %s573 = sadd.s32 %s571, %s572
        %s574 = smul.addr %s573, 8
        %s575 = scalar_lea.vmem %s4, %s574
      $region52: #{tam_forward.6} parent=47 // pred_fallthru
        _
    $region48: #{tam_forward.6} parent=5 // pred_fallthru
      _
  $region6: #{tam_forward.6} parent=0 // loop_footer
    %s14 = sadd.s32 1, %s10
  $region7: #{tam_forward.6} parent=0 // loop_footer_branch
    %9 = sbr.rel target = $region3
  $region8: #{tam_forward.6} parent=0 // loop_exit
    _

// kernel: tam_forward.8
$region0: #{tam_forward.8}
  #allocation0 [shape = 'u32[]', space=smem, size = 0x4, offset = 0x4, fixed_abs, tag = 'smem constant byte address 0x4 - core index']
  #allocation1 [shape = 'u32[144,128]{1,0:T(1,128)}', space=vmem, size = 0x12000, scoped, tag = 'internal scratch']
  #allocation2 [shape = 'f32[1,16]{1,0:T(1,128)}', space=vmem, size = 0x200, scoped, tag = 'scratch operand']
  #allocation3 [shape = 'f32[1,16]{1,0:T(1,128)}', space=vmem, size = 0x200, scoped, tag = 'scratch operand']
  %s0 = inlined_call_operand.vmem [shape: f32[8,1,16], index: 0, kind: input, shape index: {}]
  %s1 = inlined_call_operand.vmem [shape: f32[2,16,64], index: 1, kind: input, shape index: {}]
  %s2 = inlined_call_operand.vmem [shape: f32[2,16,64], index: 2, kind: input, shape index: {}]
  %s3 = inlined_call_operand.vmem [shape: f32[2,1,64], index: 3, kind: input, shape index: {}]
  %s4 = inlined_call_operand.vmem [shape: f32[2,8,1,16], index: 4, kind: output, shape index: {}]
  %s5 = sld [smem:[#allocation0]]
  $region53: #{tam_forward.8} parent=0
    _
  %s7 = ssub.s32 1, %s5
  %s8 = scalar_select 0, %s7, %s5
  loop: start=0, step=1, limit=18
  $region2: #{tam_forward.8} parent=0 // loop_pre_header
    _
  $region3: #{tam_forward.8} parent=0 // loop_header
    %s10 = sphi 0, %s14
    %p11 = scmp.ge.s32.totalorder %s10, 18
    %s17 = sphi 0, %s29
    %s18 = sphi 0, %s25
    %s19 = sphi 0, %s17
    %s20 = sphi 0, %s18
    %s21 = sphi 0, %s19
    %s22 = sphi 0, %s20
    %s42 = sphi 0, %s44
    %s45 = sphi 0, %s42
    %s46 = sphi 0, %s45
    %s62 = sphi 0, %s46
    %s68 = sphi 0, %s70
    %s71 = sphi 0, %s68
    %s72 = sphi 0, %s71
    %s88 = sphi 0, %s72
    %s94 = sphi 0, %s96
    %s97 = sphi 0, %s94
    %s98 = sphi 0, %s97
    %s114 = sphi 0, %s98
    %s120 = sphi 0, %s122
    %s123 = sphi 0, %s120
    %s124 = sphi 0, %s123
    %s140 = sphi 0, %s124
    %s158 = sphi 0, %s160
    %s161 = sphi 0, %s158
    %s162 = sphi 0, %s161
    %s178 = sphi 0, %s162
  $region4: #{tam_forward.8} parent=0 // loop_header_branch
    %13 = sbr.rel (%p11) target = $region8
  $region5: #{tam_forward.8} parent=0 // loop_body
    %s15 = ssub.s32 %s10, 1
    %s16 = ssub.s32 %s10, 2
    %s23 = sadd.s32 1, %s18
    %p24 = scmp.ge.s32.totalorder %s23, 8
    %s25 = scalar_select %p24, 0, %s23
    %s26 = sadd.s32 1, %s17
    %s27 = scalar_select %p24, %s26, %s17
    %p28 = scmp.ge.s32.totalorder %s27, 2
    %s29 = scalar_select %p28, 0, %s27
    %s30 = ssub.s32 1, %s17
    %s31 = smul.u32 %s30, %s18
    %s32 = ssub.s32 7, %s18
    %s33 = smul.u32 %s17, %s32
    %s34 = sadd.s32 %s31, %s33
    %s35 = ssub.s32 1, %s29
    %s36 = smul.u32 %s35, %s25
    %s37 = ssub.s32 7, %s25
    %s38 = smul.u32 %s29, %s37
    %s39 = sadd.s32 %s36, %s38
    %s40 = ssub.s32 %s34, %s39
    %p41 = scmp.eq.s32.totalorder %s40, 0
    %s43 = sadd.s32 %s42, 1
    %s44 = scalar_select %p41, %s42, %s43
    %p47 = pneg %p41
    %p48 = scmp.eq.s32.totalorder %s10, 15
    %p49 = por %p47, %p48
    %p50 = scmp.ne.s32.totalorder %s42, %s45
    %p51 = scmp.eq.s32.totalorder %s10, 0
    %p52 = por %p50, %p51
    %p53 = scmp.ne.s32.totalorder %s42, %s45
    %p54 = scmp.eq.s32.totalorder %s15, 15
    %p55 = por %p53, %p54
    %p56 = scmp.ne.s32.totalorder %s45, %s46
    %p57 = scmp.eq.s32.totalorder %s15, 0
    %p58 = por %p56, %p57
    %p59 = scmp.ne.s32.totalorder %s45, %s46
    %p60 = scmp.eq.s32.totalorder %s16, 15
    %p61 = por %p59, %p60
    %p63 = scmp.ne.s32.totalorder %s46, %s62
    %p64 = scmp.eq.s32.totalorder %s16, 0
    %p65 = por %p63, %p64
    %s66 = ssub.s32 %s17, %s29
    %p67 = scmp.eq.s32.totalorder %s66, 0
    %s69 = sadd.s32 %s68, 1
    %s70 = scalar_select %p67, %s68, %s69
    %p73 = pneg %p67
    %p74 = scmp.eq.s32.totalorder %s10, 15
    %p75 = por %p73, %p74
    %p76 = scmp.ne.s32.totalorder %s68, %s71
    %p77 = scmp.eq.s32.totalorder %s10, 0
    %p78 = por %p76, %p77
    %p79 = scmp.ne.s32.totalorder %s68, %s71
    %p80 = scmp.eq.s32.totalorder %s15, 15
    %p81 = por %p79, %p80
    %p82 = scmp.ne.s32.totalorder %s71, %s72
    %p83 = scmp.eq.s32.totalorder %s15, 0
    %p84 = por %p82, %p83
    %p85 = scmp.ne.s32.totalorder %s71, %s72
    %p86 = scmp.eq.s32.totalorder %s16, 15
    %p87 = por %p85, %p86
    %p89 = scmp.ne.s32.totalorder %s72, %s88
    %p90 = scmp.eq.s32.totalorder %s16, 0
    %p91 = por %p89, %p90
    %s92 = ssub.s32 %s17, %s29
    %p93 = scmp.eq.s32.totalorder %s92, 0
    %s95 = sadd.s32 %s94, 1
    %s96 = scalar_select %p93, %s94, %s95
    %p99 = pneg %p93
    %p100 = scmp.eq.s32.totalorder %s10, 15
    %p101 = por %p99, %p100
    %p102 = scmp.ne.s32.totalorder %s94, %s97
    %p103 = scmp.eq.s32.totalorder %s10, 0
    %p104 = por %p102, %p103
    %p105 = scmp.ne.s32.totalorder %s94, %s97
    %p106 = scmp.eq.s32.totalorder %s15, 15
    %p107 = por %p105, %p106
    %p108 = scmp.ne.s32.totalorder %s97, %s98
    %p109 = scmp.eq.s32.totalorder %s15, 0
    %p110 = por %p108, %p109
    %p111 = scmp.ne.s32.totalorder %s97, %s98
    %p112 = scmp.eq.s32.totalorder %s16, 15
    %p113 = por %p111, %p112
    %p115 = scmp.ne.s32.totalorder %s98, %s114
    %p116 = scmp.eq.s32.totalorder %s16, 0
    %p117 = por %p115, %p116
    %s118 = ssub.s32 %s17, %s29
    %p119 = scmp.eq.s32.totalorder %s118, 0
    %s121 = sadd.s32 %s120, 1
    %s122 = scalar_select %p119, %s120, %s121
    %p125 = pneg %p119
    %p126 = scmp.eq.s32.totalorder %s10, 15
    %p127 = por %p125, %p126
    %p128 = scmp.ne.s32.totalorder %s120, %s123
    %p129 = scmp.eq.s32.totalorder %s10, 0
    %p130 = por %p128, %p129
    %p131 = scmp.ne.s32.totalorder %s120, %s123
    %p132 = scmp.eq.s32.totalorder %s15, 15
    %p133 = por %p131, %p132
    %p134 = scmp.ne.s32.totalorder %s123, %s124
    %p135 = scmp.eq.s32.totalorder %s15, 0
    %p136 = por %p134, %p135
    %p137 = scmp.ne.s32.totalorder %s123, %s124
    %p138 = scmp.eq.s32.totalorder %s16, 15
    %p139 = por %p137, %p138
    %p141 = scmp.ne.s32.totalorder %s124, %s140
    %p142 = scmp.eq.s32.totalorder %s16, 0
    %p143 = por %p141, %p142
    %s144 = ssub.s32 1, %s17
    %s145 = smul.u32 %s144, %s18
    %s146 = ssub.s32 7, %s18
    %s147 = smul.u32 %s17, %s146
    %s148 = sadd.s32 %s145, %s147
    %s149 = ssub.s32 1, %s29
    %s150 = smul.u32 %s149, %s25
    %s151 = ssub.s32 7, %s25
    %s152 = smul.u32 %s29, %s151
    %s153 = sadd.s32 %s150, %s152
    %s154 = ssub.s32 %s17, %s29
    %s155 = ssub.s32 %s148, %s153
    %s156 = sor.u32 %s154, %s155
    %p157 = scmp.eq.s32.totalorder %s156, 0
    %s159 = sadd.s32 %s158, 1
    %s160 = scalar_select %p157, %s158, %s159
    %p163 = pneg %p157
    %p164 = scmp.eq.s32.totalorder %s10, 15
    %p165 = por %p163, %p164
    %p166 = scmp.ne.s32.totalorder %s158, %s161
    %p167 = scmp.eq.s32.totalorder %s10, 0
    %p168 = por %p166, %p167
    %p169 = scmp.ne.s32.totalorder %s158, %s161
    %p170 = scmp.eq.s32.totalorder %s15, 15
    %p171 = por %p169, %p170
    %p172 = scmp.ne.s32.totalorder %s161, %s162
    %p173 = scmp.eq.s32.totalorder %s15, 0
    %p174 = por %p172, %p173
    %p175 = scmp.ne.s32.totalorder %s161, %s162
    %p176 = scmp.eq.s32.totalorder %s16, 15
    %p177 = por %p175, %p176
    %p179 = scmp.ne.s32.totalorder %s162, %s178
    %p180 = scmp.eq.s32.totalorder %s16, 0
    %p181 = por %p179, %p180
    %p182 = scmp.le.s32.totalorder 1, %s10
    %p183 = scmp.lt.s32.totalorder %s10, 17
    %p184 = pnand %p182, %p183
    %p185 = pneg %p184
    // Predicated region
    $region9: #{tam_forward.8} parent=5 // pred_check
      _
    $region10: #{tam_forward.8} parent=5 // pred_check_branch
      %187 = sbr.rel (%p184) target = $region12
    $region11: #{tam_forward.8} parent=5 // pred_region
      %s188 = ssub.s32 %s10, 1
    $region12: #{tam_forward.8} parent=5 // pred_fallthru
      _
    %p189 = scmp.lt.s32.totalorder %s10, 16
    // Predicated region
    $region13: #{tam_forward.8} parent=5 // pred_check
      %p190 = pneg %p189
    $region14: #{tam_forward.8} parent=5 // pred_check_branch
      %192 = sbr.rel (%p190) target = $region16
    $region15: #{tam_forward.8} parent=5 // pred_region
      // Predicated region
      $region17: #{tam_forward.8} parent=15 // pred_check
        %p193 = pneg %p52
      $region18: #{tam_forward.8} parent=15 // pred_check_branch
        %195 = sbr.rel (%p193) target = $region20
      $region19: #{tam_forward.8} parent=15 // pred_region
        %s196 = ssub.s32 1, %s17
        %s197 = smul.u32 %s196, %s18
        %s198 = ssub.s32 7, %s18
        %s199 = smul.u32 %s17, %s198
        %s200 = sadd.s32 %s197, %s199
        %p201 = scmp.lt.s32.totalorder %s200, 7
        %s202 = scalar_select %p201, %s200, 7
        %s203 = scalar_lea.vmem %s0, %s202
        %s204 = ssub.s32 1, %s17
        %s205 = smul.u32 %s204, %s18
        %s206 = ssub.s32 7, %s18
        %s207 = smul.u32 %s17, %s206
        %s208 = sadd.s32 %s205, %s207
      $region20: #{tam_forward.8} parent=15 // pred_fallthru
        _
      // Predicated region
      $region21: #{tam_forward.8} parent=15 // pred_check
        %p209 = pneg %p78
      $region22: #{tam_forward.8} parent=15 // pred_check_branch
        %211 = sbr.rel (%p209) target = $region24
      $region23: #{tam_forward.8} parent=15 // pred_region
        %p212 = scmp.lt.s32.totalorder %s17, 1
        %s213 = scalar_select %p212, %s17, 1
        %s214 = smul.addr %s213, 2
        %s215 = smul.addr %s214, 8
        %s216 = scalar_lea.vmem %s1, %s215
      $region24: #{tam_forward.8} parent=15 // pred_fallthru
        _
      // Predicated region
      $region25: #{tam_forward.8} parent=15 // pred_check
        %p217 = pneg %p104
      $region26: #{tam_forward.8} parent=15 // pred_check_branch
        %219 = sbr.rel (%p217) target = $region28
      $region27: #{tam_forward.8} parent=15 // pred_region
        %p220 = scmp.lt.s32.totalorder %s17, 1
        %s221 = scalar_select %p220, %s17, 1
        %s222 = smul.addr %s221, 2
        %s223 = smul.addr %s222, 8
        %s224 = scalar_lea.vmem %s2, %s223
      $region28: #{tam_forward.8} parent=15 // pred_fallthru
        _
      // Predicated region
      $region29: #{tam_forward.8} parent=15 // pred_check
        %p225 = pneg %p130
      $region30: #{tam_forward.8} parent=15 // pred_check_branch
        %227 = sbr.rel (%p225) target = $region32
      $region31: #{tam_forward.8} parent=15 // pred_region
        %p228 = scmp.lt.s32.totalorder %s17, 1
        %s229 = scalar_select %p228, %s17, 1
        %s230 = scalar_lea.vmem %s3, %s229
      $region32: #{tam_forward.8} parent=15 // pred_fallthru
        _
    $region16: #{tam_forward.8} parent=5 // pred_fallthru
      _
    %p231 = scmp.le.s32.totalorder 1, %s10
    %p232 = scmp.lt.s32.totalorder %s10, 17
    %p233 = pnand %p231, %p232
    %p234 = pneg %p233
    // Predicated region
    $region33: #{tam_forward.8} parent=5 // pred_check
      _
    $region34: #{tam_forward.8} parent=5 // pred_check_branch
      %236 = sbr.rel (%p233) target = $region36
    $region35: #{tam_forward.8} parent=5 // pred_region
      %s237 = ssub.s32 %s10, 1
      %s238 = ssub.s32 1, %s19
      %s239 = smul.u32 %s238, %s20
      %s240 = ssub.s32 7, %s20
      %s241 = smul.u32 %s19, %s240
      %s242 = sadd.s32 %s239, %s241
      %p243 = scmp.lt.s32.totalorder %s242, 7
      %s244 = scalar_select %p243, %s242, 7
      %s245 = scalar_lea.vmem %s0, %s244
      %p246 = pneg %p58
      %p247 = pneg %p55
      %p248 = scmp.lt.s32.totalorder %s19, 1
      %s249 = scalar_select %p248, %s19, 1
      %s250 = smul.addr %s249, 2
      %s251 = smul.addr %s250, 8
      %s252 = scalar_lea.vmem %s1, %s251
      %p253 = pneg %p84
      %p254 = pneg %p81
      %p255 = scmp.lt.s32.totalorder %s19, 1
      %s256 = scalar_select %p255, %s19, 1
      %s257 = smul.addr %s256, 2
      %s258 = smul.addr %s257, 8
      %s259 = scalar_lea.vmem %s2, %s258
      %p260 = pneg %p110
      %p261 = pneg %p107
      %p262 = scmp.lt.s32.totalorder %s19, 1
      %s263 = scalar_select %p262, %s19, 1
      %s264 = scalar_lea.vmem %s3, %s263
      %p265 = pneg %p136
      %p266 = pneg %p133
      %p267 = pneg %p174
      %p268 = pneg %p171
      %s269 = ssub.s32 1, %s19
      %s270 = smul.u32 %s269, %s20
      %s271 = ssub.s32 7, %s20
      %s272 = smul.u32 %s19, %s271
      %s273 = sadd.s32 %s270, %s272
      %p274 = scmp.lt.s32.totalorder %s19, 1
      %s275 = scalar_select %p274, %s19, 1
      %p276 = scmp.lt.s32.totalorder %s273, 7
      %s277 = scalar_select %p276, %s273, 7
      %s278 = smul.addr %s275, 8
      %s279 = sadd.s32 %s277, %s278
      %s280 = scalar_lea.vmem %s4, %s279
      %s281 = ssub.s32 1, %s19
      %s282 = smul.u32 %s281, %s20
      %s283 = ssub.s32 7, %s20
      %s284 = smul.u32 %s19, %s283
      %s285 = sadd.s32 %s282, %s284
      %p286 = scmp.lt.s32.totalorder %s285, 7
      %s287 = scalar_select %p286, %s285, 7
      %s288 = scalar_lea.vmem %s0, %s287
      %s289 = ssub.s32 1, %s19
      %s290 = smul.u32 %s289, %s20
      %s291 = ssub.s32 7, %s20
      %s292 = smul.u32 %s19, %s291
      %s293 = sadd.s32 %s290, %s292
      %p294 = scmp.lt.s32.totalorder %s19, 1
      %s295 = scalar_select %p294, %s19, 1
      %s296 = smul.addr %s295, 2
      %s297 = smul.addr %s296, 8
      %s298 = scalar_lea.vmem %s1, %s297
      %p299 = scmp.lt.s32.totalorder %s19, 1
      %s300 = scalar_select %p299, %s19, 1
      %s301 = smul.addr %s300, 2
      %s302 = smul.addr %s301, 8
      %s303 = scalar_lea.vmem %s2, %s302
      %p304 = scmp.lt.s32.totalorder %s19, 1
      %s305 = scalar_select %p304, %s19, 1
      %s306 = scalar_lea.vmem %s3, %s305
      %s307 = ssub.s32 1, %s19
      %s308 = smul.u32 %s307, %s20
      %s309 = ssub.s32 7, %s20
      %s310 = smul.u32 %s19, %s309
      %s311 = sadd.s32 %s308, %s310
      %p312 = scmp.lt.s32.totalorder %s19, 1
      %s313 = scalar_select %p312, %s19, 1
      %p314 = scmp.lt.s32.totalorder %s311, 7
      %s315 = scalar_select %p314, %s311, 7
      %s316 = smul.addr %s313, 8
      %s317 = sadd.s32 %s315, %s316
      %s318 = scalar_lea.vmem %s4, %s317
      %s319 = ssub.s32 1, %s19
      %s320 = smul.u32 %s319, %s20
      %s321 = ssub.s32 7, %s20
      %s322 = smul.u32 %s19, %s321
      %s323 = sadd.s32 %s320, %s322
      %p324 = scmp.eq.s32.totalorder %s20, 0
      // Predicated region
      $region37: #{tam_forward.8} parent=35 // pred_check
        %p325 = pneg %p324
      $region38: #{tam_forward.8} parent=35 // pred_check_branch
        %327 = sbr.rel (%p325) target = $region40
      $region39: #{tam_forward.8} parent=35 // pred_region
        %vm328 = vcmask 122880
        %329 = vst.msk [vmem:[#allocation2] sm:$0x1] %vm328, 0.0
        %330 = vst.msk [vmem:[#allocation3] sm:$0x1] %vm328, 0.0
      $region40: #{tam_forward.8} parent=35 // pred_fallthru
        _
      %v331 = vld [vmem:[%s288] sm:$0x1]
      %v332 = vld [vmem:[#allocation2] sm:$0x1]
      %v333 = vld [vmem:[#allocation3] sm:$0x1]
      %v334 = vld [vmem:[%s298] sm:$0xff]
      %v335 = vld [vmem:[%s298 + $0x8] sm:$0xff]
      %v336 = vld [vmem:[%s303] sm:$0xff]
      %v337 = vld [vmem:[%s303 + $0x8] sm:$0xff]
      %vm338 = vcmask 130048
      %v340 = vsel %vm338, %v332, 0
      %342 = vmatprep.subr.mxu0 0.0
      %343 = vmatpush1.msra.mxu0 %v336
      %344 = vmatprep.subr.mxu0 0.0
      %345 = vmatpush1.msra.mxu0 %v337
      %346 = vmatprep.subr.mxu0 0.0
      %347 = vmatpush1.msra.mxu0 0.0
      %348 = vmatprep.subr.mxu0 0.0
      %349 = vmatpush1.msra.mxu0 0.0
      %350 = vmatprep.subr.mxu0 0.0
      %351 = vmatpush1.msra.mxu0 0.0
      %352 = vmatprep.subr.mxu0 0.0
      %353 = vmatpush1.msra.mxu0 0.0
      %354 = vmatprep.subr.mxu0 0.0
      %355 = vmatpush1.msra.mxu0 0.0
      %356 = vmatprep.subr.mxu0 0.0
      %357 = vmatpush1.msra.mxu0 0.0
      %358 = vmatprep.subr.mxu0 0.0
      %359 = vmatpush1.msra.mxu0 0.0
      %360 = vmatprep.subr.mxu0 0.0
      %361 = vmatpush1.msra.mxu0 0.0
      %362 = vmatprep.subr.mxu0 0.0
      %363 = vmatpush1.msra.mxu0 0.0
      %364 = vmatprep.subr.mxu0 0.0
      %365 = vmatpush1.msra.mxu0 0.0
      %366 = vmatprep.subr.mxu0 0.0
      %367 = vmatpush1.msra.mxu0 0.0
      %368 = vmatprep.subr.mxu0 0.0
      %369 = vmatpush1.msra.mxu0 0.0
      %370 = vmatprep.subr.mxu0 0.0
      %371 = vmatpush1.msra.mxu0 0.0
      %372 = vmatprep.subr.mxu0 0.0
      %373 = vmatpush1.msra.mxu0 0.0
      %374 = vmatprep.subr.mxu0 0.0
      %375 = vmatpush1.msra.mxu0 0.0
      %376 = vmatprep.subr.mxu0 0.0
      %377 = vmatpush1.msra.mxu0 0.0
      %378 = vmatprep.subr.mxu0 0.0
      %379 = vmatpush1.msra.mxu0 0.0
      %380 = vmatprep.subr.mxu0 0.0
      %381 = vmatpush1.msra.mxu0 0.0
      %382 = vmatprep.subr.mxu0 0.0
      %383 = vmatpush1.msra.mxu0 0.0
      %384 = vmatprep.subr.mxu0 0.0
      %385 = vmatpush1.msra.mxu0 0.0
      %386 = vmatprep.subr.mxu0 0.0
      %387 = vmatpush1.msra.mxu0 0.0
      %388 = vmatprep.subr.mxu0 0.0
      %389 = vmatpush1.msra.mxu0 0.0
      %390 = vmatprep.subr.mxu0 0.0
      %391 = vmatpush1.msra.mxu0 0.0
      %392 = vmatprep.subr.mxu0 0.0
      %393 = vmatpush1.msra.mxu0 0.0
      %394 = vmatprep.subr.mxu0 0.0
      %395 = vmatpush1.msra.mxu0 0.0
      %396 = vmatprep.subr.mxu0 0.0
      %397 = vmatpush1.msra.mxu0 0.0
      %398 = vmatprep.subr.mxu0 0.0
      %399 = vmatpush1.msra.mxu0 0.0
      %400 = vmatprep.subr.mxu0 0.0
      %401 = vmatpush1.msra.mxu0 0.0
      %402 = vmatprep.subr.mxu0 0.0
      %403 = vmatpush1.msra.mxu0 0.0
      %404 = vmatprep.subr.mxu0 0.0
      %405 = vmatpush1.msra.mxu0 0.0
      %406 = vmatprep.mubr.f32.mxu0 0.0
      %407 = vmatmul.mubr.f32.gmra.mrb[0].mxu0 %v340
      %v408 = vpop.f32.mrb[0].mxu0
      %v409 = vadd.f32 0.0, %v408
      %v410 = vpop.f32.mrb[0].mxu0
      %411 = vdwg.mxu0
      %v413 = vsel %vm338, %v331, 0
      %415 = vmatprep.subr.mxu0 0.0
      %416 = vmatpush1.msra.mxu0 %v334
      %417 = vmatprep.subr.mxu0 0.0
      %418 = vmatpush1.msra.mxu0 %v335
      %419 = vmatprep.subr.mxu0 0.0
      %420 = vmatpush1.msra.mxu0 0.0
      %421 = vmatprep.subr.mxu0 0.0
      %422 = vmatpush1.msra.mxu0 0.0
      %423 = vmatprep.subr.mxu0 0.0
      %424 = vmatpush1.msra.mxu0 0.0
      %425 = vmatprep.subr.mxu0 0.0
      %426 = vmatpush1.msra.mxu0 0.0
      %427 = vmatprep.subr.mxu0 0.0
      %428 = vmatpush1.msra.mxu0 0.0
      %429 = vmatprep.subr.mxu0 0.0
      %430 = vmatpush1.msra.mxu0 0.0
      %431 = vmatprep.subr.mxu0 0.0
      %432 = vmatpush1.msra.mxu0 0.0
      %433 = vmatprep.subr.mxu0 0.0
      %434 = vmatpush1.msra.mxu0 0.0
      %435 = vmatprep.subr.mxu0 0.0
      %436 = vmatpush1.msra.mxu0 0.0
      %437 = vmatprep.subr.mxu0 0.0
      %438 = vmatpush1.msra.mxu0 0.0
      %439 = vmatprep.subr.mxu0 0.0
      %440 = vmatpush1.msra.mxu0 0.0
      %441 = vmatprep.subr.mxu0 0.0
      %442 = vmatpush1.msra.mxu0 0.0
      %443 = vmatprep.subr.mxu0 0.0
      %444 = vmatpush1.msra.mxu0 0.0
      %445 = vmatprep.subr.mxu0 0.0
      %446 = vmatpush1.msra.mxu0 0.0
      %447 = vmatprep.subr.mxu0 0.0
      %448 = vmatpush1.msra.mxu0 0.0
      %449 = vmatprep.subr.mxu0 0.0
      %450 = vmatpush1.msra.mxu0 0.0
      %451 = vmatprep.subr.mxu0 0.0
      %452 = vmatpush1.msra.mxu0 0.0
      %453 = vmatprep.subr.mxu0 0.0
      %454 = vmatpush1.msra.mxu0 0.0
      %455 = vmatprep.subr.mxu0 0.0
      %456 = vmatpush1.msra.mxu0 0.0
      %457 = vmatprep.subr.mxu0 0.0
      %458 = vmatpush1.msra.mxu0 0.0
      %459 = vmatprep.subr.mxu0 0.0
      %460 = vmatpush1.msra.mxu0 0.0
      %461 = vmatprep.subr.mxu0 0.0
      %462 = vmatpush1.msra.mxu0 0.0
      %463 = vmatprep.subr.mxu0 0.0
      %464 = vmatpush1.msra.mxu0 0.0
      %465 = vmatprep.subr.mxu0 0.0
      %466 = vmatpush1.msra.mxu0 0.0
      %467 = vmatprep.subr.mxu0 0.0
      %468 = vmatpush1.msra.mxu0 0.0
      %469 = vmatprep.subr.mxu0 0.0
      %470 = vmatpush1.msra.mxu0 0.0
      %471 = vmatprep.subr.mxu0 0.0
      %472 = vmatpush1.msra.mxu0 0.0
      %473 = vmatprep.subr.mxu0 0.0
      %474 = vmatpush1.msra.mxu0 0.0
      %475 = vmatprep.subr.mxu0 0.0
      %476 = vmatpush1.msra.mxu0 0.0
      %477 = vmatprep.subr.mxu0 0.0
      %478 = vmatpush1.msra.mxu0 0.0
      %479 = vmatprep.mubr.f32.mxu0 0.0
      %480 = vmatmul.mubr.f32.gmra.mrb[0].mxu0 %v413
      %v481 = vpop.f32.mrb[0].mxu0
      %v482 = vadd.f32 %v409, %v481
      %v483 = vpop.f32.mrb[0].mxu0
      %484 = vdwg.mxu0
      %v485 = vld [vmem:[%s306] sm:$0x1]
      %v486 = vadd.f32 %v482, %v485
      %v487 = vxor.u32 %v486, 2147483648
      %v488 = vmul.f32 %v487, 1.442695
      %v489 = vpow.pop %v488
      %v490 = vadd.f32 %v489, 1.0
      %v491 = vrcp.pop %v490
      %v492 = vmul.f32 1.0, %v491
      %v493 = vtanh.pop %v486
      %v495 = vlaneseq
      %v496 = vshrl.u32 %v495, 7
      %v497 = vsub.s32 0, %v496
      %v498 = vrot.slane %v333, %v497
      %499 = vrot.lane.b32.xlu0 %v498, 16
      %v500 = vpop.permute.xlu0 %499
      %v502 = vmul.f32 %v492, %v500
      %504 = vrot.lane.b32.xlu0 %v493, 96
      %v505 = vpop.permute.xlu0 %504
      %v507 = vmul.f32 %v492, %v505
      %509 = vrot.lane.b32.xlu0 %v507, 16
      %v510 = vpop.permute.xlu0 %509
      %v512 = vadd.f32 %v502, %v510
      %v513 = vtanh.pop %v512
      %515 = vrot.lane.b32.xlu0 %v513, 32
      %v516 = vpop.permute.xlu0 %515
      %v518 = vmul.f32 %v492, %v516
      %520 = vrot.lane.b32.xlu0 %v518, 80
      %v521 = vpop.permute.xlu0 %520
      %vm523 = vcmask 122880
      %524 = vst.msk [vmem:[#allocation2] sm:$0x1] %vm523, %v521
      %526 = vrot.lane.b32.xlu0 %v512, 112
      %v527 = vpop.permute.xlu0 %526
      %529 = vst.msk [vmem:[#allocation3] sm:$0x1] %vm523, %v527
      %530 = vst.msk [vmem:[%s318] sm:$0x1] %vm523, %v521
      %s531 = ssub.s32 1, %s19
      %s532 = smul.u32 %s531, %s20
      %s533 = ssub.s32 7, %s20
      %s534 = smul.u32 %s19, %s533
      %s535 = sadd.s32 %s532, %s534
      %p536 = scmp.lt.s32.totalorder %s19, 1
      %s537 = scalar_select %p536, %s19, 1
      %p538 = scmp.lt.s32.totalorder %s535, 7
      %s539 = scalar_select %p538, %s535, 7
      %s540 = smul.addr %s537, 8
      %s541 = sadd.s32 %s539, %s540
      %s542 = scalar_lea.vmem %s4, %s541
      // Predicated region
      $region41: #{tam_forward.8} parent=35 // pred_check
        %p543 = pneg %p171
      $region42: #{tam_forward.8} parent=35 // pred_check_branch
        %545 = sbr.rel (%p543) target = $region44
      $region43: #{tam_forward.8} parent=35 // pred_region
        %s546 = ssub.s32 1, %s19
        %s547 = smul.u32 %s546, %s20
        %s548 = ssub.s32 7, %s20
        %s549 = smul.u32 %s19, %s548
        %s550 = sadd.s32 %s547, %s549
      $region44: #{tam_forward.8} parent=35 // pred_fallthru
        _
    $region36: #{tam_forward.8} parent=5 // pred_fallthru
      _
    %p551 = scmp.le.s32.totalorder 2, %s10
    // Predicated region
    $region45: #{tam_forward.8} parent=5 // pred_check
      %p552 = pneg %p551
    $region46: #{tam_forward.8} parent=5 // pred_check_branch
      %554 = sbr.rel (%p552) target = $region48
    $region47: #{tam_forward.8} parent=5 // pred_region
      %s555 = ssub.s32 %s10, 2
      // Predicated region
      $region49: #{tam_forward.8} parent=47 // pred_check
        %p556 = pneg %p177
      $region50: #{tam_forward.8} parent=47 // pred_check_branch
        %558 = sbr.rel (%p556) target = $region52
      $region51: #{tam_forward.8} parent=47 // pred_region
        %s559 = ssub.s32 1, %s21
        %s560 = smul.u32 %s559, %s22
        %s561 = ssub.s32 7, %s22
        %s562 = smul.u32 %s21, %s561
        %s563 = sadd.s32 %s560, %s562
        %p564 = scmp.lt.s32.totalorder %s21, 1
        %s565 = scalar_select %p564, %s21, 1
        %p566 = scmp.lt.s32.totalorder %s563, 7
        %s567 = scalar_select %p566, %s563, 7
        %s568 = smul.addr %s565, 8
        %s569 = sadd.s32 %s567, %s568
        %s570 = scalar_lea.vmem %s4, %s569
      $region52: #{tam_forward.8} parent=47 // pred_fallthru
        _
    $region48: #{tam_forward.8} parent=5 // pred_fallthru
      _
  $region6: #{tam_forward.8} parent=0 // loop_footer
    %s14 = sadd.s32 1, %s10
  $region7: #{tam_forward.8} parent=0 // loop_footer_branch
    %9 = sbr.rel target = $region3
  $region8: #{tam_forward.8} parent=0 // loop_exit
    _

// kernel: tam_forward.7
$region0: #{tam_forward.7}
  #allocation0 [shape = 'u32[]', space=smem, size = 0x4, offset = 0x4, fixed_abs, tag = 'smem constant byte address 0x4 - core index']
  #allocation1 [shape = 'u32[144,128]{1,0:T(1,128)}', space=vmem, size = 0x12000, scoped, tag = 'internal scratch']
  %s0 = inlined_call_operand.vmem [shape: f32[8,6,16], index: 0, kind: input, shape index: {}]
  %s1 = inlined_call_operand.vmem [shape: f32[8,6,1], index: 1, kind: input, shape index: {}]
  %s2 = inlined_call_operand.vmem [shape: f32[16,16], index: 2, kind: input, shape index: {}]
  %s3 = inlined_call_operand.vmem [shape: f32[1,16], index: 3, kind: input, shape index: {}]
  %s4 = inlined_call_operand.vmem [shape: f32[16,1], index: 4, kind: input, shape index: {}]
  %s5 = inlined_call_operand.vmem [shape: f32[8,16], index: 5, kind: output, shape index: {}]
  %s6 = sld [smem:[#allocation0]]
  $region30: #{tam_forward.7} parent=0
    _
  %s8 = ssub.s32 1, %s6
  %s9 = scalar_select 0, %s8, %s6
  // Predicated region
  $region2: #{tam_forward.7} parent=0 // pred_check
    _
  $region3: #{tam_forward.7} parent=0 // pred_check_branch
    %11 = sbr.rel (0) target = $region5
  $region4: #{tam_forward.7} parent=0 // pred_region
    _
  $region5: #{tam_forward.7} parent=0 // pred_fallthru
    _
  // Predicated region
  $region6: #{tam_forward.7} parent=0 // pred_check
    _
  $region7: #{tam_forward.7} parent=0 // pred_check_branch
    %13 = sbr.rel (0) target = $region9
  $region8: #{tam_forward.7} parent=0 // pred_region
    _
  $region9: #{tam_forward.7} parent=0 // pred_fallthru
    _
  // Predicated region
  $region10: #{tam_forward.7} parent=0 // pred_check
    _
  $region11: #{tam_forward.7} parent=0 // pred_check_branch
    %15 = sbr.rel (0) target = $region13
  $region12: #{tam_forward.7} parent=0 // pred_region
    _
  $region13: #{tam_forward.7} parent=0 // pred_fallthru
    _
  // Predicated region
  $region14: #{tam_forward.7} parent=0 // pred_check
    _
  $region15: #{tam_forward.7} parent=0 // pred_check_branch
    %17 = sbr.rel (0) target = $region17
  $region16: #{tam_forward.7} parent=0 // pred_region
    _
  $region17: #{tam_forward.7} parent=0 // pred_fallthru
    _
  // Predicated region
  $region18: #{tam_forward.7} parent=0 // pred_check
    _
  $region19: #{tam_forward.7} parent=0 // pred_check_branch
    %19 = sbr.rel (0) target = $region21
  $region20: #{tam_forward.7} parent=0 // pred_region
    _
  $region21: #{tam_forward.7} parent=0 // pred_fallthru
    _
  %v20 = vld [vmem:[%s2] sm:$0xff]
  %v21 = vld [vmem:[%s2 + $0x8] sm:$0xff]
  %v22 = vld [vmem:[%s3] sm:$0x1]
  %v23 = vld [vmem:[%s4] sm:$0xff]
  %v24 = vld [vmem:[%s4 + $0x8] sm:$0xff]
  %v25 = vld [vmem:[%s0] sm:$0x3f]
  %v26 = vld [vmem:[%s1] sm:$0x3f]
  %v28 = vlaneseq
  %v29 = vshrl.u32 %v28, 7
  %v30 = vsub.s32 0, %v29
  %v31 = vrot.slane %v22, %v30
  %vm33 = vcmask 130048
  %v35 = vsel %vm33, %v25, 0
  %37 = vmatprep.subr.mxu0 0.0
  %38 = vmatpush1.msra.mxu0 %v20
  %39 = vmatprep.subr.mxu0 0.0
  %40 = vmatpush1.msra.mxu0 %v21
  %41 = vmatprep.subr.mxu0 0.0
  %42 = vmatpush1.msra.mxu0 0.0
  %43 = vmatprep.subr.mxu0 0.0
  %44 = vmatpush1.msra.mxu0 0.0
  %45 = vmatprep.subr.mxu0 0.0
  %46 = vmatpush1.msra.mxu0 0.0
  %47 = vmatprep.subr.mxu0 0.0
  %48 = vmatpush1.msra.mxu0 0.0
  %49 = vmatprep.subr.mxu0 0.0
  %50 = vmatpush1.msra.mxu0 0.0
  %51 = vmatprep.subr.mxu0 0.0
  %52 = vmatpush1.msra.mxu0 0.0
  %53 = vmatprep.subr.mxu0 0.0
  %54 = vmatpush1.msra.mxu0 0.0
  %55 = vmatprep.subr.mxu0 0.0
  %56 = vmatpush1.msra.mxu0 0.0
  %57 = vmatprep.subr.mxu0 0.0
  %58 = vmatpush1.msra.mxu0 0.0
  %59 = vmatprep.subr.mxu0 0.0
  %60 = vmatpush1.msra.mxu0 0.0
  %61 = vmatprep.subr.mxu0 0.0
  %62 = vmatpush1.msra.mxu0 0.0
  %63 = vmatprep.subr.mxu0 0.0
  %64 = vmatpush1.msra.mxu0 0.0
  %65 = vmatprep.subr.mxu0 0.0
  %66 = vmatpush1.msra.mxu0 0.0
  %67 = vmatprep.subr.mxu0 0.0
  %68 = vmatpush1.msra.mxu0 0.0
  %69 = vmatprep.subr.mxu0 0.0
  %70 = vmatpush1.msra.mxu0 0.0
  %71 = vmatprep.subr.mxu0 0.0
  %72 = vmatpush1.msra.mxu0 0.0
  %73 = vmatprep.subr.mxu0 0.0
  %74 = vmatpush1.msra.mxu0 0.0
  %75 = vmatprep.subr.mxu0 0.0
  %76 = vmatpush1.msra.mxu0 0.0
  %77 = vmatprep.subr.mxu0 0.0
  %78 = vmatpush1.msra.mxu0 0.0
  %79 = vmatprep.subr.mxu0 0.0
  %80 = vmatpush1.msra.mxu0 0.0
  %81 = vmatprep.subr.mxu0 0.0
  %82 = vmatpush1.msra.mxu0 0.0
  %83 = vmatprep.subr.mxu0 0.0
  %84 = vmatpush1.msra.mxu0 0.0
  %85 = vmatprep.subr.mxu0 0.0
  %86 = vmatpush1.msra.mxu0 0.0
  %87 = vmatprep.subr.mxu0 0.0
  %88 = vmatpush1.msra.mxu0 0.0
  %89 = vmatprep.subr.mxu0 0.0
  %90 = vmatpush1.msra.mxu0 0.0
  %91 = vmatprep.subr.mxu0 0.0
  %92 = vmatpush1.msra.mxu0 0.0
  %93 = vmatprep.subr.mxu0 0.0
  %94 = vmatpush1.msra.mxu0 0.0
  %95 = vmatprep.subr.mxu0 0.0
  %96 = vmatpush1.msra.mxu0 0.0
  %97 = vmatprep.subr.mxu0 0.0
  %98 = vmatpush1.msra.mxu0 0.0
  %99 = vmatprep.subr.mxu0 0.0
  %100 = vmatpush1.msra.mxu0 0.0
  %101 = vmatprep.mubr.f32.mxu0 0.0
  %102 = vmatmul.mubr.f32.gmra.mrb[0].mxu0 %v35
  %v103 = vpop.f32.mrb[0].mxu0
  %v104 = vadd.f32 %v31, %v103
  %v105 = vpop.f32.mrb[0].mxu0
  %106 = vdwg.mxu0
  %v107 = vtanh.pop %v104
  %v109 = vsel %vm33, %v107, 0
  %111 = vmatprep.subr.mxu0 0.0
  %112 = vmatpush1.msra.mxu0 %v23
  %113 = vmatprep.subr.mxu0 0.0
  %114 = vmatpush1.msra.mxu0 %v24
  %115 = vmatprep.subr.mxu0 0.0
  %116 = vmatpush1.msra.mxu0 0.0
  %117 = vmatprep.subr.mxu0 0.0
  %118 = vmatpush1.msra.mxu0 0.0
  %119 = vmatprep.subr.mxu0 0.0
  %120 = vmatpush1.msra.mxu0 0.0
  %121 = vmatprep.subr.mxu0 0.0
  %122 = vmatpush1.msra.mxu0 0.0
  %123 = vmatprep.subr.mxu0 0.0
  %124 = vmatpush1.msra.mxu0 0.0
  %125 = vmatprep.subr.mxu0 0.0
  %126 = vmatpush1.msra.mxu0 0.0
  %127 = vmatprep.subr.mxu0 0.0
  %128 = vmatpush1.msra.mxu0 0.0
  %129 = vmatprep.subr.mxu0 0.0
  %130 = vmatpush1.msra.mxu0 0.0
  %131 = vmatprep.subr.mxu0 0.0
  %132 = vmatpush1.msra.mxu0 0.0
  %133 = vmatprep.subr.mxu0 0.0
  %134 = vmatpush1.msra.mxu0 0.0
  %135 = vmatprep.subr.mxu0 0.0
  %136 = vmatpush1.msra.mxu0 0.0
  %137 = vmatprep.subr.mxu0 0.0
  %138 = vmatpush1.msra.mxu0 0.0
  %139 = vmatprep.subr.mxu0 0.0
  %140 = vmatpush1.msra.mxu0 0.0
  %141 = vmatprep.subr.mxu0 0.0
  %142 = vmatpush1.msra.mxu0 0.0
  %143 = vmatprep.subr.mxu0 0.0
  %144 = vmatpush1.msra.mxu0 0.0
  %145 = vmatprep.subr.mxu0 0.0
  %146 = vmatpush1.msra.mxu0 0.0
  %147 = vmatprep.subr.mxu0 0.0
  %148 = vmatpush1.msra.mxu0 0.0
  %149 = vmatprep.subr.mxu0 0.0
  %150 = vmatpush1.msra.mxu0 0.0
  %151 = vmatprep.subr.mxu0 0.0
  %152 = vmatpush1.msra.mxu0 0.0
  %153 = vmatprep.subr.mxu0 0.0
  %154 = vmatpush1.msra.mxu0 0.0
  %155 = vmatprep.subr.mxu0 0.0
  %156 = vmatpush1.msra.mxu0 0.0
  %157 = vmatprep.subr.mxu0 0.0
  %158 = vmatpush1.msra.mxu0 0.0
  %159 = vmatprep.subr.mxu0 0.0
  %160 = vmatpush1.msra.mxu0 0.0
  %161 = vmatprep.subr.mxu0 0.0
  %162 = vmatpush1.msra.mxu0 0.0
  %163 = vmatprep.subr.mxu0 0.0
  %164 = vmatpush1.msra.mxu0 0.0
  %165 = vmatprep.subr.mxu0 0.0
  %166 = vmatpush1.msra.mxu0 0.0
  %167 = vmatprep.subr.mxu0 0.0
  %168 = vmatpush1.msra.mxu0 0.0
  %169 = vmatprep.subr.mxu0 0.0
  %170 = vmatpush1.msra.mxu0 0.0
  %171 = vmatprep.subr.mxu0 0.0
  %172 = vmatpush1.msra.mxu0 0.0
  %173 = vmatprep.subr.mxu0 0.0
  %174 = vmatpush1.msra.mxu0 0.0
  %175 = vmatprep.mubr.f32.mxu0 0.0
  %176 = vmatmul.mubr.f32.gmra.mrb[0].mxu0 %v109
  %v177 = vpop.f32.mrb[0].mxu0
  %v178 = vadd.f32 0.0, %v177
  %v179 = vpop.f32.mrb[0].mxu0
  %180 = vdwg.mxu0
  %vm181 = vcmp.gt.f32.partialorder %v26, 0.0
  %v182 = vsel %vm181, %v178, -1e+30
  %vm183 = vcmask 5120
  %v184 = vsel %vm183, %v182, -inf
  %v185 = vrot.slane %v184, 4
  %v186 = vmax.f32 %v184, %v185
  %v187 = vrot.slane %v186, 2
  %v188 = vmax.f32 %v186, %v187
  %v189 = vrot.slane %v188, 1
  %v190 = vmax.f32 %v188, %v189
  %v191 = vsub.f32 %v182, %v190
  %v192 = vmul.f32 %v191, 1.442695
  %v193 = vpow.pop %v192
  %v194 = vmul.f32 %v193, %v26
  %v195 = vsel %vm183, %v194, 0.0
  %v196 = vrot.slane %v195, 4
  %v197 = vadd.f32 %v195, %v196
  %v198 = vrot.slane %v197, 2
  %v199 = vadd.f32 %v197, %v198
  %v200 = vrot.slane %v199, 1
  %v201 = vadd.f32 %v199, %v200
  %v202 = vmax.f32 %v201, 1e-09
  %v203 = vrcp.pop %v202
  %v204 = vmul.f32 %v194, %v203
  %206 = vset.pattern.permute.xlu0 0
  %207 = vperm.xlu0 %206, %v204
  %v208 = vpop.permute.xlu0 %207
  %v210 = vmul.f32 %v208, %v25
  %vm211 = vcmask 128000
  %v212 = vsel %vm211, %v210, 0.0
  %v213 = vrot.slane %v212, 4
  %v214 = vadd.f32 %v212, %v213
  %v215 = vrot.slane %v214, 2
  %v216 = vadd.f32 %v214, %v215
  %v217 = vrot.slane %v216, 1
  %v218 = vadd.f32 %v216, %v217
  %vm219 = vcmask 122880
  %220 = vst.msk [vmem:[%s5] sm:$0x1] %vm219, %v218
  %s221 = scalar_lea.vmem %s0, 8
  %v222 = vld [vmem:[%s221] sm:$0x3f]
  %s223 = scalar_lea.vmem %s1, 8
  %v224 = vld [vmem:[%s223] sm:$0x3f]
  %v226 = vsel %vm33, %v222, 0
  %228 = vmatprep.subr.mxu0 0.0
  %229 = vmatpush1.msra.mxu0 %v20
  %230 = vmatprep.subr.mxu0 0.0
  %231 = vmatpush1.msra.mxu0 %v21
  %232 = vmatprep.subr.mxu0 0.0
  %233 = vmatpush1.msra.mxu0 0.0
  %234 = vmatprep.subr.mxu0 0.0
  %235 = vmatpush1.msra.mxu0 0.0
  %236 = vmatprep.subr.mxu0 0.0
  %237 = vmatpush1.msra.mxu0 0.0
  %238 = vmatprep.subr.mxu0 0.0
  %239 = vmatpush1.msra.mxu0 0.0
  %240 = vmatprep.subr.mxu0 0.0
  %241 = vmatpush1.msra.mxu0 0.0
  %242 = vmatprep.subr.mxu0 0.0
  %243 = vmatpush1.msra.mxu0 0.0
  %244 = vmatprep.subr.mxu0 0.0
  %245 = vmatpush1.msra.mxu0 0.0
  %246 = vmatprep.subr.mxu0 0.0
  %247 = vmatpush1.msra.mxu0 0.0
  %248 = vmatprep.subr.mxu0 0.0
  %249 = vmatpush1.msra.mxu0 0.0
  %250 = vmatprep.subr.mxu0 0.0
  %251 = vmatpush1.msra.mxu0 0.0
  %252 = vmatprep.subr.mxu0 0.0
  %253 = vmatpush1.msra.mxu0 0.0
  %254 = vmatprep.subr.mxu0 0.0
  %255 = vmatpush1.msra.mxu0 0.0
  %256 = vmatprep.subr.mxu0 0.0
  %257 = vmatpush1.msra.mxu0 0.0
  %258 = vmatprep.subr.mxu0 0.0
  %259 = vmatpush1.msra.mxu0 0.0
  %260 = vmatprep.subr.mxu0 0.0
  %261 = vmatpush1.msra.mxu0 0.0
  %262 = vmatprep.subr.mxu0 0.0
  %263 = vmatpush1.msra.mxu0 0.0
  %264 = vmatprep.subr.mxu0 0.0
  %265 = vmatpush1.msra.mxu0 0.0
  %266 = vmatprep.subr.mxu0 0.0
  %267 = vmatpush1.msra.mxu0 0.0
  %268 = vmatprep.subr.mxu0 0.0
  %269 = vmatpush1.msra.mxu0 0.0
  %270 = vmatprep.subr.mxu0 0.0
  %271 = vmatpush1.msra.mxu0 0.0
  %272 = vmatprep.subr.mxu0 0.0
  %273 = vmatpush1.msra.mxu0 0.0
  %274 = vmatprep.subr.mxu0 0.0
  %275 = vmatpush1.msra.mxu0 0.0
  %276 = vmatprep.subr.mxu0 0.0
  %277 = vmatpush1.msra.mxu0 0.0
  %278 = vmatprep.subr.mxu0 0.0
  %279 = vmatpush1.msra.mxu0 0.0
  %280 = vmatprep.subr.mxu0 0.0
  %281 = vmatpush1.msra.mxu0 0.0
  %282 = vmatprep.subr.mxu0 0.0
  %283 = vmatpush1.msra.mxu0 0.0
  %284 = vmatprep.subr.mxu0 0.0
  %285 = vmatpush1.msra.mxu0 0.0
  %286 = vmatprep.subr.mxu0 0.0
  %287 = vmatpush1.msra.mxu0 0.0
  %288 = vmatprep.subr.mxu0 0.0
  %289 = vmatpush1.msra.mxu0 0.0
  %290 = vmatprep.subr.mxu0 0.0
  %291 = vmatpush1.msra.mxu0 0.0
  %292 = vmatprep.mubr.f32.mxu0 0.0
  %293 = vmatmul.mubr.f32.gmra.mrb[0].mxu0 %v226
  %v294 = vpop.f32.mrb[0].mxu0
  %v295 = vadd.f32 %v31, %v294
  %v296 = vpop.f32.mrb[0].mxu0
  %297 = vdwg.mxu0
  %v298 = vtanh.pop %v295
  %v300 = vsel %vm33, %v298, 0
  %302 = vmatprep.subr.mxu0 0.0
  %303 = vmatpush1.msra.mxu0 %v23
  %304 = vmatprep.subr.mxu0 0.0
  %305 = vmatpush1.msra.mxu0 %v24
  %306 = vmatprep.subr.mxu0 0.0
  %307 = vmatpush1.msra.mxu0 0.0
  %308 = vmatprep.subr.mxu0 0.0
  %309 = vmatpush1.msra.mxu0 0.0
  %310 = vmatprep.subr.mxu0 0.0
  %311 = vmatpush1.msra.mxu0 0.0
  %312 = vmatprep.subr.mxu0 0.0
  %313 = vmatpush1.msra.mxu0 0.0
  %314 = vmatprep.subr.mxu0 0.0
  %315 = vmatpush1.msra.mxu0 0.0
  %316 = vmatprep.subr.mxu0 0.0
  %317 = vmatpush1.msra.mxu0 0.0
  %318 = vmatprep.subr.mxu0 0.0
  %319 = vmatpush1.msra.mxu0 0.0
  %320 = vmatprep.subr.mxu0 0.0
  %321 = vmatpush1.msra.mxu0 0.0
  %322 = vmatprep.subr.mxu0 0.0
  %323 = vmatpush1.msra.mxu0 0.0
  %324 = vmatprep.subr.mxu0 0.0
  %325 = vmatpush1.msra.mxu0 0.0
  %326 = vmatprep.subr.mxu0 0.0
  %327 = vmatpush1.msra.mxu0 0.0
  %328 = vmatprep.subr.mxu0 0.0
  %329 = vmatpush1.msra.mxu0 0.0
  %330 = vmatprep.subr.mxu0 0.0
  %331 = vmatpush1.msra.mxu0 0.0
  %332 = vmatprep.subr.mxu0 0.0
  %333 = vmatpush1.msra.mxu0 0.0
  %334 = vmatprep.subr.mxu0 0.0
  %335 = vmatpush1.msra.mxu0 0.0
  %336 = vmatprep.subr.mxu0 0.0
  %337 = vmatpush1.msra.mxu0 0.0
  %338 = vmatprep.subr.mxu0 0.0
  %339 = vmatpush1.msra.mxu0 0.0
  %340 = vmatprep.subr.mxu0 0.0
  %341 = vmatpush1.msra.mxu0 0.0
  %342 = vmatprep.subr.mxu0 0.0
  %343 = vmatpush1.msra.mxu0 0.0
  %344 = vmatprep.subr.mxu0 0.0
  %345 = vmatpush1.msra.mxu0 0.0
  %346 = vmatprep.subr.mxu0 0.0
  %347 = vmatpush1.msra.mxu0 0.0
  %348 = vmatprep.subr.mxu0 0.0
  %349 = vmatpush1.msra.mxu0 0.0
  %350 = vmatprep.subr.mxu0 0.0
  %351 = vmatpush1.msra.mxu0 0.0
  %352 = vmatprep.subr.mxu0 0.0
  %353 = vmatpush1.msra.mxu0 0.0
  %354 = vmatprep.subr.mxu0 0.0
  %355 = vmatpush1.msra.mxu0 0.0
  %356 = vmatprep.subr.mxu0 0.0
  %357 = vmatpush1.msra.mxu0 0.0
  %358 = vmatprep.subr.mxu0 0.0
  %359 = vmatpush1.msra.mxu0 0.0
  %360 = vmatprep.subr.mxu0 0.0
  %361 = vmatpush1.msra.mxu0 0.0
  %362 = vmatprep.subr.mxu0 0.0
  %363 = vmatpush1.msra.mxu0 0.0
  %364 = vmatprep.subr.mxu0 0.0
  %365 = vmatpush1.msra.mxu0 0.0
  %366 = vmatprep.mubr.f32.mxu0 0.0
  %367 = vmatmul.mubr.f32.gmra.mrb[0].mxu0 %v300
  %v368 = vpop.f32.mrb[0].mxu0
  %v369 = vadd.f32 0.0, %v368
  %v370 = vpop.f32.mrb[0].mxu0
  %371 = vdwg.mxu0
  %vm372 = vcmp.gt.f32.partialorder %v224, 0.0
  %v373 = vsel %vm372, %v369, -1e+30
  %v374 = vsel %vm183, %v373, -inf
  %v375 = vrot.slane %v374, 4
  %v376 = vmax.f32 %v374, %v375
  %v377 = vrot.slane %v376, 2
  %v378 = vmax.f32 %v376, %v377
  %v379 = vrot.slane %v378, 1
  %v380 = vmax.f32 %v378, %v379
  %v381 = vsub.f32 %v373, %v380
  %v382 = vmul.f32 %v381, 1.442695
  %v383 = vpow.pop %v382
  %v384 = vmul.f32 %v383, %v224
  %v385 = vsel %vm183, %v384, 0.0
  %v386 = vrot.slane %v385, 4
  %v387 = vadd.f32 %v385, %v386
  %v388 = vrot.slane %v387, 2
  %v389 = vadd.f32 %v387, %v388
  %v390 = vrot.slane %v389, 1
  %v391 = vadd.f32 %v389, %v390
  %v392 = vmax.f32 %v391, 1e-09
  %v393 = vrcp.pop %v392
  %v394 = vmul.f32 %v384, %v393
  %396 = vset.pattern.permute.xlu0 0
  %397 = vperm.xlu0 %396, %v394
  %v398 = vpop.permute.xlu0 %397
  %v400 = vmul.f32 %v398, %v222
  %v401 = vsel %vm211, %v400, 0.0
  %v402 = vrot.slane %v401, 4
  %v403 = vadd.f32 %v401, %v402
  %v404 = vrot.slane %v403, 2
  %v405 = vadd.f32 %v403, %v404
  %v406 = vrot.slane %v405, 1
  %v407 = vadd.f32 %v405, %v406
  %408 = vst.msk [vmem:[%s5 + $0x1] sm:$0x1] %vm219, %v407
  %s409 = scalar_lea.vmem %s0, 16
  %v410 = vld [vmem:[%s409] sm:$0x3f]
  %s411 = scalar_lea.vmem %s1, 16
  %v412 = vld [vmem:[%s411] sm:$0x3f]
  %v414 = vsel %vm33, %v410, 0
  %416 = vmatprep.subr.mxu0 0.0
  %417 = vmatpush1.msra.mxu0 %v20
  %418 = vmatprep.subr.mxu0 0.0
  %419 = vmatpush1.msra.mxu0 %v21
  %420 = vmatprep.subr.mxu0 0.0
  %421 = vmatpush1.msra.mxu0 0.0
  %422 = vmatprep.subr.mxu0 0.0
  %423 = vmatpush1.msra.mxu0 0.0
  %424 = vmatprep.subr.mxu0 0.0
  %425 = vmatpush1.msra.mxu0 0.0
  %426 = vmatprep.subr.mxu0 0.0
  %427 = vmatpush1.msra.mxu0 0.0
  %428 = vmatprep.subr.mxu0 0.0
  %429 = vmatpush1.msra.mxu0 0.0
  %430 = vmatprep.subr.mxu0 0.0
  %431 = vmatpush1.msra.mxu0 0.0
  %432 = vmatprep.subr.mxu0 0.0
  %433 = vmatpush1.msra.mxu0 0.0
  %434 = vmatprep.subr.mxu0 0.0
  %435 = vmatpush1.msra.mxu0 0.0
  %436 = vmatprep.subr.mxu0 0.0
  %437 = vmatpush1.msra.mxu0 0.0
  %438 = vmatprep.subr.mxu0 0.0
  %439 = vmatpush1.msra.mxu0 0.0
  %440 = vmatprep.subr.mxu0 0.0
  %441 = vmatpush1.msra.mxu0 0.0
  %442 = vmatprep.subr.mxu0 0.0
  %443 = vmatpush1.msra.mxu0 0.0
  %444 = vmatprep.subr.mxu0 0.0
  %445 = vmatpush1.msra.mxu0 0.0
  %446 = vmatprep.subr.mxu0 0.0
  %447 = vmatpush1.msra.mxu0 0.0
  %448 = vmatprep.subr.mxu0 0.0
  %449 = vmatpush1.msra.mxu0 0.0
  %450 = vmatprep.subr.mxu0 0.0
  %451 = vmatpush1.msra.mxu0 0.0
  %452 = vmatprep.subr.mxu0 0.0
  %453 = vmatpush1.msra.mxu0 0.0
  %454 = vmatprep.subr.mxu0 0.0
  %455 = vmatpush1.msra.mxu0 0.0
  %456 = vmatprep.subr.mxu0 0.0
  %457 = vmatpush1.msra.mxu0 0.0
  %458 = vmatprep.subr.mxu0 0.0
  %459 = vmatpush1.msra.mxu0 0.0
  %460 = vmatprep.subr.mxu0 0.0
  %461 = vmatpush1.msra.mxu0 0.0
  %462 = vmatprep.subr.mxu0 0.0
  %463 = vmatpush1.msra.mxu0 0.0
  %464 = vmatprep.subr.mxu0 0.0
  %465 = vmatpush1.msra.mxu0 0.0
  %466 = vmatprep.subr.mxu0 0.0
  %467 = vmatpush1.msra.mxu0 0.0
  %468 = vmatprep.subr.mxu0 0.0
  %469 = vmatpush1.msra.mxu0 0.0
  %470 = vmatprep.subr.mxu0 0.0
  %471 = vmatpush1.msra.mxu0 0.0
  %472 = vmatprep.subr.mxu0 0.0
  %473 = vmatpush1.msra.mxu0 0.0
  %474 = vmatprep.subr.mxu0 0.0
  %475 = vmatpush1.msra.mxu0 0.0
  %476 = vmatprep.subr.mxu0 0.0
  %477 = vmatpush1.msra.mxu0 0.0
  %478 = vmatprep.subr.mxu0 0.0
  %479 = vmatpush1.msra.mxu0 0.0
  %480 = vmatprep.mubr.f32.mxu0 0.0
  %481 = vmatmul.mubr.f32.gmra.mrb[0].mxu0 %v414
  %v482 = vpop.f32.mrb[0].mxu0
  %v483 = vadd.f32 %v31, %v482
  %v484 = vpop.f32.mrb[0].mxu0
  %485 = vdwg.mxu0
  %v486 = vtanh.pop %v483
  %v488 = vsel %vm33, %v486, 0
  %490 = vmatprep.subr.mxu0 0.0
  %491 = vmatpush1.msra.mxu0 %v23
  %492 = vmatprep.subr.mxu0 0.0
  %493 = vmatpush1.msra.mxu0 %v24
  %494 = vmatprep.subr.mxu0 0.0
  %495 = vmatpush1.msra.mxu0 0.0
  %496 = vmatprep.subr.mxu0 0.0
  %497 = vmatpush1.msra.mxu0 0.0
  %498 = vmatprep.subr.mxu0 0.0
  %499 = vmatpush1.msra.mxu0 0.0
  %500 = vmatprep.subr.mxu0 0.0
  %501 = vmatpush1.msra.mxu0 0.0
  %502 = vmatprep.subr.mxu0 0.0
  %503 = vmatpush1.msra.mxu0 0.0
  %504 = vmatprep.subr.mxu0 0.0
  %505 = vmatpush1.msra.mxu0 0.0
  %506 = vmatprep.subr.mxu0 0.0
  %507 = vmatpush1.msra.mxu0 0.0
  %508 = vmatprep.subr.mxu0 0.0
  %509 = vmatpush1.msra.mxu0 0.0
  %510 = vmatprep.subr.mxu0 0.0
  %511 = vmatpush1.msra.mxu0 0.0
  %512 = vmatprep.subr.mxu0 0.0
  %513 = vmatpush1.msra.mxu0 0.0
  %514 = vmatprep.subr.mxu0 0.0
  %515 = vmatpush1.msra.mxu0 0.0
  %516 = vmatprep.subr.mxu0 0.0
  %517 = vmatpush1.msra.mxu0 0.0
  %518 = vmatprep.subr.mxu0 0.0
  %519 = vmatpush1.msra.mxu0 0.0
  %520 = vmatprep.subr.mxu0 0.0
  %521 = vmatpush1.msra.mxu0 0.0
  %522 = vmatprep.subr.mxu0 0.0
  %523 = vmatpush1.msra.mxu0 0.0
  %524 = vmatprep.subr.mxu0 0.0
  %525 = vmatpush1.msra.mxu0 0.0
  %526 = vmatprep.subr.mxu0 0.0
  %527 = vmatpush1.msra.mxu0 0.0
  %528 = vmatprep.subr.mxu0 0.0
  %529 = vmatpush1.msra.mxu0 0.0
  %530 = vmatprep.subr.mxu0 0.0
  %531 = vmatpush1.msra.mxu0 0.0
  %532 = vmatprep.subr.mxu0 0.0
  %533 = vmatpush1.msra.mxu0 0.0
  %534 = vmatprep.subr.mxu0 0.0
  %535 = vmatpush1.msra.mxu0 0.0
  %536 = vmatprep.subr.mxu0 0.0
  %537 = vmatpush1.msra.mxu0 0.0
  %538 = vmatprep.subr.mxu0 0.0
  %539 = vmatpush1.msra.mxu0 0.0
  %540 = vmatprep.subr.mxu0 0.0
  %541 = vmatpush1.msra.mxu0 0.0
  %542 = vmatprep.subr.mxu0 0.0
  %543 = vmatpush1.msra.mxu0 0.0
  %544 = vmatprep.subr.mxu0 0.0
  %545 = vmatpush1.msra.mxu0 0.0
  %546 = vmatprep.subr.mxu0 0.0
  %547 = vmatpush1.msra.mxu0 0.0
  %548 = vmatprep.subr.mxu0 0.0
  %549 = vmatpush1.msra.mxu0 0.0
  %550 = vmatprep.subr.mxu0 0.0
  %551 = vmatpush1.msra.mxu0 0.0
  %552 = vmatprep.subr.mxu0 0.0
  %553 = vmatpush1.msra.mxu0 0.0
  %554 = vmatprep.mubr.f32.mxu0 0.0
  %555 = vmatmul.mubr.f32.gmra.mrb[0].mxu0 %v488
  %v556 = vpop.f32.mrb[0].mxu0
  %v557 = vadd.f32 0.0, %v556
  %v558 = vpop.f32.mrb[0].mxu0
  %559 = vdwg.mxu0
  %vm560 = vcmp.gt.f32.partialorder %v412, 0.0
  %v561 = vsel %vm560, %v557, -1e+30
  %v562 = vsel %vm183, %v561, -inf
  %v563 = vrot.slane %v562, 4
  %v564 = vmax.f32 %v562, %v563
  %v565 = vrot.slane %v564, 2
  %v566 = vmax.f32 %v564, %v565
  %v567 = vrot.slane %v566, 1
  %v568 = vmax.f32 %v566, %v567
  %v569 = vsub.f32 %v561, %v568
  %v570 = vmul.f32 %v569, 1.442695
  %v571 = vpow.pop %v570
  %v572 = vmul.f32 %v571, %v412
  %v573 = vsel %vm183, %v572, 0.0
  %v574 = vrot.slane %v573, 4
  %v575 = vadd.f32 %v573, %v574
  %v576 = vrot.slane %v575, 2
  %v577 = vadd.f32 %v575, %v576
  %v578 = vrot.slane %v577, 1
  %v579 = vadd.f32 %v577, %v578
  %v580 = vmax.f32 %v579, 1e-09
  %v581 = vrcp.pop %v580
  %v582 = vmul.f32 %v572, %v581
  %584 = vset.pattern.permute.xlu0 0
  %585 = vperm.xlu0 %584, %v582
  %v586 = vpop.permute.xlu0 %585
  %v588 = vmul.f32 %v586, %v410
  %v589 = vsel %vm211, %v588, 0.0
  %v590 = vrot.slane %v589, 4
  %v591 = vadd.f32 %v589, %v590
  %v592 = vrot.slane %v591, 2
  %v593 = vadd.f32 %v591, %v592
  %v594 = vrot.slane %v593, 1
  %v595 = vadd.f32 %v593, %v594
  %596 = vst.msk [vmem:[%s5 + $0x2] sm:$0x1] %vm219, %v595
  %s597 = scalar_lea.vmem %s0, 24
  %v598 = vld [vmem:[%s597] sm:$0x3f]
  %s599 = scalar_lea.vmem %s1, 24
  %v600 = vld [vmem:[%s599] sm:$0x3f]
  %v602 = vsel %vm33, %v598, 0
  %604 = vmatprep.subr.mxu0 0.0
  %605 = vmatpush1.msra.mxu0 %v20
  %606 = vmatprep.subr.mxu0 0.0
  %607 = vmatpush1.msra.mxu0 %v21
  %608 = vmatprep.subr.mxu0 0.0
  %609 = vmatpush1.msra.mxu0 0.0
  %610 = vmatprep.subr.mxu0 0.0
  %611 = vmatpush1.msra.mxu0 0.0
  %612 = vmatprep.subr.mxu0 0.0
  %613 = vmatpush1.msra.mxu0 0.0
  %614 = vmatprep.subr.mxu0 0.0
  %615 = vmatpush1.msra.mxu0 0.0
  %616 = vmatprep.subr.mxu0 0.0
  %617 = vmatpush1.msra.mxu0 0.0
  %618 = vmatprep.subr.mxu0 0.0
  %619 = vmatpush1.msra.mxu0 0.0
  %620 = vmatprep.subr.mxu0 0.0
  %621 = vmatpush1.msra.mxu0 0.0
  %622 = vmatprep.subr.mxu0 0.0
  %623 = vmatpush1.msra.mxu0 0.0
  %624 = vmatprep.subr.mxu0 0.0
  %625 = vmatpush1.msra.mxu0 0.0
  %626 = vmatprep.subr.mxu0 0.0
  %627 = vmatpush1.msra.mxu0 0.0
  %628 = vmatprep.subr.mxu0 0.0
  %629 = vmatpush1.msra.mxu0 0.0
  %630 = vmatprep.subr.mxu0 0.0
  %631 = vmatpush1.msra.mxu0 0.0
  %632 = vmatprep.subr.mxu0 0.0
  %633 = vmatpush1.msra.mxu0 0.0
  %634 = vmatprep.subr.mxu0 0.0
  %635 = vmatpush1.msra.mxu0 0.0
  %636 = vmatprep.subr.mxu0 0.0
  %637 = vmatpush1.msra.mxu0 0.0
  %638 = vmatprep.subr.mxu0 0.0
  %639 = vmatpush1.msra.mxu0 0.0
  %640 = vmatprep.subr.mxu0 0.0
  %641 = vmatpush1.msra.mxu0 0.0
  %642 = vmatprep.subr.mxu0 0.0
  %643 = vmatpush1.msra.mxu0 0.0
  %644 = vmatprep.subr.mxu0 0.0
  %645 = vmatpush1.msra.mxu0 0.0
  %646 = vmatprep.subr.mxu0 0.0
  %647 = vmatpush1.msra.mxu0 0.0
  %648 = vmatprep.subr.mxu0 0.0
  %649 = vmatpush1.msra.mxu0 0.0
  %650 = vmatprep.subr.mxu0 0.0
  %651 = vmatpush1.msra.mxu0 0.0
  %652 = vmatprep.subr.mxu0 0.0
  %653 = vmatpush1.msra.mxu0 0.0
  %654 = vmatprep.subr.mxu0 0.0
  %655 = vmatpush1.msra.mxu0 0.0
  %656 = vmatprep.subr.mxu0 0.0
  %657 = vmatpush1.msra.mxu0 0.0
  %658 = vmatprep.subr.mxu0 0.0
  %659 = vmatpush1.msra.mxu0 0.0
  %660 = vmatprep.subr.mxu0 0.0
  %661 = vmatpush1.msra.mxu0 0.0
  %662 = vmatprep.subr.mxu0 0.0
  %663 = vmatpush1.msra.mxu0 0.0
  %664 = vmatprep.subr.mxu0 0.0
  %665 = vmatpush1.msra.mxu0 0.0
  %666 = vmatprep.subr.mxu0 0.0
  %667 = vmatpush1.msra.mxu0 0.0
  %668 = vmatprep.mubr.f32.mxu0 0.0
  %669 = vmatmul.mubr.f32.gmra.mrb[0].mxu0 %v602
  %v670 = vpop.f32.mrb[0].mxu0
  %v671 = vadd.f32 %v31, %v670
  %v672 = vpop.f32.mrb[0].mxu0
  %673 = vdwg.mxu0
  %v674 = vtanh.pop %v671
  %v676 = vsel %vm33, %v674, 0
  %678 = vmatprep.subr.mxu0 0.0
  %679 = vmatpush1.msra.mxu0 %v23
  %680 = vmatprep.subr.mxu0 0.0
  %681 = vmatpush1.msra.mxu0 %v24
  %682 = vmatprep.subr.mxu0 0.0
  %683 = vmatpush1.msra.mxu0 0.0
  %684 = vmatprep.subr.mxu0 0.0
  %685 = vmatpush1.msra.mxu0 0.0
  %686 = vmatprep.subr.mxu0 0.0
  %687 = vmatpush1.msra.mxu0 0.0
  %688 = vmatprep.subr.mxu0 0.0
  %689 = vmatpush1.msra.mxu0 0.0
  %690 = vmatprep.subr.mxu0 0.0
  %691 = vmatpush1.msra.mxu0 0.0
  %692 = vmatprep.subr.mxu0 0.0
  %693 = vmatpush1.msra.mxu0 0.0
  %694 = vmatprep.subr.mxu0 0.0
  %695 = vmatpush1.msra.mxu0 0.0
  %696 = vmatprep.subr.mxu0 0.0
  %697 = vmatpush1.msra.mxu0 0.0
  %698 = vmatprep.subr.mxu0 0.0
  %699 = vmatpush1.msra.mxu0 0.0
  %700 = vmatprep.subr.mxu0 0.0
  %701 = vmatpush1.msra.mxu0 0.0
  %702 = vmatprep.subr.mxu0 0.0
  %703 = vmatpush1.msra.mxu0 0.0
  %704 = vmatprep.subr.mxu0 0.0
  %705 = vmatpush1.msra.mxu0 0.0
  %706 = vmatprep.subr.mxu0 0.0
  %707 = vmatpush1.msra.mxu0 0.0
  %708 = vmatprep.subr.mxu0 0.0
  %709 = vmatpush1.msra.mxu0 0.0
  %710 = vmatprep.subr.mxu0 0.0
  %711 = vmatpush1.msra.mxu0 0.0
  %712 = vmatprep.subr.mxu0 0.0
  %713 = vmatpush1.msra.mxu0 0.0
  %714 = vmatprep.subr.mxu0 0.0
  %715 = vmatpush1.msra.mxu0 0.0
  %716 = vmatprep.subr.mxu0 0.0
  %717 = vmatpush1.msra.mxu0 0.0
  %718 = vmatprep.subr.mxu0 0.0
  %719 = vmatpush1.msra.mxu0 0.0
  %720 = vmatprep.subr.mxu0 0.0
  %721 = vmatpush1.msra.mxu0 0.0
  %722 = vmatprep.subr.mxu0 0.0
  %723 = vmatpush1.msra.mxu0 0.0
  %724 = vmatprep.subr.mxu0 0.0
  %725 = vmatpush1.msra.mxu0 0.0
  %726 = vmatprep.subr.mxu0 0.0
  %727 = vmatpush1.msra.mxu0 0.0
  %728 = vmatprep.subr.mxu0 0.0
  %729 = vmatpush1.msra.mxu0 0.0
  %730 = vmatprep.subr.mxu0 0.0
  %731 = vmatpush1.msra.mxu0 0.0
  %732 = vmatprep.subr.mxu0 0.0
  %733 = vmatpush1.msra.mxu0 0.0
  %734 = vmatprep.subr.mxu0 0.0
  %735 = vmatpush1.msra.mxu0 0.0
  %736 = vmatprep.subr.mxu0 0.0
  %737 = vmatpush1.msra.mxu0 0.0
  %738 = vmatprep.subr.mxu0 0.0
  %739 = vmatpush1.msra.mxu0 0.0
  %740 = vmatprep.subr.mxu0 0.0
  %741 = vmatpush1.msra.mxu0 0.0
  %742 = vmatprep.mubr.f32.mxu0 0.0
  %743 = vmatmul.mubr.f32.gmra.mrb[0].mxu0 %v676
  %v744 = vpop.f32.mrb[0].mxu0
  %v745 = vadd.f32 0.0, %v744
  %v746 = vpop.f32.mrb[0].mxu0
  %747 = vdwg.mxu0
  %vm748 = vcmp.gt.f32.partialorder %v600, 0.0
  %v749 = vsel %vm748, %v745, -1e+30
  %v750 = vsel %vm183, %v749, -inf
  %v751 = vrot.slane %v750, 4
  %v752 = vmax.f32 %v750, %v751
  %v753 = vrot.slane %v752, 2
  %v754 = vmax.f32 %v752, %v753
  %v755 = vrot.slane %v754, 1
  %v756 = vmax.f32 %v754, %v755
  %v757 = vsub.f32 %v749, %v756
  %v758 = vmul.f32 %v757, 1.442695
  %v759 = vpow.pop %v758
  %v760 = vmul.f32 %v759, %v600
  %v761 = vsel %vm183, %v760, 0.0
  %v762 = vrot.slane %v761, 4
  %v763 = vadd.f32 %v761, %v762
  %v764 = vrot.slane %v763, 2
  %v765 = vadd.f32 %v763, %v764
  %v766 = vrot.slane %v765, 1
  %v767 = vadd.f32 %v765, %v766
  %v768 = vmax.f32 %v767, 1e-09
  %v769 = vrcp.pop %v768
  %v770 = vmul.f32 %v760, %v769
  %772 = vset.pattern.permute.xlu0 0
  %773 = vperm.xlu0 %772, %v770
  %v774 = vpop.permute.xlu0 %773
  %v776 = vmul.f32 %v774, %v598
  %v777 = vsel %vm211, %v776, 0.0
  %v778 = vrot.slane %v777, 4
  %v779 = vadd.f32 %v777, %v778
  %v780 = vrot.slane %v779, 2
  %v781 = vadd.f32 %v779, %v780
  %v782 = vrot.slane %v781, 1
  %v783 = vadd.f32 %v781, %v782
  %784 = vst.msk [vmem:[%s5 + $0x3] sm:$0x1] %vm219, %v783
  %s785 = scalar_lea.vmem %s0, 32
  %v786 = vld [vmem:[%s785] sm:$0x3f]
  %s787 = scalar_lea.vmem %s1, 32
  %v788 = vld [vmem:[%s787] sm:$0x3f]
  %v790 = vsel %vm33, %v786, 0
  %792 = vmatprep.subr.mxu0 0.0
  %793 = vmatpush1.msra.mxu0 %v20
  %794 = vmatprep.subr.mxu0 0.0
  %795 = vmatpush1.msra.mxu0 %v21
  %796 = vmatprep.subr.mxu0 0.0
  %797 = vmatpush1.msra.mxu0 0.0
  %798 = vmatprep.subr.mxu0 0.0
  %799 = vmatpush1.msra.mxu0 0.0
  %800 = vmatprep.subr.mxu0 0.0
  %801 = vmatpush1.msra.mxu0 0.0
  %802 = vmatprep.subr.mxu0 0.0
  %803 = vmatpush1.msra.mxu0 0.0
  %804 = vmatprep.subr.mxu0 0.0
  %805 = vmatpush1.msra.mxu0 0.0
  %806 = vmatprep.subr.mxu0 0.0
  %807 = vmatpush1.msra.mxu0 0.0
  %808 = vmatprep.subr.mxu0 0.0
  %809 = vmatpush1.msra.mxu0 0.0
  %810 = vmatprep.subr.mxu0 0.0
  %811 = vmatpush1.msra.mxu0 0.0
  %812 = vmatprep.subr.mxu0 0.0
  %813 = vmatpush1.msra.mxu0 0.0
  %814 = vmatprep.subr.mxu0 0.0
  %815 = vmatpush1.msra.mxu0 0.0
  %816 = vmatprep.subr.mxu0 0.0
  %817 = vmatpush1.msra.mxu0 0.0
  %818 = vmatprep.subr.mxu0 0.0
  %819 = vmatpush1.msra.mxu0 0.0
  %820 = vmatprep.subr.mxu0 0.0
  %821 = vmatpush1.msra.mxu0 0.0
  %822 = vmatprep.subr.mxu0 0.0
  %823 = vmatpush1.msra.mxu0 0.0
  %824 = vmatprep.subr.mxu0 0.0
  %825 = vmatpush1.msra.mxu0 0.0
  %826 = vmatprep.subr.mxu0 0.0
  %827 = vmatpush1.msra.mxu0 0.0
  %828 = vmatprep.subr.mxu0 0.0
  %829 = vmatpush1.msra.mxu0 0.0
  %830 = vmatprep.subr.mxu0 0.0
  %831 = vmatpush1.msra.mxu0 0.0
  %832 = vmatprep.subr.mxu0 0.0
  %833 = vmatpush1.msra.mxu0 0.0
  %834 = vmatprep.subr.mxu0 0.0
  %835 = vmatpush1.msra.mxu0 0.0
  %836 = vmatprep.subr.mxu0 0.0
  %837 = vmatpush1.msra.mxu0 0.0
  %838 = vmatprep.subr.mxu0 0.0
  %839 = vmatpush1.msra.mxu0 0.0
  %840 = vmatprep.subr.mxu0 0.0
  %841 = vmatpush1.msra.mxu0 0.0
  %842 = vmatprep.subr.mxu0 0.0
  %843 = vmatpush1.msra.mxu0 0.0
  %844 = vmatprep.subr.mxu0 0.0
  %845 = vmatpush1.msra.mxu0 0.0
  %846 = vmatprep.subr.mxu0 0.0
  %847 = vmatpush1.msra.mxu0 0.0
  %848 = vmatprep.subr.mxu0 0.0
  %849 = vmatpush1.msra.mxu0 0.0
  %850 = vmatprep.subr.mxu0 0.0
  %851 = vmatpush1.msra.mxu0 0.0
  %852 = vmatprep.subr.mxu0 0.0
  %853 = vmatpush1.msra.mxu0 0.0
  %854 = vmatprep.subr.mxu0 0.0
  %855 = vmatpush1.msra.mxu0 0.0
  %856 = vmatprep.mubr.f32.mxu0 0.0
  %857 = vmatmul.mubr.f32.gmra.mrb[0].mxu0 %v790
  %v858 = vpop.f32.mrb[0].mxu0
  %v859 = vadd.f32 %v31, %v858
  %v860 = vpop.f32.mrb[0].mxu0
  %861 = vdwg.mxu0
  %v862 = vtanh.pop %v859
  %v864 = vsel %vm33, %v862, 0
  %866 = vmatprep.subr.mxu0 0.0
  %867 = vmatpush1.msra.mxu0 %v23
  %868 = vmatprep.subr.mxu0 0.0
  %869 = vmatpush1.msra.mxu0 %v24
  %870 = vmatprep.subr.mxu0 0.0
  %871 = vmatpush1.msra.mxu0 0.0
  %872 = vmatprep.subr.mxu0 0.0
  %873 = vmatpush1.msra.mxu0 0.0
  %874 = vmatprep.subr.mxu0 0.0
  %875 = vmatpush1.msra.mxu0 0.0
  %876 = vmatprep.subr.mxu0 0.0
  %877 = vmatpush1.msra.mxu0 0.0
  %878 = vmatprep.subr.mxu0 0.0
  %879 = vmatpush1.msra.mxu0 0.0
  %880 = vmatprep.subr.mxu0 0.0
  %881 = vmatpush1.msra.mxu0 0.0
  %882 = vmatprep.subr.mxu0 0.0
  %883 = vmatpush1.msra.mxu0 0.0
  %884 = vmatprep.subr.mxu0 0.0
  %885 = vmatpush1.msra.mxu0 0.0
  %886 = vmatprep.subr.mxu0 0.0
  %887 = vmatpush1.msra.mxu0 0.0
  %888 = vmatprep.subr.mxu0 0.0
  %889 = vmatpush1.msra.mxu0 0.0
  %890 = vmatprep.subr.mxu0 0.0
  %891 = vmatpush1.msra.mxu0 0.0
  %892 = vmatprep.subr.mxu0 0.0
  %893 = vmatpush1.msra.mxu0 0.0
  %894 = vmatprep.subr.mxu0 0.0
  %895 = vmatpush1.msra.mxu0 0.0
  %896 = vmatprep.subr.mxu0 0.0
  %897 = vmatpush1.msra.mxu0 0.0
  %898 = vmatprep.subr.mxu0 0.0
  %899 = vmatpush1.msra.mxu0 0.0
  %900 = vmatprep.subr.mxu0 0.0
  %901 = vmatpush1.msra.mxu0 0.0
  %902 = vmatprep.subr.mxu0 0.0
  %903 = vmatpush1.msra.mxu0 0.0
  %904 = vmatprep.subr.mxu0 0.0
  %905 = vmatpush1.msra.mxu0 0.0
  %906 = vmatprep.subr.mxu0 0.0
  %907 = vmatpush1.msra.mxu0 0.0
  %908 = vmatprep.subr.mxu0 0.0
  %909 = vmatpush1.msra.mxu0 0.0
  %910 = vmatprep.subr.mxu0 0.0
  %911 = vmatpush1.msra.mxu0 0.0
  %912 = vmatprep.subr.mxu0 0.0
  %913 = vmatpush1.msra.mxu0 0.0
  %914 = vmatprep.subr.mxu0 0.0
  %915 = vmatpush1.msra.mxu0 0.0
  %916 = vmatprep.subr.mxu0 0.0
  %917 = vmatpush1.msra.mxu0 0.0
  %918 = vmatprep.subr.mxu0 0.0
  %919 = vmatpush1.msra.mxu0 0.0
  %920 = vmatprep.subr.mxu0 0.0
  %921 = vmatpush1.msra.mxu0 0.0
  %922 = vmatprep.subr.mxu0 0.0
  %923 = vmatpush1.msra.mxu0 0.0
  %924 = vmatprep.subr.mxu0 0.0
  %925 = vmatpush1.msra.mxu0 0.0
  %926 = vmatprep.subr.mxu0 0.0
  %927 = vmatpush1.msra.mxu0 0.0
  %928 = vmatprep.subr.mxu0 0.0
  %929 = vmatpush1.msra.mxu0 0.0
  %930 = vmatprep.mubr.f32.mxu0 0.0
  %931 = vmatmul.mubr.f32.gmra.mrb[0].mxu0 %v864
  %v932 = vpop.f32.mrb[0].mxu0
  %v933 = vadd.f32 0.0, %v932
  %v934 = vpop.f32.mrb[0].mxu0
  %935 = vdwg.mxu0
  %vm936 = vcmp.gt.f32.partialorder %v788, 0.0
  %v937 = vsel %vm936, %v933, -1e+30
  %v938 = vsel %vm183, %v937, -inf
  %v939 = vrot.slane %v938, 4
  %v940 = vmax.f32 %v938, %v939
  %v941 = vrot.slane %v940, 2
  %v942 = vmax.f32 %v940, %v941
  %v943 = vrot.slane %v942, 1
  %v944 = vmax.f32 %v942, %v943
  %v945 = vsub.f32 %v937, %v944
  %v946 = vmul.f32 %v945, 1.442695
  %v947 = vpow.pop %v946
  %v948 = vmul.f32 %v947, %v788
  %v949 = vsel %vm183, %v948, 0.0
  %v950 = vrot.slane %v949, 4
  %v951 = vadd.f32 %v949, %v950
  %v952 = vrot.slane %v951, 2
  %v953 = vadd.f32 %v951, %v952
  %v954 = vrot.slane %v953, 1
  %v955 = vadd.f32 %v953, %v954
  %v956 = vmax.f32 %v955, 1e-09
  %v957 = vrcp.pop %v956
  %v958 = vmul.f32 %v948, %v957
  %960 = vset.pattern.permute.xlu0 0
  %961 = vperm.xlu0 %960, %v958
  %v962 = vpop.permute.xlu0 %961
  %v964 = vmul.f32 %v962, %v786
  %v965 = vsel %vm211, %v964, 0.0
  %v966 = vrot.slane %v965, 4
  %v967 = vadd.f32 %v965, %v966
  %v968 = vrot.slane %v967, 2
  %v969 = vadd.f32 %v967, %v968
  %v970 = vrot.slane %v969, 1
  %v971 = vadd.f32 %v969, %v970
  %972 = vst.msk [vmem:[%s5 + $0x4] sm:$0x1] %vm219, %v971
  %s973 = scalar_lea.vmem %s0, 40
  %v974 = vld [vmem:[%s973] sm:$0x3f]
  %s975 = scalar_lea.vmem %s1, 40
  %v976 = vld [vmem:[%s975] sm:$0x3f]
  %v978 = vsel %vm33, %v974, 0
  %980 = vmatprep.subr.mxu0 0.0
  %981 = vmatpush1.msra.mxu0 %v20
  %982 = vmatprep.subr.mxu0 0.0
  %983 = vmatpush1.msra.mxu0 %v21
  %984 = vmatprep.subr.mxu0 0.0
  %985 = vmatpush1.msra.mxu0 0.0
  %986 = vmatprep.subr.mxu0 0.0
  %987 = vmatpush1.msra.mxu0 0.0
  %988 = vmatprep.subr.mxu0 0.0
  %989 = vmatpush1.msra.mxu0 0.0
  %990 = vmatprep.subr.mxu0 0.0
  %991 = vmatpush1.msra.mxu0 0.0
  %992 = vmatprep.subr.mxu0 0.0
  %993 = vmatpush1.msra.mxu0 0.0
  %994 = vmatprep.subr.mxu0 0.0
  %995 = vmatpush1.msra.mxu0 0.0
  %996 = vmatprep.subr.mxu0 0.0
  %997 = vmatpush1.msra.mxu0 0.0
  %998 = vmatprep.subr.mxu0 0.0
  %999 = vmatpush1.msra.mxu0 0.0
  %1000 = vmatprep.subr.mxu0 0.0
  %1001 = vmatpush1.msra.mxu0 0.0
  %1002 = vmatprep.subr.mxu0 0.0
  %1003 = vmatpush1.msra.mxu0 0.0
  %1004 = vmatprep.subr.mxu0 0.0
  %1005 = vmatpush1.msra.mxu0 0.0
  %1006 = vmatprep.subr.mxu0 0.0
  %1007 = vmatpush1.msra.mxu0 0.0
  %1008 = vmatprep.subr.mxu0 0.0
  %1009 = vmatpush1.msra.mxu0 0.0
  %1010 = vmatprep.subr.mxu0 0.0
  %1011 = vmatpush1.msra.mxu0 0.0
  %1012 = vmatprep.subr.mxu0 0.0
  %1013 = vmatpush1.msra.mxu0 0.0
  %1014 = vmatprep.subr.mxu0 0.0
  %1015 = vmatpush1.msra.mxu0 0.0
  %1016 = vmatprep.subr.mxu0 0.0
  %1017 = vmatpush1.msra.mxu0 0.0
  %1018 = vmatprep.subr.mxu0 0.0
  %1019 = vmatpush1.msra.mxu0 0.0
  %1020 = vmatprep.subr.mxu0 0.0
  %1021 = vmatpush1.msra.mxu0 0.0
  %1022 = vmatprep.subr.mxu0 0.0
  %1023 = vmatpush1.msra.mxu0 0.0
  %1024 = vmatprep.subr.mxu0 0.0
  %1025 = vmatpush1.msra.mxu0 0.0
  %1026 = vmatprep.subr.mxu0 0.0
  %1027 = vmatpush1.msra.mxu0 0.0
  %1028 = vmatprep.subr.mxu0 0.0
  %1029 = vmatpush1.msra.mxu0 0.0
  %1030 = vmatprep.subr.mxu0 0.0
  %1031 = vmatpush1.msra.mxu0 0.0
  %1032 = vmatprep.subr.mxu0 0.0
  %1033 = vmatpush1.msra.mxu0 0.0
  %1034 = vmatprep.subr.mxu0 0.0
  %1035 = vmatpush1.msra.mxu0 0.0
  %1036 = vmatprep.subr.mxu0 0.0
  %1037 = vmatpush1.msra.mxu0 0.0
  %1038 = vmatprep.subr.mxu0 0.0
  %1039 = vmatpush1.msra.mxu0 0.0
  %1040 = vmatprep.subr.mxu0 0.0
  %1041 = vmatpush1.msra.mxu0 0.0
  %1042 = vmatprep.subr.mxu0 0.0
  %1043 = vmatpush1.msra.mxu0 0.0
  %1044 = vmatprep.mubr.f32.mxu0 0.0
  %1045 = vmatmul.mubr.f32.gmra.mrb[0].mxu0 %v978
  %v1046 = vpop.f32.mrb[0].mxu0
  %v1047 = vadd.f32 %v31, %v1046
  %v1048 = vpop.f32.mrb[0].mxu0
  %1049 = vdwg.mxu0
  %v1050 = vtanh.pop %v1047
  %v1052 = vsel %vm33, %v1050, 0
  %1054 = vmatprep.subr.mxu0 0.0
  %1055 = vmatpush1.msra.mxu0 %v23
  %1056 = vmatprep.subr.mxu0 0.0
  %1057 = vmatpush1.msra.mxu0 %v24
  %1058 = vmatprep.subr.mxu0 0.0
  %1059 = vmatpush1.msra.mxu0 0.0
  %1060 = vmatprep.subr.mxu0 0.0
  %1061 = vmatpush1.msra.mxu0 0.0
  %1062 = vmatprep.subr.mxu0 0.0
  %1063 = vmatpush1.msra.mxu0 0.0
  %1064 = vmatprep.subr.mxu0 0.0
  %1065 = vmatpush1.msra.mxu0 0.0
  %1066 = vmatprep.subr.mxu0 0.0
  %1067 = vmatpush1.msra.mxu0 0.0
  %1068 = vmatprep.subr.mxu0 0.0
  %1069 = vmatpush1.msra.mxu0 0.0
  %1070 = vmatprep.subr.mxu0 0.0
  %1071 = vmatpush1.msra.mxu0 0.0
  %1072 = vmatprep.subr.mxu0 0.0
  %1073 = vmatpush1.msra.mxu0 0.0
  %1074 = vmatprep.subr.mxu0 0.0
  %1075 = vmatpush1.msra.mxu0 0.0
  %1076 = vmatprep.subr.mxu0 0.0
  %1077 = vmatpush1.msra.mxu0 0.0
  %1078 = vmatprep.subr.mxu0 0.0
  %1079 = vmatpush1.msra.mxu0 0.0
  %1080 = vmatprep.subr.mxu0 0.0
  %1081 = vmatpush1.msra.mxu0 0.0
  %1082 = vmatprep.subr.mxu0 0.0
  %1083 = vmatpush1.msra.mxu0 0.0
  %1084 = vmatprep.subr.mxu0 0.0
  %1085 = vmatpush1.msra.mxu0 0.0
  %1086 = vmatprep.subr.mxu0 0.0
  %1087 = vmatpush1.msra.mxu0 0.0
  %1088 = vmatprep.subr.mxu0 0.0
  %1089 = vmatpush1.msra.mxu0 0.0
  %1090 = vmatprep.subr.mxu0 0.0
  %1091 = vmatpush1.msra.mxu0 0.0
  %1092 = vmatprep.subr.mxu0 0.0
  %1093 = vmatpush1.msra.mxu0 0.0
  %1094 = vmatprep.subr.mxu0 0.0
  %1095 = vmatpush1.msra.mxu0 0.0
  %1096 = vmatprep.subr.mxu0 0.0
  %1097 = vmatpush1.msra.mxu0 0.0
  %1098 = vmatprep.subr.mxu0 0.0
  %1099 = vmatpush1.msra.mxu0 0.0
  %1100 = vmatprep.subr.mxu0 0.0
  %1101 = vmatpush1.msra.mxu0 0.0
  %1102 = vmatprep.subr.mxu0 0.0
  %1103 = vmatpush1.msra.mxu0 0.0
  %1104 = vmatprep.subr.mxu0 0.0
  %1105 = vmatpush1.msra.mxu0 0.0
  %1106 = vmatprep.subr.mxu0 0.0
  %1107 = vmatpush1.msra.mxu0 0.0
  %1108 = vmatprep.subr.mxu0 0.0
  %1109 = vmatpush1.msra.mxu0 0.0
  %1110 = vmatprep.subr.mxu0 0.0
  %1111 = vmatpush1.msra.mxu0 0.0
  %1112 = vmatprep.subr.mxu0 0.0
  %1113 = vmatpush1.msra.mxu0 0.0
  %1114 = vmatprep.subr.mxu0 0.0
  %1115 = vmatpush1.msra.mxu0 0.0
  %1116 = vmatprep.subr.mxu0 0.0
  %1117 = vmatpush1.msra.mxu0 0.0
  %1118 = vmatprep.mubr.f32.mxu0 0.0
  %1119 = vmatmul.mubr.f32.gmra.mrb[0].mxu0 %v1052
  %v1120 = vpop.f32.mrb[0].mxu0
  %v1121 = vadd.f32 0.0, %v1120
  %v1122 = vpop.f32.mrb[0].mxu0
  %1123 = vdwg.mxu0
  %vm1124 = vcmp.gt.f32.partialorder %v976, 0.0
  %v1125 = vsel %vm1124, %v1121, -1e+30
  %v1126 = vsel %vm183, %v1125, -inf
  %v1127 = vrot.slane %v1126, 4
  %v1128 = vmax.f32 %v1126, %v1127
  %v1129 = vrot.slane %v1128, 2
  %v1130 = vmax.f32 %v1128, %v1129
  %v1131 = vrot.slane %v1130, 1
  %v1132 = vmax.f32 %v1130, %v1131
  %v1133 = vsub.f32 %v1125, %v1132
  %v1134 = vmul.f32 %v1133, 1.442695
  %v1135 = vpow.pop %v1134
  %v1136 = vmul.f32 %v1135, %v976
  %v1137 = vsel %vm183, %v1136, 0.0
  %v1138 = vrot.slane %v1137, 4
  %v1139 = vadd.f32 %v1137, %v1138
  %v1140 = vrot.slane %v1139, 2
  %v1141 = vadd.f32 %v1139, %v1140
  %v1142 = vrot.slane %v1141, 1
  %v1143 = vadd.f32 %v1141, %v1142
  %v1144 = vmax.f32 %v1143, 1e-09
  %v1145 = vrcp.pop %v1144
  %v1146 = vmul.f32 %v1136, %v1145
  %1148 = vset.pattern.permute.xlu0 0
  %1149 = vperm.xlu0 %1148, %v1146
  %v1150 = vpop.permute.xlu0 %1149
  %v1152 = vmul.f32 %v1150, %v974
  %v1153 = vsel %vm211, %v1152, 0.0
  %v1154 = vrot.slane %v1153, 4
  %v1155 = vadd.f32 %v1153, %v1154
  %v1156 = vrot.slane %v1155, 2
  %v1157 = vadd.f32 %v1155, %v1156
  %v1158 = vrot.slane %v1157, 1
  %v1159 = vadd.f32 %v1157, %v1158
  %1160 = vst.msk [vmem:[%s5 + $0x5] sm:$0x1] %vm219, %v1159
  %s1161 = scalar_lea.vmem %s0, 48
  %v1162 = vld [vmem:[%s1161] sm:$0x3f]
  %s1163 = scalar_lea.vmem %s1, 48
  %v1164 = vld [vmem:[%s1163] sm:$0x3f]
  %v1166 = vsel %vm33, %v1162, 0
  %1168 = vmatprep.subr.mxu0 0.0
  %1169 = vmatpush1.msra.mxu0 %v20
  %1170 = vmatprep.subr.mxu0 0.0
  %1171 = vmatpush1.msra.mxu0 %v21
  %1172 = vmatprep.subr.mxu0 0.0
  %1173 = vmatpush1.msra.mxu0 0.0
  %1174 = vmatprep.subr.mxu0 0.0
  %1175 = vmatpush1.msra.mxu0 0.0
  %1176 = vmatprep.subr.mxu0 0.0
  %1177 = vmatpush1.msra.mxu0 0.0
  %1178 = vmatprep.subr.mxu0 0.0
  %1179 = vmatpush1.msra.mxu0 0.0
  %1180 = vmatprep.subr.mxu0 0.0
  %1181 = vmatpush1.msra.mxu0 0.0
  %1182 = vmatprep.subr.mxu0 0.0
  %1183 = vmatpush1.msra.mxu0 0.0
  %1184 = vmatprep.subr.mxu0 0.0
  %1185 = vmatpush1.msra.mxu0 0.0
  %1186 = vmatprep.subr.mxu0 0.0
  %1187 = vmatpush1.msra.mxu0 0.0
  %1188 = vmatprep.subr.mxu0 0.0
  %1189 = vmatpush1.msra.mxu0 0.0
  %1190 = vmatprep.subr.mxu0 0.0
  %1191 = vmatpush1.msra.mxu0 0.0
  %1192 = vmatprep.subr.mxu0 0.0
  %1193 = vmatpush1.msra.mxu0 0.0
  %1194 = vmatprep.subr.mxu0 0.0
  %1195 = vmatpush1.msra.mxu0 0.0
  %1196 = vmatprep.subr.mxu0 0.0
  %1197 = vmatpush1.msra.mxu0 0.0
  %1198 = vmatprep.subr.mxu0 0.0
  %1199 = vmatpush1.msra.mxu0 0.0
  %1200 = vmatprep.subr.mxu0 0.0
  %1201 = vmatpush1.msra.mxu0 0.0
  %1202 = vmatprep.subr.mxu0 0.0
  %1203 = vmatpush1.msra.mxu0 0.0
  %1204 = vmatprep.subr.mxu0 0.0
  %1205 = vmatpush1.msra.mxu0 0.0
  %1206 = vmatprep.subr.mxu0 0.0
  %1207 = vmatpush1.msra.mxu0 0.0
  %1208 = vmatprep.subr.mxu0 0.0
  %1209 = vmatpush1.msra.mxu0 0.0
  %1210 = vmatprep.subr.mxu0 0.0
  %1211 = vmatpush1.msra.mxu0 0.0
  %1212 = vmatprep.subr.mxu0 0.0
  %1213 = vmatpush1.msra.mxu0 0.0
  %1214 = vmatprep.subr.mxu0 0.0
  %1215 = vmatpush1.msra.mxu0 0.0
  %1216 = vmatprep.subr.mxu0 0.0
  %1217 = vmatpush1.msra.mxu0 0.0
  %1218 = vmatprep.subr.mxu0 0.0
  %1219 = vmatpush1.msra.mxu0 0.0
  %1220 = vmatprep.subr.mxu0 0.0
  %1221 = vmatpush1.msra.mxu0 0.0
  %1222 = vmatprep.subr.mxu0 0.0
  %1223 = vmatpush1.msra.mxu0 0.0
  %1224 = vmatprep.subr.mxu0 0.0
  %1225 = vmatpush1.msra.mxu0 0.0
  %1226 = vmatprep.subr.mxu0 0.0
  %1227 = vmatpush1.msra.mxu0 0.0
  %1228 = vmatprep.subr.mxu0 0.0
  %1229 = vmatpush1.msra.mxu0 0.0
  %1230 = vmatprep.subr.mxu0 0.0
  %1231 = vmatpush1.msra.mxu0 0.0
  %1232 = vmatprep.mubr.f32.mxu0 0.0
  %1233 = vmatmul.mubr.f32.gmra.mrb[0].mxu0 %v1166
  %v1234 = vpop.f32.mrb[0].mxu0
  %v1235 = vadd.f32 %v31, %v1234
  %v1236 = vpop.f32.mrb[0].mxu0
  %1237 = vdwg.mxu0
  %v1238 = vtanh.pop %v1235
  %v1240 = vsel %vm33, %v1238, 0
  %1242 = vmatprep.subr.mxu0 0.0
  %1243 = vmatpush1.msra.mxu0 %v23
  %1244 = vmatprep.subr.mxu0 0.0
  %1245 = vmatpush1.msra.mxu0 %v24
  %1246 = vmatprep.subr.mxu0 0.0
  %1247 = vmatpush1.msra.mxu0 0.0
  %1248 = vmatprep.subr.mxu0 0.0
  %1249 = vmatpush1.msra.mxu0 0.0
  %1250 = vmatprep.subr.mxu0 0.0
  %1251 = vmatpush1.msra.mxu0 0.0
  %1252 = vmatprep.subr.mxu0 0.0
  %1253 = vmatpush1.msra.mxu0 0.0
  %1254 = vmatprep.subr.mxu0 0.0
  %1255 = vmatpush1.msra.mxu0 0.0
  %1256 = vmatprep.subr.mxu0 0.0
  %1257 = vmatpush1.msra.mxu0 0.0
  %1258 = vmatprep.subr.mxu0 0.0
  %1259 = vmatpush1.msra.mxu0 0.0
  %1260 = vmatprep.subr.mxu0 0.0
  %1261 = vmatpush1.msra.mxu0 0.0
  %1262 = vmatprep.subr.mxu0 0.0
  %1263 = vmatpush1.msra.mxu0 0.0
  %1264 = vmatprep.subr.mxu0 0.0
  %1265 = vmatpush1.msra.mxu0 0.0
  %1266 = vmatprep.subr.mxu0 0.0
  %1267 = vmatpush1.msra.mxu0 0.0
  %1268 = vmatprep.subr.mxu0 0.0
  %1269 = vmatpush1.msra.mxu0 0.0
  %1270 = vmatprep.subr.mxu0 0.0
  %1271 = vmatpush1.msra.mxu0 0.0
  %1272 = vmatprep.subr.mxu0 0.0
  %1273 = vmatpush1.msra.mxu0 0.0
  %1274 = vmatprep.subr.mxu0 0.0
  %1275 = vmatpush1.msra.mxu0 0.0
  %1276 = vmatprep.subr.mxu0 0.0
  %1277 = vmatpush1.msra.mxu0 0.0
  %1278 = vmatprep.subr.mxu0 0.0
  %1279 = vmatpush1.msra.mxu0 0.0
  %1280 = vmatprep.subr.mxu0 0.0
  %1281 = vmatpush1.msra.mxu0 0.0
  %1282 = vmatprep.subr.mxu0 0.0
  %1283 = vmatpush1.msra.mxu0 0.0
  %1284 = vmatprep.subr.mxu0 0.0
  %1285 = vmatpush1.msra.mxu0 0.0
  %1286 = vmatprep.subr.mxu0 0.0
  %1287 = vmatpush1.msra.mxu0 0.0
  %1288 = vmatprep.subr.mxu0 0.0
  %1289 = vmatpush1.msra.mxu0 0.0
  %1290 = vmatprep.subr.mxu0 0.0
  %1291 = vmatpush1.msra.mxu0 0.0
  %1292 = vmatprep.subr.mxu0 0.0
  %1293 = vmatpush1.msra.mxu0 0.0
  %1294 = vmatprep.subr.mxu0 0.0
  %1295 = vmatpush1.msra.mxu0 0.0
  %1296 = vmatprep.subr.mxu0 0.0
  %1297 = vmatpush1.msra.mxu0 0.0
  %1298 = vmatprep.subr.mxu0 0.0
  %1299 = vmatpush1.msra.mxu0 0.0
  %1300 = vmatprep.subr.mxu0 0.0
  %1301 = vmatpush1.msra.mxu0 0.0
  %1302 = vmatprep.subr.mxu0 0.0
  %1303 = vmatpush1.msra.mxu0 0.0
  %1304 = vmatprep.subr.mxu0 0.0
  %1305 = vmatpush1.msra.mxu0 0.0
  %1306 = vmatprep.mubr.f32.mxu0 0.0
  %1307 = vmatmul.mubr.f32.gmra.mrb[0].mxu0 %v1240
  %v1308 = vpop.f32.mrb[0].mxu0
  %v1309 = vadd.f32 0.0, %v1308
  %v1310 = vpop.f32.mrb[0].mxu0
  %1311 = vdwg.mxu0
  %vm1312 = vcmp.gt.f32.partialorder %v1164, 0.0
  %v1313 = vsel %vm1312, %v1309, -1e+30
  %v1314 = vsel %vm183, %v1313, -inf
  %v1315 = vrot.slane %v1314, 4
  %v1316 = vmax.f32 %v1314, %v1315
  %v1317 = vrot.slane %v1316, 2
  %v1318 = vmax.f32 %v1316, %v1317
  %v1319 = vrot.slane %v1318, 1
  %v1320 = vmax.f32 %v1318, %v1319
  %v1321 = vsub.f32 %v1313, %v1320
  %v1322 = vmul.f32 %v1321, 1.442695
  %v1323 = vpow.pop %v1322
  %v1324 = vmul.f32 %v1323, %v1164
  %v1325 = vsel %vm183, %v1324, 0.0
  %v1326 = vrot.slane %v1325, 4
  %v1327 = vadd.f32 %v1325, %v1326
  %v1328 = vrot.slane %v1327, 2
  %v1329 = vadd.f32 %v1327, %v1328
  %v1330 = vrot.slane %v1329, 1
  %v1331 = vadd.f32 %v1329, %v1330
  %v1332 = vmax.f32 %v1331, 1e-09
  %v1333 = vrcp.pop %v1332
  %v1334 = vmul.f32 %v1324, %v1333
  %1336 = vset.pattern.permute.xlu0 0
  %1337 = vperm.xlu0 %1336, %v1334
  %v1338 = vpop.permute.xlu0 %1337
  %v1340 = vmul.f32 %v1338, %v1162
  %v1341 = vsel %vm211, %v1340, 0.0
  %v1342 = vrot.slane %v1341, 4
  %v1343 = vadd.f32 %v1341, %v1342
  %v1344 = vrot.slane %v1343, 2
  %v1345 = vadd.f32 %v1343, %v1344
  %v1346 = vrot.slane %v1345, 1
  %v1347 = vadd.f32 %v1345, %v1346
  %1348 = vst.msk [vmem:[%s5 + $0x6] sm:$0x1] %vm219, %v1347
  %s1349 = scalar_lea.vmem %s0, 56
  %v1350 = vld [vmem:[%s1349] sm:$0x3f]
  %s1351 = scalar_lea.vmem %s1, 56
  %v1352 = vld [vmem:[%s1351] sm:$0x3f]
  %v1354 = vsel %vm33, %v1350, 0
  %1356 = vmatprep.subr.mxu0 0.0
  %1357 = vmatpush1.msra.mxu0 %v20
  %1358 = vmatprep.subr.mxu0 0.0
  %1359 = vmatpush1.msra.mxu0 %v21
  %1360 = vmatprep.subr.mxu0 0.0
  %1361 = vmatpush1.msra.mxu0 0.0
  %1362 = vmatprep.subr.mxu0 0.0
  %1363 = vmatpush1.msra.mxu0 0.0
  %1364 = vmatprep.subr.mxu0 0.0
  %1365 = vmatpush1.msra.mxu0 0.0
  %1366 = vmatprep.subr.mxu0 0.0
  %1367 = vmatpush1.msra.mxu0 0.0
  %1368 = vmatprep.subr.mxu0 0.0
  %1369 = vmatpush1.msra.mxu0 0.0
  %1370 = vmatprep.subr.mxu0 0.0
  %1371 = vmatpush1.msra.mxu0 0.0
  %1372 = vmatprep.subr.mxu0 0.0
  %1373 = vmatpush1.msra.mxu0 0.0
  %1374 = vmatprep.subr.mxu0 0.0
  %1375 = vmatpush1.msra.mxu0 0.0
  %1376 = vmatprep.subr.mxu0 0.0
  %1377 = vmatpush1.msra.mxu0 0.0
  %1378 = vmatprep.subr.mxu0 0.0
  %1379 = vmatpush1.msra.mxu0 0.0
  %1380 = vmatprep.subr.mxu0 0.0
  %1381 = vmatpush1.msra.mxu0 0.0
  %1382 = vmatprep.subr.mxu0 0.0
  %1383 = vmatpush1.msra.mxu0 0.0
  %1384 = vmatprep.subr.mxu0 0.0
  %1385 = vmatpush1.msra.mxu0 0.0
  %1386 = vmatprep.subr.mxu0 0.0
  %1387 = vmatpush1.msra.mxu0 0.0
  %1388 = vmatprep.subr.mxu0 0.0
  %1389 = vmatpush1.msra.mxu0 0.0
  %1390 = vmatprep.subr.mxu0 0.0
  %1391 = vmatpush1.msra.mxu0 0.0
  %1392 = vmatprep.subr.mxu0 0.0
  %1393 = vmatpush1.msra.mxu0 0.0
  %1394 = vmatprep.subr.mxu0 0.0
  %1395 = vmatpush1.msra.mxu0 0.0
  %1396 = vmatprep.subr.mxu0 0.0
  %1397 = vmatpush1.msra.mxu0 0.0
  %1398 = vmatprep.subr.mxu0 0.0
  %1399 = vmatpush1.msra.mxu0 0.0
  %1400 = vmatprep.subr.mxu0 0.0
  %1401 = vmatpush1.msra.mxu0 0.0
  %1402 = vmatprep.subr.mxu0 0.0
  %1403 = vmatpush1.msra.mxu0 0.0
  %1404 = vmatprep.subr.mxu0 0.0
  %1405 = vmatpush1.msra.mxu0 0.0
  %1406 = vmatprep.subr.mxu0 0.0
  %1407 = vmatpush1.msra.mxu0 0.0
  %1408 = vmatprep.subr.mxu0 0.0
  %1409 = vmatpush1.msra.mxu0 0.0
  %1410 = vmatprep.subr.mxu0 0.0
  %1411 = vmatpush1.msra.mxu0 0.0
  %1412 = vmatprep.subr.mxu0 0.0
  %1413 = vmatpush1.msra.mxu0 0.0
  %1414 = vmatprep.subr.mxu0 0.0
  %1415 = vmatpush1.msra.mxu0 0.0
  %1416 = vmatprep.subr.mxu0 0.0
  %1417 = vmatpush1.msra.mxu0 0.0
  %1418 = vmatprep.subr.mxu0 0.0
  %1419 = vmatpush1.msra.mxu0 0.0
  %1420 = vmatprep.mubr.f32.mxu0 0.0
  %1421 = vmatmul.mubr.f32.gmra.mrb[0].mxu0 %v1354
  %v1422 = vpop.f32.mrb[0].mxu0
  %v1423 = vadd.f32 %v31, %v1422
  %v1424 = vpop.f32.mrb[0].mxu0
  %1425 = vdwg.mxu0
  %v1426 = vtanh.pop %v1423
  %v1428 = vsel %vm33, %v1426, 0
  %1430 = vmatprep.subr.mxu0 0.0
  %1431 = vmatpush1.msra.mxu0 %v23
  %1432 = vmatprep.subr.mxu0 0.0
  %1433 = vmatpush1.msra.mxu0 %v24
  %1434 = vmatprep.subr.mxu0 0.0
  %1435 = vmatpush1.msra.mxu0 0.0
  %1436 = vmatprep.subr.mxu0 0.0
  %1437 = vmatpush1.msra.mxu0 0.0
  %1438 = vmatprep.subr.mxu0 0.0
  %1439 = vmatpush1.msra.mxu0 0.0
  %1440 = vmatprep.subr.mxu0 0.0
  %1441 = vmatpush1.msra.mxu0 0.0
  %1442 = vmatprep.subr.mxu0 0.0
  %1443 = vmatpush1.msra.mxu0 0.0
  %1444 = vmatprep.subr.mxu0 0.0
  %1445 = vmatpush1.msra.mxu0 0.0
  %1446 = vmatprep.subr.mxu0 0.0
  %1447 = vmatpush1.msra.mxu0 0.0
  %1448 = vmatprep.subr.mxu0 0.0
  %1449 = vmatpush1.msra.mxu0 0.0
  %1450 = vmatprep.subr.mxu0 0.0
  %1451 = vmatpush1.msra.mxu0 0.0
  %1452 = vmatprep.subr.mxu0 0.0
  %1453 = vmatpush1.msra.mxu0 0.0
  %1454 = vmatprep.subr.mxu0 0.0
  %1455 = vmatpush1.msra.mxu0 0.0
  %1456 = vmatprep.subr.mxu0 0.0
  %1457 = vmatpush1.msra.mxu0 0.0
  %1458 = vmatprep.subr.mxu0 0.0
  %1459 = vmatpush1.msra.mxu0 0.0
  %1460 = vmatprep.subr.mxu0 0.0
  %1461 = vmatpush1.msra.mxu0 0.0
  %1462 = vmatprep.subr.mxu0 0.0
  %1463 = vmatpush1.msra.mxu0 0.0
  %1464 = vmatprep.subr.mxu0 0.0
  %1465 = vmatpush1.msra.mxu0 0.0
  %1466 = vmatprep.subr.mxu0 0.0
  %1467 = vmatpush1.msra.mxu0 0.0
  %1468 = vmatprep.subr.mxu0 0.0
  %1469 = vmatpush1.msra.mxu0 0.0
  %1470 = vmatprep.subr.mxu0 0.0
  %1471 = vmatpush1.msra.mxu0 0.0
  %1472 = vmatprep.subr.mxu0 0.0
  %1473 = vmatpush1.msra.mxu0 0.0
  %1474 = vmatprep.subr.mxu0 0.0
  %1475 = vmatpush1.msra.mxu0 0.0
  %1476 = vmatprep.subr.mxu0 0.0
  %1477 = vmatpush1.msra.mxu0 0.0
  %1478 = vmatprep.subr.mxu0 0.0
  %1479 = vmatpush1.msra.mxu0 0.0
  %1480 = vmatprep.subr.mxu0 0.0
  %1481 = vmatpush1.msra.mxu0 0.0
  %1482 = vmatprep.subr.mxu0 0.0
  %1483 = vmatpush1.msra.mxu0 0.0
  %1484 = vmatprep.subr.mxu0 0.0
  %1485 = vmatpush1.msra.mxu0 0.0
  %1486 = vmatprep.subr.mxu0 0.0
  %1487 = vmatpush1.msra.mxu0 0.0
  %1488 = vmatprep.subr.mxu0 0.0
  %1489 = vmatpush1.msra.mxu0 0.0
  %1490 = vmatprep.subr.mxu0 0.0
  %1491 = vmatpush1.msra.mxu0 0.0
  %1492 = vmatprep.subr.mxu0 0.0
  %1493 = vmatpush1.msra.mxu0 0.0
  %1494 = vmatprep.mubr.f32.mxu0 0.0
  %1495 = vmatmul.mubr.f32.gmra.mrb[0].mxu0 %v1428
  %v1496 = vpop.f32.mrb[0].mxu0
  %v1497 = vadd.f32 0.0, %v1496
  %v1498 = vpop.f32.mrb[0].mxu0
  %1499 = vdwg.mxu0
  %vm1500 = vcmp.gt.f32.partialorder %v1352, 0.0
  %v1501 = vsel %vm1500, %v1497, -1e+30
  %v1502 = vsel %vm183, %v1501, -inf
  %v1503 = vrot.slane %v1502, 4
  %v1504 = vmax.f32 %v1502, %v1503
  %v1505 = vrot.slane %v1504, 2
  %v1506 = vmax.f32 %v1504, %v1505
  %v1507 = vrot.slane %v1506, 1
  %v1508 = vmax.f32 %v1506, %v1507
  %v1509 = vsub.f32 %v1501, %v1508
  %v1510 = vmul.f32 %v1509, 1.442695
  %v1511 = vpow.pop %v1510
  %v1512 = vmul.f32 %v1511, %v1352
  %v1513 = vsel %vm183, %v1512, 0.0
  %v1514 = vrot.slane %v1513, 4
  %v1515 = vadd.f32 %v1513, %v1514
  %v1516 = vrot.slane %v1515, 2
  %v1517 = vadd.f32 %v1515, %v1516
  %v1518 = vrot.slane %v1517, 1
  %v1519 = vadd.f32 %v1517, %v1518
  %v1520 = vmax.f32 %v1519, 1e-09
  %v1521 = vrcp.pop %v1520
  %v1522 = vmul.f32 %v1512, %v1521
  %1524 = vset.pattern.permute.xlu0 0
  %1525 = vperm.xlu0 %1524, %v1522
  %v1526 = vpop.permute.xlu0 %1525
  %v1528 = vmul.f32 %v1526, %v1350
  %v1529 = vsel %vm211, %v1528, 0.0
  %v1530 = vrot.slane %v1529, 4
  %v1531 = vadd.f32 %v1529, %v1530
  %v1532 = vrot.slane %v1531, 2
  %v1533 = vadd.f32 %v1531, %v1532
  %v1534 = vrot.slane %v1533, 1
  %v1535 = vadd.f32 %v1533, %v1534
  %1536 = vst.msk [vmem:[%s5 + $0x7] sm:$0x1] %vm219, %v1535
  // Predicated region
  $region22: #{tam_forward.7} parent=0 // pred_check
    _
  $region23: #{tam_forward.7} parent=0 // pred_check_branch
    %1538 = sbr.rel (0) target = $region25
  $region24: #{tam_forward.7} parent=0 // pred_region
    _
  $region25: #{tam_forward.7} parent=0 // pred_fallthru
    _
  // Predicated region
  $region26: #{tam_forward.7} parent=0 // pred_check
    _
  $region27: #{tam_forward.7} parent=0 // pred_check_branch
    %1540 = sbr.rel (0) target = $region29
  $region28: #{tam_forward.7} parent=0 // pred_region
    _
  $region29: #{tam_forward.7} parent=0 // pred_fallthru
    _

// kernel: tam_forward.9
$region0: #{tam_forward.9}
  #allocation0 [shape = 'u32[]', space=smem, size = 0x4, offset = 0x4, fixed_abs, tag = 'smem constant byte address 0x4 - core index']
  #allocation1 [shape = 'u32[144,128]{1,0:T(1,128)}', space=vmem, size = 0x12000, scoped, tag = 'internal scratch']
  #allocation2 [shape = 'f32[1,1]{1,0:T(1,128)S(1)}', space=vmem, size = 0x200, scoped, tag = 'scoped memory for tam_forward.9']
  %s0 = inlined_call_operand.vmem [shape: f32[40,32], index: 0, kind: input, shape index: {}]
  %s1 = inlined_call_operand.vmem [shape: f32[40,96], index: 1, kind: input, shape index: {}]
  %s2 = inlined_call_operand.vmem [shape: f32[32,96], index: 2, kind: input, shape index: {}]
  %s3 = inlined_call_operand.vmem [shape: f32[1,96], index: 3, kind: input, shape index: {}]
  %s4 = inlined_call_operand.vmem [shape: f32[96,512], index: 4, kind: input, shape index: {}]
  %s5 = inlined_call_operand.vmem [shape: f32[96,512], index: 5, kind: input, shape index: {}]
  %s6 = inlined_call_operand.vmem [shape: f32[96,512], index: 6, kind: input, shape index: {}]
  %s7 = inlined_call_operand.vmem [shape: f32[96,512], index: 7, kind: input, shape index: {}]
  %s8 = inlined_call_operand.vmem [shape: f32[1,512], index: 8, kind: input, shape index: {}]
  %s9 = inlined_call_operand.vmem [shape: f32[1,512], index: 9, kind: input, shape index: {}]
  %s10 = inlined_call_operand.vmem [shape: f32[512,512], index: 10, kind: input, shape index: {}]
  %s11 = inlined_call_operand.vmem [shape: f32[1,512], index: 11, kind: input, shape index: {}]
  %s12 = inlined_call_operand.vmem [shape: f32[512,1], index: 12, kind: input, shape index: {}]
  %s13 = inlined_call_operand.<no memory space> [shape: f32[1,1], index: 13, kind: input, shape index: {}]
  %s14 = inlined_call_operand.vmem [shape: f32[40,1], index: 14, kind: output, shape index: {}]
  %s15 = sld [smem:[#allocation0]]
  $region66: #{tam_forward.9} parent=0
    _
  %s17 = ssub.s32 1, %s15
  %s18 = scalar_select 0, %s17, %s15
  %v19 = vstv %s13
  %20 = vst [vmem:[#allocation2] sm:$0x1] %v19
  // Predicated region
  $region2: #{tam_forward.9} parent=0 // pred_check
    _
  $region3: #{tam_forward.9} parent=0 // pred_check_branch
    %22 = sbr.rel (0) target = $region5
  $region4: #{tam_forward.9} parent=0 // pred_region
    _
  $region5: #{tam_forward.9} parent=0 // pred_fallthru
    _
  // Predicated region
  $region6: #{tam_forward.9} parent=0 // pred_check
    _
  $region7: #{tam_forward.9} parent=0 // pred_check_branch
    %24 = sbr.rel (0) target = $region9
  $region8: #{tam_forward.9} parent=0 // pred_region
    _
  $region9: #{tam_forward.9} parent=0 // pred_fallthru
    _
  // Predicated region
  $region10: #{tam_forward.9} parent=0 // pred_check
    _
  $region11: #{tam_forward.9} parent=0 // pred_check_branch
    %26 = sbr.rel (0) target = $region13
  $region12: #{tam_forward.9} parent=0 // pred_region
    _
  $region13: #{tam_forward.9} parent=0 // pred_fallthru
    _
  // Predicated region
  $region14: #{tam_forward.9} parent=0 // pred_check
    _
  $region15: #{tam_forward.9} parent=0 // pred_check_branch
    %28 = sbr.rel (0) target = $region17
  $region16: #{tam_forward.9} parent=0 // pred_region
    _
  $region17: #{tam_forward.9} parent=0 // pred_fallthru
    _
  // Predicated region
  $region18: #{tam_forward.9} parent=0 // pred_check
    _
  $region19: #{tam_forward.9} parent=0 // pred_check_branch
    %30 = sbr.rel (0) target = $region21
  $region20: #{tam_forward.9} parent=0 // pred_region
    _
  $region21: #{tam_forward.9} parent=0 // pred_fallthru
    _
  // Predicated region
  $region22: #{tam_forward.9} parent=0 // pred_check
    _
  $region23: #{tam_forward.9} parent=0 // pred_check_branch
    %32 = sbr.rel (0) target = $region25
  $region24: #{tam_forward.9} parent=0 // pred_region
    _
  $region25: #{tam_forward.9} parent=0 // pred_fallthru
    _
  // Predicated region
  $region26: #{tam_forward.9} parent=0 // pred_check
    _
  $region27: #{tam_forward.9} parent=0 // pred_check_branch
    %34 = sbr.rel (0) target = $region29
  $region28: #{tam_forward.9} parent=0 // pred_region
    _
  $region29: #{tam_forward.9} parent=0 // pred_fallthru
    _
  // Predicated region
  $region30: #{tam_forward.9} parent=0 // pred_check
    _
  $region31: #{tam_forward.9} parent=0 // pred_check_branch
    %36 = sbr.rel (0) target = $region33
  $region32: #{tam_forward.9} parent=0 // pred_region
    _
  $region33: #{tam_forward.9} parent=0 // pred_fallthru
    _
  // Predicated region
  $region34: #{tam_forward.9} parent=0 // pred_check
    _
  $region35: #{tam_forward.9} parent=0 // pred_check_branch
    %38 = sbr.rel (0) target = $region37
  $region36: #{tam_forward.9} parent=0 // pred_region
    _
  $region37: #{tam_forward.9} parent=0 // pred_fallthru
    _
  // Predicated region
  $region38: #{tam_forward.9} parent=0 // pred_check
    _
  $region39: #{tam_forward.9} parent=0 // pred_check_branch
    %40 = sbr.rel (0) target = $region41
  $region40: #{tam_forward.9} parent=0 // pred_region
    _
  $region41: #{tam_forward.9} parent=0 // pred_fallthru
    _
  // Predicated region
  $region42: #{tam_forward.9} parent=0 // pred_check
    _
  $region43: #{tam_forward.9} parent=0 // pred_check_branch
    %42 = sbr.rel (0) target = $region45
  $region44: #{tam_forward.9} parent=0 // pred_region
    _
  $region45: #{tam_forward.9} parent=0 // pred_fallthru
    _
  // Predicated region
  $region46: #{tam_forward.9} parent=0 // pred_check
    _
  $region47: #{tam_forward.9} parent=0 // pred_check_branch
    %44 = sbr.rel (0) target = $region49
  $region48: #{tam_forward.9} parent=0 // pred_region
    _
  $region49: #{tam_forward.9} parent=0 // pred_fallthru
    _
  // Predicated region
  $region50: #{tam_forward.9} parent=0 // pred_check
    _
  $region51: #{tam_forward.9} parent=0 // pred_check_branch
    %46 = sbr.rel (0) target = $region53
  $region52: #{tam_forward.9} parent=0 // pred_region
    _
  $region53: #{tam_forward.9} parent=0 // pred_fallthru
    _
  // Predicated region
  $region54: #{tam_forward.9} parent=0 // pred_check
    _
  $region55: #{tam_forward.9} parent=0 // pred_check_branch
    %48 = sbr.rel (0) target = $region57
  $region56: #{tam_forward.9} parent=0 // pred_region
    _
  $region57: #{tam_forward.9} parent=0 // pred_fallthru
    _
  %v49 = vld [vmem:[%s1] sm:$0xff]
  %v50 = vld [vmem:[%s1 + $0x8] sm:$0xff]
  %v51 = vld [vmem:[%s1 + $0x10] sm:$0xff]
  %v52 = vld [vmem:[%s1 + $0x18] sm:$0xff]
  %v53 = vld [vmem:[%s1 + $0x20] sm:$0xff]
  %v54 = vld [vmem:[%s0] sm:$0xff]
  %v55 = vld [vmem:[%s0 + $0x8] sm:$0xff]
  %v56 = vld [vmem:[%s0 + $0x10] sm:$0xff]
  %v57 = vld [vmem:[%s0 + $0x18] sm:$0xff]
  %v58 = vld [vmem:[%s0 + $0x20] sm:$0xff]
  %v59 = vld [vmem:[%s2] sm:$0xff]
  %v60 = vld [vmem:[%s2 + $0x8] sm:$0xff]
  %v61 = vld [vmem:[%s2 + $0x10] sm:$0xff]
  %v62 = vld [vmem:[%s2 + $0x18] sm:$0xff]
  %v63 = vld [vmem:[%s3] sm:$0x1]
  %v65 = vlaneseq
  %v66 = vshrl.u32 %v65, 7
  %v67 = vsub.s32 0, %v66
  %v68 = vrot.slane %v63, %v67
  %vm70 = vcmask 261120
  %v72 = vsel %vm70, %v54, 0
  %v75 = vsel %vm70, %v55, 0
  %v78 = vsel %vm70, %v56, 0
  %v81 = vsel %vm70, %v57, 0
  %v84 = vsel %vm70, %v58, 0
  %86 = vmatprep.subr.mxu0 0.0
  %87 = vmatpush1.msra.mxu0 %v59
  %88 = vmatprep.subr.mxu0 0.0
  %89 = vmatpush1.msra.mxu0 %v60
  %90 = vmatprep.subr.mxu0 0.0
  %91 = vmatpush1.msra.mxu0 %v61
  %92 = vmatprep.subr.mxu0 0.0
  %93 = vmatpush1.msra.mxu0 %v62
  %94 = vmatprep.subr.mxu0 0.0
  %95 = vmatpush1.msra.mxu0 0.0
  %96 = vmatprep.subr.mxu0 0.0
  %97 = vmatpush1.msra.mxu0 0.0
  %98 = vmatprep.subr.mxu0 0.0
  %99 = vmatpush1.msra.mxu0 0.0
  %100 = vmatprep.subr.mxu0 0.0
  %101 = vmatpush1.msra.mxu0 0.0
  %102 = vmatprep.subr.mxu0 0.0
  %103 = vmatpush1.msra.mxu0 0.0
  %104 = vmatprep.subr.mxu0 0.0
  %105 = vmatpush1.msra.mxu0 0.0
  %106 = vmatprep.subr.mxu0 0.0
  %107 = vmatpush1.msra.mxu0 0.0
  %108 = vmatprep.subr.mxu0 0.0
  %109 = vmatpush1.msra.mxu0 0.0
  %110 = vmatprep.subr.mxu0 0.0
  %111 = vmatpush1.msra.mxu0 0.0
  %112 = vmatprep.subr.mxu0 0.0
  %113 = vmatpush1.msra.mxu0 0.0
  %114 = vmatprep.subr.mxu0 0.0
  %115 = vmatpush1.msra.mxu0 0.0
  %116 = vmatprep.subr.mxu0 0.0
  %117 = vmatpush1.msra.mxu0 0.0
  %118 = vmatprep.subr.mxu0 0.0
  %119 = vmatpush1.msra.mxu0 0.0
  %120 = vmatprep.subr.mxu0 0.0
  %121 = vmatpush1.msra.mxu0 0.0
  %122 = vmatprep.subr.mxu0 0.0
  %123 = vmatpush1.msra.mxu0 0.0
  %124 = vmatprep.subr.mxu0 0.0
  %125 = vmatpush1.msra.mxu0 0.0
  %126 = vmatprep.subr.mxu0 0.0
  %127 = vmatpush1.msra.mxu0 0.0
  %128 = vmatprep.subr.mxu0 0.0
  %129 = vmatpush1.msra.mxu0 0.0
  %130 = vmatprep.subr.mxu0 0.0
  %131 = vmatpush1.msra.mxu0 0.0
  %132 = vmatprep.subr.mxu0 0.0
  %133 = vmatpush1.msra.mxu0 0.0
  %134 = vmatprep.subr.mxu0 0.0
  %135 = vmatpush1.msra.mxu0 0.0
  %136 = vmatprep.subr.mxu0 0.0
  %137 = vmatpush1.msra.mxu0 0.0
  %138 = vmatprep.subr.mxu0 0.0
  %139 = vmatpush1.msra.mxu0 0.0
  %140 = vmatprep.subr.mxu0 0.0
  %141 = vmatpush1.msra.mxu0 0.0
  %142 = vmatprep.subr.mxu0 0.0
  %143 = vmatpush1.msra.mxu0 0.0
  %144 = vmatprep.subr.mxu0 0.0
  %145 = vmatpush1.msra.mxu0 0.0
  %146 = vmatprep.subr.mxu0 0.0
  %147 = vmatpush1.msra.mxu0 0.0
  %148 = vmatprep.subr.mxu0 0.0
  %149 = vmatpush1.msra.mxu0 0.0
  %150 = vmatprep.mubr.f32.mxu0 0.0
  %151 = vmatmul.mubr.f32.gmra.mrb[0].mxu0 %v72
  %v152 = vpop.f32.mrb[0].mxu0
  %v153 = vadd.f32 %v68, %v152
  %v154 = vpop.f32.mrb[0].mxu0
  %155 = vmatprep.mubr.f32.mxu0 0.0
  %156 = vmatmul.mubr.f32.gmra.mrb[0].mxu0 %v75
  %v157 = vpop.f32.mrb[0].mxu0
  %v158 = vadd.f32 %v68, %v157
  %v159 = vpop.f32.mrb[0].mxu0
  %160 = vmatprep.mubr.f32.mxu0 0.0
  %161 = vmatmul.mubr.f32.gmra.mrb[0].mxu0 %v78
  %v162 = vpop.f32.mrb[0].mxu0
  %v163 = vadd.f32 %v68, %v162
  %v164 = vpop.f32.mrb[0].mxu0
  %165 = vmatprep.mubr.f32.mxu0 0.0
  %166 = vmatmul.mubr.f32.gmra.mrb[0].mxu0 %v81
  %v167 = vpop.f32.mrb[0].mxu0
  %v168 = vadd.f32 %v68, %v167
  %v169 = vpop.f32.mrb[0].mxu0
  %170 = vmatprep.mubr.f32.mxu0 0.0
  %171 = vmatmul.mubr.f32.gmra.mrb[0].mxu0 %v84
  %v172 = vpop.f32.mrb[0].mxu0
  %v173 = vadd.f32 %v68, %v172
  %v174 = vpop.f32.mrb[0].mxu0
  %175 = vdwg.mxu0
  %v176 = vmul.f32 %v153, %v49
  %v177 = vmul.f32 %v158, %v50
  %v178 = vmul.f32 %v163, %v51
  %v179 = vmul.f32 %v168, %v52
  %v180 = vmul.f32 %v173, %v53
  %v181 = vsub.f32 %v153, %v49
  %v182 = vsub.f32 %v158, %v50
  %v183 = vsub.f32 %v163, %v51
  %v184 = vsub.f32 %v168, %v52
  %v185 = vsub.f32 %v173, %v53
  %vm186 = vcmask 785408
  %v187 = vsel %vm186, %v176, 0.0
  %188 = vadd.xlane.f32.xlu0 %v187
  %v189 = vpop.xlane.xlu0 %188
  %v190 = vsel %vm186, %v177, 0.0
  %191 = vadd.xlane.f32.xlu0 %v190
  %v192 = vpop.xlane.xlu0 %191
  %v193 = vsel %vm186, %v178, 0.0
  %194 = vadd.xlane.f32.xlu0 %v193
  %v195 = vpop.xlane.xlu0 %194
  %v196 = vsel %vm186, %v179, 0.0
  %197 = vadd.xlane.f32.xlu0 %v196
  %v198 = vpop.xlane.xlu0 %197
  %v199 = vsel %vm186, %v180, 0.0
  %200 = vadd.xlane.f32.xlu0 %v199
  %v201 = vpop.xlane.xlu0 %200
  %v202 = vmul.f32 %v153, %v153
  %v203 = vmul.f32 %v158, %v158
  %v204 = vmul.f32 %v163, %v163
  %v205 = vmul.f32 %v168, %v168
  %v206 = vmul.f32 %v173, %v173
  %v207 = vsel %vm186, %v202, 0.0
  %208 = vadd.xlane.f32.xlu0 %v207
  %v209 = vpop.xlane.xlu0 %208
  %v210 = vsel %vm186, %v203, 0.0
  %211 = vadd.xlane.f32.xlu0 %v210
  %v212 = vpop.xlane.xlu0 %211
  %v213 = vsel %vm186, %v204, 0.0
  %214 = vadd.xlane.f32.xlu0 %v213
  %v215 = vpop.xlane.xlu0 %214
  %v216 = vsel %vm186, %v205, 0.0
  %217 = vadd.xlane.f32.xlu0 %v216
  %v218 = vpop.xlane.xlu0 %217
  %v219 = vsel %vm186, %v206, 0.0
  %220 = vadd.xlane.f32.xlu0 %v219
  %v221 = vpop.xlane.xlu0 %220
  %v222 = vrsqrt.pop %v209
  %v223 = vmul.f32 %v209, %v222
  %vm224 = vcmp.eq.f32.partialorder %v209, inf
  %v225 = vsel %vm224, %v209, %v223
  %vm226 = vcmp.eq.f32.partialorder %v209, 0.0
  %v227 = vand.u32 %v209, 2147483648
  %v228 = vsel %vm226, %v227, %v225
  %v229 = vrsqrt.pop %v212
  %v230 = vmul.f32 %v212, %v229
  %vm231 = vcmp.eq.f32.partialorder %v212, inf
  %v232 = vsel %vm231, %v212, %v230
  %vm233 = vcmp.eq.f32.partialorder %v212, 0.0
  %v234 = vand.u32 %v212, 2147483648
  %v235 = vsel %vm233, %v234, %v232
  %v236 = vrsqrt.pop %v215
  %v237 = vmul.f32 %v215, %v236
  %vm238 = vcmp.eq.f32.partialorder %v215, inf
  %v239 = vsel %vm238, %v215, %v237
  %vm240 = vcmp.eq.f32.partialorder %v215, 0.0
  %v241 = vand.u32 %v215, 2147483648
  %v242 = vsel %vm240, %v241, %v239
  %v243 = vrsqrt.pop %v218
  %v244 = vmul.f32 %v218, %v243
  %vm245 = vcmp.eq.f32.partialorder %v218, inf
  %v246 = vsel %vm245, %v218, %v244
  %vm247 = vcmp.eq.f32.partialorder %v218, 0.0
  %v248 = vand.u32 %v218, 2147483648
  %v249 = vsel %vm247, %v248, %v246
  %v250 = vrsqrt.pop %v221
  %v251 = vmul.f32 %v221, %v250
  %vm252 = vcmp.eq.f32.partialorder %v221, inf
  %v253 = vsel %vm252, %v221, %v251
  %vm254 = vcmp.eq.f32.partialorder %v221, 0.0
  %v255 = vand.u32 %v221, 2147483648
  %v256 = vsel %vm254, %v255, %v253
  %v257 = vmul.f32 %v49, %v49
  %v258 = vmul.f32 %v50, %v50
  %v259 = vmul.f32 %v51, %v51
  %v260 = vmul.f32 %v52, %v52
  %v261 = vmul.f32 %v53, %v53
  %v262 = vsel %vm186, %v257, 0.0
  %263 = vadd.xlane.f32.xlu0 %v262
  %v264 = vpop.xlane.xlu0 %263
  %v265 = vsel %vm186, %v258, 0.0
  %266 = vadd.xlane.f32.xlu0 %v265
  %v267 = vpop.xlane.xlu0 %266
  %v268 = vsel %vm186, %v259, 0.0
  %269 = vadd.xlane.f32.xlu0 %v268
  %v270 = vpop.xlane.xlu0 %269
  %v271 = vsel %vm186, %v260, 0.0
  %272 = vadd.xlane.f32.xlu0 %v271
  %v273 = vpop.xlane.xlu0 %272
  %v274 = vsel %vm186, %v261, 0.0
  %275 = vadd.xlane.f32.xlu0 %v274
  %v276 = vpop.xlane.xlu0 %275
  %v277 = vrsqrt.pop %v264
  %v278 = vmul.f32 %v264, %v277
  %vm279 = vcmp.eq.f32.partialorder %v264, inf
  %v280 = vsel %vm279, %v264, %v278
  %vm281 = vcmp.eq.f32.partialorder %v264, 0.0
  %v282 = vand.u32 %v264, 2147483648
  %v283 = vsel %vm281, %v282, %v280
  %v284 = vrsqrt.pop %v267
  %v285 = vmul.f32 %v267, %v284
  %vm286 = vcmp.eq.f32.partialorder %v267, inf
  %v287 = vsel %vm286, %v267, %v285
  %vm288 = vcmp.eq.f32.partialorder %v267, 0.0
  %v289 = vand.u32 %v267, 2147483648
  %v290 = vsel %vm288, %v289, %v287
  %v291 = vrsqrt.pop %v270
  %v292 = vmul.f32 %v270, %v291
  %vm293 = vcmp.eq.f32.partialorder %v270, inf
  %v294 = vsel %vm293, %v270, %v292
  %vm295 = vcmp.eq.f32.partialorder %v270, 0.0
  %v296 = vand.u32 %v270, 2147483648
  %v297 = vsel %vm295, %v296, %v294
  %v298 = vrsqrt.pop %v273
  %v299 = vmul.f32 %v273, %v298
  %vm300 = vcmp.eq.f32.partialorder %v273, inf
  %v301 = vsel %vm300, %v273, %v299
  %vm302 = vcmp.eq.f32.partialorder %v273, 0.0
  %v303 = vand.u32 %v273, 2147483648
  %v304 = vsel %vm302, %v303, %v301
  %v305 = vrsqrt.pop %v276
  %v306 = vmul.f32 %v276, %v305
  %vm307 = vcmp.eq.f32.partialorder %v276, inf
  %v308 = vsel %vm307, %v276, %v306
  %vm309 = vcmp.eq.f32.partialorder %v276, 0.0
  %v310 = vand.u32 %v276, 2147483648
  %v311 = vsel %vm309, %v310, %v308
  %v312 = vmul.f32 %v228, %v283
  %v313 = vmul.f32 %v235, %v290
  %v314 = vmul.f32 %v242, %v297
  %v315 = vmul.f32 %v249, %v304
  %v316 = vmul.f32 %v256, %v311
  %v317 = vmax.f32 %v312, 1e-08
  %v318 = vmax.f32 %v313, 1e-08
  %v319 = vmax.f32 %v314, 1e-08
  %v320 = vmax.f32 %v315, 1e-08
  %v321 = vmax.f32 %v316, 1e-08
  %v322 = vrcp.pop %v317
  %v323 = vmul.f32 %v189, %v322
  %v324 = vrcp.pop %v318
  %v325 = vmul.f32 %v192, %v324
  %v326 = vrcp.pop %v319
  %v327 = vmul.f32 %v195, %v326
  %v328 = vrcp.pop %v320
  %v329 = vmul.f32 %v198, %v328
  %v330 = vrcp.pop %v321
  %v331 = vmul.f32 %v201, %v330
  %v332 = vld [vmem:[%s4] sm:$0xff]
  %v333 = vld [vmem:[%s4 + $0x8] sm:$0xff]
  %v334 = vld [vmem:[%s4 + $0x10] sm:$0xff]
  %v335 = vld [vmem:[%s4 + $0x18] sm:$0xff]
  %v336 = vld [vmem:[%s4 + $0x20] sm:$0xff]
  %v337 = vld [vmem:[%s4 + $0x28] sm:$0xff]
  %v338 = vld [vmem:[%s4 + $0x30] sm:$0xff]
  %v339 = vld [vmem:[%s4 + $0x38] sm:$0xff]
  %v340 = vld [vmem:[%s4 + $0x40] sm:$0xff]
  %v341 = vld [vmem:[%s4 + $0x48] sm:$0xff]
  %v342 = vld [vmem:[%s4 + $0x50] sm:$0xff]
  %v343 = vld [vmem:[%s4 + $0x58] sm:$0xff]
  %v344 = vld [vmem:[%s4 + $0x60] sm:$0xff]
  %v345 = vld [vmem:[%s4 + $0x68] sm:$0xff]
  %v346 = vld [vmem:[%s4 + $0x70] sm:$0xff]
  %v347 = vld [vmem:[%s4 + $0x78] sm:$0xff]
  %v348 = vld [vmem:[%s4 + $0x80] sm:$0xff]
  %v349 = vld [vmem:[%s4 + $0x88] sm:$0xff]
  %v350 = vld [vmem:[%s4 + $0x90] sm:$0xff]
  %v351 = vld [vmem:[%s4 + $0x98] sm:$0xff]
  %v352 = vld [vmem:[%s4 + $0xa0] sm:$0xff]
  %v353 = vld [vmem:[%s4 + $0xa8] sm:$0xff]
  %v354 = vld [vmem:[%s4 + $0xb0] sm:$0xff]
  %v355 = vld [vmem:[%s4 + $0xb8] sm:$0xff]
  %v356 = vld [vmem:[%s4 + $0xc0] sm:$0xff]
  %v357 = vld [vmem:[%s4 + $0xc8] sm:$0xff]
  %v358 = vld [vmem:[%s4 + $0xd0] sm:$0xff]
  %v359 = vld [vmem:[%s4 + $0xd8] sm:$0xff]
  %v360 = vld [vmem:[%s4 + $0xe0] sm:$0xff]
  %v361 = vld [vmem:[%s4 + $0xe8] sm:$0xff]
  %v362 = vld [vmem:[%s4 + $0xf0] sm:$0xff]
  %v363 = vld [vmem:[%s4 + $0xf8] sm:$0xff]
  %v364 = vld [vmem:[%s4 + $0x100] sm:$0xff]
  %v365 = vld [vmem:[%s4 + $0x108] sm:$0xff]
  %v366 = vld [vmem:[%s4 + $0x110] sm:$0xff]
  %v367 = vld [vmem:[%s4 + $0x118] sm:$0xff]
  %v368 = vld [vmem:[%s4 + $0x120] sm:$0xff]
  %v369 = vld [vmem:[%s4 + $0x128] sm:$0xff]
  %v370 = vld [vmem:[%s4 + $0x130] sm:$0xff]
  %v371 = vld [vmem:[%s4 + $0x138] sm:$0xff]
  %v372 = vld [vmem:[%s4 + $0x140] sm:$0xff]
  %v373 = vld [vmem:[%s4 + $0x148] sm:$0xff]
  %v374 = vld [vmem:[%s4 + $0x150] sm:$0xff]
  %v375 = vld [vmem:[%s4 + $0x158] sm:$0xff]
  %v376 = vld [vmem:[%s4 + $0x160] sm:$0xff]
  %v377 = vld [vmem:[%s4 + $0x168] sm:$0xff]
  %v378 = vld [vmem:[%s4 + $0x170] sm:$0xff]
  %v379 = vld [vmem:[%s4 + $0x178] sm:$0xff]
  %v380 = vld [vmem:[%s5] sm:$0xff]
  %v381 = vld [vmem:[%s5 + $0x8] sm:$0xff]
  %v382 = vld [vmem:[%s5 + $0x10] sm:$0xff]
  %v383 = vld [vmem:[%s5 + $0x18] sm:$0xff]
  %v384 = vld [vmem:[%s5 + $0x20] sm:$0xff]
  %v385 = vld [vmem:[%s5 + $0x28] sm:$0xff]
  %v386 = vld [vmem:[%s5 + $0x30] sm:$0xff]
  %v387 = vld [vmem:[%s5 + $0x38] sm:$0xff]
  %v388 = vld [vmem:[%s5 + $0x40] sm:$0xff]
  %v389 = vld [vmem:[%s5 + $0x48] sm:$0xff]
  %v390 = vld [vmem:[%s5 + $0x50] sm:$0xff]
  %v391 = vld [vmem:[%s5 + $0x58] sm:$0xff]
  %v392 = vld [vmem:[%s5 + $0x60] sm:$0xff]
  %v393 = vld [vmem:[%s5 + $0x68] sm:$0xff]
  %v394 = vld [vmem:[%s5 + $0x70] sm:$0xff]
  %v395 = vld [vmem:[%s5 + $0x78] sm:$0xff]
  %v396 = vld [vmem:[%s5 + $0x80] sm:$0xff]
  %v397 = vld [vmem:[%s5 + $0x88] sm:$0xff]
  %v398 = vld [vmem:[%s5 + $0x90] sm:$0xff]
  %v399 = vld [vmem:[%s5 + $0x98] sm:$0xff]
  %v400 = vld [vmem:[%s5 + $0xa0] sm:$0xff]
  %v401 = vld [vmem:[%s5 + $0xa8] sm:$0xff]
  %v402 = vld [vmem:[%s5 + $0xb0] sm:$0xff]
  %v403 = vld [vmem:[%s5 + $0xb8] sm:$0xff]
  %v404 = vld [vmem:[%s5 + $0xc0] sm:$0xff]
  %v405 = vld [vmem:[%s5 + $0xc8] sm:$0xff]
  %v406 = vld [vmem:[%s5 + $0xd0] sm:$0xff]
  %v407 = vld [vmem:[%s5 + $0xd8] sm:$0xff]
  %v408 = vld [vmem:[%s5 + $0xe0] sm:$0xff]
  %v409 = vld [vmem:[%s5 + $0xe8] sm:$0xff]
  %v410 = vld [vmem:[%s5 + $0xf0] sm:$0xff]
  %v411 = vld [vmem:[%s5 + $0xf8] sm:$0xff]
  %v412 = vld [vmem:[%s5 + $0x100] sm:$0xff]
  %v413 = vld [vmem:[%s5 + $0x108] sm:$0xff]
  %v414 = vld [vmem:[%s5 + $0x110] sm:$0xff]
  %v415 = vld [vmem:[%s5 + $0x118] sm:$0xff]
  %v416 = vld [vmem:[%s5 + $0x120] sm:$0xff]
  %v417 = vld [vmem:[%s5 + $0x128] sm:$0xff]
  %v418 = vld [vmem:[%s5 + $0x130] sm:$0xff]
  %v419 = vld [vmem:[%s5 + $0x138] sm:$0xff]
  %v420 = vld [vmem:[%s5 + $0x140] sm:$0xff]
  %v421 = vld [vmem:[%s5 + $0x148] sm:$0xff]
  %v422 = vld [vmem:[%s5 + $0x150] sm:$0xff]
  %v423 = vld [vmem:[%s5 + $0x158] sm:$0xff]
  %v424 = vld [vmem:[%s5 + $0x160] sm:$0xff]
  %v425 = vld [vmem:[%s5 + $0x168] sm:$0xff]
  %v426 = vld [vmem:[%s5 + $0x170] sm:$0xff]
  %v427 = vld [vmem:[%s5 + $0x178] sm:$0xff]
  %v429 = vsel %vm186, %v153, 0
  %v432 = vsel %vm186, %v158, 0
  %v435 = vsel %vm186, %v163, 0
  %v438 = vsel %vm186, %v168, 0
  %v441 = vsel %vm186, %v173, 0
  %443 = vmatprep.subr.mxu0 %v381
  %444 = vmatpush1.msra.mxu0 %v380
  %445 = vmatprep.subr.mxu0 %v385
  %446 = vmatpush1.msra.mxu0 %v384
  %447 = vmatprep.subr.mxu0 %v389
  %448 = vmatpush1.msra.mxu0 %v388
  %449 = vmatprep.subr.mxu0 %v393
  %450 = vmatpush1.msra.mxu0 %v392
  %451 = vmatprep.subr.mxu0 %v397
  %452 = vmatpush1.msra.mxu0 %v396
  %453 = vmatprep.subr.mxu0 %v401
  %454 = vmatpush1.msra.mxu0 %v400
  %455 = vmatprep.subr.mxu0 %v405
  %456 = vmatpush1.msra.mxu0 %v404
  %457 = vmatprep.subr.mxu0 %v409
  %458 = vmatpush1.msra.mxu0 %v408
  %459 = vmatprep.subr.mxu0 %v413
  %460 = vmatpush1.msra.mxu0 %v412
  %461 = vmatprep.subr.mxu0 %v417
  %462 = vmatpush1.msra.mxu0 %v416
  %463 = vmatprep.subr.mxu0 %v421
  %464 = vmatpush1.msra.mxu0 %v420
  %465 = vmatprep.subr.mxu0 %v425
  %466 = vmatpush1.msra.mxu0 %v424
  %467 = vmatprep.subr.mxu0 0.0
  %468 = vmatpush1.msra.mxu0 0.0
  %469 = vmatprep.subr.mxu0 0.0
  %470 = vmatpush1.msra.mxu0 0.0
  %471 = vmatprep.subr.mxu0 0.0
  %472 = vmatpush1.msra.mxu0 0.0
  %473 = vmatprep.subr.mxu0 0.0
  %474 = vmatpush1.msra.mxu0 0.0
  %475 = vmatprep.subr.mxu0 0.0
  %476 = vmatpush1.msra.mxu0 0.0
  %477 = vmatprep.subr.mxu0 0.0
  %478 = vmatpush1.msra.mxu0 0.0
  %479 = vmatprep.subr.mxu0 0.0
  %480 = vmatpush1.msra.mxu0 0.0
  %481 = vmatprep.subr.mxu0 0.0
  %482 = vmatpush1.msra.mxu0 0.0
  %483 = vmatprep.subr.mxu0 0.0
  %484 = vmatpush1.msra.mxu0 0.0
  %485 = vmatprep.subr.mxu0 0.0
  %486 = vmatpush1.msra.mxu0 0.0
  %487 = vmatprep.subr.mxu0 0.0
  %488 = vmatpush1.msra.mxu0 0.0
  %489 = vmatprep.subr.mxu0 0.0
  %490 = vmatpush1.msra.mxu0 0.0
  %491 = vmatprep.subr.mxu0 0.0
  %492 = vmatpush1.msra.mxu0 0.0
  %493 = vmatprep.subr.mxu0 0.0
  %494 = vmatpush1.msra.mxu0 0.0
  %495 = vmatprep.subr.mxu0 0.0
  %496 = vmatpush1.msra.mxu0 0.0
  %497 = vmatprep.subr.mxu0 0.0
  %498 = vmatpush1.msra.mxu0 0.0
  %499 = vmatprep.subr.mxu0 0.0
  %500 = vmatpush1.msra.mxu0 0.0
  %501 = vmatprep.subr.mxu0 0.0
  %502 = vmatpush1.msra.mxu0 0.0
  %503 = vmatprep.subr.mxu0 0.0
  %504 = vmatpush1.msra.mxu0 0.0
  %505 = vmatprep.subr.mxu0 0.0
  %506 = vmatpush1.msra.mxu0 0.0
  %507 = vmatprep.mubr.f32.mxu0 0.0
  %508 = vmatmul.mubr.f32.gmra.mrb[0].mxu0 %v429
  %v509 = vpop.f32.mrb[0].mxu0
  %v510 = vadd.f32 0.0, %v509
  %v511 = vpop.f32.mrb[0].mxu0
  %v512 = vadd.f32 0.0, %v511
  %513 = vmatprep.mubr.f32.mxu0 0.0
  %514 = vmatmul.mubr.f32.gmra.mrb[0].mxu0 %v432
  %v515 = vpop.f32.mrb[0].mxu0
  %v516 = vadd.f32 0.0, %v515
  %v517 = vpop.f32.mrb[0].mxu0
  %v518 = vadd.f32 0.0, %v517
  %519 = vmatprep.mubr.f32.mxu0 0.0
  %520 = vmatmul.mubr.f32.gmra.mrb[0].mxu0 %v435
  %v521 = vpop.f32.mrb[0].mxu0
  %v522 = vadd.f32 0.0, %v521
  %v523 = vpop.f32.mrb[0].mxu0
  %v524 = vadd.f32 0.0, %v523
  %525 = vmatprep.mubr.f32.mxu0 0.0
  %526 = vmatmul.mubr.f32.gmra.mrb[0].mxu0 %v438
  %v527 = vpop.f32.mrb[0].mxu0
  %v528 = vadd.f32 0.0, %v527
  %v529 = vpop.f32.mrb[0].mxu0
  %v530 = vadd.f32 0.0, %v529
  %531 = vmatprep.mubr.f32.mxu0 0.0
  %532 = vmatmul.mubr.f32.gmra.mrb[0].mxu0 %v441
  %v533 = vpop.f32.mrb[0].mxu0
  %v534 = vadd.f32 0.0, %v533
  %v535 = vpop.f32.mrb[0].mxu0
  %v536 = vadd.f32 0.0, %v535
  %537 = vdwg.mxu0
  %538 = vmatprep.subr.mxu0 %v383
  %539 = vmatpush1.msra.mxu0 %v382
  %540 = vmatprep.subr.mxu0 %v387
  %541 = vmatpush1.msra.mxu0 %v386
  %542 = vmatprep.subr.mxu0 %v391
  %543 = vmatpush1.msra.mxu0 %v390
  %544 = vmatprep.subr.mxu0 %v395
  %545 = vmatpush1.msra.mxu0 %v394
  %546 = vmatprep.subr.mxu0 %v399
  %547 = vmatpush1.msra.mxu0 %v398
  %548 = vmatprep.subr.mxu0 %v403
  %549 = vmatpush1.msra.mxu0 %v402
  %550 = vmatprep.subr.mxu0 %v407
  %551 = vmatpush1.msra.mxu0 %v406
  %552 = vmatprep.subr.mxu0 %v411
  %553 = vmatpush1.msra.mxu0 %v410
  %554 = vmatprep.subr.mxu0 %v415
  %555 = vmatpush1.msra.mxu0 %v414
  %556 = vmatprep.subr.mxu0 %v419
  %557 = vmatpush1.msra.mxu0 %v418
  %558 = vmatprep.subr.mxu0 %v423
  %559 = vmatpush1.msra.mxu0 %v422
  %560 = vmatprep.subr.mxu0 %v427
  %561 = vmatpush1.msra.mxu0 %v426
  %562 = vmatprep.subr.mxu0 0.0
  %563 = vmatpush1.msra.mxu0 0.0
  %564 = vmatprep.subr.mxu0 0.0
  %565 = vmatpush1.msra.mxu0 0.0
  %566 = vmatprep.subr.mxu0 0.0
  %567 = vmatpush1.msra.mxu0 0.0
  %568 = vmatprep.subr.mxu0 0.0
  %569 = vmatpush1.msra.mxu0 0.0
  %570 = vmatprep.subr.mxu0 0.0
  %571 = vmatpush1.msra.mxu0 0.0
  %572 = vmatprep.subr.mxu0 0.0
  %573 = vmatpush1.msra.mxu0 0.0
  %574 = vmatprep.subr.mxu0 0.0
  %575 = vmatpush1.msra.mxu0 0.0
  %576 = vmatprep.subr.mxu0 0.0
  %577 = vmatpush1.msra.mxu0 0.0
  %578 = vmatprep.subr.mxu0 0.0
  %579 = vmatpush1.msra.mxu0 0.0
  %580 = vmatprep.subr.mxu0 0.0
  %581 = vmatpush1.msra.mxu0 0.0
  %582 = vmatprep.subr.mxu0 0.0
  %583 = vmatpush1.msra.mxu0 0.0
  %584 = vmatprep.subr.mxu0 0.0
  %585 = vmatpush1.msra.mxu0 0.0
  %586 = vmatprep.subr.mxu0 0.0
  %587 = vmatpush1.msra.mxu0 0.0
  %588 = vmatprep.subr.mxu0 0.0
  %589 = vmatpush1.msra.mxu0 0.0
  %590 = vmatprep.subr.mxu0 0.0
  %591 = vmatpush1.msra.mxu0 0.0
  %592 = vmatprep.subr.mxu0 0.0
  %593 = vmatpush1.msra.mxu0 0.0
  %594 = vmatprep.subr.mxu0 0.0
  %595 = vmatpush1.msra.mxu0 0.0
  %596 = vmatprep.subr.mxu0 0.0
  %597 = vmatpush1.msra.mxu0 0.0
  %598 = vmatprep.subr.mxu0 0.0
  %599 = vmatpush1.msra.mxu0 0.0
  %600 = vmatprep.subr.mxu0 0.0
  %601 = vmatpush1.msra.mxu0 0.0
  %602 = vmatprep.mubr.f32.mxu0 0.0
  %603 = vmatmul.mubr.f32.gmra.mrb[0].mxu0 %v429
  %v604 = vpop.f32.mrb[0].mxu0
  %v605 = vadd.f32 0.0, %v604
  %v606 = vpop.f32.mrb[0].mxu0
  %v607 = vadd.f32 0.0, %v606
  %608 = vmatprep.mubr.f32.mxu0 0.0
  %609 = vmatmul.mubr.f32.gmra.mrb[0].mxu0 %v432
  %v610 = vpop.f32.mrb[0].mxu0
  %v611 = vadd.f32 0.0, %v610
  %v612 = vpop.f32.mrb[0].mxu0
  %v613 = vadd.f32 0.0, %v612
  %614 = vmatprep.mubr.f32.mxu0 0.0
  %615 = vmatmul.mubr.f32.gmra.mrb[0].mxu0 %v435
  %v616 = vpop.f32.mrb[0].mxu0
  %v617 = vadd.f32 0.0, %v616
  %v618 = vpop.f32.mrb[0].mxu0
  %v619 = vadd.f32 0.0, %v618
  %620 = vmatprep.mubr.f32.mxu0 0.0
  %621 = vmatmul.mubr.f32.gmra.mrb[0].mxu0 %v438
  %v622 = vpop.f32.mrb[0].mxu0
  %v623 = vadd.f32 0.0, %v622
  %v624 = vpop.f32.mrb[0].mxu0
  %v625 = vadd.f32 0.0, %v624
  %626 = vmatprep.mubr.f32.mxu0 0.0
  %627 = vmatmul.mubr.f32.gmra.mrb[0].mxu0 %v441
  %v628 = vpop.f32.mrb[0].mxu0
  %v629 = vadd.f32 0.0, %v628
  %v630 = vpop.f32.mrb[0].mxu0
  %v631 = vadd.f32 0.0, %v630
  %632 = vdwg.mxu0
  %v634 = vsel %vm186, %v49, 0
  %v637 = vsel %vm186, %v50, 0
  %v640 = vsel %vm186, %v51, 0
  %v643 = vsel %vm186, %v52, 0
  %v646 = vsel %vm186, %v53, 0
  %648 = vmatprep.subr.mxu0 %v333
  %649 = vmatpush1.msra.mxu0 %v332
  %650 = vmatprep.subr.mxu0 %v337
  %651 = vmatpush1.msra.mxu0 %v336
  %652 = vmatprep.subr.mxu0 %v341
  %653 = vmatpush1.msra.mxu0 %v340
  %654 = vmatprep.subr.mxu0 %v345
  %655 = vmatpush1.msra.mxu0 %v344
  %656 = vmatprep.subr.mxu0 %v349
  %657 = vmatpush1.msra.mxu0 %v348
  %658 = vmatprep.subr.mxu0 %v353
  %659 = vmatpush1.msra.mxu0 %v352
  %660 = vmatprep.subr.mxu0 %v357
  %661 = vmatpush1.msra.mxu0 %v356
  %662 = vmatprep.subr.mxu0 %v361
  %663 = vmatpush1.msra.mxu0 %v360
  %664 = vmatprep.subr.mxu0 %v365
  %665 = vmatpush1.msra.mxu0 %v364
  %666 = vmatprep.subr.mxu0 %v369
  %667 = vmatpush1.msra.mxu0 %v368
  %668 = vmatprep.subr.mxu0 %v373
  %669 = vmatpush1.msra.mxu0 %v372
  %670 = vmatprep.subr.mxu0 %v377
  %671 = vmatpush1.msra.mxu0 %v376
  %672 = vmatprep.subr.mxu0 0.0
  %673 = vmatpush1.msra.mxu0 0.0
  %674 = vmatprep.subr.mxu0 0.0
  %675 = vmatpush1.msra.mxu0 0.0
  %676 = vmatprep.subr.mxu0 0.0
  %677 = vmatpush1.msra.mxu0 0.0
  %678 = vmatprep.subr.mxu0 0.0
  %679 = vmatpush1.msra.mxu0 0.0
  %680 = vmatprep.subr.mxu0 0.0
  %681 = vmatpush1.msra.mxu0 0.0
  %682 = vmatprep.subr.mxu0 0.0
  %683 = vmatpush1.msra.mxu0 0.0
  %684 = vmatprep.subr.mxu0 0.0
  %685 = vmatpush1.msra.mxu0 0.0
  %686 = vmatprep.subr.mxu0 0.0
  %687 = vmatpush1.msra.mxu0 0.0
  %688 = vmatprep.subr.mxu0 0.0
  %689 = vmatpush1.msra.mxu0 0.0
  %690 = vmatprep.subr.mxu0 0.0
  %691 = vmatpush1.msra.mxu0 0.0
  %692 = vmatprep.subr.mxu0 0.0
  %693 = vmatpush1.msra.mxu0 0.0
  %694 = vmatprep.subr.mxu0 0.0
  %695 = vmatpush1.msra.mxu0 0.0
  %696 = vmatprep.subr.mxu0 0.0
  %697 = vmatpush1.msra.mxu0 0.0
  %698 = vmatprep.subr.mxu0 0.0
  %699 = vmatpush1.msra.mxu0 0.0
  %700 = vmatprep.subr.mxu0 0.0
  %701 = vmatpush1.msra.mxu0 0.0
  %702 = vmatprep.subr.mxu0 0.0
  %703 = vmatpush1.msra.mxu0 0.0
  %704 = vmatprep.subr.mxu0 0.0
  %705 = vmatpush1.msra.mxu0 0.0
  %706 = vmatprep.subr.mxu0 0.0
  %707 = vmatpush1.msra.mxu0 0.0
  %708 = vmatprep.subr.mxu0 0.0
  %709 = vmatpush1.msra.mxu0 0.0
  %710 = vmatprep.subr.mxu0 0.0
  %711 = vmatpush1.msra.mxu0 0.0
  %712 = vmatprep.mubr.f32.mxu0 0.0
  %713 = vmatmul.mubr.f32.gmra.mrb[0].mxu0 %v634
  %v714 = vpop.f32.mrb[0].mxu0
  %v715 = vadd.f32 %v510, %v714
  %v716 = vpop.f32.mrb[0].mxu0
  %v717 = vadd.f32 %v512, %v716
  %718 = vmatprep.mubr.f32.mxu0 0.0
  %719 = vmatmul.mubr.f32.gmra.mrb[0].mxu0 %v637
  %v720 = vpop.f32.mrb[0].mxu0
  %v721 = vadd.f32 %v516, %v720
  %v722 = vpop.f32.mrb[0].mxu0
  %v723 = vadd.f32 %v518, %v722
  %724 = vmatprep.mubr.f32.mxu0 0.0
  %725 = vmatmul.mubr.f32.gmra.mrb[0].mxu0 %v640
  %v726 = vpop.f32.mrb[0].mxu0
  %v727 = vadd.f32 %v522, %v726
  %v728 = vpop.f32.mrb[0].mxu0
  %v729 = vadd.f32 %v524, %v728
  %730 = vmatprep.mubr.f32.mxu0 0.0
  %731 = vmatmul.mubr.f32.gmra.mrb[0].mxu0 %v643
  %v732 = vpop.f32.mrb[0].mxu0
  %v733 = vadd.f32 %v528, %v732
  %v734 = vpop.f32.mrb[0].mxu0
  %v735 = vadd.f32 %v530, %v734
  %736 = vmatprep.mubr.f32.mxu0 0.0
  %737 = vmatmul.mubr.f32.gmra.mrb[0].mxu0 %v646
  %v738 = vpop.f32.mrb[0].mxu0
  %v739 = vadd.f32 %v534, %v738
  %v740 = vpop.f32.mrb[0].mxu0
  %v741 = vadd.f32 %v536, %v740
  %742 = vdwg.mxu0
  %743 = vmatprep.subr.mxu0 %v335
  %744 = vmatpush1.msra.mxu0 %v334
  %745 = vmatprep.subr.mxu0 %v339
  %746 = vmatpush1.msra.mxu0 %v338
  %747 = vmatprep.subr.mxu0 %v343
  %748 = vmatpush1.msra.mxu0 %v342
  %749 = vmatprep.subr.mxu0 %v347
  %750 = vmatpush1.msra.mxu0 %v346
  %751 = vmatprep.subr.mxu0 %v351
  %752 = vmatpush1.msra.mxu0 %v350
  %753 = vmatprep.subr.mxu0 %v355
  %754 = vmatpush1.msra.mxu0 %v354
  %755 = vmatprep.subr.mxu0 %v359
  %756 = vmatpush1.msra.mxu0 %v358
  %757 = vmatprep.subr.mxu0 %v363
  %758 = vmatpush1.msra.mxu0 %v362
  %759 = vmatprep.subr.mxu0 %v367
  %760 = vmatpush1.msra.mxu0 %v366
  %761 = vmatprep.subr.mxu0 %v371
  %762 = vmatpush1.msra.mxu0 %v370
  %763 = vmatprep.subr.mxu0 %v375
  %764 = vmatpush1.msra.mxu0 %v374
  %765 = vmatprep.subr.mxu0 %v379
  %766 = vmatpush1.msra.mxu0 %v378
  %767 = vmatprep.subr.mxu0 0.0
  %768 = vmatpush1.msra.mxu0 0.0
  %769 = vmatprep.subr.mxu0 0.0
  %770 = vmatpush1.msra.mxu0 0.0
  %771 = vmatprep.subr.mxu0 0.0
  %772 = vmatpush1.msra.mxu0 0.0
  %773 = vmatprep.subr.mxu0 0.0
  %774 = vmatpush1.msra.mxu0 0.0
  %775 = vmatprep.subr.mxu0 0.0
  %776 = vmatpush1.msra.mxu0 0.0
  %777 = vmatprep.subr.mxu0 0.0
  %778 = vmatpush1.msra.mxu0 0.0
  %779 = vmatprep.subr.mxu0 0.0
  %780 = vmatpush1.msra.mxu0 0.0
  %781 = vmatprep.subr.mxu0 0.0
  %782 = vmatpush1.msra.mxu0 0.0
  %783 = vmatprep.subr.mxu0 0.0
  %784 = vmatpush1.msra.mxu0 0.0
  %785 = vmatprep.subr.mxu0 0.0
  %786 = vmatpush1.msra.mxu0 0.0
  %787 = vmatprep.subr.mxu0 0.0
  %788 = vmatpush1.msra.mxu0 0.0
  %789 = vmatprep.subr.mxu0 0.0
  %790 = vmatpush1.msra.mxu0 0.0
  %791 = vmatprep.subr.mxu0 0.0
  %792 = vmatpush1.msra.mxu0 0.0
  %793 = vmatprep.subr.mxu0 0.0
  %794 = vmatpush1.msra.mxu0 0.0
  %795 = vmatprep.subr.mxu0 0.0
  %796 = vmatpush1.msra.mxu0 0.0
  %797 = vmatprep.subr.mxu0 0.0
  %798 = vmatpush1.msra.mxu0 0.0
  %799 = vmatprep.subr.mxu0 0.0
  %800 = vmatpush1.msra.mxu0 0.0
  %801 = vmatprep.subr.mxu0 0.0
  %802 = vmatpush1.msra.mxu0 0.0
  %803 = vmatprep.subr.mxu0 0.0
  %804 = vmatpush1.msra.mxu0 0.0
  %805 = vmatprep.subr.mxu0 0.0
  %806 = vmatpush1.msra.mxu0 0.0
  %807 = vmatprep.mubr.f32.mxu0 0.0
  %808 = vmatmul.mubr.f32.gmra.mrb[0].mxu0 %v634
  %v809 = vpop.f32.mrb[0].mxu0
  %v810 = vadd.f32 %v605, %v809
  %v811 = vpop.f32.mrb[0].mxu0
  %v812 = vadd.f32 %v607, %v811
  %813 = vmatprep.mubr.f32.mxu0 0.0
  %814 = vmatmul.mubr.f32.gmra.mrb[0].mxu0 %v637
  %v815 = vpop.f32.mrb[0].mxu0
  %v816 = vadd.f32 %v611, %v815
  %v817 = vpop.f32.mrb[0].mxu0
  %v818 = vadd.f32 %v613, %v817
  %819 = vmatprep.mubr.f32.mxu0 0.0
  %820 = vmatmul.mubr.f32.gmra.mrb[0].mxu0 %v640
  %v821 = vpop.f32.mrb[0].mxu0
  %v822 = vadd.f32 %v617, %v821
  %v823 = vpop.f32.mrb[0].mxu0
  %v824 = vadd.f32 %v619, %v823
  %825 = vmatprep.mubr.f32.mxu0 0.0
  %826 = vmatmul.mubr.f32.gmra.mrb[0].mxu0 %v643
  %v827 = vpop.f32.mrb[0].mxu0
  %v828 = vadd.f32 %v623, %v827
  %v829 = vpop.f32.mrb[0].mxu0
  %v830 = vadd.f32 %v625, %v829
  %831 = vmatprep.mubr.f32.mxu0 0.0
  %832 = vmatmul.mubr.f32.gmra.mrb[0].mxu0 %v646
  %v833 = vpop.f32.mrb[0].mxu0
  %v834 = vadd.f32 %v629, %v833
  %v835 = vpop.f32.mrb[0].mxu0
  %v836 = vadd.f32 %v631, %v835
  %837 = vdwg.mxu0
  %v838 = vld [vmem:[%s6] sm:$0xff]
  %v839 = vld [vmem:[%s6 + $0x8] sm:$0xff]
  %v840 = vld [vmem:[%s6 + $0x10] sm:$0xff]
  %v841 = vld [vmem:[%s6 + $0x18] sm:$0xff]
  %v842 = vld [vmem:[%s6 + $0x20] sm:$0xff]
  %v843 = vld [vmem:[%s6 + $0x28] sm:$0xff]
  %v844 = vld [vmem:[%s6 + $0x30] sm:$0xff]
  %v845 = vld [vmem:[%s6 + $0x38] sm:$0xff]
  %v846 = vld [vmem:[%s6 + $0x40] sm:$0xff]
  %v847 = vld [vmem:[%s6 + $0x48] sm:$0xff]
  %v848 = vld [vmem:[%s6 + $0x50] sm:$0xff]
  %v849 = vld [vmem:[%s6 + $0x58] sm:$0xff]
  %v850 = vld [vmem:[%s6 + $0x60] sm:$0xff]
  %v851 = vld [vmem:[%s6 + $0x68] sm:$0xff]
  %v852 = vld [vmem:[%s6 + $0x70] sm:$0xff]
  %v853 = vld [vmem:[%s6 + $0x78] sm:$0xff]
  %v854 = vld [vmem:[%s6 + $0x80] sm:$0xff]
  %v855 = vld [vmem:[%s6 + $0x88] sm:$0xff]
  %v856 = vld [vmem:[%s6 + $0x90] sm:$0xff]
  %v857 = vld [vmem:[%s6 + $0x98] sm:$0xff]
  %v858 = vld [vmem:[%s6 + $0xa0] sm:$0xff]
  %v859 = vld [vmem:[%s6 + $0xa8] sm:$0xff]
  %v860 = vld [vmem:[%s6 + $0xb0] sm:$0xff]
  %v861 = vld [vmem:[%s6 + $0xb8] sm:$0xff]
  %v862 = vld [vmem:[%s6 + $0xc0] sm:$0xff]
  %v863 = vld [vmem:[%s6 + $0xc8] sm:$0xff]
  %v864 = vld [vmem:[%s6 + $0xd0] sm:$0xff]
  %v865 = vld [vmem:[%s6 + $0xd8] sm:$0xff]
  %v866 = vld [vmem:[%s6 + $0xe0] sm:$0xff]
  %v867 = vld [vmem:[%s6 + $0xe8] sm:$0xff]
  %v868 = vld [vmem:[%s6 + $0xf0] sm:$0xff]
  %v869 = vld [vmem:[%s6 + $0xf8] sm:$0xff]
  %v870 = vld [vmem:[%s6 + $0x100] sm:$0xff]
  %v871 = vld [vmem:[%s6 + $0x108] sm:$0xff]
  %v872 = vld [vmem:[%s6 + $0x110] sm:$0xff]
  %v873 = vld [vmem:[%s6 + $0x118] sm:$0xff]
  %v874 = vld [vmem:[%s6 + $0x120] sm:$0xff]
  %v875 = vld [vmem:[%s6 + $0x128] sm:$0xff]
  %v876 = vld [vmem:[%s6 + $0x130] sm:$0xff]
  %v877 = vld [vmem:[%s6 + $0x138] sm:$0xff]
  %v878 = vld [vmem:[%s6 + $0x140] sm:$0xff]
  %v879 = vld [vmem:[%s6 + $0x148] sm:$0xff]
  %v880 = vld [vmem:[%s6 + $0x150] sm:$0xff]
  %v881 = vld [vmem:[%s6 + $0x158] sm:$0xff]
  %v882 = vld [vmem:[%s6 + $0x160] sm:$0xff]
  %v883 = vld [vmem:[%s6 + $0x168] sm:$0xff]
  %v884 = vld [vmem:[%s6 + $0x170] sm:$0xff]
  %v885 = vld [vmem:[%s6 + $0x178] sm:$0xff]
  %v887 = vsel %vm186, %v176, 0
  %v890 = vsel %vm186, %v177, 0
  %v893 = vsel %vm186, %v178, 0
  %v896 = vsel %vm186, %v179, 0
  %v899 = vsel %vm186, %v180, 0
  %901 = vmatprep.subr.mxu0 %v839
  %902 = vmatpush1.msra.mxu0 %v838
  %903 = vmatprep.subr.mxu0 %v843
  %904 = vmatpush1.msra.mxu0 %v842
  %905 = vmatprep.subr.mxu0 %v847
  %906 = vmatpush1.msra.mxu0 %v846
  %907 = vmatprep.subr.mxu0 %v851
  %908 = vmatpush1.msra.mxu0 %v850
  %909 = vmatprep.subr.mxu0 %v855
  %910 = vmatpush1.msra.mxu0 %v854
  %911 = vmatprep.subr.mxu0 %v859
  %912 = vmatpush1.msra.mxu0 %v858
  %913 = vmatprep.subr.mxu0 %v863
  %914 = vmatpush1.msra.mxu0 %v862
  %915 = vmatprep.subr.mxu0 %v867
  %916 = vmatpush1.msra.mxu0 %v866
  %917 = vmatprep.subr.mxu0 %v871
  %918 = vmatpush1.msra.mxu0 %v870
  %919 = vmatprep.subr.mxu0 %v875
  %920 = vmatpush1.msra.mxu0 %v874
  %921 = vmatprep.subr.mxu0 %v879
  %922 = vmatpush1.msra.mxu0 %v878
  %923 = vmatprep.subr.mxu0 %v883
  %924 = vmatpush1.msra.mxu0 %v882
  %925 = vmatprep.subr.mxu0 0.0
  %926 = vmatpush1.msra.mxu0 0.0
  %927 = vmatprep.subr.mxu0 0.0
  %928 = vmatpush1.msra.mxu0 0.0
  %929 = vmatprep.subr.mxu0 0.0
  %930 = vmatpush1.msra.mxu0 0.0
  %931 = vmatprep.subr.mxu0 0.0
  %932 = vmatpush1.msra.mxu0 0.0
  %933 = vmatprep.subr.mxu0 0.0
  %934 = vmatpush1.msra.mxu0 0.0
  %935 = vmatprep.subr.mxu0 0.0
  %936 = vmatpush1.msra.mxu0 0.0
  %937 = vmatprep.subr.mxu0 0.0
  %938 = vmatpush1.msra.mxu0 0.0
  %939 = vmatprep.subr.mxu0 0.0
  %940 = vmatpush1.msra.mxu0 0.0
  %941 = vmatprep.subr.mxu0 0.0
  %942 = vmatpush1.msra.mxu0 0.0
  %943 = vmatprep.subr.mxu0 0.0
  %944 = vmatpush1.msra.mxu0 0.0
  %945 = vmatprep.subr.mxu0 0.0
  %946 = vmatpush1.msra.mxu0 0.0
  %947 = vmatprep.subr.mxu0 0.0
  %948 = vmatpush1.msra.mxu0 0.0
  %949 = vmatprep.subr.mxu0 0.0
  %950 = vmatpush1.msra.mxu0 0.0
  %951 = vmatprep.subr.mxu0 0.0
  %952 = vmatpush1.msra.mxu0 0.0
  %953 = vmatprep.subr.mxu0 0.0
  %954 = vmatpush1.msra.mxu0 0.0
  %955 = vmatprep.subr.mxu0 0.0
  %956 = vmatpush1.msra.mxu0 0.0
  %957 = vmatprep.subr.mxu0 0.0
  %958 = vmatpush1.msra.mxu0 0.0
  %959 = vmatprep.subr.mxu0 0.0
  %960 = vmatpush1.msra.mxu0 0.0
  %961 = vmatprep.subr.mxu0 0.0
  %962 = vmatpush1.msra.mxu0 0.0
  %963 = vmatprep.subr.mxu0 0.0
  %964 = vmatpush1.msra.mxu0 0.0
  %965 = vmatprep.mubr.f32.mxu0 0.0
  %966 = vmatmul.mubr.f32.gmra.mrb[0].mxu0 %v887
  %v967 = vpop.f32.mrb[0].mxu0
  %v968 = vadd.f32 0.0, %v967
  %v969 = vpop.f32.mrb[0].mxu0
  %v970 = vadd.f32 0.0, %v969
  %971 = vmatprep.mubr.f32.mxu0 0.0
  %972 = vmatmul.mubr.f32.gmra.mrb[0].mxu0 %v890
  %v973 = vpop.f32.mrb[0].mxu0
  %v974 = vadd.f32 0.0, %v973
  %v975 = vpop.f32.mrb[0].mxu0
  %v976 = vadd.f32 0.0, %v975
  %977 = vmatprep.mubr.f32.mxu0 0.0
  %978 = vmatmul.mubr.f32.gmra.mrb[0].mxu0 %v893
  %v979 = vpop.f32.mrb[0].mxu0
  %v980 = vadd.f32 0.0, %v979
  %v981 = vpop.f32.mrb[0].mxu0
  %v982 = vadd.f32 0.0, %v981
  %983 = vmatprep.mubr.f32.mxu0 0.0
  %984 = vmatmul.mubr.f32.gmra.mrb[0].mxu0 %v896
  %v985 = vpop.f32.mrb[0].mxu0
  %v986 = vadd.f32 0.0, %v985
  %v987 = vpop.f32.mrb[0].mxu0
  %v988 = vadd.f32 0.0, %v987
  %989 = vmatprep.mubr.f32.mxu0 0.0
  %990 = vmatmul.mubr.f32.gmra.mrb[0].mxu0 %v899
  %v991 = vpop.f32.mrb[0].mxu0
  %v992 = vadd.f32 0.0, %v991
  %v993 = vpop.f32.mrb[0].mxu0
  %v994 = vadd.f32 0.0, %v993
  %995 = vdwg.mxu0
  %996 = vmatprep.subr.mxu0 %v841
  %997 = vmatpush1.msra.mxu0 %v840
  %998 = vmatprep.subr.mxu0 %v845
  %999 = vmatpush1.msra.mxu0 %v844
  %1000 = vmatprep.subr.mxu0 %v849
  %1001 = vmatpush1.msra.mxu0 %v848
  %1002 = vmatprep.subr.mxu0 %v853
  %1003 = vmatpush1.msra.mxu0 %v852
  %1004 = vmatprep.subr.mxu0 %v857
  %1005 = vmatpush1.msra.mxu0 %v856
  %1006 = vmatprep.subr.mxu0 %v861
  %1007 = vmatpush1.msra.mxu0 %v860
  %1008 = vmatprep.subr.mxu0 %v865
  %1009 = vmatpush1.msra.mxu0 %v864
  %1010 = vmatprep.subr.mxu0 %v869
  %1011 = vmatpush1.msra.mxu0 %v868
  %1012 = vmatprep.subr.mxu0 %v873
  %1013 = vmatpush1.msra.mxu0 %v872
  %1014 = vmatprep.subr.mxu0 %v877
  %1015 = vmatpush1.msra.mxu0 %v876
  %1016 = vmatprep.subr.mxu0 %v881
  %1017 = vmatpush1.msra.mxu0 %v880
  %1018 = vmatprep.subr.mxu0 %v885
  %1019 = vmatpush1.msra.mxu0 %v884
  %1020 = vmatprep.subr.mxu0 0.0
  %1021 = vmatpush1.msra.mxu0 0.0
  %1022 = vmatprep.subr.mxu0 0.0
  %1023 = vmatpush1.msra.mxu0 0.0
  %1024 = vmatprep.subr.mxu0 0.0
  %1025 = vmatpush1.msra.mxu0 0.0
  %1026 = vmatprep.subr.mxu0 0.0
  %1027 = vmatpush1.msra.mxu0 0.0
  %1028 = vmatprep.subr.mxu0 0.0
  %1029 = vmatpush1.msra.mxu0 0.0
  %1030 = vmatprep.subr.mxu0 0.0
  %1031 = vmatpush1.msra.mxu0 0.0
  %1032 = vmatprep.subr.mxu0 0.0
  %1033 = vmatpush1.msra.mxu0 0.0
  %1034 = vmatprep.subr.mxu0 0.0
  %1035 = vmatpush1.msra.mxu0 0.0
  %1036 = vmatprep.subr.mxu0 0.0
  %1037 = vmatpush1.msra.mxu0 0.0
  %1038 = vmatprep.subr.mxu0 0.0
  %1039 = vmatpush1.msra.mxu0 0.0
  %1040 = vmatprep.subr.mxu0 0.0
  %1041 = vmatpush1.msra.mxu0 0.0
  %1042 = vmatprep.subr.mxu0 0.0
  %1043 = vmatpush1.msra.mxu0 0.0
  %1044 = vmatprep.subr.mxu0 0.0
  %1045 = vmatpush1.msra.mxu0 0.0
  %1046 = vmatprep.subr.mxu0 0.0
  %1047 = vmatpush1.msra.mxu0 0.0
  %1048 = vmatprep.subr.mxu0 0.0
  %1049 = vmatpush1.msra.mxu0 0.0
  %1050 = vmatprep.subr.mxu0 0.0
  %1051 = vmatpush1.msra.mxu0 0.0
  %1052 = vmatprep.subr.mxu0 0.0
  %1053 = vmatpush1.msra.mxu0 0.0
  %1054 = vmatprep.subr.mxu0 0.0
  %1055 = vmatpush1.msra.mxu0 0.0
  %1056 = vmatprep.subr.mxu0 0.0
  %1057 = vmatpush1.msra.mxu0 0.0
  %1058 = vmatprep.subr.mxu0 0.0
  %1059 = vmatpush1.msra.mxu0 0.0
  %1060 = vmatprep.mubr.f32.mxu0 0.0
  %1061 = vmatmul.mubr.f32.gmra.mrb[0].mxu0 %v887
  %v1062 = vpop.f32.mrb[0].mxu0
  %v1063 = vadd.f32 0.0, %v1062
  %v1064 = vpop.f32.mrb[0].mxu0
  %v1065 = vadd.f32 0.0, %v1064
  %1066 = vmatprep.mubr.f32.mxu0 0.0
  %1067 = vmatmul.mubr.f32.gmra.mrb[0].mxu0 %v890
  %v1068 = vpop.f32.mrb[0].mxu0
  %v1069 = vadd.f32 0.0, %v1068
  %v1070 = vpop.f32.mrb[0].mxu0
  %v1071 = vadd.f32 0.0, %v1070
  %1072 = vmatprep.mubr.f32.mxu0 0.0
  %1073 = vmatmul.mubr.f32.gmra.mrb[0].mxu0 %v893
  %v1074 = vpop.f32.mrb[0].mxu0
  %v1075 = vadd.f32 0.0, %v1074
  %v1076 = vpop.f32.mrb[0].mxu0
  %v1077 = vadd.f32 0.0, %v1076
  %1078 = vmatprep.mubr.f32.mxu0 0.0
  %1079 = vmatmul.mubr.f32.gmra.mrb[0].mxu0 %v896
  %v1080 = vpop.f32.mrb[0].mxu0
  %v1081 = vadd.f32 0.0, %v1080
  %v1082 = vpop.f32.mrb[0].mxu0
  %v1083 = vadd.f32 0.0, %v1082
  %1084 = vmatprep.mubr.f32.mxu0 0.0
  %1085 = vmatmul.mubr.f32.gmra.mrb[0].mxu0 %v899
  %v1086 = vpop.f32.mrb[0].mxu0
  %v1087 = vadd.f32 0.0, %v1086
  %v1088 = vpop.f32.mrb[0].mxu0
  %v1089 = vadd.f32 0.0, %v1088
  %1090 = vdwg.mxu0
  %v1091 = vadd.f32 %v715, %v968
  %v1092 = vadd.f32 %v717, %v970
  %v1093 = vadd.f32 %v810, %v1063
  %v1094 = vadd.f32 %v812, %v1065
  %v1095 = vadd.f32 %v721, %v974
  %v1096 = vadd.f32 %v723, %v976
  %v1097 = vadd.f32 %v816, %v1069
  %v1098 = vadd.f32 %v818, %v1071
  %v1099 = vadd.f32 %v727, %v980
  %v1100 = vadd.f32 %v729, %v982
  %v1101 = vadd.f32 %v822, %v1075
  %v1102 = vadd.f32 %v824, %v1077
  %v1103 = vadd.f32 %v733, %v986
  %v1104 = vadd.f32 %v735, %v988
  %v1105 = vadd.f32 %v828, %v1081
  %v1106 = vadd.f32 %v830, %v1083
  %v1107 = vadd.f32 %v739, %v992
  %v1108 = vadd.f32 %v741, %v994
  %v1109 = vadd.f32 %v834, %v1087
  %v1110 = vadd.f32 %v836, %v1089
  %v1111 = vld [vmem:[%s7] sm:$0xff]
  %v1112 = vld [vmem:[%s7 + $0x8] sm:$0xff]
  %v1113 = vld [vmem:[%s7 + $0x10] sm:$0xff]
  %v1114 = vld [vmem:[%s7 + $0x18] sm:$0xff]
  %v1115 = vld [vmem:[%s7 + $0x20] sm:$0xff]
  %v1116 = vld [vmem:[%s7 + $0x28] sm:$0xff]
  %v1117 = vld [vmem:[%s7 + $0x30] sm:$0xff]
  %v1118 = vld [vmem:[%s7 + $0x38] sm:$0xff]
  %v1119 = vld [vmem:[%s7 + $0x40] sm:$0xff]
  %v1120 = vld [vmem:[%s7 + $0x48] sm:$0xff]
  %v1121 = vld [vmem:[%s7 + $0x50] sm:$0xff]
  %v1122 = vld [vmem:[%s7 + $0x58] sm:$0xff]
  %v1123 = vld [vmem:[%s7 + $0x60] sm:$0xff]
  %v1124 = vld [vmem:[%s7 + $0x68] sm:$0xff]
  %v1125 = vld [vmem:[%s7 + $0x70] sm:$0xff]
  %v1126 = vld [vmem:[%s7 + $0x78] sm:$0xff]
  %v1127 = vld [vmem:[%s7 + $0x80] sm:$0xff]
  %v1128 = vld [vmem:[%s7 + $0x88] sm:$0xff]
  %v1129 = vld [vmem:[%s7 + $0x90] sm:$0xff]
  %v1130 = vld [vmem:[%s7 + $0x98] sm:$0xff]
  %v1131 = vld [vmem:[%s7 + $0xa0] sm:$0xff]
  %v1132 = vld [vmem:[%s7 + $0xa8] sm:$0xff]
  %v1133 = vld [vmem:[%s7 + $0xb0] sm:$0xff]
  %v1134 = vld [vmem:[%s7 + $0xb8] sm:$0xff]
  %v1135 = vld [vmem:[%s7 + $0xc0] sm:$0xff]
  %v1136 = vld [vmem:[%s7 + $0xc8] sm:$0xff]
  %v1137 = vld [vmem:[%s7 + $0xd0] sm:$0xff]
  %v1138 = vld [vmem:[%s7 + $0xd8] sm:$0xff]
  %v1139 = vld [vmem:[%s7 + $0xe0] sm:$0xff]
  %v1140 = vld [vmem:[%s7 + $0xe8] sm:$0xff]
  %v1141 = vld [vmem:[%s7 + $0xf0] sm:$0xff]
  %v1142 = vld [vmem:[%s7 + $0xf8] sm:$0xff]
  %v1143 = vld [vmem:[%s7 + $0x100] sm:$0xff]
  %v1144 = vld [vmem:[%s7 + $0x108] sm:$0xff]
  %v1145 = vld [vmem:[%s7 + $0x110] sm:$0xff]
  %v1146 = vld [vmem:[%s7 + $0x118] sm:$0xff]
  %v1147 = vld [vmem:[%s7 + $0x120] sm:$0xff]
  %v1148 = vld [vmem:[%s7 + $0x128] sm:$0xff]
  %v1149 = vld [vmem:[%s7 + $0x130] sm:$0xff]
  %v1150 = vld [vmem:[%s7 + $0x138] sm:$0xff]
  %v1151 = vld [vmem:[%s7 + $0x140] sm:$0xff]
  %v1152 = vld [vmem:[%s7 + $0x148] sm:$0xff]
  %v1153 = vld [vmem:[%s7 + $0x150] sm:$0xff]
  %v1154 = vld [vmem:[%s7 + $0x158] sm:$0xff]
  %v1155 = vld [vmem:[%s7 + $0x160] sm:$0xff]
  %v1156 = vld [vmem:[%s7 + $0x168] sm:$0xff]
  %v1157 = vld [vmem:[%s7 + $0x170] sm:$0xff]
  %v1158 = vld [vmem:[%s7 + $0x178] sm:$0xff]
  %v1160 = vsel %vm186, %v181, 0
  %v1163 = vsel %vm186, %v182, 0
  %v1166 = vsel %vm186, %v183, 0
  %v1169 = vsel %vm186, %v184, 0
  %v1172 = vsel %vm186, %v185, 0
  %1174 = vmatprep.subr.mxu0 %v1112
  %1175 = vmatpush1.msra.mxu0 %v1111
  %1176 = vmatprep.subr.mxu0 %v1116
  %1177 = vmatpush1.msra.mxu0 %v1115
  %1178 = vmatprep.subr.mxu0 %v1120
  %1179 = vmatpush1.msra.mxu0 %v1119
  %1180 = vmatprep.subr.mxu0 %v1124
  %1181 = vmatpush1.msra.mxu0 %v1123
  %1182 = vmatprep.subr.mxu0 %v1128
  %1183 = vmatpush1.msra.mxu0 %v1127
  %1184 = vmatprep.subr.mxu0 %v1132
  %1185 = vmatpush1.msra.mxu0 %v1131
  %1186 = vmatprep.subr.mxu0 %v1136
  %1187 = vmatpush1.msra.mxu0 %v1135
  %1188 = vmatprep.subr.mxu0 %v1140
  %1189 = vmatpush1.msra.mxu0 %v1139
  %1190 = vmatprep.subr.mxu0 %v1144
  %1191 = vmatpush1.msra.mxu0 %v1143
  %1192 = vmatprep.subr.mxu0 %v1148
  %1193 = vmatpush1.msra.mxu0 %v1147
  %1194 = vmatprep.subr.mxu0 %v1152
  %1195 = vmatpush1.msra.mxu0 %v1151
  %1196 = vmatprep.subr.mxu0 %v1156
  %1197 = vmatpush1.msra.mxu0 %v1155
  %1198 = vmatprep.subr.mxu0 0.0
  %1199 = vmatpush1.msra.mxu0 0.0
  %1200 = vmatprep.subr.mxu0 0.0
  %1201 = vmatpush1.msra.mxu0 0.0
  %1202 = vmatprep.subr.mxu0 0.0
  %1203 = vmatpush1.msra.mxu0 0.0
  %1204 = vmatprep.subr.mxu0 0.0
  %1205 = vmatpush1.msra.mxu0 0.0
  %1206 = vmatprep.subr.mxu0 0.0
  %1207 = vmatpush1.msra.mxu0 0.0
  %1208 = vmatprep.subr.mxu0 0.0
  %1209 = vmatpush1.msra.mxu0 0.0
  %1210 = vmatprep.subr.mxu0 0.0
  %1211 = vmatpush1.msra.mxu0 0.0
  %1212 = vmatprep.subr.mxu0 0.0
  %1213 = vmatpush1.msra.mxu0 0.0
  %1214 = vmatprep.subr.mxu0 0.0
  %1215 = vmatpush1.msra.mxu0 0.0
  %1216 = vmatprep.subr.mxu0 0.0
  %1217 = vmatpush1.msra.mxu0 0.0
  %1218 = vmatprep.subr.mxu0 0.0
  %1219 = vmatpush1.msra.mxu0 0.0
  %1220 = vmatprep.subr.mxu0 0.0
  %1221 = vmatpush1.msra.mxu0 0.0
  %1222 = vmatprep.subr.mxu0 0.0
  %1223 = vmatpush1.msra.mxu0 0.0
  %1224 = vmatprep.subr.mxu0 0.0
  %1225 = vmatpush1.msra.mxu0 0.0
  %1226 = vmatprep.subr.mxu0 0.0
  %1227 = vmatpush1.msra.mxu0 0.0
  %1228 = vmatprep.subr.mxu0 0.0
  %1229 = vmatpush1.msra.mxu0 0.0
  %1230 = vmatprep.subr.mxu0 0.0
  %1231 = vmatpush1.msra.mxu0 0.0
  %1232 = vmatprep.subr.mxu0 0.0
  %1233 = vmatpush1.msra.mxu0 0.0
  %1234 = vmatprep.subr.mxu0 0.0
  %1235 = vmatpush1.msra.mxu0 0.0
  %1236 = vmatprep.subr.mxu0 0.0
  %1237 = vmatpush1.msra.mxu0 0.0
  %1238 = vmatprep.mubr.f32.mxu0 0.0
  %1239 = vmatmul.mubr.f32.gmra.mrb[0].mxu0 %v1160
  %v1240 = vpop.f32.mrb[0].mxu0
  %v1241 = vadd.f32 0.0, %v1240
  %v1242 = vpop.f32.mrb[0].mxu0
  %v1243 = vadd.f32 0.0, %v1242
  %1244 = vmatprep.mubr.f32.mxu0 0.0
  %1245 = vmatmul.mubr.f32.gmra.mrb[0].mxu0 %v1163
  %v1246 = vpop.f32.mrb[0].mxu0
  %v1247 = vadd.f32 0.0, %v1246
  %v1248 = vpop.f32.mrb[0].mxu0
  %v1249 = vadd.f32 0.0, %v1248
  %1250 = vmatprep.mubr.f32.mxu0 0.0
  %1251 = vmatmul.mubr.f32.gmra.mrb[0].mxu0 %v1166
  %v1252 = vpop.f32.mrb[0].mxu0
  %v1253 = vadd.f32 0.0, %v1252
  %v1254 = vpop.f32.mrb[0].mxu0
  %v1255 = vadd.f32 0.0, %v1254
  %1256 = vmatprep.mubr.f32.mxu0 0.0
  %1257 = vmatmul.mubr.f32.gmra.mrb[0].mxu0 %v1169
  %v1258 = vpop.f32.mrb[0].mxu0
  %v1259 = vadd.f32 0.0, %v1258
  %v1260 = vpop.f32.mrb[0].mxu0
  %v1261 = vadd.f32 0.0, %v1260
  %1262 = vmatprep.mubr.f32.mxu0 0.0
  %1263 = vmatmul.mubr.f32.gmra.mrb[0].mxu0 %v1172
  %v1264 = vpop.f32.mrb[0].mxu0
  %v1265 = vadd.f32 0.0, %v1264
  %v1266 = vpop.f32.mrb[0].mxu0
  %v1267 = vadd.f32 0.0, %v1266
  %1268 = vdwg.mxu0
  %1269 = vmatprep.subr.mxu0 %v1114
  %1270 = vmatpush1.msra.mxu0 %v1113
  %1271 = vmatprep.subr.mxu0 %v1118
  %1272 = vmatpush1.msra.mxu0 %v1117
  %1273 = vmatprep.subr.mxu0 %v1122
  %1274 = vmatpush1.msra.mxu0 %v1121
  %1275 = vmatprep.subr.mxu0 %v1126
  %1276 = vmatpush1.msra.mxu0 %v1125
  %1277 = vmatprep.subr.mxu0 %v1130
  %1278 = vmatpush1.msra.mxu0 %v1129
  %1279 = vmatprep.subr.mxu0 %v1134
  %1280 = vmatpush1.msra.mxu0 %v1133
  %1281 = vmatprep.subr.mxu0 %v1138
  %1282 = vmatpush1.msra.mxu0 %v1137
  %1283 = vmatprep.subr.mxu0 %v1142
  %1284 = vmatpush1.msra.mxu0 %v1141
  %1285 = vmatprep.subr.mxu0 %v1146
  %1286 = vmatpush1.msra.mxu0 %v1145
  %1287 = vmatprep.subr.mxu0 %v1150
  %1288 = vmatpush1.msra.mxu0 %v1149
  %1289 = vmatprep.subr.mxu0 %v1154
  %1290 = vmatpush1.msra.mxu0 %v1153
  %1291 = vmatprep.subr.mxu0 %v1158
  %1292 = vmatpush1.msra.mxu0 %v1157
  %1293 = vmatprep.subr.mxu0 0.0
  %1294 = vmatpush1.msra.mxu0 0.0
  %1295 = vmatprep.subr.mxu0 0.0
  %1296 = vmatpush1.msra.mxu0 0.0
  %1297 = vmatprep.subr.mxu0 0.0
  %1298 = vmatpush1.msra.mxu0 0.0
  %1299 = vmatprep.subr.mxu0 0.0
  %1300 = vmatpush1.msra.mxu0 0.0
  %1301 = vmatprep.subr.mxu0 0.0
  %1302 = vmatpush1.msra.mxu0 0.0
  %1303 = vmatprep.subr.mxu0 0.0
  %1304 = vmatpush1.msra.mxu0 0.0
  %1305 = vmatprep.subr.mxu0 0.0
  %1306 = vmatpush1.msra.mxu0 0.0
  %1307 = vmatprep.subr.mxu0 0.0
  %1308 = vmatpush1.msra.mxu0 0.0
  %1309 = vmatprep.subr.mxu0 0.0
  %1310 = vmatpush1.msra.mxu0 0.0
  %1311 = vmatprep.subr.mxu0 0.0
  %1312 = vmatpush1.msra.mxu0 0.0
  %1313 = vmatprep.subr.mxu0 0.0
  %1314 = vmatpush1.msra.mxu0 0.0
  %1315 = vmatprep.subr.mxu0 0.0
  %1316 = vmatpush1.msra.mxu0 0.0
  %1317 = vmatprep.subr.mxu0 0.0
  %1318 = vmatpush1.msra.mxu0 0.0
  %1319 = vmatprep.subr.mxu0 0.0
  %1320 = vmatpush1.msra.mxu0 0.0
  %1321 = vmatprep.subr.mxu0 0.0
  %1322 = vmatpush1.msra.mxu0 0.0
  %1323 = vmatprep.subr.mxu0 0.0
  %1324 = vmatpush1.msra.mxu0 0.0
  %1325 = vmatprep.subr.mxu0 0.0
  %1326 = vmatpush1.msra.mxu0 0.0
  %1327 = vmatprep.subr.mxu0 0.0
  %1328 = vmatpush1.msra.mxu0 0.0
  %1329 = vmatprep.subr.mxu0 0.0
  %1330 = vmatpush1.msra.mxu0 0.0
  %1331 = vmatprep.subr.mxu0 0.0
  %1332 = vmatpush1.msra.mxu0 0.0
  %1333 = vmatprep.mubr.f32.mxu0 0.0
  %1334 = vmatmul.mubr.f32.gmra.mrb[0].mxu0 %v1160
  %v1335 = vpop.f32.mrb[0].mxu0
  %v1336 = vadd.f32 0.0, %v1335
  %v1337 = vpop.f32.mrb[0].mxu0
  %v1338 = vadd.f32 0.0, %v1337
  %1339 = vmatprep.mubr.f32.mxu0 0.0
  %1340 = vmatmul.mubr.f32.gmra.mrb[0].mxu0 %v1163
  %v1341 = vpop.f32.mrb[0].mxu0
  %v1342 = vadd.f32 0.0, %v1341
  %v1343 = vpop.f32.mrb[0].mxu0
  %v1344 = vadd.f32 0.0, %v1343
  %1345 = vmatprep.mubr.f32.mxu0 0.0
  %1346 = vmatmul.mubr.f32.gmra.mrb[0].mxu0 %v1166
  %v1347 = vpop.f32.mrb[0].mxu0
  %v1348 = vadd.f32 0.0, %v1347
  %v1349 = vpop.f32.mrb[0].mxu0
  %v1350 = vadd.f32 0.0, %v1349
  %1351 = vmatprep.mubr.f32.mxu0 0.0
  %1352 = vmatmul.mubr.f32.gmra.mrb[0].mxu0 %v1169
  %v1353 = vpop.f32.mrb[0].mxu0
  %v1354 = vadd.f32 0.0, %v1353
  %v1355 = vpop.f32.mrb[0].mxu0
  %v1356 = vadd.f32 0.0, %v1355
  %1357 = vmatprep.mubr.f32.mxu0 0.0
  %1358 = vmatmul.mubr.f32.gmra.mrb[0].mxu0 %v1172
  %v1359 = vpop.f32.mrb[0].mxu0
  %v1360 = vadd.f32 0.0, %v1359
  %v1361 = vpop.f32.mrb[0].mxu0
  %v1362 = vadd.f32 0.0, %v1361
  %1363 = vdwg.mxu0
  %v1364 = vadd.f32 %v1091, %v1241
  %v1365 = vadd.f32 %v1092, %v1243
  %v1366 = vadd.f32 %v1093, %v1336
  %v1367 = vadd.f32 %v1094, %v1338
  %v1368 = vadd.f32 %v1095, %v1247
  %v1369 = vadd.f32 %v1096, %v1249
  %v1370 = vadd.f32 %v1097, %v1342
  %v1371 = vadd.f32 %v1098, %v1344
  %v1372 = vadd.f32 %v1099, %v1253
  %v1373 = vadd.f32 %v1100, %v1255
  %v1374 = vadd.f32 %v1101, %v1348
  %v1375 = vadd.f32 %v1102, %v1350
  %v1376 = vadd.f32 %v1103, %v1259
  %v1377 = vadd.f32 %v1104, %v1261
  %v1378 = vadd.f32 %v1105, %v1354
  %v1379 = vadd.f32 %v1106, %v1356
  %v1380 = vadd.f32 %v1107, %v1265
  %v1381 = vadd.f32 %v1108, %v1267
  %v1382 = vadd.f32 %v1109, %v1360
  %v1383 = vadd.f32 %v1110, %v1362
  %v1384 = vld [vmem:[%s8] sm:$0xf]
  %v1386 = vlaneseq
  %v1387 = vshrl.u32 %v1386, 7
  %v1388 = vsub.s32 0, %v1387
  %v1389 = vrot.slane %v1384, %v1388
  %v1390 = vlaneseq
  %v1391 = vshrl.u32 %v1390, 7
  %v1392 = vsub.s32 1, %v1391
  %v1393 = vrot.slane %v1384, %v1392
  %v1394 = vlaneseq
  %v1395 = vshrl.u32 %v1394, 7
  %v1396 = vsub.s32 2, %v1395
  %v1397 = vrot.slane %v1384, %v1396
  %v1398 = vlaneseq
  %v1399 = vshrl.u32 %v1398, 7
  %v1400 = vsub.s32 3, %v1399
  %v1401 = vrot.slane %v1384, %v1400
  %v1406 = vmul.f32 %v323, %v1389
  %v1407 = vmul.f32 %v323, %v1393
  %v1408 = vmul.f32 %v323, %v1397
  %v1409 = vmul.f32 %v323, %v1401
  %v1410 = vmul.f32 %v325, %v1389
  %v1411 = vmul.f32 %v325, %v1393
  %v1412 = vmul.f32 %v325, %v1397
  %v1413 = vmul.f32 %v325, %v1401
  %v1414 = vmul.f32 %v327, %v1389
  %v1415 = vmul.f32 %v327, %v1393
  %v1416 = vmul.f32 %v327, %v1397
  %v1417 = vmul.f32 %v327, %v1401
  %v1418 = vmul.f32 %v329, %v1389
  %v1419 = vmul.f32 %v329, %v1393
  %v1420 = vmul.f32 %v329, %v1397
  %v1421 = vmul.f32 %v329, %v1401
  %v1422 = vmul.f32 %v331, %v1389
  %v1423 = vmul.f32 %v331, %v1393
  %v1424 = vmul.f32 %v331, %v1397
  %v1425 = vmul.f32 %v331, %v1401
  %v1426 = vadd.f32 %v1364, %v1406
  %v1427 = vadd.f32 %v1365, %v1407
  %v1428 = vadd.f32 %v1366, %v1408
  %v1429 = vadd.f32 %v1367, %v1409
  %v1430 = vadd.f32 %v1368, %v1410
  %v1431 = vadd.f32 %v1369, %v1411
  %v1432 = vadd.f32 %v1370, %v1412
  %v1433 = vadd.f32 %v1371, %v1413
  %v1434 = vadd.f32 %v1372, %v1414
  %v1435 = vadd.f32 %v1373, %v1415
  %v1436 = vadd.f32 %v1374, %v1416
  %v1437 = vadd.f32 %v1375, %v1417
  %v1438 = vadd.f32 %v1376, %v1418
  %v1439 = vadd.f32 %v1377, %v1419
  %v1440 = vadd.f32 %v1378, %v1420
  %v1441 = vadd.f32 %v1379, %v1421
  %v1442 = vadd.f32 %v1380, %v1422
  %v1443 = vadd.f32 %v1381, %v1423
  %v1444 = vadd.f32 %v1382, %v1424
  %v1445 = vadd.f32 %v1383, %v1425
  %v1446 = vld [vmem:[%s9] sm:$0xf]
  %v1448 = vlaneseq
  %v1449 = vshrl.u32 %v1448, 7
  %v1450 = vsub.s32 0, %v1449
  %v1451 = vrot.slane %v1446, %v1450
  %v1452 = vlaneseq
  %v1453 = vshrl.u32 %v1452, 7
  %v1454 = vsub.s32 1, %v1453
  %v1455 = vrot.slane %v1446, %v1454
  %v1456 = vlaneseq
  %v1457 = vshrl.u32 %v1456, 7
  %v1458 = vsub.s32 2, %v1457
  %v1459 = vrot.slane %v1446, %v1458
  %v1460 = vlaneseq
  %v1461 = vshrl.u32 %v1460, 7
  %v1462 = vsub.s32 3, %v1461
  %v1463 = vrot.slane %v1446, %v1462
  %v1468 = vadd.f32 %v1426, %v1451
  %v1469 = vadd.f32 %v1427, %v1455
  %v1470 = vadd.f32 %v1428, %v1459
  %v1471 = vadd.f32 %v1429, %v1463
  %v1472 = vadd.f32 %v1430, %v1451
  %v1473 = vadd.f32 %v1431, %v1455
  %v1474 = vadd.f32 %v1432, %v1459
  %v1475 = vadd.f32 %v1433, %v1463
  %v1476 = vadd.f32 %v1434, %v1451
  %v1477 = vadd.f32 %v1435, %v1455
  %v1478 = vadd.f32 %v1436, %v1459
  %v1479 = vadd.f32 %v1437, %v1463
  %v1480 = vadd.f32 %v1438, %v1451
  %v1481 = vadd.f32 %v1439, %v1455
  %v1482 = vadd.f32 %v1440, %v1459
  %v1483 = vadd.f32 %v1441, %v1463
  %v1484 = vadd.f32 %v1442, %v1451
  %v1485 = vadd.f32 %v1443, %v1455
  %v1486 = vadd.f32 %v1444, %v1459
  %v1487 = vadd.f32 %v1445, %v1463
  %v1488 = vmax.f32 %v1468, 0.0
  %v1489 = vmax.f32 %v1469, 0.0
  %v1490 = vmax.f32 %v1470, 0.0
  %v1491 = vmax.f32 %v1471, 0.0
  %v1492 = vmax.f32 %v1472, 0.0
  %v1493 = vmax.f32 %v1473, 0.0
  %v1494 = vmax.f32 %v1474, 0.0
  %v1495 = vmax.f32 %v1475, 0.0
  %v1496 = vmax.f32 %v1476, 0.0
  %v1497 = vmax.f32 %v1477, 0.0
  %v1498 = vmax.f32 %v1478, 0.0
  %v1499 = vmax.f32 %v1479, 0.0
  %v1500 = vmax.f32 %v1480, 0.0
  %v1501 = vmax.f32 %v1481, 0.0
  %v1502 = vmax.f32 %v1482, 0.0
  %v1503 = vmax.f32 %v1483, 0.0
  %v1504 = vmax.f32 %v1484, 0.0
  %v1505 = vmax.f32 %v1485, 0.0
  %v1506 = vmax.f32 %v1486, 0.0
  %v1507 = vmax.f32 %v1487, 0.0
  %v1508 = vld [vmem:[%s10] sm:$0xff]
  %v1509 = vld [vmem:[%s10 + $0x8] sm:$0xff]
  %v1510 = vld [vmem:[%s10 + $0x10] sm:$0xff]
  %v1511 = vld [vmem:[%s10 + $0x18] sm:$0xff]
  %v1512 = vld [vmem:[%s10 + $0x20] sm:$0xff]
  %v1513 = vld [vmem:[%s10 + $0x28] sm:$0xff]
  %v1514 = vld [vmem:[%s10 + $0x30] sm:$0xff]
  %v1515 = vld [vmem:[%s10 + $0x38] sm:$0xff]
  %v1516 = vld [vmem:[%s10 + $0x40] sm:$0xff]
  %v1517 = vld [vmem:[%s10 + $0x48] sm:$0xff]
  %v1518 = vld [vmem:[%s10 + $0x50] sm:$0xff]
  %v1519 = vld [vmem:[%s10 + $0x58] sm:$0xff]
  %v1520 = vld [vmem:[%s10 + $0x60] sm:$0xff]
  %v1521 = vld [vmem:[%s10 + $0x68] sm:$0xff]
  %v1522 = vld [vmem:[%s10 + $0x70] sm:$0xff]
  %v1523 = vld [vmem:[%s10 + $0x78] sm:$0xff]
  %v1524 = vld [vmem:[%s10 + $0x80] sm:$0xff]
  %v1525 = vld [vmem:[%s10 + $0x88] sm:$0xff]
  %v1526 = vld [vmem:[%s10 + $0x90] sm:$0xff]
  %v1527 = vld [vmem:[%s10 + $0x98] sm:$0xff]
  %v1528 = vld [vmem:[%s10 + $0xa0] sm:$0xff]
  %v1529 = vld [vmem:[%s10 + $0xa8] sm:$0xff]
  %v1530 = vld [vmem:[%s10 + $0xb0] sm:$0xff]
  %v1531 = vld [vmem:[%s10 + $0xb8] sm:$0xff]
  %v1532 = vld [vmem:[%s10 + $0xc0] sm:$0xff]
  %v1533 = vld [vmem:[%s10 + $0xc8] sm:$0xff]
  %v1534 = vld [vmem:[%s10 + $0xd0] sm:$0xff]
  %v1535 = vld [vmem:[%s10 + $0xd8] sm:$0xff]
  %v1536 = vld [vmem:[%s10 + $0xe0] sm:$0xff]
  %v1537 = vld [vmem:[%s10 + $0xe8] sm:$0xff]
  %v1538 = vld [vmem:[%s10 + $0xf0] sm:$0xff]
  %v1539 = vld [vmem:[%s10 + $0xf8] sm:$0xff]
  %v1540 = vld [vmem:[%s10 + $0x100] sm:$0xff]
  %v1541 = vld [vmem:[%s10 + $0x108] sm:$0xff]
  %v1542 = vld [vmem:[%s10 + $0x110] sm:$0xff]
  %v1543 = vld [vmem:[%s10 + $0x118] sm:$0xff]
  %v1544 = vld [vmem:[%s10 + $0x120] sm:$0xff]
  %v1545 = vld [vmem:[%s10 + $0x128] sm:$0xff]
  %v1546 = vld [vmem:[%s10 + $0x130] sm:$0xff]
  %v1547 = vld [vmem:[%s10 + $0x138] sm:$0xff]
  %v1548 = vld [vmem:[%s10 + $0x140] sm:$0xff]
  %v1549 = vld [vmem:[%s10 + $0x148] sm:$0xff]
  %v1550 = vld [vmem:[%s10 + $0x150] sm:$0xff]
  %v1551 = vld [vmem:[%s10 + $0x158] sm:$0xff]
  %v1552 = vld [vmem:[%s10 + $0x160] sm:$0xff]
  %v1553 = vld [vmem:[%s10 + $0x168] sm:$0xff]
  %v1554 = vld [vmem:[%s10 + $0x170] sm:$0xff]
  %v1555 = vld [vmem:[%s10 + $0x178] sm:$0xff]
  %v1556 = vld [vmem:[%s10 + $0x180] sm:$0xff]
  %v1557 = vld [vmem:[%s10 + $0x188] sm:$0xff]
  %v1558 = vld [vmem:[%s10 + $0x190] sm:$0xff]
  %v1559 = vld [vmem:[%s10 + $0x198] sm:$0xff]
  %v1560 = vld [vmem:[%s10 + $0x1a0] sm:$0xff]
  %v1561 = vld [vmem:[%s10 + $0x1a8] sm:$0xff]
  %v1562 = vld [vmem:[%s10 + $0x1b0] sm:$0xff]
  %v1563 = vld [vmem:[%s10 + $0x1b8] sm:$0xff]
  %v1564 = vld [vmem:[%s10 + $0x1c0] sm:$0xff]
  %v1565 = vld [vmem:[%s10 + $0x1c8] sm:$0xff]
  %v1566 = vld [vmem:[%s10 + $0x1d0] sm:$0xff]
  %v1567 = vld [vmem:[%s10 + $0x1d8] sm:$0xff]
  %v1568 = vld [vmem:[%s10 + $0x1e0] sm:$0xff]
  %v1569 = vld [vmem:[%s10 + $0x1e8] sm:$0xff]
  %v1570 = vld [vmem:[%s10 + $0x1f0] sm:$0xff]
  %v1571 = vld [vmem:[%s10 + $0x1f8] sm:$0xff]
  %v1572 = vld [vmem:[%s10 + $0x200] sm:$0xff]
  %v1573 = vld [vmem:[%s10 + $0x208] sm:$0xff]
  %v1574 = vld [vmem:[%s10 + $0x210] sm:$0xff]
  %v1575 = vld [vmem:[%s10 + $0x218] sm:$0xff]
  %v1576 = vld [vmem:[%s10 + $0x220] sm:$0xff]
  %v1577 = vld [vmem:[%s10 + $0x228] sm:$0xff]
  %v1578 = vld [vmem:[%s10 + $0x230] sm:$0xff]
  %v1579 = vld [vmem:[%s10 + $0x238] sm:$0xff]
  %v1580 = vld [vmem:[%s10 + $0x240] sm:$0xff]
  %v1581 = vld [vmem:[%s10 + $0x248] sm:$0xff]
  %v1582 = vld [vmem:[%s10 + $0x250] sm:$0xff]
  %v1583 = vld [vmem:[%s10 + $0x258] sm:$0xff]
  %v1584 = vld [vmem:[%s10 + $0x260] sm:$0xff]
  %v1585 = vld [vmem:[%s10 + $0x268] sm:$0xff]
  %v1586 = vld [vmem:[%s10 + $0x270] sm:$0xff]
  %v1587 = vld [vmem:[%s10 + $0x278] sm:$0xff]
  %v1588 = vld [vmem:[%s10 + $0x280] sm:$0xff]
  %v1589 = vld [vmem:[%s10 + $0x288] sm:$0xff]
  %v1590 = vld [vmem:[%s10 + $0x290] sm:$0xff]
  %v1591 = vld [vmem:[%s10 + $0x298] sm:$0xff]
  %v1592 = vld [vmem:[%s10 + $0x2a0] sm:$0xff]
  %v1593 = vld [vmem:[%s10 + $0x2a8] sm:$0xff]
  %v1594 = vld [vmem:[%s10 + $0x2b0] sm:$0xff]
  %v1595 = vld [vmem:[%s10 + $0x2b8] sm:$0xff]
  %v1596 = vld [vmem:[%s10 + $0x2c0] sm:$0xff]
  %v1597 = vld [vmem:[%s10 + $0x2c8] sm:$0xff]
  %v1598 = vld [vmem:[%s10 + $0x2d0] sm:$0xff]
  %v1599 = vld [vmem:[%s10 + $0x2d8] sm:$0xff]
  %v1600 = vld [vmem:[%s10 + $0x2e0] sm:$0xff]
  %v1601 = vld [vmem:[%s10 + $0x2e8] sm:$0xff]
  %v1602 = vld [vmem:[%s10 + $0x2f0] sm:$0xff]
  %v1603 = vld [vmem:[%s10 + $0x2f8] sm:$0xff]
  %v1604 = vld [vmem:[%s10 + $0x300] sm:$0xff]
  %v1605 = vld [vmem:[%s10 + $0x308] sm:$0xff]
  %v1606 = vld [vmem:[%s10 + $0x310] sm:$0xff]
  %v1607 = vld [vmem:[%s10 + $0x318] sm:$0xff]
  %v1608 = vld [vmem:[%s10 + $0x320] sm:$0xff]
  %v1609 = vld [vmem:[%s10 + $0x328] sm:$0xff]
  %v1610 = vld [vmem:[%s10 + $0x330] sm:$0xff]
  %v1611 = vld [vmem:[%s10 + $0x338] sm:$0xff]
  %v1612 = vld [vmem:[%s10 + $0x340] sm:$0xff]
  %v1613 = vld [vmem:[%s10 + $0x348] sm:$0xff]
  %v1614 = vld [vmem:[%s10 + $0x350] sm:$0xff]
  %v1615 = vld [vmem:[%s10 + $0x358] sm:$0xff]
  %v1616 = vld [vmem:[%s10 + $0x360] sm:$0xff]
  %v1617 = vld [vmem:[%s10 + $0x368] sm:$0xff]
  %v1618 = vld [vmem:[%s10 + $0x370] sm:$0xff]
  %v1619 = vld [vmem:[%s10 + $0x378] sm:$0xff]
  %v1620 = vld [vmem:[%s10 + $0x380] sm:$0xff]
  %v1621 = vld [vmem:[%s10 + $0x388] sm:$0xff]
  %v1622 = vld [vmem:[%s10 + $0x390] sm:$0xff]
  %v1623 = vld [vmem:[%s10 + $0x398] sm:$0xff]
  %v1624 = vld [vmem:[%s10 + $0x3a0] sm:$0xff]
  %v1625 = vld [vmem:[%s10 + $0x3a8] sm:$0xff]
  %v1626 = vld [vmem:[%s10 + $0x3b0] sm:$0xff]
  %v1627 = vld [vmem:[%s10 + $0x3b8] sm:$0xff]
  %v1628 = vld [vmem:[%s10 + $0x3c0] sm:$0xff]
  %v1629 = vld [vmem:[%s10 + $0x3c8] sm:$0xff]
  %v1630 = vld [vmem:[%s10 + $0x3d0] sm:$0xff]
  %v1631 = vld [vmem:[%s10 + $0x3d8] sm:$0xff]
  %v1632 = vld [vmem:[%s10 + $0x3e0] sm:$0xff]
  %v1633 = vld [vmem:[%s10 + $0x3e8] sm:$0xff]
  %v1634 = vld [vmem:[%s10 + $0x3f0] sm:$0xff]
  %v1635 = vld [vmem:[%s10 + $0x3f8] sm:$0xff]
  %v1636 = vld [vmem:[%s10 + $0x400] sm:$0xff]
  %v1637 = vld [vmem:[%s10 + $0x408] sm:$0xff]
  %v1638 = vld [vmem:[%s10 + $0x410] sm:$0xff]
  %v1639 = vld [vmem:[%s10 + $0x418] sm:$0xff]
  %v1640 = vld [vmem:[%s10 + $0x420] sm:$0xff]
  %v1641 = vld [vmem:[%s10 + $0x428] sm:$0xff]
  %v1642 = vld [vmem:[%s10 + $0x430] sm:$0xff]
  %v1643 = vld [vmem:[%s10 + $0x438] sm:$0xff]
  %v1644 = vld [vmem:[%s10 + $0x440] sm:$0xff]
  %v1645 = vld [vmem:[%s10 + $0x448] sm:$0xff]
  %v1646 = vld [vmem:[%s10 + $0x450] sm:$0xff]
  %v1647 = vld [vmem:[%s10 + $0x458] sm:$0xff]
  %v1648 = vld [vmem:[%s10 + $0x460] sm:$0xff]
  %v1649 = vld [vmem:[%s10 + $0x468] sm:$0xff]
  %v1650 = vld [vmem:[%s10 + $0x470] sm:$0xff]
  %v1651 = vld [vmem:[%s10 + $0x478] sm:$0xff]
  %v1652 = vld [vmem:[%s10 + $0x480] sm:$0xff]
  %v1653 = vld [vmem:[%s10 + $0x488] sm:$0xff]
  %v1654 = vld [vmem:[%s10 + $0x490] sm:$0xff]
  %v1655 = vld [vmem:[%s10 + $0x498] sm:$0xff]
  %v1656 = vld [vmem:[%s10 + $0x4a0] sm:$0xff]
  %v1657 = vld [vmem:[%s10 + $0x4a8] sm:$0xff]
  %v1658 = vld [vmem:[%s10 + $0x4b0] sm:$0xff]
  %v1659 = vld [vmem:[%s10 + $0x4b8] sm:$0xff]
  %v1660 = vld [vmem:[%s10 + $0x4c0] sm:$0xff]
  %v1661 = vld [vmem:[%s10 + $0x4c8] sm:$0xff]
  %v1662 = vld [vmem:[%s10 + $0x4d0] sm:$0xff]
  %v1663 = vld [vmem:[%s10 + $0x4d8] sm:$0xff]
  %v1664 = vld [vmem:[%s10 + $0x4e0] sm:$0xff]
  %v1665 = vld [vmem:[%s10 + $0x4e8] sm:$0xff]
  %v1666 = vld [vmem:[%s10 + $0x4f0] sm:$0xff]
  %v1667 = vld [vmem:[%s10 + $0x4f8] sm:$0xff]
  %v1668 = vld [vmem:[%s10 + $0x500] sm:$0xff]
  %v1669 = vld [vmem:[%s10 + $0x508] sm:$0xff]
  %v1670 = vld [vmem:[%s10 + $0x510] sm:$0xff]
  %v1671 = vld [vmem:[%s10 + $0x518] sm:$0xff]
  %v1672 = vld [vmem:[%s10 + $0x520] sm:$0xff]
  %v1673 = vld [vmem:[%s10 + $0x528] sm:$0xff]
  %v1674 = vld [vmem:[%s10 + $0x530] sm:$0xff]
  %v1675 = vld [vmem:[%s10 + $0x538] sm:$0xff]
  %v1676 = vld [vmem:[%s10 + $0x540] sm:$0xff]
  %v1677 = vld [vmem:[%s10 + $0x548] sm:$0xff]
  %v1678 = vld [vmem:[%s10 + $0x550] sm:$0xff]
  %v1679 = vld [vmem:[%s10 + $0x558] sm:$0xff]
  %v1680 = vld [vmem:[%s10 + $0x560] sm:$0xff]
  %v1681 = vld [vmem:[%s10 + $0x568] sm:$0xff]
  %v1682 = vld [vmem:[%s10 + $0x570] sm:$0xff]
  %v1683 = vld [vmem:[%s10 + $0x578] sm:$0xff]
  %v1684 = vld [vmem:[%s10 + $0x580] sm:$0xff]
  %v1685 = vld [vmem:[%s10 + $0x588] sm:$0xff]
  %v1686 = vld [vmem:[%s10 + $0x590] sm:$0xff]
  %v1687 = vld [vmem:[%s10 + $0x598] sm:$0xff]
  %v1688 = vld [vmem:[%s10 + $0x5a0] sm:$0xff]
  %v1689 = vld [vmem:[%s10 + $0x5a8] sm:$0xff]
  %v1690 = vld [vmem:[%s10 + $0x5b0] sm:$0xff]
  %v1691 = vld [vmem:[%s10 + $0x5b8] sm:$0xff]
  %v1692 = vld [vmem:[%s10 + $0x5c0] sm:$0xff]
  %v1693 = vld [vmem:[%s10 + $0x5c8] sm:$0xff]
  %v1694 = vld [vmem:[%s10 + $0x5d0] sm:$0xff]
  %v1695 = vld [vmem:[%s10 + $0x5d8] sm:$0xff]
  %v1696 = vld [vmem:[%s10 + $0x5e0] sm:$0xff]
  %v1697 = vld [vmem:[%s10 + $0x5e8] sm:$0xff]
  %v1698 = vld [vmem:[%s10 + $0x5f0] sm:$0xff]
  %v1699 = vld [vmem:[%s10 + $0x5f8] sm:$0xff]
  %v1700 = vld [vmem:[%s10 + $0x600] sm:$0xff]
  %v1701 = vld [vmem:[%s10 + $0x608] sm:$0xff]
  %v1702 = vld [vmem:[%s10 + $0x610] sm:$0xff]
  %v1703 = vld [vmem:[%s10 + $0x618] sm:$0xff]
  %v1704 = vld [vmem:[%s10 + $0x620] sm:$0xff]
  %v1705 = vld [vmem:[%s10 + $0x628] sm:$0xff]
  %v1706 = vld [vmem:[%s10 + $0x630] sm:$0xff]
  %v1707 = vld [vmem:[%s10 + $0x638] sm:$0xff]
  %v1708 = vld [vmem:[%s10 + $0x640] sm:$0xff]
  %v1709 = vld [vmem:[%s10 + $0x648] sm:$0xff]
  %v1710 = vld [vmem:[%s10 + $0x650] sm:$0xff]
  %v1711 = vld [vmem:[%s10 + $0x658] sm:$0xff]
  %v1712 = vld [vmem:[%s10 + $0x660] sm:$0xff]
  %v1713 = vld [vmem:[%s10 + $0x668] sm:$0xff]
  %v1714 = vld [vmem:[%s10 + $0x670] sm:$0xff]
  %v1715 = vld [vmem:[%s10 + $0x678] sm:$0xff]
  %v1716 = vld [vmem:[%s10 + $0x680] sm:$0xff]
  %v1717 = vld [vmem:[%s10 + $0x688] sm:$0xff]
  %v1718 = vld [vmem:[%s10 + $0x690] sm:$0xff]
  %v1719 = vld [vmem:[%s10 + $0x698] sm:$0xff]
  %v1720 = vld [vmem:[%s10 + $0x6a0] sm:$0xff]
  %v1721 = vld [vmem:[%s10 + $0x6a8] sm:$0xff]
  %v1722 = vld [vmem:[%s10 + $0x6b0] sm:$0xff]
  %v1723 = vld [vmem:[%s10 + $0x6b8] sm:$0xff]
  %v1724 = vld [vmem:[%s10 + $0x6c0] sm:$0xff]
  %v1725 = vld [vmem:[%s10 + $0x6c8] sm:$0xff]
  %v1726 = vld [vmem:[%s10 + $0x6d0] sm:$0xff]
  %v1727 = vld [vmem:[%s10 + $0x6d8] sm:$0xff]
  %v1728 = vld [vmem:[%s10 + $0x6e0] sm:$0xff]
  %v1729 = vld [vmem:[%s10 + $0x6e8] sm:$0xff]
  %v1730 = vld [vmem:[%s10 + $0x6f0] sm:$0xff]
  %v1731 = vld [vmem:[%s10 + $0x6f8] sm:$0xff]
  %v1732 = vld [vmem:[%s10 + $0x700] sm:$0xff]
  %v1733 = vld [vmem:[%s10 + $0x708] sm:$0xff]
  %v1734 = vld [vmem:[%s10 + $0x710] sm:$0xff]
  %v1735 = vld [vmem:[%s10 + $0x718] sm:$0xff]
  %v1736 = vld [vmem:[%s10 + $0x720] sm:$0xff]
  %v1737 = vld [vmem:[%s10 + $0x728] sm:$0xff]
  %v1738 = vld [vmem:[%s10 + $0x730] sm:$0xff]
  %v1739 = vld [vmem:[%s10 + $0x738] sm:$0xff]
  %v1740 = vld [vmem:[%s10 + $0x740] sm:$0xff]
  %v1741 = vld [vmem:[%s10 + $0x748] sm:$0xff]
  %v1742 = vld [vmem:[%s10 + $0x750] sm:$0xff]
  %v1743 = vld [vmem:[%s10 + $0x758] sm:$0xff]
  %v1744 = vld [vmem:[%s10 + $0x760] sm:$0xff]
  %v1745 = vld [vmem:[%s10 + $0x768] sm:$0xff]
  %v1746 = vld [vmem:[%s10 + $0x770] sm:$0xff]
  %v1747 = vld [vmem:[%s10 + $0x778] sm:$0xff]
  %v1748 = vld [vmem:[%s10 + $0x780] sm:$0xff]
  %v1749 = vld [vmem:[%s10 + $0x788] sm:$0xff]
  %v1750 = vld [vmem:[%s10 + $0x790] sm:$0xff]
  %v1751 = vld [vmem:[%s10 + $0x798] sm:$0xff]
  %v1752 = vld [vmem:[%s10 + $0x7a0] sm:$0xff]
  %v1753 = vld [vmem:[%s10 + $0x7a8] sm:$0xff]
  %v1754 = vld [vmem:[%s10 + $0x7b0] sm:$0xff]
  %v1755 = vld [vmem:[%s10 + $0x7b8] sm:$0xff]
  %v1756 = vld [vmem:[%s10 + $0x7c0] sm:$0xff]
  %v1757 = vld [vmem:[%s10 + $0x7c8] sm:$0xff]
  %v1758 = vld [vmem:[%s10 + $0x7d0] sm:$0xff]
  %v1759 = vld [vmem:[%s10 + $0x7d8] sm:$0xff]
  %v1760 = vld [vmem:[%s10 + $0x7e0] sm:$0xff]
  %v1761 = vld [vmem:[%s10 + $0x7e8] sm:$0xff]
  %v1762 = vld [vmem:[%s10 + $0x7f0] sm:$0xff]
  %v1763 = vld [vmem:[%s10 + $0x7f8] sm:$0xff]
  %v1764 = vld [vmem:[%s11] sm:$0xf]
  %v1766 = vlaneseq
  %v1767 = vshrl.u32 %v1766, 7
  %v1768 = vsub.s32 0, %v1767
  %v1769 = vrot.slane %v1764, %v1768
  %v1770 = vlaneseq
  %v1771 = vshrl.u32 %v1770, 7
  %v1772 = vsub.s32 1, %v1771
  %v1773 = vrot.slane %v1764, %v1772
  %v1774 = vlaneseq
  %v1775 = vshrl.u32 %v1774, 7
  %v1776 = vsub.s32 2, %v1775
  %v1777 = vrot.slane %v1764, %v1776
  %v1778 = vlaneseq
  %v1779 = vshrl.u32 %v1778, 7
  %v1780 = vsub.s32 3, %v1779
  %v1781 = vrot.slane %v1764, %v1780
  %1786 = vmatprep.subr.mxu0 %v1509
  %1787 = vmatpush1.msra.mxu0 %v1508
  %1788 = vmatprep.subr.mxu0 %v1513
  %1789 = vmatpush1.msra.mxu0 %v1512
  %1790 = vmatprep.subr.mxu0 %v1517
  %1791 = vmatpush1.msra.mxu0 %v1516
  %1792 = vmatprep.subr.mxu0 %v1521
  %1793 = vmatpush1.msra.mxu0 %v1520
  %1794 = vmatprep.subr.mxu0 %v1525
  %1795 = vmatpush1.msra.mxu0 %v1524
  %1796 = vmatprep.subr.mxu0 %v1529
  %1797 = vmatpush1.msra.mxu0 %v1528
  %1798 = vmatprep.subr.mxu0 %v1533
  %1799 = vmatpush1.msra.mxu0 %v1532
  %1800 = vmatprep.subr.mxu0 %v1537
  %1801 = vmatpush1.msra.mxu0 %v1536
  %1802 = vmatprep.subr.mxu0 %v1541
  %1803 = vmatpush1.msra.mxu0 %v1540
  %1804 = vmatprep.subr.mxu0 %v1545
  %1805 = vmatpush1.msra.mxu0 %v1544
  %1806 = vmatprep.subr.mxu0 %v1549
  %1807 = vmatpush1.msra.mxu0 %v1548
  %1808 = vmatprep.subr.mxu0 %v1553
  %1809 = vmatpush1.msra.mxu0 %v1552
  %1810 = vmatprep.subr.mxu0 %v1557
  %1811 = vmatpush1.msra.mxu0 %v1556
  %1812 = vmatprep.subr.mxu0 %v1561
  %1813 = vmatpush1.msra.mxu0 %v1560
  %1814 = vmatprep.subr.mxu0 %v1565
  %1815 = vmatpush1.msra.mxu0 %v1564
  %1816 = vmatprep.subr.mxu0 %v1569
  %1817 = vmatpush1.msra.mxu0 %v1568
  %1818 = vmatprep.subr.mxu0 %v1573
  %1819 = vmatpush1.msra.mxu0 %v1572
  %1820 = vmatprep.subr.mxu0 %v1577
  %1821 = vmatpush1.msra.mxu0 %v1576
  %1822 = vmatprep.subr.mxu0 %v1581
  %1823 = vmatpush1.msra.mxu0 %v1580
  %1824 = vmatprep.subr.mxu0 %v1585
  %1825 = vmatpush1.msra.mxu0 %v1584
  %1826 = vmatprep.subr.mxu0 %v1589
  %1827 = vmatpush1.msra.mxu0 %v1588
  %1828 = vmatprep.subr.mxu0 %v1593
  %1829 = vmatpush1.msra.mxu0 %v1592
  %1830 = vmatprep.subr.mxu0 %v1597
  %1831 = vmatpush1.msra.mxu0 %v1596
  %1832 = vmatprep.subr.mxu0 %v1601
  %1833 = vmatpush1.msra.mxu0 %v1600
  %1834 = vmatprep.subr.mxu0 %v1605
  %1835 = vmatpush1.msra.mxu0 %v1604
  %1836 = vmatprep.subr.mxu0 %v1609
  %1837 = vmatpush1.msra.mxu0 %v1608
  %1838 = vmatprep.subr.mxu0 %v1613
  %1839 = vmatpush1.msra.mxu0 %v1612
  %1840 = vmatprep.subr.mxu0 %v1617
  %1841 = vmatpush1.msra.mxu0 %v1616
  %1842 = vmatprep.subr.mxu0 %v1621
  %1843 = vmatpush1.msra.mxu0 %v1620
  %1844 = vmatprep.subr.mxu0 %v1625
  %1845 = vmatpush1.msra.mxu0 %v1624
  %1846 = vmatprep.subr.mxu0 %v1629
  %1847 = vmatpush1.msra.mxu0 %v1628
  %1848 = vmatprep.subr.mxu0 %v1633
  %1849 = vmatpush1.msra.mxu0 %v1632
  %1850 = vmatprep.mubr.f32.mxu0 %v1489
  %1851 = vmatmul.mubr.f32.gmra.mrb[0].mxu0 %v1488
  %v1852 = vpop.f32.mrb[0].mxu0
  %v1853 = vadd.f32 %v1769, %v1852
  %v1854 = vpop.f32.mrb[0].mxu0
  %v1855 = vadd.f32 %v1773, %v1854
  %1856 = vmatprep.mubr.f32.mxu0 %v1493
  %1857 = vmatmul.mubr.f32.gmra.mrb[0].mxu0 %v1492
  %v1858 = vpop.f32.mrb[0].mxu0
  %v1859 = vadd.f32 %v1769, %v1858
  %v1860 = vpop.f32.mrb[0].mxu0
  %v1861 = vadd.f32 %v1773, %v1860
  %1862 = vmatprep.mubr.f32.mxu0 %v1497
  %1863 = vmatmul.mubr.f32.gmra.mrb[0].mxu0 %v1496
  %v1864 = vpop.f32.mrb[0].mxu0
  %v1865 = vadd.f32 %v1769, %v1864
  %v1866 = vpop.f32.mrb[0].mxu0
  %v1867 = vadd.f32 %v1773, %v1866
  %1868 = vmatprep.mubr.f32.mxu0 %v1501
  %1869 = vmatmul.mubr.f32.gmra.mrb[0].mxu0 %v1500
  %v1870 = vpop.f32.mrb[0].mxu0
  %v1871 = vadd.f32 %v1769, %v1870
  %v1872 = vpop.f32.mrb[0].mxu0
  %v1873 = vadd.f32 %v1773, %v1872
  %1874 = vmatprep.mubr.f32.mxu0 %v1505
  %1875 = vmatmul.mubr.f32.gmra.mrb[0].mxu0 %v1504
  %v1876 = vpop.f32.mrb[0].mxu0
  %v1877 = vadd.f32 %v1769, %v1876
  %v1878 = vpop.f32.mrb[0].mxu0
  %v1879 = vadd.f32 %v1773, %v1878
  %1880 = vdwg.mxu0
  %1881 = vmatprep.subr.mxu0 %v1637
  %1882 = vmatpush1.msra.mxu0 %v1636
  %1883 = vmatprep.subr.mxu0 %v1641
  %1884 = vmatpush1.msra.mxu0 %v1640
  %1885 = vmatprep.subr.mxu0 %v1645
  %1886 = vmatpush1.msra.mxu0 %v1644
  %1887 = vmatprep.subr.mxu0 %v1649
  %1888 = vmatpush1.msra.mxu0 %v1648
  %1889 = vmatprep.subr.mxu0 %v1653
  %1890 = vmatpush1.msra.mxu0 %v1652
  %1891 = vmatprep.subr.mxu0 %v1657
  %1892 = vmatpush1.msra.mxu0 %v1656
  %1893 = vmatprep.subr.mxu0 %v1661
  %1894 = vmatpush1.msra.mxu0 %v1660
  %1895 = vmatprep.subr.mxu0 %v1665
  %1896 = vmatpush1.msra.mxu0 %v1664
  %1897 = vmatprep.subr.mxu0 %v1669
  %1898 = vmatpush1.msra.mxu0 %v1668
  %1899 = vmatprep.subr.mxu0 %v1673
  %1900 = vmatpush1.msra.mxu0 %v1672
  %1901 = vmatprep.subr.mxu0 %v1677
  %1902 = vmatpush1.msra.mxu0 %v1676
  %1903 = vmatprep.subr.mxu0 %v1681
  %1904 = vmatpush1.msra.mxu0 %v1680
  %1905 = vmatprep.subr.mxu0 %v1685
  %1906 = vmatpush1.msra.mxu0 %v1684
  %1907 = vmatprep.subr.mxu0 %v1689
  %1908 = vmatpush1.msra.mxu0 %v1688
  %1909 = vmatprep.subr.mxu0 %v1693
  %1910 = vmatpush1.msra.mxu0 %v1692
  %1911 = vmatprep.subr.mxu0 %v1697
  %1912 = vmatpush1.msra.mxu0 %v1696
  %1913 = vmatprep.subr.mxu0 %v1701
  %1914 = vmatpush1.msra.mxu0 %v1700
  %1915 = vmatprep.subr.mxu0 %v1705
  %1916 = vmatpush1.msra.mxu0 %v1704
  %1917 = vmatprep.subr.mxu0 %v1709
  %1918 = vmatpush1.msra.mxu0 %v1708
  %1919 = vmatprep.subr.mxu0 %v1713
  %1920 = vmatpush1.msra.mxu0 %v1712
  %1921 = vmatprep.subr.mxu0 %v1717
  %1922 = vmatpush1.msra.mxu0 %v1716
  %1923 = vmatprep.subr.mxu0 %v1721
  %1924 = vmatpush1.msra.mxu0 %v1720
  %1925 = vmatprep.subr.mxu0 %v1725
  %1926 = vmatpush1.msra.mxu0 %v1724
  %1927 = vmatprep.subr.mxu0 %v1729
  %1928 = vmatpush1.msra.mxu0 %v1728
  %1929 = vmatprep.subr.mxu0 %v1733
  %1930 = vmatpush1.msra.mxu0 %v1732
  %1931 = vmatprep.subr.mxu0 %v1737
  %1932 = vmatpush1.msra.mxu0 %v1736
  %1933 = vmatprep.subr.mxu0 %v1741
  %1934 = vmatpush1.msra.mxu0 %v1740
  %1935 = vmatprep.subr.mxu0 %v1745
  %1936 = vmatpush1.msra.mxu0 %v1744
  %1937 = vmatprep.subr.mxu0 %v1749
  %1938 = vmatpush1.msra.mxu0 %v1748
  %1939 = vmatprep.subr.mxu0 %v1753
  %1940 = vmatpush1.msra.mxu0 %v1752
  %1941 = vmatprep.subr.mxu0 %v1757
  %1942 = vmatpush1.msra.mxu0 %v1756
  %1943 = vmatprep.subr.mxu0 %v1761
  %1944 = vmatpush1.msra.mxu0 %v1760
  %1945 = vmatprep.mubr.f32.mxu0 %v1491
  %1946 = vmatmul.mubr.f32.gmra.mrb[0].mxu0 %v1490
  %v1947 = vpop.f32.mrb[0].mxu0
  %v1948 = vadd.f32 %v1853, %v1947
  %v1949 = vpop.f32.mrb[0].mxu0
  %v1950 = vadd.f32 %v1855, %v1949
  %1951 = vmatprep.mubr.f32.mxu0 %v1495
  %1952 = vmatmul.mubr.f32.gmra.mrb[0].mxu0 %v1494
  %v1953 = vpop.f32.mrb[0].mxu0
  %v1954 = vadd.f32 %v1859, %v1953
  %v1955 = vpop.f32.mrb[0].mxu0
  %v1956 = vadd.f32 %v1861, %v1955
  %1957 = vmatprep.mubr.f32.mxu0 %v1499
  %1958 = vmatmul.mubr.f32.gmra.mrb[0].mxu0 %v1498
  %v1959 = vpop.f32.mrb[0].mxu0
  %v1960 = vadd.f32 %v1865, %v1959
  %v1961 = vpop.f32.mrb[0].mxu0
  %v1962 = vadd.f32 %v1867, %v1961
  %1963 = vmatprep.mubr.f32.mxu0 %v1503
  %1964 = vmatmul.mubr.f32.gmra.mrb[0].mxu0 %v1502
  %v1965 = vpop.f32.mrb[0].mxu0
  %v1966 = vadd.f32 %v1871, %v1965
  %v1967 = vpop.f32.mrb[0].mxu0
  %v1968 = vadd.f32 %v1873, %v1967
  %1969 = vmatprep.mubr.f32.mxu0 %v1507
  %1970 = vmatmul.mubr.f32.gmra.mrb[0].mxu0 %v1506
  %v1971 = vpop.f32.mrb[0].mxu0
  %v1972 = vadd.f32 %v1877, %v1971
  %v1973 = vpop.f32.mrb[0].mxu0
  %v1974 = vadd.f32 %v1879, %v1973
  %1975 = vdwg.mxu0
  %1976 = vmatprep.subr.mxu0 %v1511
  %1977 = vmatpush1.msra.mxu0 %v1510
  %1978 = vmatprep.subr.mxu0 %v1515
  %1979 = vmatpush1.msra.mxu0 %v1514
  %1980 = vmatprep.subr.mxu0 %v1519
  %1981 = vmatpush1.msra.mxu0 %v1518
  %1982 = vmatprep.subr.mxu0 %v1523
  %1983 = vmatpush1.msra.mxu0 %v1522
  %1984 = vmatprep.subr.mxu0 %v1527
  %1985 = vmatpush1.msra.mxu0 %v1526
  %1986 = vmatprep.subr.mxu0 %v1531
  %1987 = vmatpush1.msra.mxu0 %v1530
  %1988 = vmatprep.subr.mxu0 %v1535
  %1989 = vmatpush1.msra.mxu0 %v1534
  %1990 = vmatprep.subr.mxu0 %v1539
  %1991 = vmatpush1.msra.mxu0 %v1538
  %1992 = vmatprep.subr.mxu0 %v1543
  %1993 = vmatpush1.msra.mxu0 %v1542
  %1994 = vmatprep.subr.mxu0 %v1547
  %1995 = vmatpush1.msra.mxu0 %v1546
  %1996 = vmatprep.subr.mxu0 %v1551
  %1997 = vmatpush1.msra.mxu0 %v1550
  %1998 = vmatprep.subr.mxu0 %v1555
  %1999 = vmatpush1.msra.mxu0 %v1554
  %2000 = vmatprep.subr.mxu0 %v1559
  %2001 = vmatpush1.msra.mxu0 %v1558
  %2002 = vmatprep.subr.mxu0 %v1563
  %2003 = vmatpush1.msra.mxu0 %v1562
  %2004 = vmatprep.subr.mxu0 %v1567
  %2005 = vmatpush1.msra.mxu0 %v1566
  %2006 = vmatprep.subr.mxu0 %v1571
  %2007 = vmatpush1.msra.mxu0 %v1570
  %2008 = vmatprep.subr.mxu0 %v1575
  %2009 = vmatpush1.msra.mxu0 %v1574
  %2010 = vmatprep.subr.mxu0 %v1579
  %2011 = vmatpush1.msra.mxu0 %v1578
  %2012 = vmatprep.subr.mxu0 %v1583
  %2013 = vmatpush1.msra.mxu0 %v1582
  %2014 = vmatprep.subr.mxu0 %v1587
  %2015 = vmatpush1.msra.mxu0 %v1586
  %2016 = vmatprep.subr.mxu0 %v1591
  %2017 = vmatpush1.msra.mxu0 %v1590
  %2018 = vmatprep.subr.mxu0 %v1595
  %2019 = vmatpush1.msra.mxu0 %v1594
  %2020 = vmatprep.subr.mxu0 %v1599
  %2021 = vmatpush1.msra.mxu0 %v1598
  %2022 = vmatprep.subr.mxu0 %v1603
  %2023 = vmatpush1.msra.mxu0 %v1602
  %2024 = vmatprep.subr.mxu0 %v1607
  %2025 = vmatpush1.msra.mxu0 %v1606
  %2026 = vmatprep.subr.mxu0 %v1611
  %2027 = vmatpush1.msra.mxu0 %v1610
  %2028 = vmatprep.subr.mxu0 %v1615
  %2029 = vmatpush1.msra.mxu0 %v1614
  %2030 = vmatprep.subr.mxu0 %v1619
  %2031 = vmatpush1.msra.mxu0 %v1618
  %2032 = vmatprep.subr.mxu0 %v1623
  %2033 = vmatpush1.msra.mxu0 %v1622
  %2034 = vmatprep.subr.mxu0 %v1627
  %2035 = vmatpush1.msra.mxu0 %v1626
  %2036 = vmatprep.subr.mxu0 %v1631
  %2037 = vmatpush1.msra.mxu0 %v1630
  %2038 = vmatprep.subr.mxu0 %v1635
  %2039 = vmatpush1.msra.mxu0 %v1634
  %2040 = vmatprep.mubr.f32.mxu0 %v1489
  %2041 = vmatmul.mubr.f32.gmra.mrb[0].mxu0 %v1488
  %v2042 = vpop.f32.mrb[0].mxu0
  %v2043 = vadd.f32 %v1777, %v2042
  %v2044 = vpop.f32.mrb[0].mxu0
  %v2045 = vadd.f32 %v1781, %v2044
  %2046 = vmatprep.mubr.f32.mxu0 %v1493
  %2047 = vmatmul.mubr.f32.gmra.mrb[0].mxu0 %v1492
  %v2048 = vpop.f32.mrb[0].mxu0
  %v2049 = vadd.f32 %v1777, %v2048
  %v2050 = vpop.f32.mrb[0].mxu0
  %v2051 = vadd.f32 %v1781, %v2050
  %2052 = vmatprep.mubr.f32.mxu0 %v1497
  %2053 = vmatmul.mubr.f32.gmra.mrb[0].mxu0 %v1496
  %v2054 = vpop.f32.mrb[0].mxu0
  %v2055 = vadd.f32 %v1777, %v2054
  %v2056 = vpop.f32.mrb[0].mxu0
  %v2057 = vadd.f32 %v1781, %v2056
  %2058 = vmatprep.mubr.f32.mxu0 %v1501
  %2059 = vmatmul.mubr.f32.gmra.mrb[0].mxu0 %v1500
  %v2060 = vpop.f32.mrb[0].mxu0
  %v2061 = vadd.f32 %v1777, %v2060
  %v2062 = vpop.f32.mrb[0].mxu0
  %v2063 = vadd.f32 %v1781, %v2062
  %2064 = vmatprep.mubr.f32.mxu0 %v1505
  %2065 = vmatmul.mubr.f32.gmra.mrb[0].mxu0 %v1504
  %v2066 = vpop.f32.mrb[0].mxu0
  %v2067 = vadd.f32 %v1777, %v2066
  %v2068 = vpop.f32.mrb[0].mxu0
  %v2069 = vadd.f32 %v1781, %v2068
  %2070 = vdwg.mxu0
  %2071 = vmatprep.subr.mxu0 %v1639
  %2072 = vmatpush1.msra.mxu0 %v1638
  %2073 = vmatprep.subr.mxu0 %v1643
  %2074 = vmatpush1.msra.mxu0 %v1642
  %2075 = vmatprep.subr.mxu0 %v1647
  %2076 = vmatpush1.msra.mxu0 %v1646
  %2077 = vmatprep.subr.mxu0 %v1651
  %2078 = vmatpush1.msra.mxu0 %v1650
  %2079 = vmatprep.subr.mxu0 %v1655
  %2080 = vmatpush1.msra.mxu0 %v1654
  %2081 = vmatprep.subr.mxu0 %v1659
  %2082 = vmatpush1.msra.mxu0 %v1658
  %2083 = vmatprep.subr.mxu0 %v1663
  %2084 = vmatpush1.msra.mxu0 %v1662
  %2085 = vmatprep.subr.mxu0 %v1667
  %2086 = vmatpush1.msra.mxu0 %v1666
  %2087 = vmatprep.subr.mxu0 %v1671
  %2088 = vmatpush1.msra.mxu0 %v1670
  %2089 = vmatprep.subr.mxu0 %v1675
  %2090 = vmatpush1.msra.mxu0 %v1674
  %2091 = vmatprep.subr.mxu0 %v1679
  %2092 = vmatpush1.msra.mxu0 %v1678
  %2093 = vmatprep.subr.mxu0 %v1683
  %2094 = vmatpush1.msra.mxu0 %v1682
  %2095 = vmatprep.subr.mxu0 %v1687
  %2096 = vmatpush1.msra.mxu0 %v1686
  %2097 = vmatprep.subr.mxu0 %v1691
  %2098 = vmatpush1.msra.mxu0 %v1690
  %2099 = vmatprep.subr.mxu0 %v1695
  %2100 = vmatpush1.msra.mxu0 %v1694
  %2101 = vmatprep.subr.mxu0 %v1699
  %2102 = vmatpush1.msra.mxu0 %v1698
  %2103 = vmatprep.subr.mxu0 %v1703
  %2104 = vmatpush1.msra.mxu0 %v1702
  %2105 = vmatprep.subr.mxu0 %v1707
  %2106 = vmatpush1.msra.mxu0 %v1706
  %2107 = vmatprep.subr.mxu0 %v1711
  %2108 = vmatpush1.msra.mxu0 %v1710
  %2109 = vmatprep.subr.mxu0 %v1715
  %2110 = vmatpush1.msra.mxu0 %v1714
  %2111 = vmatprep.subr.mxu0 %v1719
  %2112 = vmatpush1.msra.mxu0 %v1718
  %2113 = vmatprep.subr.mxu0 %v1723
  %2114 = vmatpush1.msra.mxu0 %v1722
  %2115 = vmatprep.subr.mxu0 %v1727
  %2116 = vmatpush1.msra.mxu0 %v1726
  %2117 = vmatprep.subr.mxu0 %v1731
  %2118 = vmatpush1.msra.mxu0 %v1730
  %2119 = vmatprep.subr.mxu0 %v1735
  %2120 = vmatpush1.msra.mxu0 %v1734
  %2121 = vmatprep.subr.mxu0 %v1739
  %2122 = vmatpush1.msra.mxu0 %v1738
  %2123 = vmatprep.subr.mxu0 %v1743
  %2124 = vmatpush1.msra.mxu0 %v1742
  %2125 = vmatprep.subr.mxu0 %v1747
  %2126 = vmatpush1.msra.mxu0 %v1746
  %2127 = vmatprep.subr.mxu0 %v1751
  %2128 = vmatpush1.msra.mxu0 %v1750
  %2129 = vmatprep.subr.mxu0 %v1755
  %2130 = vmatpush1.msra.mxu0 %v1754
  %2131 = vmatprep.subr.mxu0 %v1759
  %2132 = vmatpush1.msra.mxu0 %v1758
  %2133 = vmatprep.subr.mxu0 %v1763
  %2134 = vmatpush1.msra.mxu0 %v1762
  %2135 = vmatprep.mubr.f32.mxu0 %v1491
  %2136 = vmatmul.mubr.f32.gmra.mrb[0].mxu0 %v1490
  %v2137 = vpop.f32.mrb[0].mxu0
  %v2138 = vadd.f32 %v2043, %v2137
  %v2139 = vpop.f32.mrb[0].mxu0
  %v2140 = vadd.f32 %v2045, %v2139
  %2141 = vmatprep.mubr.f32.mxu0 %v1495
  %2142 = vmatmul.mubr.f32.gmra.mrb[0].mxu0 %v1494
  %v2143 = vpop.f32.mrb[0].mxu0
  %v2144 = vadd.f32 %v2049, %v2143
  %v2145 = vpop.f32.mrb[0].mxu0
  %v2146 = vadd.f32 %v2051, %v2145
  %2147 = vmatprep.mubr.f32.mxu0 %v1499
  %2148 = vmatmul.mubr.f32.gmra.mrb[0].mxu0 %v1498
  %v2149 = vpop.f32.mrb[0].mxu0
  %v2150 = vadd.f32 %v2055, %v2149
  %v2151 = vpop.f32.mrb[0].mxu0
  %v2152 = vadd.f32 %v2057, %v2151
  %2153 = vmatprep.mubr.f32.mxu0 %v1503
  %2154 = vmatmul.mubr.f32.gmra.mrb[0].mxu0 %v1502
  %v2155 = vpop.f32.mrb[0].mxu0
  %v2156 = vadd.f32 %v2061, %v2155
  %v2157 = vpop.f32.mrb[0].mxu0
  %v2158 = vadd.f32 %v2063, %v2157
  %2159 = vmatprep.mubr.f32.mxu0 %v1507
  %2160 = vmatmul.mubr.f32.gmra.mrb[0].mxu0 %v1506
  %v2161 = vpop.f32.mrb[0].mxu0
  %v2162 = vadd.f32 %v2067, %v2161
  %v2163 = vpop.f32.mrb[0].mxu0
  %v2164 = vadd.f32 %v2069, %v2163
  %2165 = vdwg.mxu0
  %v2166 = vmax.f32 %v1948, 0.0
  %v2167 = vmax.f32 %v1950, 0.0
  %v2168 = vmax.f32 %v2138, 0.0
  %v2169 = vmax.f32 %v2140, 0.0
  %v2170 = vmax.f32 %v1954, 0.0
  %v2171 = vmax.f32 %v1956, 0.0
  %v2172 = vmax.f32 %v2144, 0.0
  %v2173 = vmax.f32 %v2146, 0.0
  %v2174 = vmax.f32 %v1960, 0.0
  %v2175 = vmax.f32 %v1962, 0.0
  %v2176 = vmax.f32 %v2150, 0.0
  %v2177 = vmax.f32 %v2152, 0.0
  %v2178 = vmax.f32 %v1966, 0.0
  %v2179 = vmax.f32 %v1968, 0.0
  %v2180 = vmax.f32 %v2156, 0.0
  %v2181 = vmax.f32 %v2158, 0.0
  %v2182 = vmax.f32 %v1972, 0.0
  %v2183 = vmax.f32 %v1974, 0.0
  %v2184 = vmax.f32 %v2162, 0.0
  %v2185 = vmax.f32 %v2164, 0.0
  %v2186 = vld [vmem:[%s12] sm:$0xff]
  %v2187 = vld [vmem:[%s12 + $0x8] sm:$0xff]
  %v2188 = vld [vmem:[%s12 + $0x10] sm:$0xff]
  %v2189 = vld [vmem:[%s12 + $0x18] sm:$0xff]
  %v2190 = vld [vmem:[%s12 + $0x20] sm:$0xff]
  %v2191 = vld [vmem:[%s12 + $0x28] sm:$0xff]
  %v2192 = vld [vmem:[%s12 + $0x30] sm:$0xff]
  %v2193 = vld [vmem:[%s12 + $0x38] sm:$0xff]
  %v2194 = vld [vmem:[%s12 + $0x40] sm:$0xff]
  %v2195 = vld [vmem:[%s12 + $0x48] sm:$0xff]
  %v2196 = vld [vmem:[%s12 + $0x50] sm:$0xff]
  %v2197 = vld [vmem:[%s12 + $0x58] sm:$0xff]
  %v2198 = vld [vmem:[%s12 + $0x60] sm:$0xff]
  %v2199 = vld [vmem:[%s12 + $0x68] sm:$0xff]
  %v2200 = vld [vmem:[%s12 + $0x70] sm:$0xff]
  %v2201 = vld [vmem:[%s12 + $0x78] sm:$0xff]
  %v2202 = vld [vmem:[%s12 + $0x80] sm:$0xff]
  %v2203 = vld [vmem:[%s12 + $0x88] sm:$0xff]
  %v2204 = vld [vmem:[%s12 + $0x90] sm:$0xff]
  %v2205 = vld [vmem:[%s12 + $0x98] sm:$0xff]
  %v2206 = vld [vmem:[%s12 + $0xa0] sm:$0xff]
  %v2207 = vld [vmem:[%s12 + $0xa8] sm:$0xff]
  %v2208 = vld [vmem:[%s12 + $0xb0] sm:$0xff]
  %v2209 = vld [vmem:[%s12 + $0xb8] sm:$0xff]
  %v2210 = vld [vmem:[%s12 + $0xc0] sm:$0xff]
  %v2211 = vld [vmem:[%s12 + $0xc8] sm:$0xff]
  %v2212 = vld [vmem:[%s12 + $0xd0] sm:$0xff]
  %v2213 = vld [vmem:[%s12 + $0xd8] sm:$0xff]
  %v2214 = vld [vmem:[%s12 + $0xe0] sm:$0xff]
  %v2215 = vld [vmem:[%s12 + $0xe8] sm:$0xff]
  %v2216 = vld [vmem:[%s12 + $0xf0] sm:$0xff]
  %v2217 = vld [vmem:[%s12 + $0xf8] sm:$0xff]
  %v2218 = vld [vmem:[%s12 + $0x100] sm:$0xff]
  %v2219 = vld [vmem:[%s12 + $0x108] sm:$0xff]
  %v2220 = vld [vmem:[%s12 + $0x110] sm:$0xff]
  %v2221 = vld [vmem:[%s12 + $0x118] sm:$0xff]
  %v2222 = vld [vmem:[%s12 + $0x120] sm:$0xff]
  %v2223 = vld [vmem:[%s12 + $0x128] sm:$0xff]
  %v2224 = vld [vmem:[%s12 + $0x130] sm:$0xff]
  %v2225 = vld [vmem:[%s12 + $0x138] sm:$0xff]
  %v2226 = vld [vmem:[%s12 + $0x140] sm:$0xff]
  %v2227 = vld [vmem:[%s12 + $0x148] sm:$0xff]
  %v2228 = vld [vmem:[%s12 + $0x150] sm:$0xff]
  %v2229 = vld [vmem:[%s12 + $0x158] sm:$0xff]
  %v2230 = vld [vmem:[%s12 + $0x160] sm:$0xff]
  %v2231 = vld [vmem:[%s12 + $0x168] sm:$0xff]
  %v2232 = vld [vmem:[%s12 + $0x170] sm:$0xff]
  %v2233 = vld [vmem:[%s12 + $0x178] sm:$0xff]
  %v2234 = vld [vmem:[%s12 + $0x180] sm:$0xff]
  %v2235 = vld [vmem:[%s12 + $0x188] sm:$0xff]
  %v2236 = vld [vmem:[%s12 + $0x190] sm:$0xff]
  %v2237 = vld [vmem:[%s12 + $0x198] sm:$0xff]
  %v2238 = vld [vmem:[%s12 + $0x1a0] sm:$0xff]
  %v2239 = vld [vmem:[%s12 + $0x1a8] sm:$0xff]
  %v2240 = vld [vmem:[%s12 + $0x1b0] sm:$0xff]
  %v2241 = vld [vmem:[%s12 + $0x1b8] sm:$0xff]
  %v2242 = vld [vmem:[%s12 + $0x1c0] sm:$0xff]
  %v2243 = vld [vmem:[%s12 + $0x1c8] sm:$0xff]
  %v2244 = vld [vmem:[%s12 + $0x1d0] sm:$0xff]
  %v2245 = vld [vmem:[%s12 + $0x1d8] sm:$0xff]
  %v2246 = vld [vmem:[%s12 + $0x1e0] sm:$0xff]
  %v2247 = vld [vmem:[%s12 + $0x1e8] sm:$0xff]
  %v2248 = vld [vmem:[%s12 + $0x1f0] sm:$0xff]
  %v2249 = vld [vmem:[%s12 + $0x1f8] sm:$0xff]
  %v2250 = vld [vmem:[#allocation2] sm:$0x1]
  %v2252 = vlaneseq
  %v2253 = vshrl.u32 %v2252, 7
  %v2254 = vsub.s32 0, %v2253
  %v2255 = vrot.slane %v2250, %v2254
  %2257 = vmatprep.subr.mxu0 0.0
  %2258 = vmatpush1.msra.mxu0 %v2186
  %2259 = vmatprep.subr.mxu0 0.0
  %2260 = vmatpush1.msra.mxu0 %v2187
  %2261 = vmatprep.subr.mxu0 0.0
  %2262 = vmatpush1.msra.mxu0 %v2188
  %2263 = vmatprep.subr.mxu0 0.0
  %2264 = vmatpush1.msra.mxu0 %v2189
  %2265 = vmatprep.subr.mxu0 0.0
  %2266 = vmatpush1.msra.mxu0 %v2190
  %2267 = vmatprep.subr.mxu0 0.0
  %2268 = vmatpush1.msra.mxu0 %v2191
  %2269 = vmatprep.subr.mxu0 0.0
  %2270 = vmatpush1.msra.mxu0 %v2192
  %2271 = vmatprep.subr.mxu0 0.0
  %2272 = vmatpush1.msra.mxu0 %v2193
  %2273 = vmatprep.subr.mxu0 0.0
  %2274 = vmatpush1.msra.mxu0 %v2194
  %2275 = vmatprep.subr.mxu0 0.0
  %2276 = vmatpush1.msra.mxu0 %v2195
  %2277 = vmatprep.subr.mxu0 0.0
  %2278 = vmatpush1.msra.mxu0 %v2196
  %2279 = vmatprep.subr.mxu0 0.0
  %2280 = vmatpush1.msra.mxu0 %v2197
  %2281 = vmatprep.subr.mxu0 0.0
  %2282 = vmatpush1.msra.mxu0 %v2198
  %2283 = vmatprep.subr.mxu0 0.0
  %2284 = vmatpush1.msra.mxu0 %v2199
  %2285 = vmatprep.subr.mxu0 0.0
  %2286 = vmatpush1.msra.mxu0 %v2200
  %2287 = vmatprep.subr.mxu0 0.0
  %2288 = vmatpush1.msra.mxu0 %v2201
  %2289 = vmatprep.subr.mxu0 0.0
  %2290 = vmatpush1.msra.mxu0 %v2202
  %2291 = vmatprep.subr.mxu0 0.0
  %2292 = vmatpush1.msra.mxu0 %v2203
  %2293 = vmatprep.subr.mxu0 0.0
  %2294 = vmatpush1.msra.mxu0 %v2204
  %2295 = vmatprep.subr.mxu0 0.0
  %2296 = vmatpush1.msra.mxu0 %v2205
  %2297 = vmatprep.subr.mxu0 0.0
  %2298 = vmatpush1.msra.mxu0 %v2206
  %2299 = vmatprep.subr.mxu0 0.0
  %2300 = vmatpush1.msra.mxu0 %v2207
  %2301 = vmatprep.subr.mxu0 0.0
  %2302 = vmatpush1.msra.mxu0 %v2208
  %2303 = vmatprep.subr.mxu0 0.0
  %2304 = vmatpush1.msra.mxu0 %v2209
  %2305 = vmatprep.subr.mxu0 0.0
  %2306 = vmatpush1.msra.mxu0 %v2210
  %2307 = vmatprep.subr.mxu0 0.0
  %2308 = vmatpush1.msra.mxu0 %v2211
  %2309 = vmatprep.subr.mxu0 0.0
  %2310 = vmatpush1.msra.mxu0 %v2212
  %2311 = vmatprep.subr.mxu0 0.0
  %2312 = vmatpush1.msra.mxu0 %v2213
  %2313 = vmatprep.subr.mxu0 0.0
  %2314 = vmatpush1.msra.mxu0 %v2214
  %2315 = vmatprep.subr.mxu0 0.0
  %2316 = vmatpush1.msra.mxu0 %v2215
  %2317 = vmatprep.subr.mxu0 0.0
  %2318 = vmatpush1.msra.mxu0 %v2216
  %2319 = vmatprep.subr.mxu0 0.0
  %2320 = vmatpush1.msra.mxu0 %v2217
  %2321 = vmatprep.mubr.f32.mxu0 %v2167
  %2322 = vmatmul.mubr.f32.gmra.mrb[0].mxu0 %v2166
  %v2323 = vpop.f32.mrb[0].mxu0
  %v2324 = vadd.f32 %v2255, %v2323
  %v2325 = vpop.f32.mrb[0].mxu0
  %2326 = vmatprep.mubr.f32.mxu0 %v2171
  %2327 = vmatmul.mubr.f32.gmra.mrb[0].mxu0 %v2170
  %v2328 = vpop.f32.mrb[0].mxu0
  %v2329 = vadd.f32 %v2255, %v2328
  %v2330 = vpop.f32.mrb[0].mxu0
  %2331 = vmatprep.mubr.f32.mxu0 %v2175
  %2332 = vmatmul.mubr.f32.gmra.mrb[0].mxu0 %v2174
  %v2333 = vpop.f32.mrb[0].mxu0
  %v2334 = vadd.f32 %v2255, %v2333
  %v2335 = vpop.f32.mrb[0].mxu0
  %2336 = vmatprep.mubr.f32.mxu0 %v2179
  %2337 = vmatmul.mubr.f32.gmra.mrb[0].mxu0 %v2178
  %v2338 = vpop.f32.mrb[0].mxu0
  %v2339 = vadd.f32 %v2255, %v2338
  %v2340 = vpop.f32.mrb[0].mxu0
  %2341 = vmatprep.mubr.f32.mxu0 %v2183
  %2342 = vmatmul.mubr.f32.gmra.mrb[0].mxu0 %v2182
  %v2343 = vpop.f32.mrb[0].mxu0
  %v2344 = vadd.f32 %v2255, %v2343
  %v2345 = vpop.f32.mrb[0].mxu0
  %2346 = vdwg.mxu0
  %2347 = vmatprep.subr.mxu0 0.0
  %2348 = vmatpush1.msra.mxu0 %v2218
  %2349 = vmatprep.subr.mxu0 0.0
  %2350 = vmatpush1.msra.mxu0 %v2219
  %2351 = vmatprep.subr.mxu0 0.0
  %2352 = vmatpush1.msra.mxu0 %v2220
  %2353 = vmatprep.subr.mxu0 0.0
  %2354 = vmatpush1.msra.mxu0 %v2221
  %2355 = vmatprep.subr.mxu0 0.0
  %2356 = vmatpush1.msra.mxu0 %v2222
  %2357 = vmatprep.subr.mxu0 0.0
  %2358 = vmatpush1.msra.mxu0 %v2223
  %2359 = vmatprep.subr.mxu0 0.0
  %2360 = vmatpush1.msra.mxu0 %v2224
  %2361 = vmatprep.subr.mxu0 0.0
  %2362 = vmatpush1.msra.mxu0 %v2225
  %2363 = vmatprep.subr.mxu0 0.0
  %2364 = vmatpush1.msra.mxu0 %v2226
  %2365 = vmatprep.subr.mxu0 0.0
  %2366 = vmatpush1.msra.mxu0 %v2227
  %2367 = vmatprep.subr.mxu0 0.0
  %2368 = vmatpush1.msra.mxu0 %v2228
  %2369 = vmatprep.subr.mxu0 0.0
  %2370 = vmatpush1.msra.mxu0 %v2229
  %2371 = vmatprep.subr.mxu0 0.0
  %2372 = vmatpush1.msra.mxu0 %v2230
  %2373 = vmatprep.subr.mxu0 0.0
  %2374 = vmatpush1.msra.mxu0 %v2231
  %2375 = vmatprep.subr.mxu0 0.0
  %2376 = vmatpush1.msra.mxu0 %v2232
  %2377 = vmatprep.subr.mxu0 0.0
  %2378 = vmatpush1.msra.mxu0 %v2233
  %2379 = vmatprep.subr.mxu0 0.0
  %2380 = vmatpush1.msra.mxu0 %v2234
  %2381 = vmatprep.subr.mxu0 0.0
  %2382 = vmatpush1.msra.mxu0 %v2235
  %2383 = vmatprep.subr.mxu0 0.0
  %2384 = vmatpush1.msra.mxu0 %v2236
  %2385 = vmatprep.subr.mxu0 0.0
  %2386 = vmatpush1.msra.mxu0 %v2237
  %2387 = vmatprep.subr.mxu0 0.0
  %2388 = vmatpush1.msra.mxu0 %v2238
  %2389 = vmatprep.subr.mxu0 0.0
  %2390 = vmatpush1.msra.mxu0 %v2239
  %2391 = vmatprep.subr.mxu0 0.0
  %2392 = vmatpush1.msra.mxu0 %v2240
  %2393 = vmatprep.subr.mxu0 0.0
  %2394 = vmatpush1.msra.mxu0 %v2241
  %2395 = vmatprep.subr.mxu0 0.0
  %2396 = vmatpush1.msra.mxu0 %v2242
  %2397 = vmatprep.subr.mxu0 0.0
  %2398 = vmatpush1.msra.mxu0 %v2243
  %2399 = vmatprep.subr.mxu0 0.0
  %2400 = vmatpush1.msra.mxu0 %v2244
  %2401 = vmatprep.subr.mxu0 0.0
  %2402 = vmatpush1.msra.mxu0 %v2245
  %2403 = vmatprep.subr.mxu0 0.0
  %2404 = vmatpush1.msra.mxu0 %v2246
  %2405 = vmatprep.subr.mxu0 0.0
  %2406 = vmatpush1.msra.mxu0 %v2247
  %2407 = vmatprep.subr.mxu0 0.0
  %2408 = vmatpush1.msra.mxu0 %v2248
  %2409 = vmatprep.subr.mxu0 0.0
  %2410 = vmatpush1.msra.mxu0 %v2249
  %2411 = vmatprep.mubr.f32.mxu0 %v2169
  %2412 = vmatmul.mubr.f32.gmra.mrb[0].mxu0 %v2168
  %v2413 = vpop.f32.mrb[0].mxu0
  %v2414 = vadd.f32 %v2324, %v2413
  %v2415 = vpop.f32.mrb[0].mxu0
  %2416 = vmatprep.mubr.f32.mxu0 %v2173
  %2417 = vmatmul.mubr.f32.gmra.mrb[0].mxu0 %v2172
  %v2418 = vpop.f32.mrb[0].mxu0
  %v2419 = vadd.f32 %v2329, %v2418
  %v2420 = vpop.f32.mrb[0].mxu0
  %2421 = vmatprep.mubr.f32.mxu0 %v2177
  %2422 = vmatmul.mubr.f32.gmra.mrb[0].mxu0 %v2176
  %v2423 = vpop.f32.mrb[0].mxu0
  %v2424 = vadd.f32 %v2334, %v2423
  %v2425 = vpop.f32.mrb[0].mxu0
  %2426 = vmatprep.mubr.f32.mxu0 %v2181
  %2427 = vmatmul.mubr.f32.gmra.mrb[0].mxu0 %v2180
  %v2428 = vpop.f32.mrb[0].mxu0
  %v2429 = vadd.f32 %v2339, %v2428
  %v2430 = vpop.f32.mrb[0].mxu0
  %2431 = vmatprep.mubr.f32.mxu0 %v2185
  %2432 = vmatmul.mubr.f32.gmra.mrb[0].mxu0 %v2184
  %v2433 = vpop.f32.mrb[0].mxu0
  %v2434 = vadd.f32 %v2344, %v2433
  %v2435 = vpop.f32.mrb[0].mxu0
  %2436 = vdwg.mxu0
  %vm2437 = vcmask 7168
  %2438 = vst.msk [vmem:[%s14] sm:$0xff] %vm2437, %v2414
  %2439 = vst.msk [vmem:[%s14 + $0x8] sm:$0xff] %vm2437, %v2419
  %2440 = vst.msk [vmem:[%s14 + $0x10] sm:$0xff] %vm2437, %v2424
  %2441 = vst.msk [vmem:[%s14 + $0x18] sm:$0xff] %vm2437, %v2429
  %2442 = vst.msk [vmem:[%s14 + $0x20] sm:$0xff] %vm2437, %v2434
  // Predicated region
  $region58: #{tam_forward.9} parent=0 // pred_check
    _
  $region59: #{tam_forward.9} parent=0 // pred_check_branch
    %2444 = sbr.rel (0) target = $region61
  $region60: #{tam_forward.9} parent=0 // pred_region
    _
  $region61: #{tam_forward.9} parent=0 // pred_fallthru
    _
  // Predicated region
  $region62: #{tam_forward.9} parent=0 // pred_check
    _
  $region63: #{tam_forward.9} parent=0 // pred_check_branch
    %2446 = sbr.rel (0) target = $region65
  $region64: #{tam_forward.9} parent=0 // pred_region
    _
  $region65: #{tam_forward.9} parent=0 // pred_fallthru
    _

</llo_original>
